<compile_context>
chip_gen: v5e
topology: v5e:2x2
jax: 0.10.0
libtpu: 0.0.40
codegen_flags: <defaults>
</compile_context>

<pallas_src>
import functools
import numpy as np

import jax
import jax.numpy as jnp
from jax.experimental import pallas as pl
from jax.experimental.pallas import tpu as pltpu

PAD_TOKEN_ID = 0
MASK_TOKEN_ID = 4

_VMEM_LIMIT = 48 * 1024 * 1024  # conservative scoped-VMEM cap (fits v7x 64 MiB physical)


# ----------------------------------------------------------------------------
# tiling helper
# ----------------------------------------------------------------------------
def _pick_tile(dim, pref, align):
    """Largest multiple-of-`align` tile <= pref that divides `dim`; else full dim."""
    if dim <= pref:
        return dim
    t = (pref // align) * align
    while t >= align:
        if dim % t == 0:
            return t
        t -= align
    return dim


# ----------------------------------------------------------------------------
# dense (+GELU) (+residual) (+LayerNorm) — K is the last grid axis
# ----------------------------------------------------------------------------
def _dense_kernel(act, ln, res, *refs):
    a_ref, w_ref, b_ref = refs[0], refs[1], refs[2]
    i = 3
    r_ref = None
    if res:
        r_ref = refs[i]
        i += 1
    if ln:
        g_ref, beta_ref = refs[i], refs[i + 1]
        i += 2
    o_ref, acc_ref = refs[i], refs[i + 1]

    @pl.when(pl.program_id(2) == 0)
    def _init():
        acc_ref[...] = jnp.zeros_like(acc_ref)

    # bf16 MXU operands, fp32 VMEM accumulator
    acc_ref[...] += jnp.dot(a_ref[...], w_ref[...],
                            preferred_element_type=jnp.float32)

    @pl.when(pl.program_id(2) == pl.num_programs(2) - 1)
    def _finish():
        y = acc_ref[...] + b_ref[...]
        if act == "gelu":
            # TODO(synk): HF ELECTRA uses erf-GELU; tanh approximation used here.
            y = jax.nn.gelu(y, approximate=True)
        if res:
            y = y + r_ref[...].astype(jnp.float32)      # fused residual add
        if ln:
            mu = jnp.mean(y, axis=-1, keepdims=True)
            var = jnp.mean((y - mu) * (y - mu), axis=-1, keepdims=True)
            y = (y - mu) * jax.lax.rsqrt(var + 1e-12) * g_ref[...] + beta_ref[...]
        o_ref[...] = y.astype(o_ref.dtype)


def dense(x, w, b, act=None, ln_g=None, ln_b=None, residual=None,
          out_dtype=jnp.bfloat16):
    """y = [LN]([res +] act(x @ w + b)); LN epilogue requires tn == N."""
    M, K = x.shape
    Kw, N = w.shape
    assert K == Kw
    ln = ln_g is not None
    res = residual is not None

    tm = _pick_tile(M, 256, 8)
    tn = N if ln else _pick_tile(N, 512, 128)
    # keep the whole contraction resident when K is modest (weight DMA'd once per tile)
    tk = K if K <= 1024 else _pick_tile(K, 512, 128)
    nk = K // tk
    grid = (M // tm, N // tn, nk)

    in_specs = [pl.BlockSpec((tm, tk), lambda i, j, k: (i, k)),
                pl.BlockSpec((tk, tn), lambda i, j, k: (k, j)),
                pl.BlockSpec((1, tn), lambda i, j, k: (0, j))]
    args = [x.astype(jnp.bfloat16), w.astype(jnp.bfloat16),
            b.astype(jnp.float32).reshape(1, N)]
    if res:
        in_specs.append(pl.BlockSpec((tm, tn), lambda i, j, k: (i, j)))
        args.append(residual.astype(jnp.bfloat16))
    if ln:
        in_specs += [pl.BlockSpec((1, tn), lambda i, j, k: (0, j)),
                     pl.BlockSpec((1, tn), lambda i, j, k: (0, j))]
        args += [ln_g.astype(jnp.float32).reshape(1, N),
                 ln_b.astype(jnp.float32).reshape(1, N)]

    return pl.pallas_call(
        functools.partial(_dense_kernel, act, ln, res),
        grid=grid,
        in_specs=in_specs,
        out_specs=pl.BlockSpec((tm, tn), lambda i, j, k: (i, j)),
        out_shape=jax.ShapeDtypeStruct((M, N), out_dtype),
        scratch_shapes=[pltpu.VMEM((tm, tn), jnp.float32)],
        compiler_params=pltpu.CompilerParams(
            dimension_semantics=("parallel", "parallel", "arbitrary"),
            vmem_limit_bytes=_VMEM_LIMIT),
    )(*args)


# ----------------------------------------------------------------------------
# tied LM head: logits = x @ w_t.T + b (no transpose materialization)
# ----------------------------------------------------------------------------
def _dense_nt_kernel(a_ref, w_ref, b_ref, o_ref, acc_ref):
    @pl.when(pl.program_id(2) == 0)
    def _init():
        acc_ref[...] = jnp.zeros_like(acc_ref)

    acc_ref[...] += jax.lax.dot_general(
        a_ref[...], w_ref[...], (((1,), (1,)), ((), ())),
        preferred_element_type=jnp.float32)

    @pl.when(pl.program_id(2) == pl.num_programs(2) - 1)
    def _finish():
        o_ref[...] = (acc_ref[...] + b_ref[...]).astype(o_ref.dtype)


def dense_nt(x, w_t, b, out_dtype=jnp.bfloat16):
    M, K = x.shape
    V, Kw = w_t.shape
    assert K == Kw
    # Pad vocab to an aligned multiple and cap the lane tile at 512 so the output
    # block + fp32 accumulator stay bounded even for real ELECTRA vocab sizes.
    if V <= 512:
        Vp = ((V + 127) // 128) * 128
        tn = Vp
    else:
        tn = 512
        Vp = ((V + 511) // 512) * 512
    w_t = w_t.astype(jnp.bfloat16)
    b = b.astype(jnp.float32)
    if Vp != V:
        w_t = jnp.pad(w_t, ((0, Vp - V), (0, 0)))
        b = jnp.pad(b, (0, Vp - V))

    tm = _pick_tile(M, 256, 8)
    tk = K if K <= 1024 else _pick_tile(K, 512, 128)
    nk = K // tk
    grid = (M // tm, Vp // tn, nk)

    out = pl.pallas_call(
        _dense_nt_kernel,
        grid=grid,
        in_specs=[pl.BlockSpec((tm, tk), lambda i, j, k: (i, k)),
                  pl.BlockSpec((tn, tk), lambda i, j, k: (j, k)),
                  pl.BlockSpec((1, tn), lambda i, j, k: (0, j))],
        out_specs=pl.BlockSpec((tm, tn), lambda i, j, k: (i, j)),
        out_shape=jax.ShapeDtypeStruct((M, Vp), out_dtype),
        scratch_shapes=[pltpu.VMEM((tm, tn), jnp.float32)],
        compiler_params=pltpu.CompilerParams(
            dimension_semantics=("parallel", "parallel", "arbitrary"),
            vmem_limit_bytes=_VMEM_LIMIT),
    )(x.astype(jnp.bfloat16), w_t, b.reshape(1, Vp))
    return out[:, :V] if Vp != V else out


# ----------------------------------------------------------------------------
# standalone LayerNorm (embeddings only; per-layer LN is fused into dense)
# ----------------------------------------------------------------------------
def _ln_kernel(x_ref, g_ref, b_ref, o_ref):
    x = x_ref[...].astype(jnp.float32)
    mu = jnp.mean(x, axis=-1, keepdims=True)
    var = jnp.mean((x - mu) * (x - mu), axis=-1, keepdims=True)
    o_ref[...] = ((x - mu) * jax.lax.rsqrt(var + 1e-12) * g_ref[...]
                  + b_ref[...]).astype(o_ref.dtype)


def layer_norm(x, g, b, out_dtype=jnp.bfloat16):
    M, H = x.shape
    tm = _pick_tile(M, 512, 8)
    row = pl.BlockSpec((tm, H), lambda i: (i, 0))
    vec = pl.BlockSpec((1, H), lambda i: (0, 0))
    return pl.pallas_call(
        _ln_kernel, grid=(M // tm,), in_specs=[row, vec, vec], out_specs=row,
        out_shape=jax.ShapeDtypeStruct((M, H), out_dtype),
        compiler_params=pltpu.CompilerParams(dimension_semantics=("parallel",)),
    )(x.astype(jnp.bfloat16), g.astype(jnp.float32).reshape(1, H),
      b.astype(jnp.float32).reshape(1, H))


# ----------------------------------------------------------------------------
# attention: one batch row per grid step, head-major lane-aligned q/k/v,
# single lane-dense (L, hidden) output store
# ----------------------------------------------------------------------------
def _attention_kernel(heads, scale, q_ref, k_ref, v_ref, bias_ref, o_ref):
    # TODO(synk): block the kv axis flash-style (online softmax) for long L on v7x.
    bias = bias_ref[0]                               # (1, L) f32 additive pad mask
    ctxs = []
    for h in range(heads):                           # small static unroll
        q = q_ref[0, h] * scale                      # fold 1/sqrt(d) into q, (L, d) bf16
        k = k_ref[0, h]
        v = v_ref[0, h]
        s = jax.lax.dot_general(q, k, (((1,), (1,)), ((), ())),
                                preferred_element_type=jnp.float32)
        s = s + bias
        s = s - jnp.max(s, axis=-1, keepdims=True)   # f32 softmax
        p = jnp.exp(s)
        p = p * pl.reciprocal(jnp.sum(p, axis=-1, keepdims=True), approx=True)
        ctx = jnp.dot(p.astype(jnp.bfloat16), v,
                      preferred_element_type=jnp.float32)
        ctxs.append(ctx.astype(o_ref.dtype))
    o_ref[0] = jnp.concatenate(ctxs, axis=-1)        # one lane-dense (L, hidden) store


def attention(q, k, v, attn_bias):
    # q, k, v: (B, heads, L, d) bf16;  attn_bias: (B, 1, L) f32
    B, heads, L, d = q.shape
    hidden = heads * d
    scale = 1.0 / float(np.sqrt(d))
    qkv_spec = pl.BlockSpec((1, heads, L, d), lambda b: (b, 0, 0, 0))
    return pl.pallas_call(
        functools.partial(_attention_kernel, heads, scale),
        grid=(B,),
        in_specs=[qkv_spec, qkv_spec, qkv_spec,
                  pl.BlockSpec((1, 1, L), lambda b: (b, 0, 0))],
        out_specs=pl.BlockSpec((1, L, hidden), lambda b: (b, 0, 0)),
        out_shape=jax.ShapeDtypeStruct((B, L, hidden), jnp.bfloat16),
        compiler_params=pltpu.CompilerParams(
            dimension_semantics=("parallel",), vmem_limit_bytes=_VMEM_LIMIT),
    )(q, k, v, attn_bias)


# ----------------------------------------------------------------------------
# fused discriminator head: dense + GELU + (hidden -> 1) projection,
# output widened to 128 lanes (column 0 carries the logit) for lane-dense stores
# ----------------------------------------------------------------------------
def _disc_head_kernel(x_ref, dpw_ref, dpb_ref, dow_ref, dob_ref, o_ref):
    x = jnp.dot(x_ref[...], dpw_ref[...],
                preferred_element_type=jnp.float32) + dpb_ref[...]
    x = jax.nn.gelu(x, approximate=True)
    o_ref[...] = jnp.dot(x.astype(jnp.bfloat16), dow_ref[...],
                         preferred_element_type=jnp.float32) + dob_ref[...]


def disc_head(x, dp_w, dp_b, do_w, do_b):
    M, H = x.shape
    tm = _pick_tile(M, 256, 8)
    dow_pad = jnp.zeros((H, 128), jnp.bfloat16).at[:, 0].set(
        do_w.reshape(H).astype(jnp.bfloat16))
    dob_pad = jnp.zeros((1, 128), jnp.float32).at[0, 0].set(
        do_b.reshape(()).astype(jnp.float32))
    out = pl.pallas_call(
        _disc_head_kernel,
        grid=(M // tm,),
        in_specs=[pl.BlockSpec((tm, H), lambda i: (i, 0)),
                  pl.BlockSpec((H, H), lambda i: (0, 0)),
                  pl.BlockSpec((1, H), lambda i: (0, 0)),
                  pl.BlockSpec((H, 128), lambda i: (0, 0)),
                  pl.BlockSpec((1, 128), lambda i: (0, 0))],
        out_specs=pl.BlockSpec((tm, 128), lambda i: (i, 0)),
        out_shape=jax.ShapeDtypeStruct((M, 128), jnp.float32),
        compiler_params=pltpu.CompilerParams(dimension_semantics=("parallel",)),
    )(x.astype(jnp.bfloat16), dp_w.astype(jnp.bfloat16),
      dp_b.astype(jnp.float32).reshape(1, H), dow_pad, dob_pad)
    return out[:, 0]


# ----------------------------------------------------------------------------
# Electra parameter construction (deterministic, synthetic; weights in bf16)
# ----------------------------------------------------------------------------
def init_electra_params(key, *, vocab, max_pos, type_vocab, emb, hidden, heads,
                        n_layers, inter, head):
    def nrm(k, shape):
        return (0.02 * jax.random.normal(k, shape, jnp.float32)).astype(jnp.bfloat16)

    keys = iter(jax.random.split(key, 16 + 16 * n_layers))
    p = {
        "word_emb": nrm(next(keys), (vocab, emb)),
        "pos_emb": nrm(next(keys), (max_pos, emb)),
        "tt_emb": nrm(next(keys), (type_vocab, emb)),
        "emb_ln_g": jnp.ones((emb,), jnp.float32),
        "emb_ln_b": jnp.zeros((emb,), jnp.float32),
    }
    if emb != hidden:
        p["proj_w"] = nrm(next(keys), (emb, hidden))
        p["proj_b"] = jnp.zeros((hidden,), jnp.float32)
    p["layers"] = []
    for _ in range(n_layers):
        lp = {
            # fused q|k|v projection: one MXU pass
            "qkv_w": nrm(next(keys), (hidden, 3 * hidden)),
            "qkv_b": jnp.zeros((3 * hidden,), jnp.float32),
            "ao_w": nrm(next(keys), (hidden, hidden)),
            "ao_b": jnp.zeros((hidden,), jnp.float32),
            "attn_ln_g": jnp.ones((hidden,), jnp.float32),
            "attn_ln_b": jnp.zeros((hidden,), jnp.float32),
            "i_w": nrm(next(keys), (hidden, inter)),
            "i_b": jnp.zeros((inter,), jnp.float32),
            "o_w": nrm(next(keys), (inter, hidden)),
            "o_b": jnp.zeros((hidden,), jnp.float32),
            "out_ln_g": jnp.ones((hidden,), jnp.float32),
            "out_ln_b": jnp.zeros((hidden,), jnp.float32),
        }
        p["layers"].append(lp)
    if head == "gen":
        p["gp_w"] = nrm(next(keys), (hidden, emb))
        p["gp_b"] = jnp.zeros((emb,), jnp.float32)
        p["gp_ln_g"] = jnp.ones((emb,), jnp.float32)
        p["gp_ln_b"] = jnp.zeros((emb,), jnp.float32)
        # LM head tied to word_emb (contracted via dense_nt, no transpose copy)
        p["lm_b"] = jnp.zeros((vocab,), jnp.float32)
    else:
        p["dp_w"] = nrm(next(keys), (hidden, hidden))
        p["dp_b"] = jnp.zeros((hidden,), jnp.float32)
        p["do_w"] = nrm(next(keys), (hidden, 1))
        p["do_b"] = jnp.zeros((1,), jnp.float32)
    return p


# ----------------------------------------------------------------------------
# Electra forward passes (built from the Pallas kernels)
# ----------------------------------------------------------------------------
def electra_encoder(params, input_ids, attention_mask, token_type_ids, cfg):
    B, L = input_ids.shape
    emb, hidden, heads = cfg["emb"], cfg["hidden"], cfg["heads"]
    d = hidden // heads

    # Embedding gathers stay in plain JAX (data-dependent gather), bf16.
    x = (params["word_emb"][input_ids]
         + params["pos_emb"][:L][None, :, :]
         + params["tt_emb"][token_type_ids])
    h = layer_norm(x.reshape(B * L, emb), params["emb_ln_g"], params["emb_ln_b"])
    if "proj_w" in params:
        h = dense(h, params["proj_w"], params["proj_b"])

    # additive attention bias: 0 for real tokens, -1e4 for padding (HF convention)
    attn_bias = ((1.0 - attention_mask.astype(jnp.float32)) * -10000.0)[:, None, :]

    for lp in params["layers"]:
        qkv = dense(h, lp["qkv_w"], lp["qkv_b"])                 # (B*L, 3H) bf16
        # head-major layout so every per-head load in the kernel is lane-aligned
        qkv = qkv.reshape(B, L, 3, heads, d)
        qkv = jnp.transpose(qkv, (2, 0, 3, 1, 4))                # (3, B, heads, L, d)
        ctx = attention(qkv[0], qkv[1], qkv[2], attn_bias)       # (B, L, H) bf16
        # attn output projection + residual + LayerNorm fused in one kernel
        h = dense(ctx.reshape(B * L, hidden), lp["ao_w"], lp["ao_b"],
                  residual=h, ln_g=lp["attn_ln_g"], ln_b=lp["attn_ln_b"])
        inter = dense(h, lp["i_w"], lp["i_b"], act="gelu")
        h = dense(inter, lp["o_w"], lp["o_b"],
                  residual=h, ln_g=lp["out_ln_g"], ln_b=lp["out_ln_b"])
    return h  # (B*L, hidden) bf16


def generator_forward(params, input_ids, attention_mask, token_type_ids, cfg):
    B, L = input_ids.shape
    h = electra_encoder(params, input_ids, attention_mask, token_type_ids, cfg)
    # fused dense + GELU + LayerNorm epilogue
    x = dense(h, params["gp_w"], params["gp_b"], act="gelu",
              ln_g=params["gp_ln_g"], ln_b=params["gp_ln_b"])
    # tied LM head: logits = x @ word_emb.T + b
    logits = dense_nt(x, params["word_emb"], params["lm_b"])
    return logits.reshape(B, L, cfg["vocab"])


def discriminator_forward(params, input_ids, attention_mask, token_type_ids, cfg):
    B, L = input_ids.shape
    h = electra_encoder(params, input_ids, attention_mask, token_type_ids, cfg)
    logits = disc_head(h, params["dp_w"], params["dp_b"],
                       params["do_w"], params["do_b"])           # (B*L,)
    return logits.reshape(B, L)


# ----------------------------------------------------------------------------
# ELECTRAModel.forward equivalent
# ----------------------------------------------------------------------------
def electra_model_forward(gen_params, disc_params, masked_inputs, sentA_lengths,
                          is_mlm_applied, labels, mlm_rows, mlm_cols, gumbel_key,
                          gen_cfg, disc_cfg):
    B, L = masked_inputs.shape
    # _get_pad_mask_and_token_type
    attention_mask = masked_inputs != PAD_TOKEN_ID
    token_type_ids = (jnp.arange(L)[None, :] >= sentA_lengths[:, None]).astype(jnp.int32)

    gen_logits = generator_forward(gen_params, masked_inputs, attention_mask,
                                   token_type_ids, gen_cfg)      # (B, L, V)

    # gen_logits[is_mlm_applied, :] -- static-size gather (row-major True order)
    mlm_gen_logits = gen_logits[mlm_rows, mlm_cols].astype(jnp.float32)  # (K, V)

    # sample(): fp32_gumbel -> argmax(logits + Gumbel(0,1))
    gumbel = jax.random.gumbel(gumbel_key, mlm_gen_logits.shape, dtype=jnp.float32)
    pred_toks = jnp.argmax(mlm_gen_logits + gumbel, axis=-1)
    pred_toks = pred_toks.astype(masked_inputs.dtype)

    generated = masked_inputs.at[mlm_rows, mlm_cols].set(pred_toks)
    is_replaced = is_mlm_applied.at[mlm_rows, mlm_cols].set(
        pred_toks != labels[mlm_rows, mlm_cols])

    disc_logits = discriminator_forward(disc_params, generated, attention_mask,
                                        token_type_ids, disc_cfg)  # (B, L)

    return (mlm_gen_logits, generated, disc_logits, is_replaced,
            attention_mask, is_mlm_applied)


# ----------------------------------------------------------------------------
# Driver
# ----------------------------------------------------------------------------
if __name__ == "__main__":
    B, L = 2, 16
    VOCAB, MAX_POS, TYPE_VOCAB, EMB = 512, 64, 2, 256
    # mirrors the real model: generator has emb->hidden projection, disc does not
    gen_cfg = dict(vocab=VOCAB, emb=EMB, hidden=128, heads=2, inter=256)
    disc_cfg = dict(vocab=VOCAB, emb=EMB, hidden=256, heads=4, inter=512)

    root = jax.random.PRNGKey(0)
    k_gen, k_disc, k_ids, k_orig, k_gumbel = jax.random.split(root, 5)

    gen_params = init_electra_params(
        k_gen, vocab=VOCAB, max_pos=MAX_POS, type_vocab=TYPE_VOCAB, emb=EMB,
        hidden=gen_cfg["hidden"], heads=gen_cfg["heads"], n_layers=2,
        inter=gen_cfg["inter"], head="gen")
    disc_params = init_electra_params(
        k_disc, vocab=VOCAB, max_pos=MAX_POS, type_vocab=TYPE_VOCAB, emb=EMB,
        hidden=disc_cfg["hidden"], heads=disc_cfg["heads"], n_layers=2,
        inter=disc_cfg["inter"], head="disc")

    # deterministic example batch (np.array => writable host copies)
    ids = np.array(jax.random.randint(k_ids, (B, L), 5, VOCAB, dtype=jnp.int32))
    orig = np.array(jax.random.randint(k_orig, (B, L), 5, VOCAB, dtype=jnp.int32))
    seq_lengths = np.array([12, 16], dtype=np.int32)
    sentA_lengths = np.array([6, 9], dtype=np.int32)
    for b in range(B):
        ids[b, seq_lengths[b]:] = PAD_TOKEN_ID

    is_mlm = np.zeros((B, L), dtype=bool)
    is_mlm[:, 2::5] = True                       # deterministic mlm positions
    is_mlm &= ids != PAD_TOKEN_ID
    labels = np.full((B, L), -100, dtype=np.int32)
    labels[is_mlm] = orig[is_mlm]
    masked_inputs = ids.copy()
    masked_inputs[is_mlm] = MASK_TOKEN_ID
    mlm_rows, mlm_cols = np.nonzero(is_mlm)      # static count K (row-major, like torch bool-indexing)

    fwd = jax.jit(functools.partial(electra_model_forward,
                                    gen_cfg=gen_cfg, disc_cfg=disc_cfg))
    outs = fwd(gen_params, disc_params,
               jnp.asarray(masked_inputs), jnp.asarray(sentA_lengths),
               jnp.asarray(is_mlm), jnp.asarray(labels),
               jnp.asarray(mlm_rows), jnp.asarray(mlm_cols), k_gumbel)
    outs = jax.block_until_ready(outs)

    mlm_gen_logits, generated, disc_logits, is_replaced, attn_mask, mlm_mask = outs
    assert mlm_gen_logits.shape == (len(mlm_rows), VOCAB)
    assert generated.shape == (B, L) and generated.dtype == jnp.int32
    assert disc_logits.shape == (B, L)
    assert is_replaced.shape == (B, L) and is_replaced.dtype == jnp.bool_
    assert attn_mask.shape == (B, L) and mlm_mask.shape == (B, L)
    assert bool(jnp.all(jnp.isfinite(mlm_gen_logits)))
    assert bool(jnp.all(jnp.isfinite(disc_logits)))
    print("KERNEL_OK")
</pallas_src>

<mosaic_0001>
module attributes {stable_mosaic.version = 11 : i64} {
  func.func @_dense_kernel(%arg0: i32, %arg1: i32, %arg2: i32, %arg3: memref<32x256xbf16, #tpu.memory_space<vmem>>, %arg4: memref<256x128xbf16, #tpu.memory_space<vmem>>, %arg5: memref<1x128xf32, #tpu.memory_space<vmem>>, %arg6: memref<32x128xbf16, #tpu.memory_space<vmem>>, %arg7: memref<32x128xf32, #tpu.memory_space<vmem>>) attributes {dimension_semantics = [#tpu.dimension_semantics<parallel>, #tpu.dimension_semantics<parallel>, #tpu.dimension_semantics<arbitrary>], iteration_bounds = array<i64: 1, 1, 1>, scalar_prefetch = 0 : i64, scratch_operands = 1 : i64, tpu.core_type = #tpu.core_type<tc>, window_params = [{transform_indices = @transform_0, window_bounds = array<i64: 32, 256>}, {transform_indices = @transform_1, window_bounds = array<i64: 256, 128>}, {transform_indices = @transform_2, window_bounds = array<i64: 1, 128>}, {transform_indices = @transform_3, window_bounds = array<i64: 32, 128>}]} {
    %c0_i32 = arith.constant 0 : i32
    %0 = arith.cmpi eq, %arg2, %c0_i32 : i32
    %1 = arith.extui %0 : i1 to i32
    %c0_i32_0 = arith.constant 0 : i32
    %2 = arith.cmpi ne, %1, %c0_i32_0 : i32
    scf.if %2 {
      %cst_10 = arith.constant 0.000000e+00 : f32
      %12 = vector.broadcast %cst_10 : f32 to vector<32x128xf32>
      %c0_11 = arith.constant 0 : index
      %c0_12 = arith.constant 0 : index
      %13 = vector.load %arg7[%c0_11, %c0_12] : memref<32x128xf32, #tpu.memory_space<vmem>>, vector<32x128xf32>
      tpu.vector_store %arg7[%c0_11, %c0_12], %12 {strides = array<i32>} : memref<32x128xf32, #tpu.memory_space<vmem>>, vector<32x128xf32>,
    } else {
    }
    %c0 = arith.constant 0 : index
    %c0_1 = arith.constant 0 : index
    %3 = vector.load %arg7[%c0, %c0_1] : memref<32x128xf32, #tpu.memory_space<vmem>>, vector<32x128xf32>
    %c0_2 = arith.constant 0 : index
    %c0_3 = arith.constant 0 : index
    %4 = vector.load %arg3[%c0_2, %c0_3] : memref<32x256xbf16, #tpu.memory_space<vmem>>, vector<32x256xbf16>
    %c0_4 = arith.constant 0 : index
    %c0_5 = arith.constant 0 : index
    %5 = vector.load %arg4[%c0_4, %c0_5] : memref<256x128xbf16, #tpu.memory_space<vmem>>, vector<256x128xbf16>
    %cst = arith.constant dense<0.000000e+00> : vector<32x128xf32>
    %6 = tpu.matmul %4, %5, %cst {dimension_numbers = #tpu.dot_dimension_numbers<[1], [0], [0], [1], [0, 0, 1, 1], [], []>} : vector<32x256xbf16>, vector<256x128xbf16>, vector<32x128xf32> -> vector<32x128xf32>
    %7 = arith.addf %3, %6 : vector<32x128xf32>
    %c0_6 = arith.constant 0 : index
    %c0_7 = arith.constant 0 : index
    %8 = vector.load %arg7[%c0_6, %c0_7] : memref<32x128xf32, #tpu.memory_space<vmem>>, vector<32x128xf32>
    tpu.vector_store %arg7[%c0_6, %c0_7], %7 {strides = array<i32>} : memref<32x128xf32, #tpu.memory_space<vmem>>, vector<32x128xf32>,
    %c0_i32_8 = arith.constant 0 : i32
    %9 = arith.cmpi eq, %arg2, %c0_i32_8 : i32
    %10 = arith.extui %9 : i1 to i32
    %c0_i32_9 = arith.constant 0 : i32
    %11 = arith.cmpi ne, %10, %c0_i32_9 : i32
    scf.if %11 {
      %c0_10 = arith.constant 0 : index
      %c0_11 = arith.constant 0 : index
      %12 = vector.load %arg7[%c0_10, %c0_11] : memref<32x128xf32, #tpu.memory_space<vmem>>, vector<32x128xf32>
      %c0_12 = arith.constant 0 : index
      %c0_13 = arith.constant 0 : index
      %13 = vector.load %arg5[%c0_12, %c0_13] : memref<1x128xf32, #tpu.memory_space<vmem>>, vector<1x128xf32>
      %14 = vector.broadcast %13 : vector<1x128xf32> to vector<32x128xf32>
      %15 = arith.addf %12, %14 : vector<32x128xf32>
      %16 = arith.truncf %15 : vector<32x128xf32> to vector<32x128xbf16>
      %c0_14 = arith.constant 0 : index
      %c0_15 = arith.constant 0 : index
      %17 = vector.load %arg6[%c0_14, %c0_15] : memref<32x128xbf16, #tpu.memory_space<vmem>>, vector<32x128xbf16>
      tpu.vector_store %arg6[%c0_14, %c0_15], %16 {strides = array<i32>} : memref<32x128xbf16, #tpu.memory_space<vmem>>, vector<32x128xbf16>,
    } else {
    }
    return
  }
  func.func @transform_0(%arg0: i32, %arg1: i32, %arg2: i32) -> (i32, i32) {
    %c0_i32 = arith.constant 0 : i32
    return %arg0, %arg2 : i32, i32
  }
  func.func @transform_1(%arg0: i32, %arg1: i32, %arg2: i32) -> (i32, i32) {
    %c0_i32 = arith.constant 0 : i32
    return %arg2, %arg1 : i32, i32
  }
  func.func @transform_2(%arg0: i32, %arg1: i32, %arg2: i32) -> (i32, i32) {
    %c0_i32 = arith.constant 0 : i32
    %c0_i32_0 = arith.constant 0 : i32
    return %c0_i32, %arg1 : i32, i32
  }
  func.func @transform_3(%arg0: i32, %arg1: i32, %arg2: i32) -> (i32, i32) {
    %c0_i32 = arith.constant 0 : i32
    return %arg0, %arg1 : i32, i32
  }
}

module attributes {stable_mosaic.version = 11 : i64} {
  func.func @_ln_kernel(%arg0: i32, %arg1: memref<32x256xbf16, #tpu.memory_space<vmem>>, %arg2: memref<1x256xf32, #tpu.memory_space<vmem>>, %arg3: memref<1x256xf32, #tpu.memory_space<vmem>>, %arg4: memref<32x256xbf16, #tpu.memory_space<vmem>>) attributes {dimension_semantics = [#tpu.dimension_semantics<parallel>], iteration_bounds = array<i64: 1>, scalar_prefetch = 0 : i64, scratch_operands = 0 : i64, tpu.core_type = #tpu.core_type<tc>, window_params = [{transform_indices = @transform_0, window_bounds = array<i64: 32, 256>}, {pipeline_mode = #tpu.pipeline_mode<synchronous>, transform_indices = @transform_1, window_bounds = array<i64: 1, 256>}, {pipeline_mode = #tpu.pipeline_mode<synchronous>, transform_indices = @transform_2, window_bounds = array<i64: 1, 256>}, {transform_indices = @transform_3, window_bounds = array<i64: 32, 256>}]} {
    %c0 = arith.constant 0 : index
    %c0_0 = arith.constant 0 : index
    %0 = vector.load %arg1[%c0, %c0_0] : memref<32x256xbf16, #tpu.memory_space<vmem>>, vector<32x256xbf16>
    %1 = arith.extf %0 : vector<32x256xbf16> to vector<32x256xf32>
    %cst = arith.constant dense<0.000000e+00> : vector<32xf32>
    %2 = vector.multi_reduction <add>, %1, %cst [1] : vector<32x256xf32> to vector<32xf32>
    %3 = vector.shape_cast %2 : vector<32xf32> to vector<32x1xf32>
    %cst_1 = arith.constant 2.560000e+02 : f32
    %4 = vector.broadcast %cst_1 : f32 to vector<32x1xf32>
    %5 = arith.divf %3, %4 : vector<32x1xf32>
    %6 = vector.broadcast %5 : vector<32x1xf32> to vector<32x256xf32>
    %7 = arith.subf %1, %6 : vector<32x256xf32>
    %8 = vector.broadcast %5 : vector<32x1xf32> to vector<32x256xf32>
    %9 = arith.subf %1, %8 : vector<32x256xf32>
    %10 = arith.mulf %7, %9 : vector<32x256xf32>
    %cst_2 = arith.constant dense<0.000000e+00> : vector<32xf32>
    %11 = vector.multi_reduction <add>, %10, %cst_2 [1] : vector<32x256xf32> to vector<32xf32>
    %12 = vector.shape_cast %11 : vector<32xf32> to vector<32x1xf32>
    %cst_3 = arith.constant 2.560000e+02 : f32
    %13 = vector.broadcast %cst_3 : f32 to vector<32x1xf32>
    %14 = arith.divf %12, %13 : vector<32x1xf32>
    %15 = vector.broadcast %5 : vector<32x1xf32> to vector<32x256xf32>
    %16 = arith.subf %1, %15 : vector<32x256xf32>
    %cst_4 = arith.constant 9.99999996E-13 : f32
    %17 = vector.broadcast %cst_4 : f32 to vector<32x1xf32>
    %18 = arith.addf %14, %17 : vector<32x1xf32>
    %19 = math.rsqrt %18 : vector<32x1xf32>
    %20 = vector.broadcast %19 : vector<32x1xf32> to vector<32x256xf32>
    %21 = arith.mulf %16, %20 : vector<32x256xf32>
    %c0_5 = arith.constant 0 : index
    %c0_6 = arith.constant 0 : index
    %22 = vector.load %arg2[%c0_5, %c0_6] : memref<1x256xf32, #tpu.memory_space<vmem>>, vector<1x256xf32>
    %23 = vector.broadcast %22 : vector<1x256xf32> to vector<32x256xf32>
    %24 = arith.mulf %21, %23 : vector<32x256xf32>
    %c0_7 = arith.constant 0 : index
    %c0_8 = arith.constant 0 : index
    %25 = vector.load %arg3[%c0_7, %c0_8] : memref<1x256xf32, #tpu.memory_space<vmem>>, vector<1x256xf32>
    %26 = vector.broadcast %25 : vector<1x256xf32> to vector<32x256xf32>
    %27 = arith.addf %24, %26 : vector<32x256xf32>
    %28 = arith.truncf %27 : vector<32x256xf32> to vector<32x256xbf16>
    %c0_9 = arith.constant 0 : index
    %c0_10 = arith.constant 0 : index
    %29 = vector.load %arg4[%c0_9, %c0_10] : memref<32x256xbf16, #tpu.memory_space<vmem>>, vector<32x256xbf16>
    tpu.vector_store %arg4[%c0_9, %c0_10], %28 {strides = array<i32>} : memref<32x256xbf16, #tpu.memory_space<vmem>>, vector<32x256xbf16>,
    return
  }
  func.func @transform_0(%arg0: i32) -> (i32, i32) {
    %c0_i32 = arith.constant 0 : i32
    %c0_i32_0 = arith.constant 0 : i32
    return %arg0, %c0_i32 : i32, i32
  }
  func.func @transform_1(%arg0: i32) -> (i32, i32) {
    %c0_i32 = arith.constant 0 : i32
    %c0_i32_0 = arith.constant 0 : i32
    %c0_i32_1 = arith.constant 0 : i32
    return %c0_i32, %c0_i32_0 : i32, i32
  }
  func.func @transform_2(%arg0: i32) -> (i32, i32) {
    %c0_i32 = arith.constant 0 : i32
    %c0_i32_0 = arith.constant 0 : i32
    %c0_i32_1 = arith.constant 0 : i32
    return %c0_i32, %c0_i32_0 : i32, i32
  }
  func.func @transform_3(%arg0: i32) -> (i32, i32) {
    %c0_i32 = arith.constant 0 : i32
    %c0_i32_0 = arith.constant 0 : i32
    return %arg0, %c0_i32 : i32, i32
  }
}

module attributes {stable_mosaic.version = 11 : i64} {
  func.func @_dense_kernel(%arg0: i32, %arg1: i32, %arg2: i32, %arg3: memref<32x128xbf16, #tpu.memory_space<vmem>>, %arg4: memref<128x384xbf16, #tpu.memory_space<vmem>>, %arg5: memref<1x384xf32, #tpu.memory_space<vmem>>, %arg6: memref<32x384xbf16, #tpu.memory_space<vmem>>, %arg7: memref<32x384xf32, #tpu.memory_space<vmem>>) attributes {dimension_semantics = [#tpu.dimension_semantics<parallel>, #tpu.dimension_semantics<parallel>, #tpu.dimension_semantics<arbitrary>], iteration_bounds = array<i64: 1, 1, 1>, scalar_prefetch = 0 : i64, scratch_operands = 1 : i64, tpu.core_type = #tpu.core_type<tc>, window_params = [{transform_indices = @transform_0, window_bounds = array<i64: 32, 128>}, {transform_indices = @transform_1, window_bounds = array<i64: 128, 384>}, {transform_indices = @transform_2, window_bounds = array<i64: 1, 384>}, {transform_indices = @transform_3, window_bounds = array<i64: 32, 384>}]} {
    %c0_i32 = arith.constant 0 : i32
    %0 = arith.cmpi eq, %arg2, %c0_i32 : i32
    %1 = arith.extui %0 : i1 to i32
    %c0_i32_0 = arith.constant 0 : i32
    %2 = arith.cmpi ne, %1, %c0_i32_0 : i32
    scf.if %2 {
      %cst_10 = arith.constant 0.000000e+00 : f32
      %12 = vector.broadcast %cst_10 : f32 to vector<32x384xf32>
      %c0_11 = arith.constant 0 : index
      %c0_12 = arith.constant 0 : index
      %13 = vector.load %arg7[%c0_11, %c0_12] : memref<32x384xf32, #tpu.memory_space<vmem>>, vector<32x384xf32>
      tpu.vector_store %arg7[%c0_11, %c0_12], %12 {strides = array<i32>} : memref<32x384xf32, #tpu.memory_space<vmem>>, vector<32x384xf32>,
    } else {
    }
    %c0 = arith.constant 0 : index
    %c0_1 = arith.constant 0 : index
    %3 = vector.load %arg7[%c0, %c0_1] : memref<32x384xf32, #tpu.memory_space<vmem>>, vector<32x384xf32>
    %c0_2 = arith.constant 0 : index
    %c0_3 = arith.constant 0 : index
    %4 = vector.load %arg3[%c0_2, %c0_3] : memref<32x128xbf16, #tpu.memory_space<vmem>>, vector<32x128xbf16>
    %c0_4 = arith.constant 0 : index
    %c0_5 = arith.constant 0 : index
    %5 = vector.load %arg4[%c0_4, %c0_5] : memref<128x384xbf16, #tpu.memory_space<vmem>>, vector<128x384xbf16>
    %cst = arith.constant dense<0.000000e+00> : vector<32x384xf32>
    %6 = tpu.matmul %4, %5, %cst {dimension_numbers = #tpu.dot_dimension_numbers<[1], [0], [0], [1], [0, 0, 1, 1], [], []>} : vector<32x128xbf16>, vector<128x384xbf16>, vector<32x384xf32> -> vector<32x384xf32>
    %7 = arith.addf %3, %6 : vector<32x384xf32>
    %c0_6 = arith.constant 0 : index
    %c0_7 = arith.constant 0 : index
    %8 = vector.load %arg7[%c0_6, %c0_7] : memref<32x384xf32, #tpu.memory_space<vmem>>, vector<32x384xf32>
    tpu.vector_store %arg7[%c0_6, %c0_7], %7 {strides = array<i32>} : memref<32x384xf32, #tpu.memory_space<vmem>>, vector<32x384xf32>,
    %c0_i32_8 = arith.constant 0 : i32
    %9 = arith.cmpi eq, %arg2, %c0_i32_8 : i32
    %10 = arith.extui %9 : i1 to i32
    %c0_i32_9 = arith.constant 0 : i32
    %11 = arith.cmpi ne, %10, %c0_i32_9 : i32
    scf.if %11 {
      %c0_10 = arith.constant 0 : index
      %c0_11 = arith.constant 0 : index
      %12 = vector.load %arg7[%c0_10, %c0_11] : memref<32x384xf32, #tpu.memory_space<vmem>>, vector<32x384xf32>
      %c0_12 = arith.constant 0 : index
      %c0_13 = arith.constant 0 : index
      %13 = vector.load %arg5[%c0_12, %c0_13] : memref<1x384xf32, #tpu.memory_space<vmem>>, vector<1x384xf32>
      %14 = vector.broadcast %13 : vector<1x384xf32> to vector<32x384xf32>
      %15 = arith.addf %12, %14 : vector<32x384xf32>
      %16 = arith.truncf %15 : vector<32x384xf32> to vector<32x384xbf16>
      %c0_14 = arith.constant 0 : index
      %c0_15 = arith.constant 0 : index
      %17 = vector.load %arg6[%c0_14, %c0_15] : memref<32x384xbf16, #tpu.memory_space<vmem>>, vector<32x384xbf16>
      tpu.vector_store %arg6[%c0_14, %c0_15], %16 {strides = array<i32>} : memref<32x384xbf16, #tpu.memory_space<vmem>>, vector<32x384xbf16>,
    } else {
    }
    return
  }
  func.func @transform_0(%arg0: i32, %arg1: i32, %arg2: i32) -> (i32, i32) {
    %c0_i32 = arith.constant 0 : i32
    return %arg0, %arg2 : i32, i32
  }
  func.func @transform_1(%arg0: i32, %arg1: i32, %arg2: i32) -> (i32, i32) {
    %c0_i32 = arith.constant 0 : i32
    return %arg2, %arg1 : i32, i32
  }
  func.func @transform_2(%arg0: i32, %arg1: i32, %arg2: i32) -> (i32, i32) {
    %c0_i32 = arith.constant 0 : i32
    %c0_i32_0 = arith.constant 0 : i32
    return %c0_i32, %arg1 : i32, i32
  }
  func.func @transform_3(%arg0: i32, %arg1: i32, %arg2: i32) -> (i32, i32) {
    %c0_i32 = arith.constant 0 : i32
    return %arg0, %arg1 : i32, i32
  }
}

module attributes {stable_mosaic.version = 11 : i64} {
  func.func @_dense_kernel(%arg0: i32, %arg1: i32, %arg2: i32, %arg3: memref<32x128xbf16, #tpu.memory_space<vmem>>, %arg4: memref<128x256xbf16, #tpu.memory_space<vmem>>, %arg5: memref<1x256xf32, #tpu.memory_space<vmem>>, %arg6: memref<32x256xbf16, #tpu.memory_space<vmem>>, %arg7: memref<32x256xf32, #tpu.memory_space<vmem>>) attributes {dimension_semantics = [#tpu.dimension_semantics<parallel>, #tpu.dimension_semantics<parallel>, #tpu.dimension_semantics<arbitrary>], iteration_bounds = array<i64: 1, 1, 1>, scalar_prefetch = 0 : i64, scratch_operands = 1 : i64, tpu.core_type = #tpu.core_type<tc>, window_params = [{transform_indices = @transform_0, window_bounds = array<i64: 32, 128>}, {transform_indices = @transform_1, window_bounds = array<i64: 128, 256>}, {transform_indices = @transform_2, window_bounds = array<i64: 1, 256>}, {transform_indices = @transform_3, window_bounds = array<i64: 32, 256>}]} {
    %c0_i32 = arith.constant 0 : i32
    %0 = arith.cmpi eq, %arg2, %c0_i32 : i32
    %1 = arith.extui %0 : i1 to i32
    %c0_i32_0 = arith.constant 0 : i32
    %2 = arith.cmpi ne, %1, %c0_i32_0 : i32
    scf.if %2 {
      %cst_10 = arith.constant 0.000000e+00 : f32
      %12 = vector.broadcast %cst_10 : f32 to vector<32x256xf32>
      %c0_11 = arith.constant 0 : index
      %c0_12 = arith.constant 0 : index
      %13 = vector.load %arg7[%c0_11, %c0_12] : memref<32x256xf32, #tpu.memory_space<vmem>>, vector<32x256xf32>
      tpu.vector_store %arg7[%c0_11, %c0_12], %12 {strides = array<i32>} : memref<32x256xf32, #tpu.memory_space<vmem>>, vector<32x256xf32>,
    } else {
    }
    %c0 = arith.constant 0 : index
    %c0_1 = arith.constant 0 : index
    %3 = vector.load %arg7[%c0, %c0_1] : memref<32x256xf32, #tpu.memory_space<vmem>>, vector<32x256xf32>
    %c0_2 = arith.constant 0 : index
    %c0_3 = arith.constant 0 : index
    %4 = vector.load %arg3[%c0_2, %c0_3] : memref<32x128xbf16, #tpu.memory_space<vmem>>, vector<32x128xbf16>
    %c0_4 = arith.constant 0 : index
    %c0_5 = arith.constant 0 : index
    %5 = vector.load %arg4[%c0_4, %c0_5] : memref<128x256xbf16, #tpu.memory_space<vmem>>, vector<128x256xbf16>
    %cst = arith.constant dense<0.000000e+00> : vector<32x256xf32>
    %6 = tpu.matmul %4, %5, %cst {dimension_numbers = #tpu.dot_dimension_numbers<[1], [0], [0], [1], [0, 0, 1, 1], [], []>} : vector<32x128xbf16>, vector<128x256xbf16>, vector<32x256xf32> -> vector<32x256xf32>
    %7 = arith.addf %3, %6 : vector<32x256xf32>
    %c0_6 = arith.constant 0 : index
    %c0_7 = arith.constant 0 : index
    %8 = vector.load %arg7[%c0_6, %c0_7] : memref<32x256xf32, #tpu.memory_space<vmem>>, vector<32x256xf32>
    tpu.vector_store %arg7[%c0_6, %c0_7], %7 {strides = array<i32>} : memref<32x256xf32, #tpu.memory_space<vmem>>, vector<32x256xf32>,
    %c0_i32_8 = arith.constant 0 : i32
    %9 = arith.cmpi eq, %arg2, %c0_i32_8 : i32
    %10 = arith.extui %9 : i1 to i32
    %c0_i32_9 = arith.constant 0 : i32
    %11 = arith.cmpi ne, %10, %c0_i32_9 : i32
    scf.if %11 {
      %c0_10 = arith.constant 0 : index
      %c0_11 = arith.constant 0 : index
      %12 = vector.load %arg7[%c0_10, %c0_11] : memref<32x256xf32, #tpu.memory_space<vmem>>, vector<32x256xf32>
      %c0_12 = arith.constant 0 : index
      %c0_13 = arith.constant 0 : index
      %13 = vector.load %arg5[%c0_12, %c0_13] : memref<1x256xf32, #tpu.memory_space<vmem>>, vector<1x256xf32>
      %14 = vector.broadcast %13 : vector<1x256xf32> to vector<32x256xf32>
      %15 = arith.addf %12, %14 : vector<32x256xf32>
      %16 = arith.mulf %15, %15 : vector<32x256xf32>
      %17 = arith.mulf %15, %16 : vector<32x256xf32>
      %cst_14 = arith.constant 4.471500e-02 : f32
      %18 = vector.broadcast %cst_14 : f32 to vector<32x256xf32>
      %19 = arith.mulf %18, %17 : vector<32x256xf32>
      %20 = arith.addf %15, %19 : vector<32x256xf32>
      %cst_15 = arith.constant 0.797884583 : f32
      %21 = vector.broadcast %cst_15 : f32 to vector<32x256xf32>
      %22 = arith.mulf %21, %20 : vector<32x256xf32>
      %23 = math.tanh %22 : vector<32x256xf32>
      %cst_16 = arith.constant 1.000000e+00 : f32
      %24 = vector.broadcast %cst_16 : f32 to vector<32x256xf32>
      %25 = arith.addf %24, %23 : vector<32x256xf32>
      %cst_17 = arith.constant 5.000000e-01 : f32
      %26 = vector.broadcast %cst_17 : f32 to vector<32x256xf32>
      %27 = arith.mulf %26, %25 : vector<32x256xf32>
      %28 = arith.mulf %15, %27 : vector<32x256xf32>
      %29 = arith.truncf %28 : vector<32x256xf32> to vector<32x256xbf16>
      %c0_18 = arith.constant 0 : index
      %c0_19 = arith.constant 0 : index
      %30 = vector.load %arg6[%c0_18, %c0_19] : memref<32x256xbf16, #tpu.memory_space<vmem>>, vector<32x256xbf16>
      tpu.vector_store %arg6[%c0_18, %c0_19], %29 {strides = array<i32>} : memref<32x256xbf16, #tpu.memory_space<vmem>>, vector<32x256xbf16>,
    } else {
    }
    return
  }
  func.func @transform_0(%arg0: i32, %arg1: i32, %arg2: i32) -> (i32, i32) {
    %c0_i32 = arith.constant 0 : i32
    return %arg0, %arg2 : i32, i32
  }
  func.func @transform_1(%arg0: i32, %arg1: i32, %arg2: i32) -> (i32, i32) {
    %c0_i32 = arith.constant 0 : i32
    return %arg2, %arg1 : i32, i32
  }
  func.func @transform_2(%arg0: i32, %arg1: i32, %arg2: i32) -> (i32, i32) {
    %c0_i32 = arith.constant 0 : i32
    %c0_i32_0 = arith.constant 0 : i32
    return %c0_i32, %arg1 : i32, i32
  }
  func.func @transform_3(%arg0: i32, %arg1: i32, %arg2: i32) -> (i32, i32) {
    %c0_i32 = arith.constant 0 : i32
    return %arg0, %arg1 : i32, i32
  }
}

module attributes {stable_mosaic.version = 11 : i64} {
  func.func @_dense_kernel(%arg0: i32, %arg1: i32, %arg2: i32, %arg3: memref<32x128xbf16, #tpu.memory_space<vmem>>, %arg4: memref<128x128xbf16, #tpu.memory_space<vmem>>, %arg5: memref<1x128xf32, #tpu.memory_space<vmem>>, %arg6: memref<32x128xbf16, #tpu.memory_space<vmem>>, %arg7: memref<1x128xf32, #tpu.memory_space<vmem>>, %arg8: memref<1x128xf32, #tpu.memory_space<vmem>>, %arg9: memref<32x128xbf16, #tpu.memory_space<vmem>>, %arg10: memref<32x128xf32, #tpu.memory_space<vmem>>) attributes {dimension_semantics = [#tpu.dimension_semantics<parallel>, #tpu.dimension_semantics<parallel>, #tpu.dimension_semantics<arbitrary>], iteration_bounds = array<i64: 1, 1, 1>, scalar_prefetch = 0 : i64, scratch_operands = 1 : i64, tpu.core_type = #tpu.core_type<tc>, window_params = [{transform_indices = @transform_0, window_bounds = array<i64: 32, 128>}, {transform_indices = @transform_1, window_bounds = array<i64: 128, 128>}, {transform_indices = @transform_2, window_bounds = array<i64: 1, 128>}, {transform_indices = @transform_3, window_bounds = array<i64: 32, 128>}, {transform_indices = @transform_4, window_bounds = array<i64: 1, 128>}, {transform_indices = @transform_5, window_bounds = array<i64: 1, 128>}, {transform_indices = @transform_6, window_bounds = array<i64: 32, 128>}]} {
    %c0_i32 = arith.constant 0 : i32
    %0 = arith.cmpi eq, %arg2, %c0_i32 : i32
    %1 = arith.extui %0 : i1 to i32
    %c0_i32_0 = arith.constant 0 : i32
    %2 = arith.cmpi ne, %1, %c0_i32_0 : i32
    scf.if %2 {
      %cst_10 = arith.constant 0.000000e+00 : f32
      %12 = vector.broadcast %cst_10 : f32 to vector<32x128xf32>
      %c0_11 = arith.constant 0 : index
      %c0_12 = arith.constant 0 : index
      %13 = vector.load %arg10[%c0_11, %c0_12] : memref<32x128xf32, #tpu.memory_space<vmem>>, vector<32x128xf32>
      tpu.vector_store %arg10[%c0_11, %c0_12], %12 {strides = array<i32>} : memref<32x128xf32, #tpu.memory_space<vmem>>, vector<32x128xf32>,
    } else {
    }
    %c0 = arith.constant 0 : index
    %c0_1 = arith.constant 0 : index
    %3 = vector.load %arg10[%c0, %c0_1] : memref<32x128xf32, #tpu.memory_space<vmem>>, vector<32x128xf32>
    %c0_2 = arith.constant 0 : index
    %c0_3 = arith.constant 0 : index
    %4 = vector.load %arg3[%c0_2, %c0_3] : memref<32x128xbf16, #tpu.memory_space<vmem>>, vector<32x128xbf16>
    %c0_4 = arith.constant 0 : index
    %c0_5 = arith.constant 0 : index
    %5 = vector.load %arg4[%c0_4, %c0_5] : memref<128x128xbf16, #tpu.memory_space<vmem>>, vector<128x128xbf16>
    %cst = arith.constant dense<0.000000e+00> : vector<32x128xf32>
    %6 = tpu.matmul %4, %5, %cst {dimension_numbers = #tpu.dot_dimension_numbers<[1], [0], [0], [1], [0, 0, 1, 1], [], []>} : vector<32x128xbf16>, vector<128x128xbf16>, vector<32x128xf32> -> vector<32x128xf32>
    %7 = arith.addf %3, %6 : vector<32x128xf32>
    %c0_6 = arith.constant 0 : index
    %c0_7 = arith.constant 0 : index
    %8 = vector.load %arg10[%c0_6, %c0_7] : memref<32x128xf32, #tpu.memory_space<vmem>>, vector<32x128xf32>
    tpu.vector_store %arg10[%c0_6, %c0_7], %7 {strides = array<i32>} : memref<32x128xf32, #tpu.memory_space<vmem>>, vector<32x128xf32>,
    %c0_i32_8 = arith.constant 0 : i32
    %9 = arith.cmpi eq, %arg2, %c0_i32_8 : i32
    %10 = arith.extui %9 : i1 to i32
    %c0_i32_9 = arith.constant 0 : i32
    %11 = arith.cmpi ne, %10, %c0_i32_9 : i32
    scf.if %11 {
      %c0_10 = arith.constant 0 : index
      %c0_11 = arith.constant 0 : index
      %12 = vector.load %arg10[%c0_10, %c0_11] : memref<32x128xf32, #tpu.memory_space<vmem>>, vector<32x128xf32>
      %c0_12 = arith.constant 0 : index
      %c0_13 = arith.constant 0 : index
      %13 = vector.load %arg5[%c0_12, %c0_13] : memref<1x128xf32, #tpu.memory_space<vmem>>, vector<1x128xf32>
      %14 = vector.broadcast %13 : vector<1x128xf32> to vector<32x128xf32>
      %15 = arith.addf %12, %14 : vector<32x128xf32>
      %c0_14 = arith.constant 0 : index
      %c0_15 = arith.constant 0 : index
      %16 = vector.load %arg6[%c0_14, %c0_15] : memref<32x128xbf16, #tpu.memory_space<vmem>>, vector<32x128xbf16>
      %17 = arith.extf %16 : vector<32x128xbf16> to vector<32x128xf32>
      %18 = arith.addf %15, %17 : vector<32x128xf32>
      %cst_16 = arith.constant dense<0.000000e+00> : vector<32xf32>
      %19 = vector.multi_reduction <add>, %18, %cst_16 [1] : vector<32x128xf32> to vector<32xf32>
      %20 = vector.shape_cast %19 : vector<32xf32> to vector<32x1xf32>
      %cst_17 = arith.constant 1.280000e+02 : f32
      %21 = vector.broadcast %cst_17 : f32 to vector<32x1xf32>
      %22 = arith.divf %20, %21 : vector<32x1xf32>
      %23 = vector.broadcast %22 : vector<32x1xf32> to vector<32x128xf32>
      %24 = arith.subf %18, %23 : vector<32x128xf32>
      %25 = vector.broadcast %22 : vector<32x1xf32> to vector<32x128xf32>
      %26 = arith.subf %18, %25 : vector<32x128xf32>
      %27 = arith.mulf %24, %26 : vector<32x128xf32>
      %cst_18 = arith.constant dense<0.000000e+00> : vector<32xf32>
      %28 = vector.multi_reduction <add>, %27, %cst_18 [1] : vector<32x128xf32> to vector<32xf32>
      %29 = vector.shape_cast %28 : vector<32xf32> to vector<32x1xf32>
      %cst_19 = arith.constant 1.280000e+02 : f32
      %30 = vector.broadcast %cst_19 : f32 to vector<32x1xf32>
      %31 = arith.divf %29, %30 : vector<32x1xf32>
      %32 = vector.broadcast %22 : vector<32x1xf32> to vector<32x128xf32>
      %33 = arith.subf %18, %32 : vector<32x128xf32>
      %cst_20 = arith.constant 9.99999996E-13 : f32
      %34 = vector.broadcast %cst_20 : f32 to vector<32x1xf32>
      %35 = arith.addf %31, %34 : vector<32x1xf32>
      %36 = math.rsqrt %35 : vector<32x1xf32>
      %37 = vector.broadcast %36 : vector<32x1xf32> to vector<32x128xf32>
      %38 = arith.mulf %33, %37 : vector<32x128xf32>
      %c0_21 = arith.constant 0 : index
      %c0_22 = arith.constant 0 : index
      %39 = vector.load %arg7[%c0_21, %c0_22] : memref<1x128xf32, #tpu.memory_space<vmem>>, vector<1x128xf32>
      %40 = vector.broadcast %39 : vector<1x128xf32> to vector<32x128xf32>
      %41 = arith.mulf %38, %40 : vector<32x128xf32>
      %c0_23 = arith.constant 0 : index
      %c0_24 = arith.constant 0 : index
      %42 = vector.load %arg8[%c0_23, %c0_24] : memref<1x128xf32, #tpu.memory_space<vmem>>, vector<1x128xf32>
      %43 = vector.broadcast %42 : vector<1x128xf32> to vector<32x128xf32>
      %44 = arith.addf %41, %43 : vector<32x128xf32>
      %45 = arith.truncf %44 : vector<32x128xf32> to vector<32x128xbf16>
      %c0_25 = arith.constant 0 : index
      %c0_26 = arith.constant 0 : index
      %46 = vector.load %arg9[%c0_25, %c0_26] : memref<32x128xbf16, #tpu.memory_space<vmem>>, vector<32x128xbf16>
      tpu.vector_store %arg9[%c0_25, %c0_26], %45 {strides = array<i32>} : memref<32x128xbf16, #tpu.memory_space<vmem>>, vector<32x128xbf16>,
    } else {
    }
    return
  }
  func.func @transform_0(%arg0: i32, %arg1: i32, %arg2: i32) -> (i32, i32) {
    %c0_i32 = arith.constant 0 : i32
    return %arg0, %arg2 : i32, i32
  }
  func.func @transform_1(%arg0: i32, %arg1: i32, %arg2: i32) -> (i32, i32) {
    %c0_i32 = arith.constant 0 : i32
    return %arg2, %arg1 : i32, i32
  }
  func.func @transform_2(%arg0: i32, %arg1: i32, %arg2: i32) -> (i32, i32) {
    %c0_i32 = arith.constant 0 : i32
    %c0_i32_0 = arith.constant 0 : i32
    return %c0_i32, %arg1 : i32, i32
  }
  func.func @transform_3(%arg0: i32, %arg1: i32, %arg2: i32) -> (i32, i32) {
    %c0_i32 = arith.constant 0 : i32
    return %arg0, %arg1 : i32, i32
  }
  func.func @transform_4(%arg0: i32, %arg1: i32, %arg2: i32) -> (i32, i32) {
    %c0_i32 = arith.constant 0 : i32
    %c0_i32_0 = arith.constant 0 : i32
    return %c0_i32, %arg1 : i32, i32
  }
  func.func @transform_5(%arg0: i32, %arg1: i32, %arg2: i32) -> (i32, i32) {
    %c0_i32 = arith.constant 0 : i32
    %c0_i32_0 = arith.constant 0 : i32
    return %c0_i32, %arg1 : i32, i32
  }
  func.func @transform_6(%arg0: i32, %arg1: i32, %arg2: i32) -> (i32, i32) {
    %c0_i32 = arith.constant 0 : i32
    return %arg0, %arg1 : i32, i32
  }
}

module attributes {stable_mosaic.version = 11 : i64} {
  func.func @_attention_kernel(%arg0: i32, %arg1: memref<1x2x16x64xbf16, #tpu.memory_space<vmem>>, %arg2: memref<1x2x16x64xbf16, #tpu.memory_space<vmem>>, %arg3: memref<1x2x16x64xbf16, #tpu.memory_space<vmem>>, %arg4: memref<1x1x16xf32, #tpu.memory_space<vmem>>, %arg5: memref<1x16x128xbf16, #tpu.memory_space<vmem>>) attributes {dimension_semantics = [#tpu.dimension_semantics<parallel>], iteration_bounds = array<i64: 2>, scalar_prefetch = 0 : i64, scratch_operands = 0 : i64, tpu.core_type = #tpu.core_type<tc>, window_params = [{transform_indices = @transform_0, window_bounds = array<i64: 1, 2, 16, 64>}, {transform_indices = @transform_1, window_bounds = array<i64: 1, 2, 16, 64>}, {transform_indices = @transform_2, window_bounds = array<i64: 1, 2, 16, 64>}, {transform_indices = @transform_3, window_bounds = array<i64: 1, 1, 16>}, {transform_indices = @transform_4, window_bounds = array<i64: 1, 16, 128>}]} {
    %c0 = arith.constant 0 : index
    %c0_0 = arith.constant 0 : index
    %c0_1 = arith.constant 0 : index
    %0 = vector.load %arg4[%c0, %c0_0, %c0_1] : memref<1x1x16xf32, #tpu.memory_space<vmem>>, vector<1x1x16xf32>
    %1 = vector.shape_cast %0 : vector<1x1x16xf32> to vector<1x16xf32>
    %c0_2 = arith.constant 0 : index
    %c0_3 = arith.constant 0 : index
    %c0_4 = arith.constant 0 : index
    %c0_5 = arith.constant 0 : index
    %2 = vector.load %arg1[%c0_2, %c0_3, %c0_4, %c0_5] : memref<1x2x16x64xbf16, #tpu.memory_space<vmem>>, vector<1x1x16x64xbf16>
    %3 = vector.shape_cast %2 : vector<1x1x16x64xbf16> to vector<16x64xbf16>
    %cst = arith.constant 1.250000e-01 : bf16
    %4 = vector.broadcast %cst : bf16 to vector<16x64xbf16>
    %5 = arith.mulf %3, %4 : vector<16x64xbf16>
    %c0_6 = arith.constant 0 : index
    %c0_7 = arith.constant 0 : index
    %c0_8 = arith.constant 0 : index
    %c0_9 = arith.constant 0 : index
    %6 = vector.load %arg2[%c0_6, %c0_7, %c0_8, %c0_9] : memref<1x2x16x64xbf16, #tpu.memory_space<vmem>>, vector<1x1x16x64xbf16>
    %7 = vector.shape_cast %6 : vector<1x1x16x64xbf16> to vector<16x64xbf16>
    %c0_10 = arith.constant 0 : index
    %c0_11 = arith.constant 0 : index
    %c0_12 = arith.constant 0 : index
    %c0_13 = arith.constant 0 : index
    %8 = vector.load %arg3[%c0_10, %c0_11, %c0_12, %c0_13] : memref<1x2x16x64xbf16, #tpu.memory_space<vmem>>, vector<1x1x16x64xbf16>
    %9 = vector.shape_cast %8 : vector<1x1x16x64xbf16> to vector<16x64xbf16>
    %cst_14 = arith.constant dense<0.000000e+00> : vector<16x16xf32>
    %10 = tpu.matmul %5, %7, %cst_14 {dimension_numbers = #tpu.dot_dimension_numbers<[1], [1], [0], [0], [0, 0, 1, 0], [], []>} : vector<16x64xbf16>, vector<16x64xbf16>, vector<16x16xf32> -> vector<16x16xf32>
    %11 = vector.broadcast %1 : vector<1x16xf32> to vector<16x16xf32>
    %12 = arith.addf %10, %11 : vector<16x16xf32>
    %cst_15 = arith.constant dense<0xFF800000> : vector<16xf32>
    %13 = vector.multi_reduction <maximumf>, %12, %cst_15 [1] : vector<16x16xf32> to vector<16xf32>
    %14 = vector.shape_cast %13 : vector<16xf32> to vector<16x1xf32>
    %15 = vector.broadcast %14 : vector<16x1xf32> to vector<16x16xf32>
    %16 = arith.subf %12, %15 : vector<16x16xf32>
    %17 = math.exp %16 : vector<16x16xf32>
    %cst_16 = arith.constant dense<0.000000e+00> : vector<16xf32>
    %18 = vector.multi_reduction <add>, %17, %cst_16 [1] : vector<16x16xf32> to vector<16xf32>
    %19 = vector.shape_cast %18 : vector<16xf32> to vector<16x1xf32>
    %20 = tpu.reciprocal %19 {approx = true} : vector<16x1xf32> -> vector<16x1xf32>
    %21 = vector.broadcast %20 : vector<16x1xf32> to vector<16x16xf32>
    %22 = arith.mulf %17, %21 : vector<16x16xf32>
    %23 = arith.truncf %22 : vector<16x16xf32> to vector<16x16xbf16>
    %cst_17 = arith.constant dense<0.000000e+00> : vector<16x64xf32>
    %24 = tpu.matmul %23, %9, %cst_17 {dimension_numbers = #tpu.dot_dimension_numbers<[1], [0], [0], [1], [0, 0, 1, 1], [], []>} : vector<16x16xbf16>, vector<16x64xbf16>, vector<16x64xf32> -> vector<16x64xf32>
    %25 = arith.truncf %24 : vector<16x64xf32> to vector<16x64xbf16>
    %c0_18 = arith.constant 0 : index
    %c1 = arith.constant 1 : index
    %c0_19 = arith.constant 0 : index
    %c0_20 = arith.constant 0 : index
    %26 = vector.load %arg1[%c0_18, %c1, %c0_19, %c0_20] : memref<1x2x16x64xbf16, #tpu.memory_space<vmem>>, vector<1x1x16x64xbf16>
    %27 = vector.shape_cast %26 : vector<1x1x16x64xbf16> to vector<16x64xbf16>
    %cst_21 = arith.constant 1.250000e-01 : bf16
    %28 = vector.broadcast %cst_21 : bf16 to vector<16x64xbf16>
    %29 = arith.mulf %27, %28 : vector<16x64xbf16>
    %c0_22 = arith.constant 0 : index
    %c1_23 = arith.constant 1 : index
    %c0_24 = arith.constant 0 : index
    %c0_25 = arith.constant 0 : index
    %30 = vector.load %arg2[%c0_22, %c1_23, %c0_24, %c0_25] : memref<1x2x16x64xbf16, #tpu.memory_space<vmem>>, vector<1x1x16x64xbf16>
    %31 = vector.shape_cast %30 : vector<1x1x16x64xbf16> to vector<16x64xbf16>
    %c0_26 = arith.constant 0 : index
    %c1_27 = arith.constant 1 : index
    %c0_28 = arith.constant 0 : index
    %c0_29 = arith.constant 0 : index
    %32 = vector.load %arg3[%c0_26, %c1_27, %c0_28, %c0_29] : memref<1x2x16x64xbf16, #tpu.memory_space<vmem>>, vector<1x1x16x64xbf16>
    %33 = vector.shape_cast %32 : vector<1x1x16x64xbf16> to vector<16x64xbf16>
    %cst_30 = arith.constant dense<0.000000e+00> : vector<16x16xf32>
    %34 = tpu.matmul %29, %31, %cst_30 {dimension_numbers = #tpu.dot_dimension_numbers<[1], [1], [0], [0], [0, 0, 1, 0], [], []>} : vector<16x64xbf16>, vector<16x64xbf16>, vector<16x16xf32> -> vector<16x16xf32>
    %35 = vector.broadcast %1 : vector<1x16xf32> to vector<16x16xf32>
    %36 = arith.addf %34, %35 : vector<16x16xf32>
    %cst_31 = arith.constant dense<0xFF800000> : vector<16xf32>
    %37 = vector.multi_reduction <maximumf>, %36, %cst_31 [1] : vector<16x16xf32> to vector<16xf32>
    %38 = vector.shape_cast %37 : vector<16xf32> to vector<16x1xf32>
    %39 = vector.broadcast %38 : vector<16x1xf32> to vector<16x16xf32>
    %40 = arith.subf %36, %39 : vector<16x16xf32>
    %41 = math.exp %40 : vector<16x16xf32>
    %cst_32 = arith.constant dense<0.000000e+00> : vector<16xf32>
    %42 = vector.multi_reduction <add>, %41, %cst_32 [1] : vector<16x16xf32> to vector<16xf32>
    %43 = vector.shape_cast %42 : vector<16xf32> to vector<16x1xf32>
    %44 = tpu.reciprocal %43 {approx = true} : vector<16x1xf32> -> vector<16x1xf32>
    %45 = vector.broadcast %44 : vector<16x1xf32> to vector<16x16xf32>
    %46 = arith.mulf %41, %45 : vector<16x16xf32>
    %47 = arith.truncf %46 : vector<16x16xf32> to vector<16x16xbf16>
    %cst_33 = arith.constant dense<0.000000e+00> : vector<16x64xf32>
    %48 = tpu.matmul %47, %33, %cst_33 {dimension_numbers = #tpu.dot_dimension_numbers<[1], [0], [0], [1], [0, 0, 1, 1], [], []>} : vector<16x16xbf16>, vector<16x64xbf16>, vector<16x64xf32> -> vector<16x64xf32>
    %49 = arith.truncf %48 : vector<16x64xf32> to vector<16x64xbf16>
    %50 = tpu.concatenate %25, %49 in 1 : vector<16x64xbf16>, vector<16x64xbf16> -> vector<16x128xbf16>
    %c0_34 = arith.constant 0 : index
    %c0_35 = arith.constant 0 : index
    %c0_36 = arith.constant 0 : index
    %51 = vector.load %arg5[%c0_34, %c0_35, %c0_36] : memref<1x16x128xbf16, #tpu.memory_space<vmem>>, vector<1x16x128xbf16>
    %52 = vector.shape_cast %51 : vector<1x16x128xbf16> to vector<16x128xbf16>
    %53 = vector.shape_cast %50 : vector<16x128xbf16> to vector<1x16x128xbf16>
    tpu.vector_store %arg5[%c0_34, %c0_35, %c0_36], %53 {strides = array<i32>} : memref<1x16x128xbf16, #tpu.memory_space<vmem>>, vector<1x16x128xbf16>,
    return
  }
  func.func @transform_0(%arg0: i32) -> (i32, i32, i32, i32) {
    %c0_i32 = arith.constant 0 : i32
    %c0_i32_0 = arith.constant 0 : i32
    %c0_i32_1 = arith.constant 0 : i32
    %c0_i32_2 = arith.constant 0 : i32
    return %arg0, %c0_i32, %c0_i32_0, %c0_i32_1 : i32, i32, i32, i32
  }
  func.func @transform_1(%arg0: i32) -> (i32, i32, i32, i32) {
    %c0_i32 = arith.constant 0 : i32
    %c0_i32_0 = arith.constant 0 : i32
    %c0_i32_1 = arith.constant 0 : i32
    %c0_i32_2 = arith.constant 0 : i32
    return %arg0, %c0_i32, %c0_i32_0, %c0_i32_1 : i32, i32, i32, i32
  }
  func.func @transform_2(%arg0: i32) -> (i32, i32, i32, i32) {
    %c0_i32 = arith.constant 0 : i32
    %c0_i32_0 = arith.constant 0 : i32
    %c0_i32_1 = arith.constant 0 : i32
    %c0_i32_2 = arith.constant 0 : i32
    return %arg0, %c0_i32, %c0_i32_0, %c0_i32_1 : i32, i32, i32, i32
  }
  func.func @transform_3(%arg0: i32) -> (i32, i32, i32) {
    %c0_i32 = arith.constant 0 : i32
    %c0_i32_0 = arith.constant 0 : i32
    %c0_i32_1 = arith.constant 0 : i32
    return %arg0, %c0_i32, %c0_i32_0 : i32, i32, i32
  }
  func.func @transform_4(%arg0: i32) -> (i32, i32, i32) {
    %c0_i32 = arith.constant 0 : i32
    %c0_i32_0 = arith.constant 0 : i32
    %c0_i32_1 = arith.constant 0 : i32
    return %arg0, %c0_i32, %c0_i32_0 : i32, i32, i32
  }
}

module attributes {stable_mosaic.version = 11 : i64} {
  func.func @_dense_kernel(%arg0: i32, %arg1: i32, %arg2: i32, %arg3: memref<32x256xbf16, #tpu.memory_space<vmem>>, %arg4: memref<256x128xbf16, #tpu.memory_space<vmem>>, %arg5: memref<1x128xf32, #tpu.memory_space<vmem>>, %arg6: memref<32x128xbf16, #tpu.memory_space<vmem>>, %arg7: memref<1x128xf32, #tpu.memory_space<vmem>>, %arg8: memref<1x128xf32, #tpu.memory_space<vmem>>, %arg9: memref<32x128xbf16, #tpu.memory_space<vmem>>, %arg10: memref<32x128xf32, #tpu.memory_space<vmem>>) attributes {dimension_semantics = [#tpu.dimension_semantics<parallel>, #tpu.dimension_semantics<parallel>, #tpu.dimension_semantics<arbitrary>], iteration_bounds = array<i64: 1, 1, 1>, scalar_prefetch = 0 : i64, scratch_operands = 1 : i64, tpu.core_type = #tpu.core_type<tc>, window_params = [{transform_indices = @transform_0, window_bounds = array<i64: 32, 256>}, {transform_indices = @transform_1, window_bounds = array<i64: 256, 128>}, {transform_indices = @transform_2, window_bounds = array<i64: 1, 128>}, {transform_indices = @transform_3, window_bounds = array<i64: 32, 128>}, {transform_indices = @transform_4, window_bounds = array<i64: 1, 128>}, {transform_indices = @transform_5, window_bounds = array<i64: 1, 128>}, {transform_indices = @transform_6, window_bounds = array<i64: 32, 128>}]} {
    %c0_i32 = arith.constant 0 : i32
    %0 = arith.cmpi eq, %arg2, %c0_i32 : i32
    %1 = arith.extui %0 : i1 to i32
    %c0_i32_0 = arith.constant 0 : i32
    %2 = arith.cmpi ne, %1, %c0_i32_0 : i32
    scf.if %2 {
      %cst_10 = arith.constant 0.000000e+00 : f32
      %12 = vector.broadcast %cst_10 : f32 to vector<32x128xf32>
      %c0_11 = arith.constant 0 : index
      %c0_12 = arith.constant 0 : index
      %13 = vector.load %arg10[%c0_11, %c0_12] : memref<32x128xf32, #tpu.memory_space<vmem>>, vector<32x128xf32>
      tpu.vector_store %arg10[%c0_11, %c0_12], %12 {strides = array<i32>} : memref<32x128xf32, #tpu.memory_space<vmem>>, vector<32x128xf32>,
    } else {
    }
    %c0 = arith.constant 0 : index
    %c0_1 = arith.constant 0 : index
    %3 = vector.load %arg10[%c0, %c0_1] : memref<32x128xf32, #tpu.memory_space<vmem>>, vector<32x128xf32>
    %c0_2 = arith.constant 0 : index
    %c0_3 = arith.constant 0 : index
    %4 = vector.load %arg3[%c0_2, %c0_3] : memref<32x256xbf16, #tpu.memory_space<vmem>>, vector<32x256xbf16>
    %c0_4 = arith.constant 0 : index
    %c0_5 = arith.constant 0 : index
    %5 = vector.load %arg4[%c0_4, %c0_5] : memref<256x128xbf16, #tpu.memory_space<vmem>>, vector<256x128xbf16>
    %cst = arith.constant dense<0.000000e+00> : vector<32x128xf32>
    %6 = tpu.matmul %4, %5, %cst {dimension_numbers = #tpu.dot_dimension_numbers<[1], [0], [0], [1], [0, 0, 1, 1], [], []>} : vector<32x256xbf16>, vector<256x128xbf16>, vector<32x128xf32> -> vector<32x128xf32>
    %7 = arith.addf %3, %6 : vector<32x128xf32>
    %c0_6 = arith.constant 0 : index
    %c0_7 = arith.constant 0 : index
    %8 = vector.load %arg10[%c0_6, %c0_7] : memref<32x128xf32, #tpu.memory_space<vmem>>, vector<32x128xf32>
    tpu.vector_store %arg10[%c0_6, %c0_7], %7 {strides = array<i32>} : memref<32x128xf32, #tpu.memory_space<vmem>>, vector<32x128xf32>,
    %c0_i32_8 = arith.constant 0 : i32
    %9 = arith.cmpi eq, %arg2, %c0_i32_8 : i32
    %10 = arith.extui %9 : i1 to i32
    %c0_i32_9 = arith.constant 0 : i32
    %11 = arith.cmpi ne, %10, %c0_i32_9 : i32
    scf.if %11 {
      %c0_10 = arith.constant 0 : index
      %c0_11 = arith.constant 0 : index
      %12 = vector.load %arg10[%c0_10, %c0_11] : memref<32x128xf32, #tpu.memory_space<vmem>>, vector<32x128xf32>
      %c0_12 = arith.constant 0 : index
      %c0_13 = arith.constant 0 : index
      %13 = vector.load %arg5[%c0_12, %c0_13] : memref<1x128xf32, #tpu.memory_space<vmem>>, vector<1x128xf32>
      %14 = vector.broadcast %13 : vector<1x128xf32> to vector<32x128xf32>
      %15 = arith.addf %12, %14 : vector<32x128xf32>
      %c0_14 = arith.constant 0 : index
      %c0_15 = arith.constant 0 : index
      %16 = vector.load %arg6[%c0_14, %c0_15] : memref<32x128xbf16, #tpu.memory_space<vmem>>, vector<32x128xbf16>
      %17 = arith.extf %16 : vector<32x128xbf16> to vector<32x128xf32>
      %18 = arith.addf %15, %17 : vector<32x128xf32>
      %cst_16 = arith.constant dense<0.000000e+00> : vector<32xf32>
      %19 = vector.multi_reduction <add>, %18, %cst_16 [1] : vector<32x128xf32> to vector<32xf32>
      %20 = vector.shape_cast %19 : vector<32xf32> to vector<32x1xf32>
      %cst_17 = arith.constant 1.280000e+02 : f32
      %21 = vector.broadcast %cst_17 : f32 to vector<32x1xf32>
      %22 = arith.divf %20, %21 : vector<32x1xf32>
      %23 = vector.broadcast %22 : vector<32x1xf32> to vector<32x128xf32>
      %24 = arith.subf %18, %23 : vector<32x128xf32>
      %25 = vector.broadcast %22 : vector<32x1xf32> to vector<32x128xf32>
      %26 = arith.subf %18, %25 : vector<32x128xf32>
      %27 = arith.mulf %24, %26 : vector<32x128xf32>
      %cst_18 = arith.constant dense<0.000000e+00> : vector<32xf32>
      %28 = vector.multi_reduction <add>, %27, %cst_18 [1] : vector<32x128xf32> to vector<32xf32>
      %29 = vector.shape_cast %28 : vector<32xf32> to vector<32x1xf32>
      %cst_19 = arith.constant 1.280000e+02 : f32
      %30 = vector.broadcast %cst_19 : f32 to vector<32x1xf32>
      %31 = arith.divf %29, %30 : vector<32x1xf32>
      %32 = vector.broadcast %22 : vector<32x1xf32> to vector<32x128xf32>
      %33 = arith.subf %18, %32 : vector<32x128xf32>
      %cst_20 = arith.constant 9.99999996E-13 : f32
      %34 = vector.broadcast %cst_20 : f32 to vector<32x1xf32>
      %35 = arith.addf %31, %34 : vector<32x1xf32>
      %36 = math.rsqrt %35 : vector<32x1xf32>
      %37 = vector.broadcast %36 : vector<32x1xf32> to vector<32x128xf32>
      %38 = arith.mulf %33, %37 : vector<32x128xf32>
      %c0_21 = arith.constant 0 : index
      %c0_22 = arith.constant 0 : index
      %39 = vector.load %arg7[%c0_21, %c0_22] : memref<1x128xf32, #tpu.memory_space<vmem>>, vector<1x128xf32>
      %40 = vector.broadcast %39 : vector<1x128xf32> to vector<32x128xf32>
      %41 = arith.mulf %38, %40 : vector<32x128xf32>
      %c0_23 = arith.constant 0 : index
      %c0_24 = arith.constant 0 : index
      %42 = vector.load %arg8[%c0_23, %c0_24] : memref<1x128xf32, #tpu.memory_space<vmem>>, vector<1x128xf32>
      %43 = vector.broadcast %42 : vector<1x128xf32> to vector<32x128xf32>
      %44 = arith.addf %41, %43 : vector<32x128xf32>
      %45 = arith.truncf %44 : vector<32x128xf32> to vector<32x128xbf16>
      %c0_25 = arith.constant 0 : index
      %c0_26 = arith.constant 0 : index
      %46 = vector.load %arg9[%c0_25, %c0_26] : memref<32x128xbf16, #tpu.memory_space<vmem>>, vector<32x128xbf16>
      tpu.vector_store %arg9[%c0_25, %c0_26], %45 {strides = array<i32>} : memref<32x128xbf16, #tpu.memory_space<vmem>>, vector<32x128xbf16>,
    } else {
    }
    return
  }
  func.func @transform_0(%arg0: i32, %arg1: i32, %arg2: i32) -> (i32, i32) {
    %c0_i32 = arith.constant 0 : i32
    return %arg0, %arg2 : i32, i32
  }
  func.func @transform_1(%arg0: i32, %arg1: i32, %arg2: i32) -> (i32, i32) {
    %c0_i32 = arith.constant 0 : i32
    return %arg2, %arg1 : i32, i32
  }
  func.func @transform_2(%arg0: i32, %arg1: i32, %arg2: i32) -> (i32, i32) {
    %c0_i32 = arith.constant 0 : i32
    %c0_i32_0 = arith.constant 0 : i32
    return %c0_i32, %arg1 : i32, i32
  }
  func.func @transform_3(%arg0: i32, %arg1: i32, %arg2: i32) -> (i32, i32) {
    %c0_i32 = arith.constant 0 : i32
    return %arg0, %arg1 : i32, i32
  }
  func.func @transform_4(%arg0: i32, %arg1: i32, %arg2: i32) -> (i32, i32) {
    %c0_i32 = arith.constant 0 : i32
    %c0_i32_0 = arith.constant 0 : i32
    return %c0_i32, %arg1 : i32, i32
  }
  func.func @transform_5(%arg0: i32, %arg1: i32, %arg2: i32) -> (i32, i32) {
    %c0_i32 = arith.constant 0 : i32
    %c0_i32_0 = arith.constant 0 : i32
    return %c0_i32, %arg1 : i32, i32
  }
  func.func @transform_6(%arg0: i32, %arg1: i32, %arg2: i32) -> (i32, i32) {
    %c0_i32 = arith.constant 0 : i32
    return %arg0, %arg1 : i32, i32
  }
}

module attributes {stable_mosaic.version = 11 : i64} {
  func.func @_dense_kernel(%arg0: i32, %arg1: i32, %arg2: i32, %arg3: memref<32x128xbf16, #tpu.memory_space<vmem>>, %arg4: memref<128x256xbf16, #tpu.memory_space<vmem>>, %arg5: memref<1x256xf32, #tpu.memory_space<vmem>>, %arg6: memref<1x256xf32, #tpu.memory_space<vmem>>, %arg7: memref<1x256xf32, #tpu.memory_space<vmem>>, %arg8: memref<32x256xbf16, #tpu.memory_space<vmem>>, %arg9: memref<32x256xf32, #tpu.memory_space<vmem>>) attributes {dimension_semantics = [#tpu.dimension_semantics<parallel>, #tpu.dimension_semantics<parallel>, #tpu.dimension_semantics<arbitrary>], iteration_bounds = array<i64: 1, 1, 1>, scalar_prefetch = 0 : i64, scratch_operands = 1 : i64, tpu.core_type = #tpu.core_type<tc>, window_params = [{transform_indices = @transform_0, window_bounds = array<i64: 32, 128>}, {transform_indices = @transform_1, window_bounds = array<i64: 128, 256>}, {transform_indices = @transform_2, window_bounds = array<i64: 1, 256>}, {transform_indices = @transform_3, window_bounds = array<i64: 1, 256>}, {transform_indices = @transform_4, window_bounds = array<i64: 1, 256>}, {transform_indices = @transform_5, window_bounds = array<i64: 32, 256>}]} {
    %c0_i32 = arith.constant 0 : i32
    %0 = arith.cmpi eq, %arg2, %c0_i32 : i32
    %1 = arith.extui %0 : i1 to i32
    %c0_i32_0 = arith.constant 0 : i32
    %2 = arith.cmpi ne, %1, %c0_i32_0 : i32
    scf.if %2 {
      %cst_10 = arith.constant 0.000000e+00 : f32
      %12 = vector.broadcast %cst_10 : f32 to vector<32x256xf32>
      %c0_11 = arith.constant 0 : index
      %c0_12 = arith.constant 0 : index
      %13 = vector.load %arg9[%c0_11, %c0_12] : memref<32x256xf32, #tpu.memory_space<vmem>>, vector<32x256xf32>
      tpu.vector_store %arg9[%c0_11, %c0_12], %12 {strides = array<i32>} : memref<32x256xf32, #tpu.memory_space<vmem>>, vector<32x256xf32>,
    } else {
    }
    %c0 = arith.constant 0 : index
    %c0_1 = arith.constant 0 : index
    %3 = vector.load %arg9[%c0, %c0_1] : memref<32x256xf32, #tpu.memory_space<vmem>>, vector<32x256xf32>
    %c0_2 = arith.constant 0 : index
    %c0_3 = arith.constant 0 : index
    %4 = vector.load %arg3[%c0_2, %c0_3] : memref<32x128xbf16, #tpu.memory_space<vmem>>, vector<32x128xbf16>
    %c0_4 = arith.constant 0 : index
    %c0_5 = arith.constant 0 : index
    %5 = vector.load %arg4[%c0_4, %c0_5] : memref<128x256xbf16, #tpu.memory_space<vmem>>, vector<128x256xbf16>
    %cst = arith.constant dense<0.000000e+00> : vector<32x256xf32>
    %6 = tpu.matmul %4, %5, %cst {dimension_numbers = #tpu.dot_dimension_numbers<[1], [0], [0], [1], [0, 0, 1, 1], [], []>} : vector<32x128xbf16>, vector<128x256xbf16>, vector<32x256xf32> -> vector<32x256xf32>
    %7 = arith.addf %3, %6 : vector<32x256xf32>
    %c0_6 = arith.constant 0 : index
    %c0_7 = arith.constant 0 : index
    %8 = vector.load %arg9[%c0_6, %c0_7] : memref<32x256xf32, #tpu.memory_space<vmem>>, vector<32x256xf32>
    tpu.vector_store %arg9[%c0_6, %c0_7], %7 {strides = array<i32>} : memref<32x256xf32, #tpu.memory_space<vmem>>, vector<32x256xf32>,
    %c0_i32_8 = arith.constant 0 : i32
    %9 = arith.cmpi eq, %arg2, %c0_i32_8 : i32
    %10 = arith.extui %9 : i1 to i32
    %c0_i32_9 = arith.constant 0 : i32
    %11 = arith.cmpi ne, %10, %c0_i32_9 : i32
    scf.if %11 {
      %c0_10 = arith.constant 0 : index
      %c0_11 = arith.constant 0 : index
      %12 = vector.load %arg9[%c0_10, %c0_11] : memref<32x256xf32, #tpu.memory_space<vmem>>, vector<32x256xf32>
      %c0_12 = arith.constant 0 : index
      %c0_13 = arith.constant 0 : index
      %13 = vector.load %arg5[%c0_12, %c0_13] : memref<1x256xf32, #tpu.memory_space<vmem>>, vector<1x256xf32>
      %14 = vector.broadcast %13 : vector<1x256xf32> to vector<32x256xf32>
      %15 = arith.addf %12, %14 : vector<32x256xf32>
      %16 = arith.mulf %15, %15 : vector<32x256xf32>
      %17 = arith.mulf %15, %16 : vector<32x256xf32>
      %cst_14 = arith.constant 4.471500e-02 : f32
      %18 = vector.broadcast %cst_14 : f32 to vector<32x256xf32>
      %19 = arith.mulf %18, %17 : vector<32x256xf32>
      %20 = arith.addf %15, %19 : vector<32x256xf32>
      %cst_15 = arith.constant 0.797884583 : f32
      %21 = vector.broadcast %cst_15 : f32 to vector<32x256xf32>
      %22 = arith.mulf %21, %20 : vector<32x256xf32>
      %23 = math.tanh %22 : vector<32x256xf32>
      %cst_16 = arith.constant 1.000000e+00 : f32
      %24 = vector.broadcast %cst_16 : f32 to vector<32x256xf32>
      %25 = arith.addf %24, %23 : vector<32x256xf32>
      %cst_17 = arith.constant 5.000000e-01 : f32
      %26 = vector.broadcast %cst_17 : f32 to vector<32x256xf32>
      %27 = arith.mulf %26, %25 : vector<32x256xf32>
      %28 = arith.mulf %15, %27 : vector<32x256xf32>
      %cst_18 = arith.constant dense<0.000000e+00> : vector<32xf32>
      %29 = vector.multi_reduction <add>, %28, %cst_18 [1] : vector<32x256xf32> to vector<32xf32>
      %30 = vector.shape_cast %29 : vector<32xf32> to vector<32x1xf32>
      %cst_19 = arith.constant 2.560000e+02 : f32
      %31 = vector.broadcast %cst_19 : f32 to vector<32x1xf32>
      %32 = arith.divf %30, %31 : vector<32x1xf32>
      %33 = vector.broadcast %32 : vector<32x1xf32> to vector<32x256xf32>
      %34 = arith.subf %28, %33 : vector<32x256xf32>
      %35 = vector.broadcast %32 : vector<32x1xf32> to vector<32x256xf32>
      %36 = arith.subf %28, %35 : vector<32x256xf32>
      %37 = arith.mulf %34, %36 : vector<32x256xf32>
      %cst_20 = arith.constant dense<0.000000e+00> : vector<32xf32>
      %38 = vector.multi_reduction <add>, %37, %cst_20 [1] : vector<32x256xf32> to vector<32xf32>
      %39 = vector.shape_cast %38 : vector<32xf32> to vector<32x1xf32>
      %cst_21 = arith.constant 2.560000e+02 : f32
      %40 = vector.broadcast %cst_21 : f32 to vector<32x1xf32>
      %41 = arith.divf %39, %40 : vector<32x1xf32>
      %42 = vector.broadcast %32 : vector<32x1xf32> to vector<32x256xf32>
      %43 = arith.subf %28, %42 : vector<32x256xf32>
      %cst_22 = arith.constant 9.99999996E-13 : f32
      %44 = vector.broadcast %cst_22 : f32 to vector<32x1xf32>
      %45 = arith.addf %41, %44 : vector<32x1xf32>
      %46 = math.rsqrt %45 : vector<32x1xf32>
      %47 = vector.broadcast %46 : vector<32x1xf32> to vector<32x256xf32>
      %48 = arith.mulf %43, %47 : vector<32x256xf32>
      %c0_23 = arith.constant 0 : index
      %c0_24 = arith.constant 0 : index
      %49 = vector.load %arg6[%c0_23, %c0_24] : memref<1x256xf32, #tpu.memory_space<vmem>>, vector<1x256xf32>
      %50 = vector.broadcast %49 : vector<1x256xf32> to vector<32x256xf32>
      %51 = arith.mulf %48, %50 : vector<32x256xf32>
      %c0_25 = arith.constant 0 : index
      %c0_26 = arith.constant 0 : index
      %52 = vector.load %arg7[%c0_25, %c0_26] : memref<1x256xf32, #tpu.memory_space<vmem>>, vector<1x256xf32>
      %53 = vector.broadcast %52 : vector<1x256xf32> to vector<32x256xf32>
      %54 = arith.addf %51, %53 : vector<32x256xf32>
      %55 = arith.truncf %54 : vector<32x256xf32> to vector<32x256xbf16>
      %c0_27 = arith.constant 0 : index
      %c0_28 = arith.constant 0 : index
      %56 = vector.load %arg8[%c0_27, %c0_28] : memref<32x256xbf16, #tpu.memory_space<vmem>>, vector<32x256xbf16>
      tpu.vector_store %arg8[%c0_27, %c0_28], %55 {strides = array<i32>} : memref<32x256xbf16, #tpu.memory_space<vmem>>, vector<32x256xbf16>,
    } else {
    }
    return
  }
  func.func @transform_0(%arg0: i32, %arg1: i32, %arg2: i32) -> (i32, i32) {
    %c0_i32 = arith.constant 0 : i32
    return %arg0, %arg2 : i32, i32
  }
  func.func @transform_1(%arg0: i32, %arg1: i32, %arg2: i32) -> (i32, i32) {
    %c0_i32 = arith.constant 0 : i32
    return %arg2, %arg1 : i32, i32
  }
  func.func @transform_2(%arg0: i32, %arg1: i32, %arg2: i32) -> (i32, i32) {
    %c0_i32 = arith.constant 0 : i32
    %c0_i32_0 = arith.constant 0 : i32
    return %c0_i32, %arg1 : i32, i32
  }
  func.func @transform_3(%arg0: i32, %arg1: i32, %arg2: i32) -> (i32, i32) {
    %c0_i32 = arith.constant 0 : i32
    %c0_i32_0 = arith.constant 0 : i32
    return %c0_i32, %arg1 : i32, i32
  }
  func.func @transform_4(%arg0: i32, %arg1: i32, %arg2: i32) -> (i32, i32) {
    %c0_i32 = arith.constant 0 : i32
    %c0_i32_0 = arith.constant 0 : i32
    return %c0_i32, %arg1 : i32, i32
  }
  func.func @transform_5(%arg0: i32, %arg1: i32, %arg2: i32) -> (i32, i32) {
    %c0_i32 = arith.constant 0 : i32
    return %arg0, %arg1 : i32, i32
  }
}

module attributes {stable_mosaic.version = 11 : i64} {
  func.func @_dense_nt_kernel(%arg0: i32, %arg1: i32, %arg2: i32, %arg3: memref<32x256xbf16, #tpu.memory_space<vmem>>, %arg4: memref<512x256xbf16, #tpu.memory_space<vmem>>, %arg5: memref<1x512xf32, #tpu.memory_space<vmem>>, %arg6: memref<32x512xbf16, #tpu.memory_space<vmem>>, %arg7: memref<32x512xf32, #tpu.memory_space<vmem>>) attributes {dimension_semantics = [#tpu.dimension_semantics<parallel>, #tpu.dimension_semantics<parallel>, #tpu.dimension_semantics<arbitrary>], iteration_bounds = array<i64: 1, 1, 1>, scalar_prefetch = 0 : i64, scratch_operands = 1 : i64, tpu.core_type = #tpu.core_type<tc>, window_params = [{transform_indices = @transform_0, window_bounds = array<i64: 32, 256>}, {transform_indices = @transform_1, window_bounds = array<i64: 512, 256>}, {transform_indices = @transform_2, window_bounds = array<i64: 1, 512>}, {transform_indices = @transform_3, window_bounds = array<i64: 32, 512>}]} {
    %c0_i32 = arith.constant 0 : i32
    %0 = arith.cmpi eq, %arg2, %c0_i32 : i32
    %1 = arith.extui %0 : i1 to i32
    %c0_i32_0 = arith.constant 0 : i32
    %2 = arith.cmpi ne, %1, %c0_i32_0 : i32
    scf.if %2 {
      %cst_10 = arith.constant 0.000000e+00 : f32
      %12 = vector.broadcast %cst_10 : f32 to vector<32x512xf32>
      %c0_11 = arith.constant 0 : index
      %c0_12 = arith.constant 0 : index
      %13 = vector.load %arg7[%c0_11, %c0_12] : memref<32x512xf32, #tpu.memory_space<vmem>>, vector<32x512xf32>
      tpu.vector_store %arg7[%c0_11, %c0_12], %12 {strides = array<i32>} : memref<32x512xf32, #tpu.memory_space<vmem>>, vector<32x512xf32>,
    } else {
    }
    %c0 = arith.constant 0 : index
    %c0_1 = arith.constant 0 : index
    %3 = vector.load %arg7[%c0, %c0_1] : memref<32x512xf32, #tpu.memory_space<vmem>>, vector<32x512xf32>
    %c0_2 = arith.constant 0 : index
    %c0_3 = arith.constant 0 : index
    %4 = vector.load %arg3[%c0_2, %c0_3] : memref<32x256xbf16, #tpu.memory_space<vmem>>, vector<32x256xbf16>
    %c0_4 = arith.constant 0 : index
    %c0_5 = arith.constant 0 : index
    %5 = vector.load %arg4[%c0_4, %c0_5] : memref<512x256xbf16, #tpu.memory_space<vmem>>, vector<512x256xbf16>
    %cst = arith.constant dense<0.000000e+00> : vector<32x512xf32>
    %6 = tpu.matmul %4, %5, %cst {dimension_numbers = #tpu.dot_dimension_numbers<[1], [1], [0], [0], [0, 0, 1, 0], [], []>} : vector<32x256xbf16>, vector<512x256xbf16>, vector<32x512xf32> -> vector<32x512xf32>
    %7 = arith.addf %3, %6 : vector<32x512xf32>
    %c0_6 = arith.constant 0 : index
    %c0_7 = arith.constant 0 : index
    %8 = vector.load %arg7[%c0_6, %c0_7] : memref<32x512xf32, #tpu.memory_space<vmem>>, vector<32x512xf32>
    tpu.vector_store %arg7[%c0_6, %c0_7], %7 {strides = array<i32>} : memref<32x512xf32, #tpu.memory_space<vmem>>, vector<32x512xf32>,
    %c0_i32_8 = arith.constant 0 : i32
    %9 = arith.cmpi eq, %arg2, %c0_i32_8 : i32
    %10 = arith.extui %9 : i1 to i32
    %c0_i32_9 = arith.constant 0 : i32
    %11 = arith.cmpi ne, %10, %c0_i32_9 : i32
    scf.if %11 {
      %c0_10 = arith.constant 0 : index
      %c0_11 = arith.constant 0 : index
      %12 = vector.load %arg7[%c0_10, %c0_11] : memref<32x512xf32, #tpu.memory_space<vmem>>, vector<32x512xf32>
      %c0_12 = arith.constant 0 : index
      %c0_13 = arith.constant 0 : index
      %13 = vector.load %arg5[%c0_12, %c0_13] : memref<1x512xf32, #tpu.memory_space<vmem>>, vector<1x512xf32>
      %14 = vector.broadcast %13 : vector<1x512xf32> to vector<32x512xf32>
      %15 = arith.addf %12, %14 : vector<32x512xf32>
      %16 = arith.truncf %15 : vector<32x512xf32> to vector<32x512xbf16>
      %c0_14 = arith.constant 0 : index
      %c0_15 = arith.constant 0 : index
      %17 = vector.load %arg6[%c0_14, %c0_15] : memref<32x512xbf16, #tpu.memory_space<vmem>>, vector<32x512xbf16>
      tpu.vector_store %arg6[%c0_14, %c0_15], %16 {strides = array<i32>} : memref<32x512xbf16, #tpu.memory_space<vmem>>, vector<32x512xbf16>,
    } else {
    }
    return
  }
  func.func @transform_0(%arg0: i32, %arg1: i32, %arg2: i32) -> (i32, i32) {
    %c0_i32 = arith.constant 0 : i32
    return %arg0, %arg2 : i32, i32
  }
  func.func @transform_1(%arg0: i32, %arg1: i32, %arg2: i32) -> (i32, i32) {
    %c0_i32 = arith.constant 0 : i32
    return %arg1, %arg2 : i32, i32
  }
  func.func @transform_2(%arg0: i32, %arg1: i32, %arg2: i32) -> (i32, i32) {
    %c0_i32 = arith.constant 0 : i32
    %c0_i32_0 = arith.constant 0 : i32
    return %c0_i32, %arg1 : i32, i32
  }
  func.func @transform_3(%arg0: i32, %arg1: i32, %arg2: i32) -> (i32, i32) {
    %c0_i32 = arith.constant 0 : i32
    return %arg0, %arg1 : i32, i32
  }
}

module attributes {stable_mosaic.version = 11 : i64} {
  func.func @_dense_kernel(%arg0: i32, %arg1: i32, %arg2: i32, %arg3: memref<32x256xbf16, #tpu.memory_space<vmem>>, %arg4: memref<256x384xbf16, #tpu.memory_space<vmem>>, %arg5: memref<1x384xf32, #tpu.memory_space<vmem>>, %arg6: memref<32x384xbf16, #tpu.memory_space<vmem>>, %arg7: memref<32x384xf32, #tpu.memory_space<vmem>>) attributes {dimension_semantics = [#tpu.dimension_semantics<parallel>, #tpu.dimension_semantics<parallel>, #tpu.dimension_semantics<arbitrary>], iteration_bounds = array<i64: 1, 2, 1>, scalar_prefetch = 0 : i64, scratch_operands = 1 : i64, tpu.core_type = #tpu.core_type<tc>, window_params = [{transform_indices = @transform_0, window_bounds = array<i64: 32, 256>}, {transform_indices = @transform_1, window_bounds = array<i64: 256, 384>}, {transform_indices = @transform_2, window_bounds = array<i64: 1, 384>}, {transform_indices = @transform_3, window_bounds = array<i64: 32, 384>}]} {
    %c0_i32 = arith.constant 0 : i32
    %0 = arith.cmpi eq, %arg2, %c0_i32 : i32
    %1 = arith.extui %0 : i1 to i32
    %c0_i32_0 = arith.constant 0 : i32
    %2 = arith.cmpi ne, %1, %c0_i32_0 : i32
    scf.if %2 {
      %cst_10 = arith.constant 0.000000e+00 : f32
      %12 = vector.broadcast %cst_10 : f32 to vector<32x384xf32>
      %c0_11 = arith.constant 0 : index
      %c0_12 = arith.constant 0 : index
      %13 = vector.load %arg7[%c0_11, %c0_12] : memref<32x384xf32, #tpu.memory_space<vmem>>, vector<32x384xf32>
      tpu.vector_store %arg7[%c0_11, %c0_12], %12 {strides = array<i32>} : memref<32x384xf32, #tpu.memory_space<vmem>>, vector<32x384xf32>,
    } else {
    }
    %c0 = arith.constant 0 : index
    %c0_1 = arith.constant 0 : index
    %3 = vector.load %arg7[%c0, %c0_1] : memref<32x384xf32, #tpu.memory_space<vmem>>, vector<32x384xf32>
    %c0_2 = arith.constant 0 : index
    %c0_3 = arith.constant 0 : index
    %4 = vector.load %arg3[%c0_2, %c0_3] : memref<32x256xbf16, #tpu.memory_space<vmem>>, vector<32x256xbf16>
    %c0_4 = arith.constant 0 : index
    %c0_5 = arith.constant 0 : index
    %5 = vector.load %arg4[%c0_4, %c0_5] : memref<256x384xbf16, #tpu.memory_space<vmem>>, vector<256x384xbf16>
    %cst = arith.constant dense<0.000000e+00> : vector<32x384xf32>
    %6 = tpu.matmul %4, %5, %cst {dimension_numbers = #tpu.dot_dimension_numbers<[1], [0], [0], [1], [0, 0, 1, 1], [], []>} : vector<32x256xbf16>, vector<256x384xbf16>, vector<32x384xf32> -> vector<32x384xf32>
    %7 = arith.addf %3, %6 : vector<32x384xf32>
    %c0_6 = arith.constant 0 : index
    %c0_7 = arith.constant 0 : index
    %8 = vector.load %arg7[%c0_6, %c0_7] : memref<32x384xf32, #tpu.memory_space<vmem>>, vector<32x384xf32>
    tpu.vector_store %arg7[%c0_6, %c0_7], %7 {strides = array<i32>} : memref<32x384xf32, #tpu.memory_space<vmem>>, vector<32x384xf32>,
    %c0_i32_8 = arith.constant 0 : i32
    %9 = arith.cmpi eq, %arg2, %c0_i32_8 : i32
    %10 = arith.extui %9 : i1 to i32
    %c0_i32_9 = arith.constant 0 : i32
    %11 = arith.cmpi ne, %10, %c0_i32_9 : i32
    scf.if %11 {
      %c0_10 = arith.constant 0 : index
      %c0_11 = arith.constant 0 : index
      %12 = vector.load %arg7[%c0_10, %c0_11] : memref<32x384xf32, #tpu.memory_space<vmem>>, vector<32x384xf32>
      %c0_12 = arith.constant 0 : index
      %c0_13 = arith.constant 0 : index
      %13 = vector.load %arg5[%c0_12, %c0_13] : memref<1x384xf32, #tpu.memory_space<vmem>>, vector<1x384xf32>
      %14 = vector.broadcast %13 : vector<1x384xf32> to vector<32x384xf32>
      %15 = arith.addf %12, %14 : vector<32x384xf32>
      %16 = arith.truncf %15 : vector<32x384xf32> to vector<32x384xbf16>
      %c0_14 = arith.constant 0 : index
      %c0_15 = arith.constant 0 : index
      %17 = vector.load %arg6[%c0_14, %c0_15] : memref<32x384xbf16, #tpu.memory_space<vmem>>, vector<32x384xbf16>
      tpu.vector_store %arg6[%c0_14, %c0_15], %16 {strides = array<i32>} : memref<32x384xbf16, #tpu.memory_space<vmem>>, vector<32x384xbf16>,
    } else {
    }
    return
  }
  func.func @transform_0(%arg0: i32, %arg1: i32, %arg2: i32) -> (i32, i32) {
    %c0_i32 = arith.constant 0 : i32
    return %arg0, %arg2 : i32, i32
  }
  func.func @transform_1(%arg0: i32, %arg1: i32, %arg2: i32) -> (i32, i32) {
    %c0_i32 = arith.constant 0 : i32
    return %arg2, %arg1 : i32, i32
  }
  func.func @transform_2(%arg0: i32, %arg1: i32, %arg2: i32) -> (i32, i32) {
    %c0_i32 = arith.constant 0 : i32
    %c0_i32_0 = arith.constant 0 : i32
    return %c0_i32, %arg1 : i32, i32
  }
  func.func @transform_3(%arg0: i32, %arg1: i32, %arg2: i32) -> (i32, i32) {
    %c0_i32 = arith.constant 0 : i32
    return %arg0, %arg1 : i32, i32
  }
}

module attributes {stable_mosaic.version = 11 : i64} {
  func.func @_attention_kernel(%arg0: i32, %arg1: memref<1x4x16x64xbf16, #tpu.memory_space<vmem>>, %arg2: memref<1x4x16x64xbf16, #tpu.memory_space<vmem>>, %arg3: memref<1x4x16x64xbf16, #tpu.memory_space<vmem>>, %arg4: memref<1x1x16xf32, #tpu.memory_space<vmem>>, %arg5: memref<1x16x256xbf16, #tpu.memory_space<vmem>>) attributes {dimension_semantics = [#tpu.dimension_semantics<parallel>], iteration_bounds = array<i64: 2>, scalar_prefetch = 0 : i64, scratch_operands = 0 : i64, tpu.core_type = #tpu.core_type<tc>, window_params = [{transform_indices = @transform_0, window_bounds = array<i64: 1, 4, 16, 64>}, {transform_indices = @transform_1, window_bounds = array<i64: 1, 4, 16, 64>}, {transform_indices = @transform_2, window_bounds = array<i64: 1, 4, 16, 64>}, {transform_indices = @transform_3, window_bounds = array<i64: 1, 1, 16>}, {transform_indices = @transform_4, window_bounds = array<i64: 1, 16, 256>}]} {
    %c0 = arith.constant 0 : index
    %c0_0 = arith.constant 0 : index
    %c0_1 = arith.constant 0 : index
    %0 = vector.load %arg4[%c0, %c0_0, %c0_1] : memref<1x1x16xf32, #tpu.memory_space<vmem>>, vector<1x1x16xf32>
    %1 = vector.shape_cast %0 : vector<1x1x16xf32> to vector<1x16xf32>
    %c0_2 = arith.constant 0 : index
    %c0_3 = arith.constant 0 : index
    %c0_4 = arith.constant 0 : index
    %c0_5 = arith.constant 0 : index
    %2 = vector.load %arg1[%c0_2, %c0_3, %c0_4, %c0_5] : memref<1x4x16x64xbf16, #tpu.memory_space<vmem>>, vector<1x1x16x64xbf16>
    %3 = vector.shape_cast %2 : vector<1x1x16x64xbf16> to vector<16x64xbf16>
    %cst = arith.constant 1.250000e-01 : bf16
    %4 = vector.broadcast %cst : bf16 to vector<16x64xbf16>
    %5 = arith.mulf %3, %4 : vector<16x64xbf16>
    %c0_6 = arith.constant 0 : index
    %c0_7 = arith.constant 0 : index
    %c0_8 = arith.constant 0 : index
    %c0_9 = arith.constant 0 : index
    %6 = vector.load %arg2[%c0_6, %c0_7, %c0_8, %c0_9] : memref<1x4x16x64xbf16, #tpu.memory_space<vmem>>, vector<1x1x16x64xbf16>
    %7 = vector.shape_cast %6 : vector<1x1x16x64xbf16> to vector<16x64xbf16>
    %c0_10 = arith.constant 0 : index
    %c0_11 = arith.constant 0 : index
    %c0_12 = arith.constant 0 : index
    %c0_13 = arith.constant 0 : index
    %8 = vector.load %arg3[%c0_10, %c0_11, %c0_12, %c0_13] : memref<1x4x16x64xbf16, #tpu.memory_space<vmem>>, vector<1x1x16x64xbf16>
    %9 = vector.shape_cast %8 : vector<1x1x16x64xbf16> to vector<16x64xbf16>
    %cst_14 = arith.constant dense<0.000000e+00> : vector<16x16xf32>
    %10 = tpu.matmul %5, %7, %cst_14 {dimension_numbers = #tpu.dot_dimension_numbers<[1], [1], [0], [0], [0, 0, 1, 0], [], []>} : vector<16x64xbf16>, vector<16x64xbf16>, vector<16x16xf32> -> vector<16x16xf32>
    %11 = vector.broadcast %1 : vector<1x16xf32> to vector<16x16xf32>
    %12 = arith.addf %10, %11 : vector<16x16xf32>
    %cst_15 = arith.constant dense<0xFF800000> : vector<16xf32>
    %13 = vector.multi_reduction <maximumf>, %12, %cst_15 [1] : vector<16x16xf32> to vector<16xf32>
    %14 = vector.shape_cast %13 : vector<16xf32> to vector<16x1xf32>
    %15 = vector.broadcast %14 : vector<16x1xf32> to vector<16x16xf32>
    %16 = arith.subf %12, %15 : vector<16x16xf32>
    %17 = math.exp %16 : vector<16x16xf32>
    %cst_16 = arith.constant dense<0.000000e+00> : vector<16xf32>
    %18 = vector.multi_reduction <add>, %17, %cst_16 [1] : vector<16x16xf32> to vector<16xf32>
    %19 = vector.shape_cast %18 : vector<16xf32> to vector<16x1xf32>
    %20 = tpu.reciprocal %19 {approx = true} : vector<16x1xf32> -> vector<16x1xf32>
    %21 = vector.broadcast %20 : vector<16x1xf32> to vector<16x16xf32>
    %22 = arith.mulf %17, %21 : vector<16x16xf32>
    %23 = arith.truncf %22 : vector<16x16xf32> to vector<16x16xbf16>
    %cst_17 = arith.constant dense<0.000000e+00> : vector<16x64xf32>
    %24 = tpu.matmul %23, %9, %cst_17 {dimension_numbers = #tpu.dot_dimension_numbers<[1], [0], [0], [1], [0, 0, 1, 1], [], []>} : vector<16x16xbf16>, vector<16x64xbf16>, vector<16x64xf32> -> vector<16x64xf32>
    %25 = arith.truncf %24 : vector<16x64xf32> to vector<16x64xbf16>
    %c0_18 = arith.constant 0 : index
    %c1 = arith.constant 1 : index
    %c0_19 = arith.constant 0 : index
    %c0_20 = arith.constant 0 : index
    %26 = vector.load %arg1[%c0_18, %c1, %c0_19, %c0_20] : memref<1x4x16x64xbf16, #tpu.memory_space<vmem>>, vector<1x1x16x64xbf16>
    %27 = vector.shape_cast %26 : vector<1x1x16x64xbf16> to vector<16x64xbf16>
    %cst_21 = arith.constant 1.250000e-01 : bf16
    %28 = vector.broadcast %cst_21 : bf16 to vector<16x64xbf16>
    %29 = arith.mulf %27, %28 : vector<16x64xbf16>
    %c0_22 = arith.constant 0 : index
    %c1_23 = arith.constant 1 : index
    %c0_24 = arith.constant 0 : index
    %c0_25 = arith.constant 0 : index
    %30 = vector.load %arg2[%c0_22, %c1_23, %c0_24, %c0_25] : memref<1x4x16x64xbf16, #tpu.memory_space<vmem>>, vector<1x1x16x64xbf16>
    %31 = vector.shape_cast %30 : vector<1x1x16x64xbf16> to vector<16x64xbf16>
    %c0_26 = arith.constant 0 : index
    %c1_27 = arith.constant 1 : index
    %c0_28 = arith.constant 0 : index
    %c0_29 = arith.constant 0 : index
    %32 = vector.load %arg3[%c0_26, %c1_27, %c0_28, %c0_29] : memref<1x4x16x64xbf16, #tpu.memory_space<vmem>>, vector<1x1x16x64xbf16>
    %33 = vector.shape_cast %32 : vector<1x1x16x64xbf16> to vector<16x64xbf16>
    %cst_30 = arith.constant dense<0.000000e+00> : vector<16x16xf32>
    %34 = tpu.matmul %29, %31, %cst_30 {dimension_numbers = #tpu.dot_dimension_numbers<[1], [1], [0], [0], [0, 0, 1, 0], [], []>} : vector<16x64xbf16>, vector<16x64xbf16>, vector<16x16xf32> -> vector<16x16xf32>
    %35 = vector.broadcast %1 : vector<1x16xf32> to vector<16x16xf32>
    %36 = arith.addf %34, %35 : vector<16x16xf32>
    %cst_31 = arith.constant dense<0xFF800000> : vector<16xf32>
    %37 = vector.multi_reduction <maximumf>, %36, %cst_31 [1] : vector<16x16xf32> to vector<16xf32>
    %38 = vector.shape_cast %37 : vector<16xf32> to vector<16x1xf32>
    %39 = vector.broadcast %38 : vector<16x1xf32> to vector<16x16xf32>
    %40 = arith.subf %36, %39 : vector<16x16xf32>
    %41 = math.exp %40 : vector<16x16xf32>
    %cst_32 = arith.constant dense<0.000000e+00> : vector<16xf32>
    %42 = vector.multi_reduction <add>, %41, %cst_32 [1] : vector<16x16xf32> to vector<16xf32>
    %43 = vector.shape_cast %42 : vector<16xf32> to vector<16x1xf32>
    %44 = tpu.reciprocal %43 {approx = true} : vector<16x1xf32> -> vector<16x1xf32>
    %45 = vector.broadcast %44 : vector<16x1xf32> to vector<16x16xf32>
    %46 = arith.mulf %41, %45 : vector<16x16xf32>
    %47 = arith.truncf %46 : vector<16x16xf32> to vector<16x16xbf16>
    %cst_33 = arith.constant dense<0.000000e+00> : vector<16x64xf32>
    %48 = tpu.matmul %47, %33, %cst_33 {dimension_numbers = #tpu.dot_dimension_numbers<[1], [0], [0], [1], [0, 0, 1, 1], [], []>} : vector<16x16xbf16>, vector<16x64xbf16>, vector<16x64xf32> -> vector<16x64xf32>
    %49 = arith.truncf %48 : vector<16x64xf32> to vector<16x64xbf16>
    %c0_34 = arith.constant 0 : index
    %c2 = arith.constant 2 : index
    %c0_35 = arith.constant 0 : index
    %c0_36 = arith.constant 0 : index
    %50 = vector.load %arg1[%c0_34, %c2, %c0_35, %c0_36] : memref<1x4x16x64xbf16, #tpu.memory_space<vmem>>, vector<1x1x16x64xbf16>
    %51 = vector.shape_cast %50 : vector<1x1x16x64xbf16> to vector<16x64xbf16>
    %cst_37 = arith.constant 1.250000e-01 : bf16
    %52 = vector.broadcast %cst_37 : bf16 to vector<16x64xbf16>
    %53 = arith.mulf %51, %52 : vector<16x64xbf16>
    %c0_38 = arith.constant 0 : index
    %c2_39 = arith.constant 2 : index
    %c0_40 = arith.constant 0 : index
    %c0_41 = arith.constant 0 : index
    %54 = vector.load %arg2[%c0_38, %c2_39, %c0_40, %c0_41] : memref<1x4x16x64xbf16, #tpu.memory_space<vmem>>, vector<1x1x16x64xbf16>
    %55 = vector.shape_cast %54 : vector<1x1x16x64xbf16> to vector<16x64xbf16>
    %c0_42 = arith.constant 0 : index
    %c2_43 = arith.constant 2 : index
    %c0_44 = arith.constant 0 : index
    %c0_45 = arith.constant 0 : index
    %56 = vector.load %arg3[%c0_42, %c2_43, %c0_44, %c0_45] : memref<1x4x16x64xbf16, #tpu.memory_space<vmem>>, vector<1x1x16x64xbf16>
    %57 = vector.shape_cast %56 : vector<1x1x16x64xbf16> to vector<16x64xbf16>
    %cst_46 = arith.constant dense<0.000000e+00> : vector<16x16xf32>
    %58 = tpu.matmul %53, %55, %cst_46 {dimension_numbers = #tpu.dot_dimension_numbers<[1], [1], [0], [0], [0, 0, 1, 0], [], []>} : vector<16x64xbf16>, vector<16x64xbf16>, vector<16x16xf32> -> vector<16x16xf32>
    %59 = vector.broadcast %1 : vector<1x16xf32> to vector<16x16xf32>
    %60 = arith.addf %58, %59 : vector<16x16xf32>
    %cst_47 = arith.constant dense<0xFF800000> : vector<16xf32>
    %61 = vector.multi_reduction <maximumf>, %60, %cst_47 [1] : vector<16x16xf32> to vector<16xf32>
    %62 = vector.shape_cast %61 : vector<16xf32> to vector<16x1xf32>
    %63 = vector.broadcast %62 : vector<16x1xf32> to vector<16x16xf32>
    %64 = arith.subf %60, %63 : vector<16x16xf32>
    %65 = math.exp %64 : vector<16x16xf32>
    %cst_48 = arith.constant dense<0.000000e+00> : vector<16xf32>
    %66 = vector.multi_reduction <add>, %65, %cst_48 [1] : vector<16x16xf32> to vector<16xf32>
    %67 = vector.shape_cast %66 : vector<16xf32> to vector<16x1xf32>
    %68 = tpu.reciprocal %67 {approx = true} : vector<16x1xf32> -> vector<16x1xf32>
    %69 = vector.broadcast %68 : vector<16x1xf32> to vector<16x16xf32>
    %70 = arith.mulf %65, %69 : vector<16x16xf32>
    %71 = arith.truncf %70 : vector<16x16xf32> to vector<16x16xbf16>
    %cst_49 = arith.constant dense<0.000000e+00> : vector<16x64xf32>
    %72 = tpu.matmul %71, %57, %cst_49 {dimension_numbers = #tpu.dot_dimension_numbers<[1], [0], [0], [1], [0, 0, 1, 1], [], []>} : vector<16x16xbf16>, vector<16x64xbf16>, vector<16x64xf32> -> vector<16x64xf32>
    %73 = arith.truncf %72 : vector<16x64xf32> to vector<16x64xbf16>
    %c0_50 = arith.constant 0 : index
    %c3 = arith.constant 3 : index
    %c0_51 = arith.constant 0 : index
    %c0_52 = arith.constant 0 : index
    %74 = vector.load %arg1[%c0_50, %c3, %c0_51, %c0_52] : memref<1x4x16x64xbf16, #tpu.memory_space<vmem>>, vector<1x1x16x64xbf16>
    %75 = vector.shape_cast %74 : vector<1x1x16x64xbf16> to vector<16x64xbf16>
    %cst_53 = arith.constant 1.250000e-01 : bf16
    %76 = vector.broadcast %cst_53 : bf16 to vector<16x64xbf16>
    %77 = arith.mulf %75, %76 : vector<16x64xbf16>
    %c0_54 = arith.constant 0 : index
    %c3_55 = arith.constant 3 : index
    %c0_56 = arith.constant 0 : index
    %c0_57 = arith.constant 0 : index
    %78 = vector.load %arg2[%c0_54, %c3_55, %c0_56, %c0_57] : memref<1x4x16x64xbf16, #tpu.memory_space<vmem>>, vector<1x1x16x64xbf16>
    %79 = vector.shape_cast %78 : vector<1x1x16x64xbf16> to vector<16x64xbf16>
    %c0_58 = arith.constant 0 : index
    %c3_59 = arith.constant 3 : index
    %c0_60 = arith.constant 0 : index
    %c0_61 = arith.constant 0 : index
    %80 = vector.load %arg3[%c0_58, %c3_59, %c0_60, %c0_61] : memref<1x4x16x64xbf16, #tpu.memory_space<vmem>>, vector<1x1x16x64xbf16>
    %81 = vector.shape_cast %80 : vector<1x1x16x64xbf16> to vector<16x64xbf16>
    %cst_62 = arith.constant dense<0.000000e+00> : vector<16x16xf32>
    %82 = tpu.matmul %77, %79, %cst_62 {dimension_numbers = #tpu.dot_dimension_numbers<[1], [1], [0], [0], [0, 0, 1, 0], [], []>} : vector<16x64xbf16>, vector<16x64xbf16>, vector<16x16xf32> -> vector<16x16xf32>
    %83 = vector.broadcast %1 : vector<1x16xf32> to vector<16x16xf32>
    %84 = arith.addf %82, %83 : vector<16x16xf32>
    %cst_63 = arith.constant dense<0xFF800000> : vector<16xf32>
    %85 = vector.multi_reduction <maximumf>, %84, %cst_63 [1] : vector<16x16xf32> to vector<16xf32>
    %86 = vector.shape_cast %85 : vector<16xf32> to vector<16x1xf32>
    %87 = vector.broadcast %86 : vector<16x1xf32> to vector<16x16xf32>
    %88 = arith.subf %84, %87 : vector<16x16xf32>
    %89 = math.exp %88 : vector<16x16xf32>
    %cst_64 = arith.constant dense<0.000000e+00> : vector<16xf32>
    %90 = vector.multi_reduction <add>, %89, %cst_64 [1] : vector<16x16xf32> to vector<16xf32>
    %91 = vector.shape_cast %90 : vector<16xf32> to vector<16x1xf32>
    %92 = tpu.reciprocal %91 {approx = true} : vector<16x1xf32> -> vector<16x1xf32>
    %93 = vector.broadcast %92 : vector<16x1xf32> to vector<16x16xf32>
    %94 = arith.mulf %89, %93 : vector<16x16xf32>
    %95 = arith.truncf %94 : vector<16x16xf32> to vector<16x16xbf16>
    %cst_65 = arith.constant dense<0.000000e+00> : vector<16x64xf32>
    %96 = tpu.matmul %95, %81, %cst_65 {dimension_numbers = #tpu.dot_dimension_numbers<[1], [0], [0], [1], [0, 0, 1, 1], [], []>} : vector<16x16xbf16>, vector<16x64xbf16>, vector<16x64xf32> -> vector<16x64xf32>
    %97 = arith.truncf %96 : vector<16x64xf32> to vector<16x64xbf16>
    %98 = tpu.concatenate %25, %49, %73, %97 in 1 : vector<16x64xbf16>, vector<16x64xbf16>, vector<16x64xbf16>, vector<16x64xbf16> -> vector<16x256xbf16>
    %c0_66 = arith.constant 0 : index
    %c0_67 = arith.constant 0 : index
    %c0_68 = arith.constant 0 : index
    %99 = vector.load %arg5[%c0_66, %c0_67, %c0_68] : memref<1x16x256xbf16, #tpu.memory_space<vmem>>, vector<1x16x256xbf16>
    %100 = vector.shape_cast %99 : vector<1x16x256xbf16> to vector<16x256xbf16>
    %101 = vector.shape_cast %98 : vector<16x256xbf16> to vector<1x16x256xbf16>
    tpu.vector_store %arg5[%c0_66, %c0_67, %c0_68], %101 {strides = array<i32>} : memref<1x16x256xbf16, #tpu.memory_space<vmem>>, vector<1x16x256xbf16>,
    return
  }
  func.func @transform_0(%arg0: i32) -> (i32, i32, i32, i32) {
    %c0_i32 = arith.constant 0 : i32
    %c0_i32_0 = arith.constant 0 : i32
    %c0_i32_1 = arith.constant 0 : i32
    %c0_i32_2 = arith.constant 0 : i32
    return %arg0, %c0_i32, %c0_i32_0, %c0_i32_1 : i32, i32, i32, i32
  }
  func.func @transform_1(%arg0: i32) -> (i32, i32, i32, i32) {
    %c0_i32 = arith.constant 0 : i32
    %c0_i32_0 = arith.constant 0 : i32
    %c0_i32_1 = arith.constant 0 : i32
    %c0_i32_2 = arith.constant 0 : i32
    return %arg0, %c0_i32, %c0_i32_0, %c0_i32_1 : i32, i32, i32, i32
  }
  func.func @transform_2(%arg0: i32) -> (i32, i32, i32, i32) {
    %c0_i32 = arith.constant 0 : i32
    %c0_i32_0 = arith.constant 0 : i32
    %c0_i32_1 = arith.constant 0 : i32
    %c0_i32_2 = arith.constant 0 : i32
    return %arg0, %c0_i32, %c0_i32_0, %c0_i32_1 : i32, i32, i32, i32
  }
  func.func @transform_3(%arg0: i32) -> (i32, i32, i32) {
    %c0_i32 = arith.constant 0 : i32
    %c0_i32_0 = arith.constant 0 : i32
    %c0_i32_1 = arith.constant 0 : i32
    return %arg0, %c0_i32, %c0_i32_0 : i32, i32, i32
  }
  func.func @transform_4(%arg0: i32) -> (i32, i32, i32) {
    %c0_i32 = arith.constant 0 : i32
    %c0_i32_0 = arith.constant 0 : i32
    %c0_i32_1 = arith.constant 0 : i32
    return %arg0, %c0_i32, %c0_i32_0 : i32, i32, i32
  }
}

module attributes {stable_mosaic.version = 11 : i64} {
  func.func @_dense_kernel(%arg0: i32, %arg1: i32, %arg2: i32, %arg3: memref<32x256xbf16, #tpu.memory_space<vmem>>, %arg4: memref<256x256xbf16, #tpu.memory_space<vmem>>, %arg5: memref<1x256xf32, #tpu.memory_space<vmem>>, %arg6: memref<32x256xbf16, #tpu.memory_space<vmem>>, %arg7: memref<1x256xf32, #tpu.memory_space<vmem>>, %arg8: memref<1x256xf32, #tpu.memory_space<vmem>>, %arg9: memref<32x256xbf16, #tpu.memory_space<vmem>>, %arg10: memref<32x256xf32, #tpu.memory_space<vmem>>) attributes {dimension_semantics = [#tpu.dimension_semantics<parallel>, #tpu.dimension_semantics<parallel>, #tpu.dimension_semantics<arbitrary>], iteration_bounds = array<i64: 1, 1, 1>, scalar_prefetch = 0 : i64, scratch_operands = 1 : i64, tpu.core_type = #tpu.core_type<tc>, window_params = [{transform_indices = @transform_0, window_bounds = array<i64: 32, 256>}, {transform_indices = @transform_1, window_bounds = array<i64: 256, 256>}, {transform_indices = @transform_2, window_bounds = array<i64: 1, 256>}, {transform_indices = @transform_3, window_bounds = array<i64: 32, 256>}, {transform_indices = @transform_4, window_bounds = array<i64: 1, 256>}, {transform_indices = @transform_5, window_bounds = array<i64: 1, 256>}, {transform_indices = @transform_6, window_bounds = array<i64: 32, 256>}]} {
    %c0_i32 = arith.constant 0 : i32
    %0 = arith.cmpi eq, %arg2, %c0_i32 : i32
    %1 = arith.extui %0 : i1 to i32
    %c0_i32_0 = arith.constant 0 : i32
    %2 = arith.cmpi ne, %1, %c0_i32_0 : i32
    scf.if %2 {
      %cst_10 = arith.constant 0.000000e+00 : f32
      %12 = vector.broadcast %cst_10 : f32 to vector<32x256xf32>
      %c0_11 = arith.constant 0 : index
      %c0_12 = arith.constant 0 : index
      %13 = vector.load %arg10[%c0_11, %c0_12] : memref<32x256xf32, #tpu.memory_space<vmem>>, vector<32x256xf32>
      tpu.vector_store %arg10[%c0_11, %c0_12], %12 {strides = array<i32>} : memref<32x256xf32, #tpu.memory_space<vmem>>, vector<32x256xf32>,
    } else {
    }
    %c0 = arith.constant 0 : index
    %c0_1 = arith.constant 0 : index
    %3 = vector.load %arg10[%c0, %c0_1] : memref<32x256xf32, #tpu.memory_space<vmem>>, vector<32x256xf32>
    %c0_2 = arith.constant 0 : index
    %c0_3 = arith.constant 0 : index
    %4 = vector.load %arg3[%c0_2, %c0_3] : memref<32x256xbf16, #tpu.memory_space<vmem>>, vector<32x256xbf16>
    %c0_4 = arith.constant 0 : index
    %c0_5 = arith.constant 0 : index
    %5 = vector.load %arg4[%c0_4, %c0_5] : memref<256x256xbf16, #tpu.memory_space<vmem>>, vector<256x256xbf16>
    %cst = arith.constant dense<0.000000e+00> : vector<32x256xf32>
    %6 = tpu.matmul %4, %5, %cst {dimension_numbers = #tpu.dot_dimension_numbers<[1], [0], [0], [1], [0, 0, 1, 1], [], []>} : vector<32x256xbf16>, vector<256x256xbf16>, vector<32x256xf32> -> vector<32x256xf32>
    %7 = arith.addf %3, %6 : vector<32x256xf32>
    %c0_6 = arith.constant 0 : index
    %c0_7 = arith.constant 0 : index
    %8 = vector.load %arg10[%c0_6, %c0_7] : memref<32x256xf32, #tpu.memory_space<vmem>>, vector<32x256xf32>
    tpu.vector_store %arg10[%c0_6, %c0_7], %7 {strides = array<i32>} : memref<32x256xf32, #tpu.memory_space<vmem>>, vector<32x256xf32>,
    %c0_i32_8 = arith.constant 0 : i32
    %9 = arith.cmpi eq, %arg2, %c0_i32_8 : i32
    %10 = arith.extui %9 : i1 to i32
    %c0_i32_9 = arith.constant 0 : i32
    %11 = arith.cmpi ne, %10, %c0_i32_9 : i32
    scf.if %11 {
      %c0_10 = arith.constant 0 : index
      %c0_11 = arith.constant 0 : index
      %12 = vector.load %arg10[%c0_10, %c0_11] : memref<32x256xf32, #tpu.memory_space<vmem>>, vector<32x256xf32>
      %c0_12 = arith.constant 0 : index
      %c0_13 = arith.constant 0 : index
      %13 = vector.load %arg5[%c0_12, %c0_13] : memref<1x256xf32, #tpu.memory_space<vmem>>, vector<1x256xf32>
      %14 = vector.broadcast %13 : vector<1x256xf32> to vector<32x256xf32>
      %15 = arith.addf %12, %14 : vector<32x256xf32>
      %c0_14 = arith.constant 0 : index
      %c0_15 = arith.constant 0 : index
      %16 = vector.load %arg6[%c0_14, %c0_15] : memref<32x256xbf16, #tpu.memory_space<vmem>>, vector<32x256xbf16>
      %17 = arith.extf %16 : vector<32x256xbf16> to vector<32x256xf32>
      %18 = arith.addf %15, %17 : vector<32x256xf32>
      %cst_16 = arith.constant dense<0.000000e+00> : vector<32xf32>
      %19 = vector.multi_reduction <add>, %18, %cst_16 [1] : vector<32x256xf32> to vector<32xf32>
      %20 = vector.shape_cast %19 : vector<32xf32> to vector<32x1xf32>
      %cst_17 = arith.constant 2.560000e+02 : f32
      %21 = vector.broadcast %cst_17 : f32 to vector<32x1xf32>
      %22 = arith.divf %20, %21 : vector<32x1xf32>
      %23 = vector.broadcast %22 : vector<32x1xf32> to vector<32x256xf32>
      %24 = arith.subf %18, %23 : vector<32x256xf32>
      %25 = vector.broadcast %22 : vector<32x1xf32> to vector<32x256xf32>
      %26 = arith.subf %18, %25 : vector<32x256xf32>
      %27 = arith.mulf %24, %26 : vector<32x256xf32>
      %cst_18 = arith.constant dense<0.000000e+00> : vector<32xf32>
      %28 = vector.multi_reduction <add>, %27, %cst_18 [1] : vector<32x256xf32> to vector<32xf32>
      %29 = vector.shape_cast %28 : vector<32xf32> to vector<32x1xf32>
      %cst_19 = arith.constant 2.560000e+02 : f32
      %30 = vector.broadcast %cst_19 : f32 to vector<32x1xf32>
      %31 = arith.divf %29, %30 : vector<32x1xf32>
      %32 = vector.broadcast %22 : vector<32x1xf32> to vector<32x256xf32>
      %33 = arith.subf %18, %32 : vector<32x256xf32>
      %cst_20 = arith.constant 9.99999996E-13 : f32
      %34 = vector.broadcast %cst_20 : f32 to vector<32x1xf32>
      %35 = arith.addf %31, %34 : vector<32x1xf32>
      %36 = math.rsqrt %35 : vector<32x1xf32>
      %37 = vector.broadcast %36 : vector<32x1xf32> to vector<32x256xf32>
      %38 = arith.mulf %33, %37 : vector<32x256xf32>
      %c0_21 = arith.constant 0 : index
      %c0_22 = arith.constant 0 : index
      %39 = vector.load %arg7[%c0_21, %c0_22] : memref<1x256xf32, #tpu.memory_space<vmem>>, vector<1x256xf32>
      %40 = vector.broadcast %39 : vector<1x256xf32> to vector<32x256xf32>
      %41 = arith.mulf %38, %40 : vector<32x256xf32>
      %c0_23 = arith.constant 0 : index
      %c0_24 = arith.constant 0 : index
      %42 = vector.load %arg8[%c0_23, %c0_24] : memref<1x256xf32, #tpu.memory_space<vmem>>, vector<1x256xf32>
      %43 = vector.broadcast %42 : vector<1x256xf32> to vector<32x256xf32>
      %44 = arith.addf %41, %43 : vector<32x256xf32>
      %45 = arith.truncf %44 : vector<32x256xf32> to vector<32x256xbf16>
      %c0_25 = arith.constant 0 : index
      %c0_26 = arith.constant 0 : index
      %46 = vector.load %arg9[%c0_25, %c0_26] : memref<32x256xbf16, #tpu.memory_space<vmem>>, vector<32x256xbf16>
      tpu.vector_store %arg9[%c0_25, %c0_26], %45 {strides = array<i32>} : memref<32x256xbf16, #tpu.memory_space<vmem>>, vector<32x256xbf16>,
    } else {
    }
    return
  }
  func.func @transform_0(%arg0: i32, %arg1: i32, %arg2: i32) -> (i32, i32) {
    %c0_i32 = arith.constant 0 : i32
    return %arg0, %arg2 : i32, i32
  }
  func.func @transform_1(%arg0: i32, %arg1: i32, %arg2: i32) -> (i32, i32) {
    %c0_i32 = arith.constant 0 : i32
    return %arg2, %arg1 : i32, i32
  }
  func.func @transform_2(%arg0: i32, %arg1: i32, %arg2: i32) -> (i32, i32) {
    %c0_i32 = arith.constant 0 : i32
    %c0_i32_0 = arith.constant 0 : i32
    return %c0_i32, %arg1 : i32, i32
  }
  func.func @transform_3(%arg0: i32, %arg1: i32, %arg2: i32) -> (i32, i32) {
    %c0_i32 = arith.constant 0 : i32
    return %arg0, %arg1 : i32, i32
  }
  func.func @transform_4(%arg0: i32, %arg1: i32, %arg2: i32) -> (i32, i32) {
    %c0_i32 = arith.constant 0 : i32
    %c0_i32_0 = arith.constant 0 : i32
    return %c0_i32, %arg1 : i32, i32
  }
  func.func @transform_5(%arg0: i32, %arg1: i32, %arg2: i32) -> (i32, i32) {
    %c0_i32 = arith.constant 0 : i32
    %c0_i32_0 = arith.constant 0 : i32
    return %c0_i32, %arg1 : i32, i32
  }
  func.func @transform_6(%arg0: i32, %arg1: i32, %arg2: i32) -> (i32, i32) {
    %c0_i32 = arith.constant 0 : i32
    return %arg0, %arg1 : i32, i32
  }
}

module attributes {stable_mosaic.version = 11 : i64} {
  func.func @_dense_kernel(%arg0: i32, %arg1: i32, %arg2: i32, %arg3: memref<32x256xbf16, #tpu.memory_space<vmem>>, %arg4: memref<256x512xbf16, #tpu.memory_space<vmem>>, %arg5: memref<1x512xf32, #tpu.memory_space<vmem>>, %arg6: memref<32x512xbf16, #tpu.memory_space<vmem>>, %arg7: memref<32x512xf32, #tpu.memory_space<vmem>>) attributes {dimension_semantics = [#tpu.dimension_semantics<parallel>, #tpu.dimension_semantics<parallel>, #tpu.dimension_semantics<arbitrary>], iteration_bounds = array<i64: 1, 1, 1>, scalar_prefetch = 0 : i64, scratch_operands = 1 : i64, tpu.core_type = #tpu.core_type<tc>, window_params = [{transform_indices = @transform_0, window_bounds = array<i64: 32, 256>}, {transform_indices = @transform_1, window_bounds = array<i64: 256, 512>}, {transform_indices = @transform_2, window_bounds = array<i64: 1, 512>}, {transform_indices = @transform_3, window_bounds = array<i64: 32, 512>}]} {
    %c0_i32 = arith.constant 0 : i32
    %0 = arith.cmpi eq, %arg2, %c0_i32 : i32
    %1 = arith.extui %0 : i1 to i32
    %c0_i32_0 = arith.constant 0 : i32
    %2 = arith.cmpi ne, %1, %c0_i32_0 : i32
    scf.if %2 {
      %cst_10 = arith.constant 0.000000e+00 : f32
      %12 = vector.broadcast %cst_10 : f32 to vector<32x512xf32>
      %c0_11 = arith.constant 0 : index
      %c0_12 = arith.constant 0 : index
      %13 = vector.load %arg7[%c0_11, %c0_12] : memref<32x512xf32, #tpu.memory_space<vmem>>, vector<32x512xf32>
      tpu.vector_store %arg7[%c0_11, %c0_12], %12 {strides = array<i32>} : memref<32x512xf32, #tpu.memory_space<vmem>>, vector<32x512xf32>,
    } else {
    }
    %c0 = arith.constant 0 : index
    %c0_1 = arith.constant 0 : index
    %3 = vector.load %arg7[%c0, %c0_1] : memref<32x512xf32, #tpu.memory_space<vmem>>, vector<32x512xf32>
    %c0_2 = arith.constant 0 : index
    %c0_3 = arith.constant 0 : index
    %4 = vector.load %arg3[%c0_2, %c0_3] : memref<32x256xbf16, #tpu.memory_space<vmem>>, vector<32x256xbf16>
    %c0_4 = arith.constant 0 : index
    %c0_5 = arith.constant 0 : index
    %5 = vector.load %arg4[%c0_4, %c0_5] : memref<256x512xbf16, #tpu.memory_space<vmem>>, vector<256x512xbf16>
    %cst = arith.constant dense<0.000000e+00> : vector<32x512xf32>
    %6 = tpu.matmul %4, %5, %cst {dimension_numbers = #tpu.dot_dimension_numbers<[1], [0], [0], [1], [0, 0, 1, 1], [], []>} : vector<32x256xbf16>, vector<256x512xbf16>, vector<32x512xf32> -> vector<32x512xf32>
    %7 = arith.addf %3, %6 : vector<32x512xf32>
    %c0_6 = arith.constant 0 : index
    %c0_7 = arith.constant 0 : index
    %8 = vector.load %arg7[%c0_6, %c0_7] : memref<32x512xf32, #tpu.memory_space<vmem>>, vector<32x512xf32>
    tpu.vector_store %arg7[%c0_6, %c0_7], %7 {strides = array<i32>} : memref<32x512xf32, #tpu.memory_space<vmem>>, vector<32x512xf32>,
    %c0_i32_8 = arith.constant 0 : i32
    %9 = arith.cmpi eq, %arg2, %c0_i32_8 : i32
    %10 = arith.extui %9 : i1 to i32
    %c0_i32_9 = arith.constant 0 : i32
    %11 = arith.cmpi ne, %10, %c0_i32_9 : i32
    scf.if %11 {
      %c0_10 = arith.constant 0 : index
      %c0_11 = arith.constant 0 : index
      %12 = vector.load %arg7[%c0_10, %c0_11] : memref<32x512xf32, #tpu.memory_space<vmem>>, vector<32x512xf32>
      %c0_12 = arith.constant 0 : index
      %c0_13 = arith.constant 0 : index
      %13 = vector.load %arg5[%c0_12, %c0_13] : memref<1x512xf32, #tpu.memory_space<vmem>>, vector<1x512xf32>
      %14 = vector.broadcast %13 : vector<1x512xf32> to vector<32x512xf32>
      %15 = arith.addf %12, %14 : vector<32x512xf32>
      %16 = arith.mulf %15, %15 : vector<32x512xf32>
      %17 = arith.mulf %15, %16 : vector<32x512xf32>
      %cst_14 = arith.constant 4.471500e-02 : f32
      %18 = vector.broadcast %cst_14 : f32 to vector<32x512xf32>
      %19 = arith.mulf %18, %17 : vector<32x512xf32>
      %20 = arith.addf %15, %19 : vector<32x512xf32>
      %cst_15 = arith.constant 0.797884583 : f32
      %21 = vector.broadcast %cst_15 : f32 to vector<32x512xf32>
      %22 = arith.mulf %21, %20 : vector<32x512xf32>
      %23 = math.tanh %22 : vector<32x512xf32>
      %cst_16 = arith.constant 1.000000e+00 : f32
      %24 = vector.broadcast %cst_16 : f32 to vector<32x512xf32>
      %25 = arith.addf %24, %23 : vector<32x512xf32>
      %cst_17 = arith.constant 5.000000e-01 : f32
      %26 = vector.broadcast %cst_17 : f32 to vector<32x512xf32>
      %27 = arith.mulf %26, %25 : vector<32x512xf32>
      %28 = arith.mulf %15, %27 : vector<32x512xf32>
      %29 = arith.truncf %28 : vector<32x512xf32> to vector<32x512xbf16>
      %c0_18 = arith.constant 0 : index
      %c0_19 = arith.constant 0 : index
      %30 = vector.load %arg6[%c0_18, %c0_19] : memref<32x512xbf16, #tpu.memory_space<vmem>>, vector<32x512xbf16>
      tpu.vector_store %arg6[%c0_18, %c0_19], %29 {strides = array<i32>} : memref<32x512xbf16, #tpu.memory_space<vmem>>, vector<32x512xbf16>,
    } else {
    }
    return
  }
  func.func @transform_0(%arg0: i32, %arg1: i32, %arg2: i32) -> (i32, i32) {
    %c0_i32 = arith.constant 0 : i32
    return %arg0, %arg2 : i32, i32
  }
  func.func @transform_1(%arg0: i32, %arg1: i32, %arg2: i32) -> (i32, i32) {
    %c0_i32 = arith.constant 0 : i32
    return %arg2, %arg1 : i32, i32
  }
  func.func @transform_2(%arg0: i32, %arg1: i32, %arg2: i32) -> (i32, i32) {
    %c0_i32 = arith.constant 0 : i32
    %c0_i32_0 = arith.constant 0 : i32
    return %c0_i32, %arg1 : i32, i32
  }
  func.func @transform_3(%arg0: i32, %arg1: i32, %arg2: i32) -> (i32, i32) {
    %c0_i32 = arith.constant 0 : i32
    return %arg0, %arg1 : i32, i32
  }
}

module attributes {stable_mosaic.version = 11 : i64} {
  func.func @_dense_kernel(%arg0: i32, %arg1: i32, %arg2: i32, %arg3: memref<32x512xbf16, #tpu.memory_space<vmem>>, %arg4: memref<512x256xbf16, #tpu.memory_space<vmem>>, %arg5: memref<1x256xf32, #tpu.memory_space<vmem>>, %arg6: memref<32x256xbf16, #tpu.memory_space<vmem>>, %arg7: memref<1x256xf32, #tpu.memory_space<vmem>>, %arg8: memref<1x256xf32, #tpu.memory_space<vmem>>, %arg9: memref<32x256xbf16, #tpu.memory_space<vmem>>, %arg10: memref<32x256xf32, #tpu.memory_space<vmem>>) attributes {dimension_semantics = [#tpu.dimension_semantics<parallel>, #tpu.dimension_semantics<parallel>, #tpu.dimension_semantics<arbitrary>], iteration_bounds = array<i64: 1, 1, 1>, scalar_prefetch = 0 : i64, scratch_operands = 1 : i64, tpu.core_type = #tpu.core_type<tc>, window_params = [{transform_indices = @transform_0, window_bounds = array<i64: 32, 512>}, {transform_indices = @transform_1, window_bounds = array<i64: 512, 256>}, {transform_indices = @transform_2, window_bounds = array<i64: 1, 256>}, {transform_indices = @transform_3, window_bounds = array<i64: 32, 256>}, {transform_indices = @transform_4, window_bounds = array<i64: 1, 256>}, {transform_indices = @transform_5, window_bounds = array<i64: 1, 256>}, {transform_indices = @transform_6, window_bounds = array<i64: 32, 256>}]} {
    %c0_i32 = arith.constant 0 : i32
    %0 = arith.cmpi eq, %arg2, %c0_i32 : i32
    %1 = arith.extui %0 : i1 to i32
    %c0_i32_0 = arith.constant 0 : i32
    %2 = arith.cmpi ne, %1, %c0_i32_0 : i32
    scf.if %2 {
      %cst_10 = arith.constant 0.000000e+00 : f32
      %12 = vector.broadcast %cst_10 : f32 to vector<32x256xf32>
      %c0_11 = arith.constant 0 : index
      %c0_12 = arith.constant 0 : index
      %13 = vector.load %arg10[%c0_11, %c0_12] : memref<32x256xf32, #tpu.memory_space<vmem>>, vector<32x256xf32>
      tpu.vector_store %arg10[%c0_11, %c0_12], %12 {strides = array<i32>} : memref<32x256xf32, #tpu.memory_space<vmem>>, vector<32x256xf32>,
    } else {
    }
    %c0 = arith.constant 0 : index
    %c0_1 = arith.constant 0 : index
    %3 = vector.load %arg10[%c0, %c0_1] : memref<32x256xf32, #tpu.memory_space<vmem>>, vector<32x256xf32>
    %c0_2 = arith.constant 0 : index
    %c0_3 = arith.constant 0 : index
    %4 = vector.load %arg3[%c0_2, %c0_3] : memref<32x512xbf16, #tpu.memory_space<vmem>>, vector<32x512xbf16>
    %c0_4 = arith.constant 0 : index
    %c0_5 = arith.constant 0 : index
    %5 = vector.load %arg4[%c0_4, %c0_5] : memref<512x256xbf16, #tpu.memory_space<vmem>>, vector<512x256xbf16>
    %cst = arith.constant dense<0.000000e+00> : vector<32x256xf32>
    %6 = tpu.matmul %4, %5, %cst {dimension_numbers = #tpu.dot_dimension_numbers<[1], [0], [0], [1], [0, 0, 1, 1], [], []>} : vector<32x512xbf16>, vector<512x256xbf16>, vector<32x256xf32> -> vector<32x256xf32>
    %7 = arith.addf %3, %6 : vector<32x256xf32>
    %c0_6 = arith.constant 0 : index
    %c0_7 = arith.constant 0 : index
    %8 = vector.load %arg10[%c0_6, %c0_7] : memref<32x256xf32, #tpu.memory_space<vmem>>, vector<32x256xf32>
    tpu.vector_store %arg10[%c0_6, %c0_7], %7 {strides = array<i32>} : memref<32x256xf32, #tpu.memory_space<vmem>>, vector<32x256xf32>,
    %c0_i32_8 = arith.constant 0 : i32
    %9 = arith.cmpi eq, %arg2, %c0_i32_8 : i32
    %10 = arith.extui %9 : i1 to i32
    %c0_i32_9 = arith.constant 0 : i32
    %11 = arith.cmpi ne, %10, %c0_i32_9 : i32
    scf.if %11 {
      %c0_10 = arith.constant 0 : index
      %c0_11 = arith.constant 0 : index
      %12 = vector.load %arg10[%c0_10, %c0_11] : memref<32x256xf32, #tpu.memory_space<vmem>>, vector<32x256xf32>
      %c0_12 = arith.constant 0 : index
      %c0_13 = arith.constant 0 : index
      %13 = vector.load %arg5[%c0_12, %c0_13] : memref<1x256xf32, #tpu.memory_space<vmem>>, vector<1x256xf32>
      %14 = vector.broadcast %13 : vector<1x256xf32> to vector<32x256xf32>
      %15 = arith.addf %12, %14 : vector<32x256xf32>
      %c0_14 = arith.constant 0 : index
      %c0_15 = arith.constant 0 : index
      %16 = vector.load %arg6[%c0_14, %c0_15] : memref<32x256xbf16, #tpu.memory_space<vmem>>, vector<32x256xbf16>
      %17 = arith.extf %16 : vector<32x256xbf16> to vector<32x256xf32>
      %18 = arith.addf %15, %17 : vector<32x256xf32>
      %cst_16 = arith.constant dense<0.000000e+00> : vector<32xf32>
      %19 = vector.multi_reduction <add>, %18, %cst_16 [1] : vector<32x256xf32> to vector<32xf32>
      %20 = vector.shape_cast %19 : vector<32xf32> to vector<32x1xf32>
      %cst_17 = arith.constant 2.560000e+02 : f32
      %21 = vector.broadcast %cst_17 : f32 to vector<32x1xf32>
      %22 = arith.divf %20, %21 : vector<32x1xf32>
      %23 = vector.broadcast %22 : vector<32x1xf32> to vector<32x256xf32>
      %24 = arith.subf %18, %23 : vector<32x256xf32>
      %25 = vector.broadcast %22 : vector<32x1xf32> to vector<32x256xf32>
      %26 = arith.subf %18, %25 : vector<32x256xf32>
      %27 = arith.mulf %24, %26 : vector<32x256xf32>
      %cst_18 = arith.constant dense<0.000000e+00> : vector<32xf32>
      %28 = vector.multi_reduction <add>, %27, %cst_18 [1] : vector<32x256xf32> to vector<32xf32>
      %29 = vector.shape_cast %28 : vector<32xf32> to vector<32x1xf32>
      %cst_19 = arith.constant 2.560000e+02 : f32
      %30 = vector.broadcast %cst_19 : f32 to vector<32x1xf32>
      %31 = arith.divf %29, %30 : vector<32x1xf32>
      %32 = vector.broadcast %22 : vector<32x1xf32> to vector<32x256xf32>
      %33 = arith.subf %18, %32 : vector<32x256xf32>
      %cst_20 = arith.constant 9.99999996E-13 : f32
      %34 = vector.broadcast %cst_20 : f32 to vector<32x1xf32>
      %35 = arith.addf %31, %34 : vector<32x1xf32>
      %36 = math.rsqrt %35 : vector<32x1xf32>
      %37 = vector.broadcast %36 : vector<32x1xf32> to vector<32x256xf32>
      %38 = arith.mulf %33, %37 : vector<32x256xf32>
      %c0_21 = arith.constant 0 : index
      %c0_22 = arith.constant 0 : index
      %39 = vector.load %arg7[%c0_21, %c0_22] : memref<1x256xf32, #tpu.memory_space<vmem>>, vector<1x256xf32>
      %40 = vector.broadcast %39 : vector<1x256xf32> to vector<32x256xf32>
      %41 = arith.mulf %38, %40 : vector<32x256xf32>
      %c0_23 = arith.constant 0 : index
      %c0_24 = arith.constant 0 : index
      %42 = vector.load %arg8[%c0_23, %c0_24] : memref<1x256xf32, #tpu.memory_space<vmem>>, vector<1x256xf32>
      %43 = vector.broadcast %42 : vector<1x256xf32> to vector<32x256xf32>
      %44 = arith.addf %41, %43 : vector<32x256xf32>
      %45 = arith.truncf %44 : vector<32x256xf32> to vector<32x256xbf16>
      %c0_25 = arith.constant 0 : index
      %c0_26 = arith.constant 0 : index
      %46 = vector.load %arg9[%c0_25, %c0_26] : memref<32x256xbf16, #tpu.memory_space<vmem>>, vector<32x256xbf16>
      tpu.vector_store %arg9[%c0_25, %c0_26], %45 {strides = array<i32>} : memref<32x256xbf16, #tpu.memory_space<vmem>>, vector<32x256xbf16>,
    } else {
    }
    return
  }
  func.func @transform_0(%arg0: i32, %arg1: i32, %arg2: i32) -> (i32, i32) {
    %c0_i32 = arith.constant 0 : i32
    return %arg0, %arg2 : i32, i32
  }
  func.func @transform_1(%arg0: i32, %arg1: i32, %arg2: i32) -> (i32, i32) {
    %c0_i32 = arith.constant 0 : i32
    return %arg2, %arg1 : i32, i32
  }
  func.func @transform_2(%arg0: i32, %arg1: i32, %arg2: i32) -> (i32, i32) {
    %c0_i32 = arith.constant 0 : i32
    %c0_i32_0 = arith.constant 0 : i32
    return %c0_i32, %arg1 : i32, i32
  }
  func.func @transform_3(%arg0: i32, %arg1: i32, %arg2: i32) -> (i32, i32) {
    %c0_i32 = arith.constant 0 : i32
    return %arg0, %arg1 : i32, i32
  }
  func.func @transform_4(%arg0: i32, %arg1: i32, %arg2: i32) -> (i32, i32) {
    %c0_i32 = arith.constant 0 : i32
    %c0_i32_0 = arith.constant 0 : i32
    return %c0_i32, %arg1 : i32, i32
  }
  func.func @transform_5(%arg0: i32, %arg1: i32, %arg2: i32) -> (i32, i32) {
    %c0_i32 = arith.constant 0 : i32
    %c0_i32_0 = arith.constant 0 : i32
    return %c0_i32, %arg1 : i32, i32
  }
  func.func @transform_6(%arg0: i32, %arg1: i32, %arg2: i32) -> (i32, i32) {
    %c0_i32 = arith.constant 0 : i32
    return %arg0, %arg1 : i32, i32
  }
}

module attributes {stable_mosaic.version = 11 : i64} {
  func.func @_disc_head_kernel(%arg0: i32, %arg1: memref<32x256xbf16, #tpu.memory_space<vmem>>, %arg2: memref<256x256xbf16, #tpu.memory_space<vmem>>, %arg3: memref<1x256xf32, #tpu.memory_space<vmem>>, %arg4: memref<256x128xbf16, #tpu.memory_space<vmem>>, %arg5: memref<1x128xf32, #tpu.memory_space<vmem>>, %arg6: memref<32x128xf32, #tpu.memory_space<vmem>>) attributes {dimension_semantics = [#tpu.dimension_semantics<parallel>], iteration_bounds = array<i64: 1>, scalar_prefetch = 0 : i64, scratch_operands = 0 : i64, tpu.core_type = #tpu.core_type<tc>, window_params = [{transform_indices = @transform_0, window_bounds = array<i64: 32, 256>}, {pipeline_mode = #tpu.pipeline_mode<synchronous>, transform_indices = @transform_1, window_bounds = array<i64: 256, 256>}, {pipeline_mode = #tpu.pipeline_mode<synchronous>, transform_indices = @transform_2, window_bounds = array<i64: 1, 256>}, {pipeline_mode = #tpu.pipeline_mode<synchronous>, transform_indices = @transform_3, window_bounds = array<i64: 256, 128>}, {pipeline_mode = #tpu.pipeline_mode<synchronous>, transform_indices = @transform_4, window_bounds = array<i64: 1, 128>}, {transform_indices = @transform_5, window_bounds = array<i64: 32, 128>}]} {
    %c0 = arith.constant 0 : index
    %c0_0 = arith.constant 0 : index
    %0 = vector.load %arg1[%c0, %c0_0] : memref<32x256xbf16, #tpu.memory_space<vmem>>, vector<32x256xbf16>
    %c0_1 = arith.constant 0 : index
    %c0_2 = arith.constant 0 : index
    %1 = vector.load %arg2[%c0_1, %c0_2] : memref<256x256xbf16, #tpu.memory_space<vmem>>, vector<256x256xbf16>
    %cst = arith.constant dense<0.000000e+00> : vector<32x256xf32>
    %2 = tpu.matmul %0, %1, %cst {dimension_numbers = #tpu.dot_dimension_numbers<[1], [0], [0], [1], [0, 0, 1, 1], [], []>} : vector<32x256xbf16>, vector<256x256xbf16>, vector<32x256xf32> -> vector<32x256xf32>
    %c0_3 = arith.constant 0 : index
    %c0_4 = arith.constant 0 : index
    %3 = vector.load %arg3[%c0_3, %c0_4] : memref<1x256xf32, #tpu.memory_space<vmem>>, vector<1x256xf32>
    %4 = vector.broadcast %3 : vector<1x256xf32> to vector<32x256xf32>
    %5 = arith.addf %2, %4 : vector<32x256xf32>
    %6 = arith.mulf %5, %5 : vector<32x256xf32>
    %7 = arith.mulf %5, %6 : vector<32x256xf32>
    %cst_5 = arith.constant 4.471500e-02 : f32
    %8 = vector.broadcast %cst_5 : f32 to vector<32x256xf32>
    %9 = arith.mulf %8, %7 : vector<32x256xf32>
    %10 = arith.addf %5, %9 : vector<32x256xf32>
    %cst_6 = arith.constant 0.797884583 : f32
    %11 = vector.broadcast %cst_6 : f32 to vector<32x256xf32>
    %12 = arith.mulf %11, %10 : vector<32x256xf32>
    %13 = math.tanh %12 : vector<32x256xf32>
    %cst_7 = arith.constant 1.000000e+00 : f32
    %14 = vector.broadcast %cst_7 : f32 to vector<32x256xf32>
    %15 = arith.addf %14, %13 : vector<32x256xf32>
    %cst_8 = arith.constant 5.000000e-01 : f32
    %16 = vector.broadcast %cst_8 : f32 to vector<32x256xf32>
    %17 = arith.mulf %16, %15 : vector<32x256xf32>
    %18 = arith.mulf %5, %17 : vector<32x256xf32>
    %19 = arith.truncf %18 : vector<32x256xf32> to vector<32x256xbf16>
    %c0_9 = arith.constant 0 : index
    %c0_10 = arith.constant 0 : index
    %20 = vector.load %arg4[%c0_9, %c0_10] : memref<256x128xbf16, #tpu.memory_space<vmem>>, vector<256x128xbf16>
    %cst_11 = arith.constant dense<0.000000e+00> : vector<32x128xf32>
    %21 = tpu.matmul %19, %20, %cst_11 {dimension_numbers = #tpu.dot_dimension_numbers<[1], [0], [0], [1], [0, 0, 1, 1], [], []>} : vector<32x256xbf16>, vector<256x128xbf16>, vector<32x128xf32> -> vector<32x128xf32>
    %c0_12 = arith.constant 0 : index
    %c0_13 = arith.constant 0 : index
    %22 = vector.load %arg5[%c0_12, %c0_13] : memref<1x128xf32, #tpu.memory_space<vmem>>, vector<1x128xf32>
    %23 = vector.broadcast %22 : vector<1x128xf32> to vector<32x128xf32>
    %24 = arith.addf %21, %23 : vector<32x128xf32>
    %c0_14 = arith.constant 0 : index
    %c0_15 = arith.constant 0 : index
    %25 = vector.load %arg6[%c0_14, %c0_15] : memref<32x128xf32, #tpu.memory_space<vmem>>, vector<32x128xf32>
    tpu.vector_store %arg6[%c0_14, %c0_15], %24 {strides = array<i32>} : memref<32x128xf32, #tpu.memory_space<vmem>>, vector<32x128xf32>,
    return
  }
  func.func @transform_0(%arg0: i32) -> (i32, i32) {
    %c0_i32 = arith.constant 0 : i32
    %c0_i32_0 = arith.constant 0 : i32
    return %arg0, %c0_i32 : i32, i32
  }
  func.func @transform_1(%arg0: i32) -> (i32, i32) {
    %c0_i32 = arith.constant 0 : i32
    %c0_i32_0 = arith.constant 0 : i32
    %c0_i32_1 = arith.constant 0 : i32
    return %c0_i32, %c0_i32_0 : i32, i32
  }
  func.func @transform_2(%arg0: i32) -> (i32, i32) {
    %c0_i32 = arith.constant 0 : i32
    %c0_i32_0 = arith.constant 0 : i32
    %c0_i32_1 = arith.constant 0 : i32
    return %c0_i32, %c0_i32_0 : i32, i32
  }
  func.func @transform_3(%arg0: i32) -> (i32, i32) {
    %c0_i32 = arith.constant 0 : i32
    %c0_i32_0 = arith.constant 0 : i32
    %c0_i32_1 = arith.constant 0 : i32
    return %c0_i32, %c0_i32_0 : i32, i32
  }
  func.func @transform_4(%arg0: i32) -> (i32, i32) {
    %c0_i32 = arith.constant 0 : i32
    %c0_i32_0 = arith.constant 0 : i32
    %c0_i32_1 = arith.constant 0 : i32
    return %c0_i32, %c0_i32_0 : i32, i32
  }
  func.func @transform_5(%arg0: i32) -> (i32, i32) {
    %c0_i32 = arith.constant 0 : i32
    %c0_i32_0 = arith.constant 0 : i32
    return %arg0, %c0_i32 : i32, i32
  }
}

</mosaic_0001>

<llo_original>
// kernel: electra_model_forward.26
$region0: #{electra_model_forward.26}
  #allocation0 [shape = 'u32[]', space=smem, size = 0x4, offset = 0x4, fixed_abs, tag = 'smem constant byte address 0x4 - core index']
  #allocation1 [shape = 'u32[72,128]{1,0:T(1,128)}', space=vmem, size = 0x9000, scoped, tag = 'internal scratch']
  %s0 = inlined_call_operand.vmem [shape: bf16[32,256], index: 0, kind: input, shape index: {}]
  %s1 = inlined_call_operand.vmem [shape: f32[1,256], index: 1, kind: input, shape index: {}]
  %s2 = inlined_call_operand.vmem [shape: f32[1,256], index: 2, kind: input, shape index: {}]
  %s3 = inlined_call_operand.vmem [shape: bf16[32,256], index: 3, kind: output, shape index: {}]
  %s4 = sld [smem:[#allocation0]]
  $region22: #{electra_model_forward.26} parent=0
    _
  %s6 = ssub.s32 1, %s4
  %s7 = scalar_select 0, %s6, %s4
  // Predicated region
  $region2: #{electra_model_forward.26} parent=0 // pred_check
    _
  $region3: #{electra_model_forward.26} parent=0 // pred_check_branch
    %9 = sbr.rel (0) target = $region5
  $region4: #{electra_model_forward.26} parent=0 // pred_region
    _
  $region5: #{electra_model_forward.26} parent=0 // pred_fallthru
    _
  // Predicated region
  $region6: #{electra_model_forward.26} parent=0 // pred_check
    _
  $region7: #{electra_model_forward.26} parent=0 // pred_check_branch
    %11 = sbr.rel (0) target = $region9
  $region8: #{electra_model_forward.26} parent=0 // pred_region
    _
  $region9: #{electra_model_forward.26} parent=0 // pred_fallthru
    _
  // Predicated region
  $region10: #{electra_model_forward.26} parent=0 // pred_check
    _
  $region11: #{electra_model_forward.26} parent=0 // pred_check_branch
    %13 = sbr.rel (0) target = $region13
  $region12: #{electra_model_forward.26} parent=0 // pred_region
    _
  $region13: #{electra_model_forward.26} parent=0 // pred_fallthru
    _
  %v14 = vld [vmem:[%s0] sm:$0xff]
  %v15 = vld [vmem:[%s0 + $0x8] sm:$0xff]
  %v16 = vld [vmem:[%s0 + $0x10] sm:$0xff]
  %v17 = vld [vmem:[%s0 + $0x18] sm:$0xff]
  %v18 = vunpack.c.l.bf16 %v14
  %v19 = vunpack.c.h.bf16 %v14
  %v20 = vunpack.c.l.bf16 %v15
  %v21 = vunpack.c.h.bf16 %v15
  %v22 = vunpack.c.l.bf16 %v16
  %v23 = vunpack.c.h.bf16 %v16
  %v24 = vunpack.c.l.bf16 %v17
  %v25 = vunpack.c.h.bf16 %v17
  %v26 = vadd.f32 %v18, %v19
  %27 = vadd.xlane.f32.xlu0 %v26
  %v28 = vpop.xlane.xlu0 %27
  %v29 = vadd.f32 %v20, %v21
  %30 = vadd.xlane.f32.xlu0 %v29
  %v31 = vpop.xlane.xlu0 %30
  %v32 = vadd.f32 %v22, %v23
  %33 = vadd.xlane.f32.xlu0 %v32
  %v34 = vpop.xlane.xlu0 %33
  %v35 = vadd.f32 %v24, %v25
  %36 = vadd.xlane.f32.xlu0 %v35
  %v37 = vpop.xlane.xlu0 %36
  %v38 = vrcp.pop 256.0
  %v39 = vmul.f32 256.0, %v38
  %v40 = vsub.f32 1.0, %v39
  %v41 = vmul.f32 %v38, %v40
  %v42 = vadd.f32 %v38, %v41
  %vm43 = vweird.f32 %v38
  %v44 = vsel %vm43, %v38, %v42
  %v45 = vmul.f32 %v28, %v44
  %v46 = vmul.f32 %v31, %v44
  %v47 = vmul.f32 %v34, %v44
  %v48 = vmul.f32 %v37, %v44
  %v49 = vsub.f32 %v18, %v45
  %v50 = vsub.f32 %v19, %v45
  %v51 = vsub.f32 %v20, %v46
  %v52 = vsub.f32 %v21, %v46
  %v53 = vsub.f32 %v22, %v47
  %v54 = vsub.f32 %v23, %v47
  %v55 = vsub.f32 %v24, %v48
  %v56 = vsub.f32 %v25, %v48
  %v57 = vmul.f32 %v49, %v49
  %v58 = vmul.f32 %v50, %v50
  %v59 = vmul.f32 %v51, %v51
  %v60 = vmul.f32 %v52, %v52
  %v61 = vmul.f32 %v53, %v53
  %v62 = vmul.f32 %v54, %v54
  %v63 = vmul.f32 %v55, %v55
  %v64 = vmul.f32 %v56, %v56
  %v65 = vadd.f32 %v57, %v58
  %66 = vadd.xlane.f32.xlu0 %v65
  %v67 = vpop.xlane.xlu0 %66
  %v68 = vadd.f32 %v59, %v60
  %69 = vadd.xlane.f32.xlu0 %v68
  %v70 = vpop.xlane.xlu0 %69
  %v71 = vadd.f32 %v61, %v62
  %72 = vadd.xlane.f32.xlu0 %v71
  %v73 = vpop.xlane.xlu0 %72
  %v74 = vadd.f32 %v63, %v64
  %75 = vadd.xlane.f32.xlu0 %v74
  %v76 = vpop.xlane.xlu0 %75
  %v77 = vmul.f32 %v67, %v44
  %v78 = vmul.f32 %v70, %v44
  %v79 = vmul.f32 %v73, %v44
  %v80 = vmul.f32 %v76, %v44
  %v81 = vadd.f32 %v77, 1e-12
  %v82 = vadd.f32 %v78, 1e-12
  %v83 = vadd.f32 %v79, 1e-12
  %v84 = vadd.f32 %v80, 1e-12
  %v85 = vrsqrt.pop %v81
  %v86 = vmul.f32 %v85, %v81
  %v87 = vmul.f32 %v86, %v85
  %v88 = vmul.f32 0.5, %v87
  %v89 = vsub.f32 1.5, %v88
  %v90 = vmul.f32 %v85, %v89
  %vm91 = vweird.f32 %v81
  %vm92 = vweird.f32 %v85
  %vm93 = vmor %vm91, %vm92
  %v94 = vsel %vm93, %v85, %v90
  %v95 = vrsqrt.pop %v82
  %v96 = vmul.f32 %v95, %v82
  %v97 = vmul.f32 %v96, %v95
  %v98 = vmul.f32 0.5, %v97
  %v99 = vsub.f32 1.5, %v98
  %v100 = vmul.f32 %v95, %v99
  %vm101 = vweird.f32 %v82
  %vm102 = vweird.f32 %v95
  %vm103 = vmor %vm101, %vm102
  %v104 = vsel %vm103, %v95, %v100
  %v105 = vrsqrt.pop %v83
  %v106 = vmul.f32 %v105, %v83
  %v107 = vmul.f32 %v106, %v105
  %v108 = vmul.f32 0.5, %v107
  %v109 = vsub.f32 1.5, %v108
  %v110 = vmul.f32 %v105, %v109
  %vm111 = vweird.f32 %v83
  %vm112 = vweird.f32 %v105
  %vm113 = vmor %vm111, %vm112
  %v114 = vsel %vm113, %v105, %v110
  %v115 = vrsqrt.pop %v84
  %v116 = vmul.f32 %v115, %v84
  %v117 = vmul.f32 %v116, %v115
  %v118 = vmul.f32 0.5, %v117
  %v119 = vsub.f32 1.5, %v118
  %v120 = vmul.f32 %v115, %v119
  %vm121 = vweird.f32 %v84
  %vm122 = vweird.f32 %v115
  %vm123 = vmor %vm121, %vm122
  %v124 = vsel %vm123, %v115, %v120
  %v125 = vmul.f32 %v49, %v94
  %v126 = vmul.f32 %v50, %v94
  %v127 = vmul.f32 %v51, %v104
  %v128 = vmul.f32 %v52, %v104
  %v129 = vmul.f32 %v53, %v114
  %v130 = vmul.f32 %v54, %v114
  %v131 = vmul.f32 %v55, %v124
  %v132 = vmul.f32 %v56, %v124
  %v133 = vld [vmem:[%s1] sm:$0x3]
  %v135 = vperm.slane %v133, 0
  %v136 = vperm.slane %v133, 1
  %v139 = vmul.f32 %v125, %v135
  %v140 = vmul.f32 %v126, %v136
  %v141 = vmul.f32 %v127, %v135
  %v142 = vmul.f32 %v128, %v136
  %v143 = vmul.f32 %v129, %v135
  %v144 = vmul.f32 %v130, %v136
  %v145 = vmul.f32 %v131, %v135
  %v146 = vmul.f32 %v132, %v136
  %v147 = vld [vmem:[%s2] sm:$0x3]
  %v149 = vperm.slane %v147, 0
  %v150 = vperm.slane %v147, 1
  %v153 = vadd.f32 %v139, %v149
  %v154 = vadd.f32 %v140, %v150
  %v155 = vadd.f32 %v141, %v149
  %v156 = vadd.f32 %v142, %v150
  %v157 = vadd.f32 %v143, %v149
  %v158 = vadd.f32 %v144, %v150
  %v159 = vadd.f32 %v145, %v149
  %v160 = vadd.f32 %v146, %v150
  %v161 = vpack.c.bf16 %v154, %v153
  %v162 = vpack.c.bf16 %v156, %v155
  %v163 = vpack.c.bf16 %v158, %v157
  %v164 = vpack.c.bf16 %v160, %v159
  %165 = vst [vmem:[%s3] sm:$0xff] %v161
  %166 = vst [vmem:[%s3 + $0x8] sm:$0xff] %v162
  %167 = vst [vmem:[%s3 + $0x10] sm:$0xff] %v163
  %168 = vst [vmem:[%s3 + $0x18] sm:$0xff] %v164
  // Predicated region
  $region14: #{electra_model_forward.26} parent=0 // pred_check
    _
  $region15: #{electra_model_forward.26} parent=0 // pred_check_branch
    %170 = sbr.rel (0) target = $region17
  $region16: #{electra_model_forward.26} parent=0 // pred_region
    _
  $region17: #{electra_model_forward.26} parent=0 // pred_fallthru
    _
  // Predicated region
  $region18: #{electra_model_forward.26} parent=0 // pred_check
    _
  $region19: #{electra_model_forward.26} parent=0 // pred_check_branch
    %172 = sbr.rel (0) target = $region21
  $region20: #{electra_model_forward.26} parent=0 // pred_region
    _
  $region21: #{electra_model_forward.26} parent=0 // pred_fallthru
    _

// kernel: electra_model_forward.27
$region0: #{electra_model_forward.27}
  #allocation0 [shape = 'u32[]', space=smem, size = 0x4, offset = 0x4, fixed_abs, tag = 'smem constant byte address 0x4 - core index']
  #allocation1 [shape = 'u32[72,128]{1,0:T(1,128)}', space=vmem, size = 0x9000, scoped, tag = 'internal scratch']
  #allocation2 [shape = 'f32[32,128]{1,0:T(8,128)}', space=vmem, size = 0x4000, scoped, tag = 'scratch operand']
  %s0 = inlined_call_operand.vmem [shape: bf16[32,256], index: 0, kind: input, shape index: {}]
  %s1 = inlined_call_operand.vmem [shape: bf16[256,128], index: 1, kind: input, shape index: {}]
  %s2 = inlined_call_operand.vmem [shape: f32[1,128], index: 2, kind: input, shape index: {}]
  %s3 = inlined_call_operand.vmem [shape: bf16[32,128], index: 3, kind: output, shape index: {}]
  %s4 = sld [smem:[#allocation0]]
  $region30: #{electra_model_forward.27} parent=0
    _
  %s6 = ssub.s32 1, %s4
  %s7 = scalar_select 0, %s6, %s4
  // Predicated region
  $region2: #{electra_model_forward.27} parent=0 // pred_check
    _
  $region3: #{electra_model_forward.27} parent=0 // pred_check_branch
    %9 = sbr.rel (0) target = $region5
  $region4: #{electra_model_forward.27} parent=0 // pred_region
    _
  $region5: #{electra_model_forward.27} parent=0 // pred_fallthru
    _
  // Predicated region
  $region6: #{electra_model_forward.27} parent=0 // pred_check
    _
  $region7: #{electra_model_forward.27} parent=0 // pred_check_branch
    %11 = sbr.rel (0) target = $region9
  $region8: #{electra_model_forward.27} parent=0 // pred_region
    _
  $region9: #{electra_model_forward.27} parent=0 // pred_fallthru
    _
  // Predicated region
  $region10: #{electra_model_forward.27} parent=0 // pred_check
    _
  $region11: #{electra_model_forward.27} parent=0 // pred_check_branch
    %13 = sbr.rel (0) target = $region13
  $region12: #{electra_model_forward.27} parent=0 // pred_region
    _
  $region13: #{electra_model_forward.27} parent=0 // pred_fallthru
    _
  %p14 = scmp.eq.s32.totalorder 0, 0
  // Predicated region
  $region14: #{electra_model_forward.27} parent=0 // pred_check
    %p15 = pneg %p14
  $region15: #{electra_model_forward.27} parent=0 // pred_check_branch
    %17 = sbr.rel (%p15) target = $region17
  $region16: #{electra_model_forward.27} parent=0 // pred_region
    %18 = vst [vmem:[#allocation2] sm:$0xff] 0.0
    %19 = vst [vmem:[#allocation2 + $0x8] sm:$0xff] 0.0
    %20 = vst [vmem:[#allocation2 + $0x10] sm:$0xff] 0.0
    %21 = vst [vmem:[#allocation2 + $0x18] sm:$0xff] 0.0
  $region17: #{electra_model_forward.27} parent=0 // pred_fallthru
    _
  %v22 = vld [vmem:[#allocation2] sm:$0xff]
  %v23 = vld [vmem:[#allocation2 + $0x8] sm:$0xff]
  %v24 = vld [vmem:[#allocation2 + $0x10] sm:$0xff]
  %v25 = vld [vmem:[#allocation2 + $0x18] sm:$0xff]
  %v26 = vld [vmem:[%s0] sm:$0xff]
  %v27 = vld [vmem:[%s0 + $0x8] sm:$0xff]
  %v28 = vld [vmem:[%s0 + $0x10] sm:$0xff]
  %v29 = vld [vmem:[%s0 + $0x18] sm:$0xff]
  %v30 = vld [vmem:[%s1] sm:$0xf]
  %v31 = vld [vmem:[%s1 + $0x4] sm:$0xf]
  %v32 = vld [vmem:[%s1 + $0x8] sm:$0xf]
  %v33 = vld [vmem:[%s1 + $0xc] sm:$0xf]
  %v34 = vld [vmem:[%s1 + $0x10] sm:$0xf]
  %v35 = vld [vmem:[%s1 + $0x14] sm:$0xf]
  %v36 = vld [vmem:[%s1 + $0x18] sm:$0xf]
  %v37 = vld [vmem:[%s1 + $0x1c] sm:$0xf]
  %v38 = vld [vmem:[%s1 + $0x20] sm:$0xf]
  %v39 = vld [vmem:[%s1 + $0x24] sm:$0xf]
  %v40 = vld [vmem:[%s1 + $0x28] sm:$0xf]
  %v41 = vld [vmem:[%s1 + $0x2c] sm:$0xf]
  %v42 = vld [vmem:[%s1 + $0x30] sm:$0xf]
  %v43 = vld [vmem:[%s1 + $0x34] sm:$0xf]
  %v44 = vld [vmem:[%s1 + $0x38] sm:$0xf]
  %v45 = vld [vmem:[%s1 + $0x3c] sm:$0xf]
  %v46 = vld [vmem:[%s1 + $0x40] sm:$0xf]
  %v47 = vld [vmem:[%s1 + $0x44] sm:$0xf]
  %v48 = vld [vmem:[%s1 + $0x48] sm:$0xf]
  %v49 = vld [vmem:[%s1 + $0x4c] sm:$0xf]
  %v50 = vld [vmem:[%s1 + $0x50] sm:$0xf]
  %v51 = vld [vmem:[%s1 + $0x54] sm:$0xf]
  %v52 = vld [vmem:[%s1 + $0x58] sm:$0xf]
  %v53 = vld [vmem:[%s1 + $0x5c] sm:$0xf]
  %v54 = vld [vmem:[%s1 + $0x60] sm:$0xf]
  %v55 = vld [vmem:[%s1 + $0x64] sm:$0xf]
  %v56 = vld [vmem:[%s1 + $0x68] sm:$0xf]
  %v57 = vld [vmem:[%s1 + $0x6c] sm:$0xf]
  %v58 = vld [vmem:[%s1 + $0x70] sm:$0xf]
  %v59 = vld [vmem:[%s1 + $0x74] sm:$0xf]
  %v60 = vld [vmem:[%s1 + $0x78] sm:$0xf]
  %v61 = vld [vmem:[%s1 + $0x7c] sm:$0xf]
  %v66 = vunpack.c.l.b16 %v26
  %v67 = vunpack.c.h.b16 %v26
  %v68 = vunpack.c.l.b16 %v27
  %v69 = vunpack.c.h.b16 %v27
  %v70 = vunpack.c.l.b16 %v28
  %v71 = vunpack.c.h.b16 %v28
  %v72 = vunpack.c.l.b16 %v29
  %v73 = vunpack.c.h.b16 %v29
  %v74 = vpack.c.b16 %v68, %v66
  %v75 = vpack.c.b16 %v69, %v67
  %v76 = vpack.c.b16 %v72, %v70
  %v77 = vpack.c.b16 %v73, %v71
  %v114 = vunpack.c.l.b16 %v30
  %v115 = vunpack.c.l.b16 %v31
  %v116 = vunpack.c.l.b16 %v32
  %v117 = vunpack.c.l.b16 %v33
  %v118 = vunpack.c.l.b16 %v34
  %v119 = vunpack.c.l.b16 %v35
  %v120 = vunpack.c.l.b16 %v36
  %v121 = vunpack.c.l.b16 %v37
  %v122 = vunpack.c.l.b16 %v38
  %v123 = vunpack.c.l.b16 %v39
  %v124 = vunpack.c.l.b16 %v40
  %v125 = vunpack.c.l.b16 %v41
  %v126 = vunpack.c.l.b16 %v42
  %v127 = vunpack.c.l.b16 %v43
  %v128 = vunpack.c.l.b16 %v44
  %v129 = vunpack.c.l.b16 %v45
  %v130 = vunpack.c.l.b16 %v46
  %v131 = vunpack.c.l.b16 %v47
  %v132 = vunpack.c.l.b16 %v48
  %v133 = vunpack.c.l.b16 %v49
  %v134 = vunpack.c.l.b16 %v50
  %v135 = vunpack.c.l.b16 %v51
  %v136 = vunpack.c.l.b16 %v52
  %v137 = vunpack.c.l.b16 %v53
  %v138 = vunpack.c.l.b16 %v54
  %v139 = vunpack.c.l.b16 %v55
  %v140 = vunpack.c.l.b16 %v56
  %v141 = vunpack.c.l.b16 %v57
  %v142 = vunpack.c.l.b16 %v58
  %v143 = vunpack.c.l.b16 %v59
  %v144 = vunpack.c.l.b16 %v60
  %v145 = vunpack.c.l.b16 %v61
  %v146 = vpack.c.b16 %v115, %v114
  %v147 = vpack.c.b16 %v117, %v116
  %v148 = vpack.c.b16 %v119, %v118
  %v149 = vpack.c.b16 %v121, %v120
  %v150 = vpack.c.b16 %v123, %v122
  %v151 = vpack.c.b16 %v125, %v124
  %v152 = vpack.c.b16 %v127, %v126
  %v153 = vpack.c.b16 %v129, %v128
  %v154 = vpack.c.b16 %v131, %v130
  %v155 = vpack.c.b16 %v133, %v132
  %v156 = vpack.c.b16 %v135, %v134
  %v157 = vpack.c.b16 %v137, %v136
  %v158 = vpack.c.b16 %v139, %v138
  %v159 = vpack.c.b16 %v141, %v140
  %v160 = vpack.c.b16 %v143, %v142
  %v161 = vpack.c.b16 %v145, %v144
  %178 = vmatpush.bf16.msra.mxu0 %v153
  %179 = vmatpush.bf16.msra.mxu0 %v152
  %180 = vmatpush.bf16.msra.mxu0 %v151
  %181 = vmatpush.bf16.msra.mxu0 %v150
  %182 = vmatpush.bf16.msra.mxu0 %v149
  %183 = vmatpush.bf16.msra.mxu0 %v148
  %184 = vmatpush.bf16.msra.mxu0 %v147
  %185 = vmatpush.bf16.msra.mxu0 %v146
  %186 = vmatmul.bf16.gmra.mxu0 %v74
  %v187 = vpop.f32.mrf.mxu0
  %v188 = vadd.f32 0.0, %v187
  %v189 = vpop.f32.mrf.mxu0
  %v190 = vadd.f32 0.0, %v189
  %191 = vmatmul.bf16.gmra.mxu0 %v76
  %v192 = vpop.f32.mrf.mxu0
  %v193 = vadd.f32 0.0, %v192
  %v194 = vpop.f32.mrf.mxu0
  %v195 = vadd.f32 0.0, %v194
  %196 = vdwg.mxu0
  %197 = vmatpush.bf16.msra.mxu0 %v161
  %198 = vmatpush.bf16.msra.mxu0 %v160
  %199 = vmatpush.bf16.msra.mxu0 %v159
  %200 = vmatpush.bf16.msra.mxu0 %v158
  %201 = vmatpush.bf16.msra.mxu0 %v157
  %202 = vmatpush.bf16.msra.mxu0 %v156
  %203 = vmatpush.bf16.msra.mxu0 %v155
  %204 = vmatpush.bf16.msra.mxu0 %v154
  %205 = vmatmul.bf16.gmra.mxu0 %v75
  %v206 = vpop.f32.mrf.mxu0
  %v207 = vadd.f32 %v188, %v206
  %v208 = vpop.f32.mrf.mxu0
  %v209 = vadd.f32 %v190, %v208
  %210 = vmatmul.bf16.gmra.mxu0 %v77
  %v211 = vpop.f32.mrf.mxu0
  %v212 = vadd.f32 %v193, %v211
  %v213 = vpop.f32.mrf.mxu0
  %v214 = vadd.f32 %v195, %v213
  %215 = vdwg.mxu0
  %v216 = vadd.f32 %v22, %v207
  %v217 = vadd.f32 %v23, %v209
  %v218 = vadd.f32 %v24, %v212
  %v219 = vadd.f32 %v25, %v214
  %220 = vst [vmem:[#allocation2] sm:$0xff] %v216
  %221 = vst [vmem:[#allocation2 + $0x8] sm:$0xff] %v217
  %222 = vst [vmem:[#allocation2 + $0x10] sm:$0xff] %v218
  %223 = vst [vmem:[#allocation2 + $0x18] sm:$0xff] %v219
  // Predicated region
  $region18: #{electra_model_forward.27} parent=0 // pred_check
    %p224 = pneg %p14
  $region19: #{electra_model_forward.27} parent=0 // pred_check_branch
    %226 = sbr.rel (%p224) target = $region21
  $region20: #{electra_model_forward.27} parent=0 // pred_region
    %v227 = vld [vmem:[#allocation2] sm:$0xff]
    %v228 = vld [vmem:[#allocation2 + $0x8] sm:$0xff]
    %v229 = vld [vmem:[#allocation2 + $0x10] sm:$0xff]
    %v230 = vld [vmem:[#allocation2 + $0x18] sm:$0xff]
    %v231 = vld [vmem:[%s2] sm:$0x1]
    %v233 = vperm.slane %v231, 0
    %v235 = vadd.f32 %v227, %v233
    %v236 = vadd.f32 %v228, %v233
    %v237 = vadd.f32 %v229, %v233
    %v238 = vadd.f32 %v230, %v233
    %v239 = vpack.c.bf16 %v235, %v235
    %v240 = vpack.c.bf16 %v236, %v236
    %v241 = vpack.c.bf16 %v237, %v237
    %v242 = vpack.c.bf16 %v238, %v238
    %243 = vst [vmem:[%s3] sm:$0xf] %v239
    %244 = vst [vmem:[%s3 + $0x4] sm:$0xf] %v240
    %245 = vst [vmem:[%s3 + $0x8] sm:$0xf] %v241
    %246 = vst [vmem:[%s3 + $0xc] sm:$0xf] %v242
  $region21: #{electra_model_forward.27} parent=0 // pred_fallthru
    _
  // Predicated region
  $region22: #{electra_model_forward.27} parent=0 // pred_check
    _
  $region23: #{electra_model_forward.27} parent=0 // pred_check_branch
    %248 = sbr.rel (0) target = $region25
  $region24: #{electra_model_forward.27} parent=0 // pred_region
    _
  $region25: #{electra_model_forward.27} parent=0 // pred_fallthru
    _
  // Predicated region
  $region26: #{electra_model_forward.27} parent=0 // pred_check
    _
  $region27: #{electra_model_forward.27} parent=0 // pred_check_branch
    %250 = sbr.rel (0) target = $region29
  $region28: #{electra_model_forward.27} parent=0 // pred_region
    _
  $region29: #{electra_model_forward.27} parent=0 // pred_fallthru
    _

// kernel: electra_model_forward.28
$region0: #{electra_model_forward.28}
  #allocation0 [shape = 'u32[]', space=smem, size = 0x4, offset = 0x4, fixed_abs, tag = 'smem constant byte address 0x4 - core index']
  #allocation1 [shape = 'u32[72,128]{1,0:T(1,128)}', space=vmem, size = 0x9000, scoped, tag = 'internal scratch']
  #allocation2 [shape = 'f32[32,384]{1,0:T(8,128)}', space=vmem, size = 0xc000, scoped, tag = 'scratch operand']
  %s0 = inlined_call_operand.vmem [shape: bf16[32,128], index: 0, kind: input, shape index: {}]
  %s1 = inlined_call_operand.vmem [shape: bf16[128,384], index: 1, kind: input, shape index: {}]
  %s2 = inlined_call_operand.vmem [shape: f32[1,384], index: 2, kind: input, shape index: {}]
  %s3 = inlined_call_operand.vmem [shape: bf16[32,384], index: 3, kind: output, shape index: {}]
  %s4 = sld [smem:[#allocation0]]
  $region30: #{electra_model_forward.28} parent=0
    _
  %s6 = ssub.s32 1, %s4
  %s7 = scalar_select 0, %s6, %s4
  // Predicated region
  $region2: #{electra_model_forward.28} parent=0 // pred_check
    _
  $region3: #{electra_model_forward.28} parent=0 // pred_check_branch
    %9 = sbr.rel (0) target = $region5
  $region4: #{electra_model_forward.28} parent=0 // pred_region
    _
  $region5: #{electra_model_forward.28} parent=0 // pred_fallthru
    _
  // Predicated region
  $region6: #{electra_model_forward.28} parent=0 // pred_check
    _
  $region7: #{electra_model_forward.28} parent=0 // pred_check_branch
    %11 = sbr.rel (0) target = $region9
  $region8: #{electra_model_forward.28} parent=0 // pred_region
    _
  $region9: #{electra_model_forward.28} parent=0 // pred_fallthru
    _
  // Predicated region
  $region10: #{electra_model_forward.28} parent=0 // pred_check
    _
  $region11: #{electra_model_forward.28} parent=0 // pred_check_branch
    %13 = sbr.rel (0) target = $region13
  $region12: #{electra_model_forward.28} parent=0 // pred_region
    _
  $region13: #{electra_model_forward.28} parent=0 // pred_fallthru
    _
  %p14 = scmp.eq.s32.totalorder 0, 0
  // Predicated region
  $region14: #{electra_model_forward.28} parent=0 // pred_check
    %p15 = pneg %p14
  $region15: #{electra_model_forward.28} parent=0 // pred_check_branch
    %17 = sbr.rel (%p15) target = $region17
  $region16: #{electra_model_forward.28} parent=0 // pred_region
    %18 = vst [vmem:[#allocation2] sm:$0xff] 0.0
    %19 = vst [vmem:[#allocation2 + $0x8] sm:$0xff] 0.0
    %20 = vst [vmem:[#allocation2 + $0x10] sm:$0xff] 0.0
    %21 = vst [vmem:[#allocation2 + $0x18] sm:$0xff] 0.0
    %22 = vst [vmem:[#allocation2 + $0x20] sm:$0xff] 0.0
    %23 = vst [vmem:[#allocation2 + $0x28] sm:$0xff] 0.0
    %24 = vst [vmem:[#allocation2 + $0x30] sm:$0xff] 0.0
    %25 = vst [vmem:[#allocation2 + $0x38] sm:$0xff] 0.0
    %26 = vst [vmem:[#allocation2 + $0x40] sm:$0xff] 0.0
    %27 = vst [vmem:[#allocation2 + $0x48] sm:$0xff] 0.0
    %28 = vst [vmem:[#allocation2 + $0x50] sm:$0xff] 0.0
    %29 = vst [vmem:[#allocation2 + $0x58] sm:$0xff] 0.0
  $region17: #{electra_model_forward.28} parent=0 // pred_fallthru
    _
  %v30 = vld [vmem:[#allocation2] sm:$0xff]
  %v31 = vld [vmem:[#allocation2 + $0x8] sm:$0xff]
  %v32 = vld [vmem:[#allocation2 + $0x10] sm:$0xff]
  %v33 = vld [vmem:[#allocation2 + $0x18] sm:$0xff]
  %v34 = vld [vmem:[#allocation2 + $0x20] sm:$0xff]
  %v35 = vld [vmem:[#allocation2 + $0x28] sm:$0xff]
  %v36 = vld [vmem:[#allocation2 + $0x30] sm:$0xff]
  %v37 = vld [vmem:[#allocation2 + $0x38] sm:$0xff]
  %v38 = vld [vmem:[#allocation2 + $0x40] sm:$0xff]
  %v39 = vld [vmem:[#allocation2 + $0x48] sm:$0xff]
  %v40 = vld [vmem:[#allocation2 + $0x50] sm:$0xff]
  %v41 = vld [vmem:[#allocation2 + $0x58] sm:$0xff]
  %v42 = vld [vmem:[%s0] sm:$0xf]
  %v43 = vld [vmem:[%s0 + $0x4] sm:$0xf]
  %v44 = vld [vmem:[%s0 + $0x8] sm:$0xf]
  %v45 = vld [vmem:[%s0 + $0xc] sm:$0xf]
  %v46 = vld [vmem:[%s1] sm:$0xff]
  %v47 = vld [vmem:[%s1 + $0x8] sm:$0xf]
  %v48 = vld [vmem:[%s1 + $0xc] sm:$0xff]
  %v49 = vld [vmem:[%s1 + $0x14] sm:$0xf]
  %v50 = vld [vmem:[%s1 + $0x18] sm:$0xff]
  %v51 = vld [vmem:[%s1 + $0x20] sm:$0xf]
  %v52 = vld [vmem:[%s1 + $0x24] sm:$0xff]
  %v53 = vld [vmem:[%s1 + $0x2c] sm:$0xf]
  %v54 = vld [vmem:[%s1 + $0x30] sm:$0xff]
  %v55 = vld [vmem:[%s1 + $0x38] sm:$0xf]
  %v56 = vld [vmem:[%s1 + $0x3c] sm:$0xff]
  %v57 = vld [vmem:[%s1 + $0x44] sm:$0xf]
  %v58 = vld [vmem:[%s1 + $0x48] sm:$0xff]
  %v59 = vld [vmem:[%s1 + $0x50] sm:$0xf]
  %v60 = vld [vmem:[%s1 + $0x54] sm:$0xff]
  %v61 = vld [vmem:[%s1 + $0x5c] sm:$0xf]
  %v62 = vld [vmem:[%s1 + $0x60] sm:$0xff]
  %v63 = vld [vmem:[%s1 + $0x68] sm:$0xf]
  %v64 = vld [vmem:[%s1 + $0x6c] sm:$0xff]
  %v65 = vld [vmem:[%s1 + $0x74] sm:$0xf]
  %v66 = vld [vmem:[%s1 + $0x78] sm:$0xff]
  %v67 = vld [vmem:[%s1 + $0x80] sm:$0xf]
  %v68 = vld [vmem:[%s1 + $0x84] sm:$0xff]
  %v69 = vld [vmem:[%s1 + $0x8c] sm:$0xf]
  %v70 = vld [vmem:[%s1 + $0x90] sm:$0xff]
  %v71 = vld [vmem:[%s1 + $0x98] sm:$0xf]
  %v72 = vld [vmem:[%s1 + $0x9c] sm:$0xff]
  %v73 = vld [vmem:[%s1 + $0xa4] sm:$0xf]
  %v74 = vld [vmem:[%s1 + $0xa8] sm:$0xff]
  %v75 = vld [vmem:[%s1 + $0xb0] sm:$0xf]
  %v76 = vld [vmem:[%s1 + $0xb4] sm:$0xff]
  %v77 = vld [vmem:[%s1 + $0xbc] sm:$0xf]
  %v82 = vunpack.c.l.b16 %v42
  %v83 = vunpack.c.l.b16 %v43
  %v84 = vunpack.c.l.b16 %v44
  %v85 = vunpack.c.l.b16 %v45
  %v86 = vpack.c.b16 %v83, %v82
  %v87 = vpack.c.b16 %v85, %v84
  %v122 = vunpack.c.l.b16 %v46
  %v123 = vunpack.c.h.b16 %v46
  %v124 = vunpack.c.l.b16 %v47
  %v125 = vunpack.c.l.b16 %v48
  %v126 = vunpack.c.h.b16 %v48
  %v127 = vunpack.c.l.b16 %v49
  %v128 = vunpack.c.l.b16 %v50
  %v129 = vunpack.c.h.b16 %v50
  %v130 = vunpack.c.l.b16 %v51
  %v131 = vunpack.c.l.b16 %v52
  %v132 = vunpack.c.h.b16 %v52
  %v133 = vunpack.c.l.b16 %v53
  %v134 = vunpack.c.l.b16 %v54
  %v135 = vunpack.c.h.b16 %v54
  %v136 = vunpack.c.l.b16 %v55
  %v137 = vunpack.c.l.b16 %v56
  %v138 = vunpack.c.h.b16 %v56
  %v139 = vunpack.c.l.b16 %v57
  %v140 = vunpack.c.l.b16 %v58
  %v141 = vunpack.c.h.b16 %v58
  %v142 = vunpack.c.l.b16 %v59
  %v143 = vunpack.c.l.b16 %v60
  %v144 = vunpack.c.h.b16 %v60
  %v145 = vunpack.c.l.b16 %v61
  %v146 = vunpack.c.l.b16 %v62
  %v147 = vunpack.c.h.b16 %v62
  %v148 = vunpack.c.l.b16 %v63
  %v149 = vunpack.c.l.b16 %v64
  %v150 = vunpack.c.h.b16 %v64
  %v151 = vunpack.c.l.b16 %v65
  %v152 = vunpack.c.l.b16 %v66
  %v153 = vunpack.c.h.b16 %v66
  %v154 = vunpack.c.l.b16 %v67
  %v155 = vunpack.c.l.b16 %v68
  %v156 = vunpack.c.h.b16 %v68
  %v157 = vunpack.c.l.b16 %v69
  %v158 = vunpack.c.l.b16 %v70
  %v159 = vunpack.c.h.b16 %v70
  %v160 = vunpack.c.l.b16 %v71
  %v161 = vunpack.c.l.b16 %v72
  %v162 = vunpack.c.h.b16 %v72
  %v163 = vunpack.c.l.b16 %v73
  %v164 = vunpack.c.l.b16 %v74
  %v165 = vunpack.c.h.b16 %v74
  %v166 = vunpack.c.l.b16 %v75
  %v167 = vunpack.c.l.b16 %v76
  %v168 = vunpack.c.h.b16 %v76
  %v169 = vunpack.c.l.b16 %v77
  %v170 = vpack.c.b16 %v125, %v122
  %v171 = vpack.c.b16 %v126, %v123
  %v172 = vpack.c.b16 %v127, %v124
  %v173 = vpack.c.b16 %v131, %v128
  %v174 = vpack.c.b16 %v132, %v129
  %v175 = vpack.c.b16 %v133, %v130
  %v176 = vpack.c.b16 %v137, %v134
  %v177 = vpack.c.b16 %v138, %v135
  %v178 = vpack.c.b16 %v139, %v136
  %v179 = vpack.c.b16 %v143, %v140
  %v180 = vpack.c.b16 %v144, %v141
  %v181 = vpack.c.b16 %v145, %v142
  %v182 = vpack.c.b16 %v149, %v146
  %v183 = vpack.c.b16 %v150, %v147
  %v184 = vpack.c.b16 %v151, %v148
  %v185 = vpack.c.b16 %v155, %v152
  %v186 = vpack.c.b16 %v156, %v153
  %v187 = vpack.c.b16 %v157, %v154
  %v188 = vpack.c.b16 %v161, %v158
  %v189 = vpack.c.b16 %v162, %v159
  %v190 = vpack.c.b16 %v163, %v160
  %v191 = vpack.c.b16 %v167, %v164
  %v192 = vpack.c.b16 %v168, %v165
  %v193 = vpack.c.b16 %v169, %v166
  %218 = vmatpush.bf16.msra.mxu0 %v191
  %219 = vmatpush.bf16.msra.mxu0 %v188
  %220 = vmatpush.bf16.msra.mxu0 %v185
  %221 = vmatpush.bf16.msra.mxu0 %v182
  %222 = vmatpush.bf16.msra.mxu0 %v179
  %223 = vmatpush.bf16.msra.mxu0 %v176
  %224 = vmatpush.bf16.msra.mxu0 %v173
  %225 = vmatpush.bf16.msra.mxu0 %v170
  %226 = vmatmul.bf16.gmra.mxu0 %v86
  %v227 = vpop.f32.mrf.mxu0
  %v228 = vadd.f32 0.0, %v227
  %v229 = vpop.f32.mrf.mxu0
  %v230 = vadd.f32 0.0, %v229
  %231 = vmatmul.bf16.gmra.mxu0 %v87
  %v232 = vpop.f32.mrf.mxu0
  %v233 = vadd.f32 0.0, %v232
  %v234 = vpop.f32.mrf.mxu0
  %v235 = vadd.f32 0.0, %v234
  %236 = vdwg.mxu0
  %237 = vmatpush.bf16.msra.mxu0 %v192
  %238 = vmatpush.bf16.msra.mxu0 %v189
  %239 = vmatpush.bf16.msra.mxu0 %v186
  %240 = vmatpush.bf16.msra.mxu0 %v183
  %241 = vmatpush.bf16.msra.mxu0 %v180
  %242 = vmatpush.bf16.msra.mxu0 %v177
  %243 = vmatpush.bf16.msra.mxu0 %v174
  %244 = vmatpush.bf16.msra.mxu0 %v171
  %245 = vmatmul.bf16.gmra.mxu0 %v86
  %v246 = vpop.f32.mrf.mxu0
  %v247 = vadd.f32 0.0, %v246
  %v248 = vpop.f32.mrf.mxu0
  %v249 = vadd.f32 0.0, %v248
  %250 = vmatmul.bf16.gmra.mxu0 %v87
  %v251 = vpop.f32.mrf.mxu0
  %v252 = vadd.f32 0.0, %v251
  %v253 = vpop.f32.mrf.mxu0
  %v254 = vadd.f32 0.0, %v253
  %255 = vdwg.mxu0
  %256 = vmatpush.bf16.msra.mxu0 %v193
  %257 = vmatpush.bf16.msra.mxu0 %v190
  %258 = vmatpush.bf16.msra.mxu0 %v187
  %259 = vmatpush.bf16.msra.mxu0 %v184
  %260 = vmatpush.bf16.msra.mxu0 %v181
  %261 = vmatpush.bf16.msra.mxu0 %v178
  %262 = vmatpush.bf16.msra.mxu0 %v175
  %263 = vmatpush.bf16.msra.mxu0 %v172
  %264 = vmatmul.bf16.gmra.mxu0 %v86
  %v265 = vpop.f32.mrf.mxu0
  %v266 = vadd.f32 0.0, %v265
  %v267 = vpop.f32.mrf.mxu0
  %v268 = vadd.f32 0.0, %v267
  %269 = vmatmul.bf16.gmra.mxu0 %v87
  %v270 = vpop.f32.mrf.mxu0
  %v271 = vadd.f32 0.0, %v270
  %v272 = vpop.f32.mrf.mxu0
  %v273 = vadd.f32 0.0, %v272
  %274 = vdwg.mxu0
  %v275 = vadd.f32 %v30, %v228
  %v276 = vadd.f32 %v31, %v247
  %v277 = vadd.f32 %v32, %v266
  %v278 = vadd.f32 %v33, %v230
  %v279 = vadd.f32 %v34, %v249
  %v280 = vadd.f32 %v35, %v268
  %v281 = vadd.f32 %v36, %v233
  %v282 = vadd.f32 %v37, %v252
  %v283 = vadd.f32 %v38, %v271
  %v284 = vadd.f32 %v39, %v235
  %v285 = vadd.f32 %v40, %v254
  %v286 = vadd.f32 %v41, %v273
  %287 = vst [vmem:[#allocation2] sm:$0xff] %v275
  %288 = vst [vmem:[#allocation2 + $0x8] sm:$0xff] %v276
  %289 = vst [vmem:[#allocation2 + $0x10] sm:$0xff] %v277
  %290 = vst [vmem:[#allocation2 + $0x18] sm:$0xff] %v278
  %291 = vst [vmem:[#allocation2 + $0x20] sm:$0xff] %v279
  %292 = vst [vmem:[#allocation2 + $0x28] sm:$0xff] %v280
  %293 = vst [vmem:[#allocation2 + $0x30] sm:$0xff] %v281
  %294 = vst [vmem:[#allocation2 + $0x38] sm:$0xff] %v282
  %295 = vst [vmem:[#allocation2 + $0x40] sm:$0xff] %v283
  %296 = vst [vmem:[#allocation2 + $0x48] sm:$0xff] %v284
  %297 = vst [vmem:[#allocation2 + $0x50] sm:$0xff] %v285
  %298 = vst [vmem:[#allocation2 + $0x58] sm:$0xff] %v286
  // Predicated region
  $region18: #{electra_model_forward.28} parent=0 // pred_check
    %p299 = pneg %p14
  $region19: #{electra_model_forward.28} parent=0 // pred_check_branch
    %301 = sbr.rel (%p299) target = $region21
  $region20: #{electra_model_forward.28} parent=0 // pred_region
    %v302 = vld [vmem:[#allocation2] sm:$0xff]
    %v303 = vld [vmem:[#allocation2 + $0x8] sm:$0xff]
    %v304 = vld [vmem:[#allocation2 + $0x10] sm:$0xff]
    %v305 = vld [vmem:[#allocation2 + $0x18] sm:$0xff]
    %v306 = vld [vmem:[#allocation2 + $0x20] sm:$0xff]
    %v307 = vld [vmem:[#allocation2 + $0x28] sm:$0xff]
    %v308 = vld [vmem:[#allocation2 + $0x30] sm:$0xff]
    %v309 = vld [vmem:[#allocation2 + $0x38] sm:$0xff]
    %v310 = vld [vmem:[#allocation2 + $0x40] sm:$0xff]
    %v311 = vld [vmem:[#allocation2 + $0x48] sm:$0xff]
    %v312 = vld [vmem:[#allocation2 + $0x50] sm:$0xff]
    %v313 = vld [vmem:[#allocation2 + $0x58] sm:$0xff]
    %v314 = vld [vmem:[%s2] sm:$0x7]
    %v316 = vperm.slane %v314, 0
    %v317 = vperm.slane %v314, 1
    %v318 = vperm.slane %v314, 2
    %v322 = vadd.f32 %v302, %v316
    %v323 = vadd.f32 %v303, %v317
    %v324 = vadd.f32 %v304, %v318
    %v325 = vadd.f32 %v305, %v316
    %v326 = vadd.f32 %v306, %v317
    %v327 = vadd.f32 %v307, %v318
    %v328 = vadd.f32 %v308, %v316
    %v329 = vadd.f32 %v309, %v317
    %v330 = vadd.f32 %v310, %v318
    %v331 = vadd.f32 %v311, %v316
    %v332 = vadd.f32 %v312, %v317
    %v333 = vadd.f32 %v313, %v318
    %v334 = vpack.c.bf16 %v323, %v322
    %v335 = vpack.c.bf16 %v324, %v324
    %v336 = vpack.c.bf16 %v326, %v325
    %v337 = vpack.c.bf16 %v327, %v327
    %v338 = vpack.c.bf16 %v329, %v328
    %v339 = vpack.c.bf16 %v330, %v330
    %v340 = vpack.c.bf16 %v332, %v331
    %v341 = vpack.c.bf16 %v333, %v333
    %342 = vst [vmem:[%s3] sm:$0xff] %v334
    %343 = vst [vmem:[%s3 + $0x8] sm:$0xf] %v335
    %344 = vst [vmem:[%s3 + $0xc] sm:$0xff] %v336
    %345 = vst [vmem:[%s3 + $0x14] sm:$0xf] %v337
    %346 = vst [vmem:[%s3 + $0x18] sm:$0xff] %v338
    %347 = vst [vmem:[%s3 + $0x20] sm:$0xf] %v339
    %348 = vst [vmem:[%s3 + $0x24] sm:$0xff] %v340
    %349 = vst [vmem:[%s3 + $0x2c] sm:$0xf] %v341
  $region21: #{electra_model_forward.28} parent=0 // pred_fallthru
    _
  // Predicated region
  $region22: #{electra_model_forward.28} parent=0 // pred_check
    _
  $region23: #{electra_model_forward.28} parent=0 // pred_check_branch
    %351 = sbr.rel (0) target = $region25
  $region24: #{electra_model_forward.28} parent=0 // pred_region
    _
  $region25: #{electra_model_forward.28} parent=0 // pred_fallthru
    _
  // Predicated region
  $region26: #{electra_model_forward.28} parent=0 // pred_check
    _
  $region27: #{electra_model_forward.28} parent=0 // pred_check_branch
    %353 = sbr.rel (0) target = $region29
  $region28: #{electra_model_forward.28} parent=0 // pred_region
    _
  $region29: #{electra_model_forward.28} parent=0 // pred_fallthru
    _

// kernel: electra_model_forward.30
$region0: #{electra_model_forward.30}
  #allocation0 [shape = 'u32[]', space=smem, size = 0x4, offset = 0x4, fixed_abs, tag = 'smem constant byte address 0x4 - core index']
  #allocation1 [shape = 'u32[72,128]{1,0:T(1,128)}', space=vmem, size = 0x9000, scoped, tag = 'internal scratch']
  #allocation2 [shape = 'f32[32,128]{1,0:T(8,128)}', space=vmem, size = 0x4000, scoped, tag = 'scratch operand']
  %s0 = inlined_call_operand.vmem [shape: bf16[32,128], index: 0, kind: input, shape index: {}]
  %s1 = inlined_call_operand.vmem [shape: bf16[128,128], index: 1, kind: input, shape index: {}]
  %s2 = inlined_call_operand.vmem [shape: f32[1,128], index: 2, kind: input, shape index: {}]
  %s3 = inlined_call_operand.vmem [shape: bf16[32,128], index: 3, kind: input, shape index: {}]
  %s4 = inlined_call_operand.vmem [shape: f32[1,128], index: 4, kind: input, shape index: {}]
  %s5 = inlined_call_operand.vmem [shape: f32[1,128], index: 5, kind: input, shape index: {}]
  %s6 = inlined_call_operand.vmem [shape: bf16[32,128], index: 6, kind: output, shape index: {}]
  %s7 = sld [smem:[#allocation0]]
  $region42: #{electra_model_forward.30} parent=0
    _
  %s9 = ssub.s32 1, %s7
  %s10 = scalar_select 0, %s9, %s7
  // Predicated region
  $region2: #{electra_model_forward.30} parent=0 // pred_check
    _
  $region3: #{electra_model_forward.30} parent=0 // pred_check_branch
    %12 = sbr.rel (0) target = $region5
  $region4: #{electra_model_forward.30} parent=0 // pred_region
    _
  $region5: #{electra_model_forward.30} parent=0 // pred_fallthru
    _
  // Predicated region
  $region6: #{electra_model_forward.30} parent=0 // pred_check
    _
  $region7: #{electra_model_forward.30} parent=0 // pred_check_branch
    %14 = sbr.rel (0) target = $region9
  $region8: #{electra_model_forward.30} parent=0 // pred_region
    _
  $region9: #{electra_model_forward.30} parent=0 // pred_fallthru
    _
  // Predicated region
  $region10: #{electra_model_forward.30} parent=0 // pred_check
    _
  $region11: #{electra_model_forward.30} parent=0 // pred_check_branch
    %16 = sbr.rel (0) target = $region13
  $region12: #{electra_model_forward.30} parent=0 // pred_region
    _
  $region13: #{electra_model_forward.30} parent=0 // pred_fallthru
    _
  // Predicated region
  $region14: #{electra_model_forward.30} parent=0 // pred_check
    _
  $region15: #{electra_model_forward.30} parent=0 // pred_check_branch
    %18 = sbr.rel (0) target = $region17
  $region16: #{electra_model_forward.30} parent=0 // pred_region
    _
  $region17: #{electra_model_forward.30} parent=0 // pred_fallthru
    _
  // Predicated region
  $region18: #{electra_model_forward.30} parent=0 // pred_check
    _
  $region19: #{electra_model_forward.30} parent=0 // pred_check_branch
    %20 = sbr.rel (0) target = $region21
  $region20: #{electra_model_forward.30} parent=0 // pred_region
    _
  $region21: #{electra_model_forward.30} parent=0 // pred_fallthru
    _
  // Predicated region
  $region22: #{electra_model_forward.30} parent=0 // pred_check
    _
  $region23: #{electra_model_forward.30} parent=0 // pred_check_branch
    %22 = sbr.rel (0) target = $region25
  $region24: #{electra_model_forward.30} parent=0 // pred_region
    _
  $region25: #{electra_model_forward.30} parent=0 // pred_fallthru
    _
  %p23 = scmp.eq.s32.totalorder 0, 0
  // Predicated region
  $region26: #{electra_model_forward.30} parent=0 // pred_check
    %p24 = pneg %p23
  $region27: #{electra_model_forward.30} parent=0 // pred_check_branch
    %26 = sbr.rel (%p24) target = $region29
  $region28: #{electra_model_forward.30} parent=0 // pred_region
    %27 = vst [vmem:[#allocation2] sm:$0xff] 0.0
    %28 = vst [vmem:[#allocation2 + $0x8] sm:$0xff] 0.0
    %29 = vst [vmem:[#allocation2 + $0x10] sm:$0xff] 0.0
    %30 = vst [vmem:[#allocation2 + $0x18] sm:$0xff] 0.0
  $region29: #{electra_model_forward.30} parent=0 // pred_fallthru
    _
  %v31 = vld [vmem:[#allocation2] sm:$0xff]
  %v32 = vld [vmem:[#allocation2 + $0x8] sm:$0xff]
  %v33 = vld [vmem:[#allocation2 + $0x10] sm:$0xff]
  %v34 = vld [vmem:[#allocation2 + $0x18] sm:$0xff]
  %v35 = vld [vmem:[%s0] sm:$0xf]
  %v36 = vld [vmem:[%s0 + $0x4] sm:$0xf]
  %v37 = vld [vmem:[%s0 + $0x8] sm:$0xf]
  %v38 = vld [vmem:[%s0 + $0xc] sm:$0xf]
  %v39 = vld [vmem:[%s1] sm:$0xf]
  %v40 = vld [vmem:[%s1 + $0x4] sm:$0xf]
  %v41 = vld [vmem:[%s1 + $0x8] sm:$0xf]
  %v42 = vld [vmem:[%s1 + $0xc] sm:$0xf]
  %v43 = vld [vmem:[%s1 + $0x10] sm:$0xf]
  %v44 = vld [vmem:[%s1 + $0x14] sm:$0xf]
  %v45 = vld [vmem:[%s1 + $0x18] sm:$0xf]
  %v46 = vld [vmem:[%s1 + $0x1c] sm:$0xf]
  %v47 = vld [vmem:[%s1 + $0x20] sm:$0xf]
  %v48 = vld [vmem:[%s1 + $0x24] sm:$0xf]
  %v49 = vld [vmem:[%s1 + $0x28] sm:$0xf]
  %v50 = vld [vmem:[%s1 + $0x2c] sm:$0xf]
  %v51 = vld [vmem:[%s1 + $0x30] sm:$0xf]
  %v52 = vld [vmem:[%s1 + $0x34] sm:$0xf]
  %v53 = vld [vmem:[%s1 + $0x38] sm:$0xf]
  %v54 = vld [vmem:[%s1 + $0x3c] sm:$0xf]
  %v59 = vunpack.c.l.b16 %v35
  %v60 = vunpack.c.l.b16 %v36
  %v61 = vunpack.c.l.b16 %v37
  %v62 = vunpack.c.l.b16 %v38
  %v63 = vpack.c.b16 %v60, %v59
  %v64 = vpack.c.b16 %v62, %v61
  %v83 = vunpack.c.l.b16 %v39
  %v84 = vunpack.c.l.b16 %v40
  %v85 = vunpack.c.l.b16 %v41
  %v86 = vunpack.c.l.b16 %v42
  %v87 = vunpack.c.l.b16 %v43
  %v88 = vunpack.c.l.b16 %v44
  %v89 = vunpack.c.l.b16 %v45
  %v90 = vunpack.c.l.b16 %v46
  %v91 = vunpack.c.l.b16 %v47
  %v92 = vunpack.c.l.b16 %v48
  %v93 = vunpack.c.l.b16 %v49
  %v94 = vunpack.c.l.b16 %v50
  %v95 = vunpack.c.l.b16 %v51
  %v96 = vunpack.c.l.b16 %v52
  %v97 = vunpack.c.l.b16 %v53
  %v98 = vunpack.c.l.b16 %v54
  %v99 = vpack.c.b16 %v84, %v83
  %v100 = vpack.c.b16 %v86, %v85
  %v101 = vpack.c.b16 %v88, %v87
  %v102 = vpack.c.b16 %v90, %v89
  %v103 = vpack.c.b16 %v92, %v91
  %v104 = vpack.c.b16 %v94, %v93
  %v105 = vpack.c.b16 %v96, %v95
  %v106 = vpack.c.b16 %v98, %v97
  %115 = vmatpush.bf16.msra.mxu0 %v106
  %116 = vmatpush.bf16.msra.mxu0 %v105
  %117 = vmatpush.bf16.msra.mxu0 %v104
  %118 = vmatpush.bf16.msra.mxu0 %v103
  %119 = vmatpush.bf16.msra.mxu0 %v102
  %120 = vmatpush.bf16.msra.mxu0 %v101
  %121 = vmatpush.bf16.msra.mxu0 %v100
  %122 = vmatpush.bf16.msra.mxu0 %v99
  %123 = vmatmul.bf16.gmra.mxu0 %v63
  %v124 = vpop.f32.mrf.mxu0
  %v125 = vadd.f32 0.0, %v124
  %v126 = vpop.f32.mrf.mxu0
  %v127 = vadd.f32 0.0, %v126
  %128 = vmatmul.bf16.gmra.mxu0 %v64
  %v129 = vpop.f32.mrf.mxu0
  %v130 = vadd.f32 0.0, %v129
  %v131 = vpop.f32.mrf.mxu0
  %v132 = vadd.f32 0.0, %v131
  %133 = vdwg.mxu0
  %v134 = vadd.f32 %v31, %v125
  %v135 = vadd.f32 %v32, %v127
  %v136 = vadd.f32 %v33, %v130
  %v137 = vadd.f32 %v34, %v132
  %138 = vst [vmem:[#allocation2] sm:$0xff] %v134
  %139 = vst [vmem:[#allocation2 + $0x8] sm:$0xff] %v135
  %140 = vst [vmem:[#allocation2 + $0x10] sm:$0xff] %v136
  %141 = vst [vmem:[#allocation2 + $0x18] sm:$0xff] %v137
  // Predicated region
  $region30: #{electra_model_forward.30} parent=0 // pred_check
    %p142 = pneg %p23
  $region31: #{electra_model_forward.30} parent=0 // pred_check_branch
    %144 = sbr.rel (%p142) target = $region33
  $region32: #{electra_model_forward.30} parent=0 // pred_region
    %v145 = vld [vmem:[#allocation2] sm:$0xff]
    %v146 = vld [vmem:[#allocation2 + $0x8] sm:$0xff]
    %v147 = vld [vmem:[#allocation2 + $0x10] sm:$0xff]
    %v148 = vld [vmem:[#allocation2 + $0x18] sm:$0xff]
    %v149 = vld [vmem:[%s2] sm:$0x1]
    %v151 = vperm.slane %v149, 0
    %v153 = vadd.f32 %v145, %v151
    %v154 = vadd.f32 %v146, %v151
    %v155 = vadd.f32 %v147, %v151
    %v156 = vadd.f32 %v148, %v151
    %v157 = vld [vmem:[%s3] sm:$0xf]
    %v158 = vld [vmem:[%s3 + $0x4] sm:$0xf]
    %v159 = vld [vmem:[%s3 + $0x8] sm:$0xf]
    %v160 = vld [vmem:[%s3 + $0xc] sm:$0xf]
    %v161 = vunpack.c.l.bf16 %v157
    %v162 = vunpack.c.l.bf16 %v158
    %v163 = vunpack.c.l.bf16 %v159
    %v164 = vunpack.c.l.bf16 %v160
    %v165 = vadd.f32 %v153, %v161
    %v166 = vadd.f32 %v154, %v162
    %v167 = vadd.f32 %v155, %v163
    %v168 = vadd.f32 %v156, %v164
    %169 = vadd.xlane.f32.xlu0 %v165
    %v170 = vpop.xlane.xlu0 %169
    %171 = vadd.xlane.f32.xlu0 %v166
    %v172 = vpop.xlane.xlu0 %171
    %173 = vadd.xlane.f32.xlu0 %v167
    %v174 = vpop.xlane.xlu0 %173
    %175 = vadd.xlane.f32.xlu0 %v168
    %v176 = vpop.xlane.xlu0 %175
    %v177 = vrcp.pop 128.0
    %v178 = vmul.f32 128.0, %v177
    %v179 = vsub.f32 1.0, %v178
    %v180 = vmul.f32 %v177, %v179
    %v181 = vadd.f32 %v177, %v180
    %vm182 = vweird.f32 %v177
    %v183 = vsel %vm182, %v177, %v181
    %v184 = vmul.f32 %v170, %v183
    %v185 = vmul.f32 %v172, %v183
    %v186 = vmul.f32 %v174, %v183
    %v187 = vmul.f32 %v176, %v183
    %v188 = vsub.f32 %v165, %v184
    %v189 = vsub.f32 %v166, %v185
    %v190 = vsub.f32 %v167, %v186
    %v191 = vsub.f32 %v168, %v187
    %v192 = vmul.f32 %v188, %v188
    %v193 = vmul.f32 %v189, %v189
    %v194 = vmul.f32 %v190, %v190
    %v195 = vmul.f32 %v191, %v191
    %196 = vadd.xlane.f32.xlu0 %v192
    %v197 = vpop.xlane.xlu0 %196
    %198 = vadd.xlane.f32.xlu0 %v193
    %v199 = vpop.xlane.xlu0 %198
    %200 = vadd.xlane.f32.xlu0 %v194
    %v201 = vpop.xlane.xlu0 %200
    %202 = vadd.xlane.f32.xlu0 %v195
    %v203 = vpop.xlane.xlu0 %202
    %v204 = vmul.f32 %v197, %v183
    %v205 = vmul.f32 %v199, %v183
    %v206 = vmul.f32 %v201, %v183
    %v207 = vmul.f32 %v203, %v183
    %v208 = vadd.f32 %v204, 1e-12
    %v209 = vadd.f32 %v205, 1e-12
    %v210 = vadd.f32 %v206, 1e-12
    %v211 = vadd.f32 %v207, 1e-12
    %v212 = vrsqrt.pop %v208
    %v213 = vmul.f32 %v212, %v208
    %v214 = vmul.f32 %v213, %v212
    %v215 = vmul.f32 0.5, %v214
    %v216 = vsub.f32 1.5, %v215
    %v217 = vmul.f32 %v212, %v216
    %vm218 = vweird.f32 %v208
    %vm219 = vweird.f32 %v212
    %vm220 = vmor %vm218, %vm219
    %v221 = vsel %vm220, %v212, %v217
    %v222 = vrsqrt.pop %v209
    %v223 = vmul.f32 %v222, %v209
    %v224 = vmul.f32 %v223, %v222
    %v225 = vmul.f32 0.5, %v224
    %v226 = vsub.f32 1.5, %v225
    %v227 = vmul.f32 %v222, %v226
    %vm228 = vweird.f32 %v209
    %vm229 = vweird.f32 %v222
    %vm230 = vmor %vm228, %vm229
    %v231 = vsel %vm230, %v222, %v227
    %v232 = vrsqrt.pop %v210
    %v233 = vmul.f32 %v232, %v210
    %v234 = vmul.f32 %v233, %v232
    %v235 = vmul.f32 0.5, %v234
    %v236 = vsub.f32 1.5, %v235
    %v237 = vmul.f32 %v232, %v236
    %vm238 = vweird.f32 %v210
    %vm239 = vweird.f32 %v232
    %vm240 = vmor %vm238, %vm239
    %v241 = vsel %vm240, %v232, %v237
    %v242 = vrsqrt.pop %v211
    %v243 = vmul.f32 %v242, %v211
    %v244 = vmul.f32 %v243, %v242
    %v245 = vmul.f32 0.5, %v244
    %v246 = vsub.f32 1.5, %v245
    %v247 = vmul.f32 %v242, %v246
    %vm248 = vweird.f32 %v211
    %vm249 = vweird.f32 %v242
    %vm250 = vmor %vm248, %vm249
    %v251 = vsel %vm250, %v242, %v247
    %v252 = vmul.f32 %v188, %v221
    %v253 = vmul.f32 %v189, %v231
    %v254 = vmul.f32 %v190, %v241
    %v255 = vmul.f32 %v191, %v251
    %v256 = vld [vmem:[%s4] sm:$0x1]
    %v258 = vperm.slane %v256, 0
    %v260 = vmul.f32 %v252, %v258
    %v261 = vmul.f32 %v253, %v258
    %v262 = vmul.f32 %v254, %v258
    %v263 = vmul.f32 %v255, %v258
    %v264 = vld [vmem:[%s5] sm:$0x1]
    %v266 = vperm.slane %v264, 0
    %v268 = vadd.f32 %v260, %v266
    %v269 = vadd.f32 %v261, %v266
    %v270 = vadd.f32 %v262, %v266
    %v271 = vadd.f32 %v263, %v266
    %v272 = vpack.c.bf16 %v268, %v268
    %v273 = vpack.c.bf16 %v269, %v269
    %v274 = vpack.c.bf16 %v270, %v270
    %v275 = vpack.c.bf16 %v271, %v271
    %276 = vst [vmem:[%s6] sm:$0xf] %v272
    %277 = vst [vmem:[%s6 + $0x4] sm:$0xf] %v273
    %278 = vst [vmem:[%s6 + $0x8] sm:$0xf] %v274
    %279 = vst [vmem:[%s6 + $0xc] sm:$0xf] %v275
  $region33: #{electra_model_forward.30} parent=0 // pred_fallthru
    _
  // Predicated region
  $region34: #{electra_model_forward.30} parent=0 // pred_check
    _
  $region35: #{electra_model_forward.30} parent=0 // pred_check_branch
    %281 = sbr.rel (0) target = $region37
  $region36: #{electra_model_forward.30} parent=0 // pred_region
    _
  $region37: #{electra_model_forward.30} parent=0 // pred_fallthru
    _
  // Predicated region
  $region38: #{electra_model_forward.30} parent=0 // pred_check
    _
  $region39: #{electra_model_forward.30} parent=0 // pred_check_branch
    %283 = sbr.rel (0) target = $region41
  $region40: #{electra_model_forward.30} parent=0 // pred_region
    _
  $region41: #{electra_model_forward.30} parent=0 // pred_fallthru
    _

// kernel: electra_model_forward.29
$region0: #{electra_model_forward.29}
  #allocation0 [shape = 'u32[]', space=smem, size = 0x4, offset = 0x4, fixed_abs, tag = 'smem constant byte address 0x4 - core index']
  #allocation1 [shape = 'u32[72,128]{1,0:T(1,128)}', space=vmem, size = 0x9000, scoped, tag = 'internal scratch']
  %s0 = inlined_call_operand.vmem [shape: bf16[2,2,16,64], index: 0, kind: input, shape index: {}]
  %s1 = inlined_call_operand.vmem [shape: bf16[2,2,16,64], index: 1, kind: input, shape index: {}]
  %s2 = inlined_call_operand.vmem [shape: bf16[2,2,16,64], index: 2, kind: input, shape index: {}]
  %s3 = inlined_call_operand.vmem [shape: f32[2,1,16], index: 3, kind: input, shape index: {}]
  %s4 = inlined_call_operand.vmem [shape: bf16[2,16,128], index: 4, kind: output, shape index: {}]
  %s5 = sld [smem:[#allocation0]]
  $region49: #{electra_model_forward.29} parent=0
    _
  %s7 = ssub.s32 1, %s5
  %s8 = scalar_select 0, %s7, %s5
  loop: start=0, step=1, limit=4
  $region2: #{electra_model_forward.29} parent=0 // loop_pre_header
    _
  $region3: #{electra_model_forward.29} parent=0 // loop_header
    %s10 = sphi 0, %s14
    %p11 = scmp.ge.s32.totalorder %s10, 4
    %s20 = sphi 0, %s22
    %s23 = sphi 0, %s20
    %s24 = sphi 0, %s23
    %s40 = sphi 0, %s24
    %s46 = sphi 0, %s48
    %s49 = sphi 0, %s46
    %s50 = sphi 0, %s49
    %s66 = sphi 0, %s50
    %s72 = sphi 0, %s74
    %s75 = sphi 0, %s72
    %s76 = sphi 0, %s75
    %s92 = sphi 0, %s76
    %s98 = sphi 0, %s100
    %s101 = sphi 0, %s98
    %s102 = sphi 0, %s101
    %s118 = sphi 0, %s102
    %s124 = sphi 0, %s126
    %s127 = sphi 0, %s124
    %s128 = sphi 0, %s127
    %s144 = sphi 0, %s128
  $region4: #{electra_model_forward.29} parent=0 // loop_header_branch
    %13 = sbr.rel (%p11) target = $region8
  $region5: #{electra_model_forward.29} parent=0 // loop_body
    %s15 = ssub.s32 %s10, 1
    %s16 = ssub.s32 %s10, 2
    %s17 = sadd.s32 %s10, 1
    %s18 = ssub.s32 %s10, %s17
    %p19 = scmp.eq.s32.totalorder %s18, 0
    %s21 = sadd.s32 %s20, 1
    %s22 = scalar_select %p19, %s20, %s21
    %p25 = pneg %p19
    %p26 = scmp.eq.s32.totalorder %s10, 1
    %p27 = por %p25, %p26
    %p28 = scmp.ne.s32.totalorder %s20, %s23
    %p29 = scmp.eq.s32.totalorder %s10, 0
    %p30 = por %p28, %p29
    %p31 = scmp.ne.s32.totalorder %s20, %s23
    %p32 = scmp.eq.s32.totalorder %s15, 1
    %p33 = por %p31, %p32
    %p34 = scmp.ne.s32.totalorder %s23, %s24
    %p35 = scmp.eq.s32.totalorder %s15, 0
    %p36 = por %p34, %p35
    %p37 = scmp.ne.s32.totalorder %s23, %s24
    %p38 = scmp.eq.s32.totalorder %s16, 1
    %p39 = por %p37, %p38
    %p41 = scmp.ne.s32.totalorder %s24, %s40
    %p42 = scmp.eq.s32.totalorder %s16, 0
    %p43 = por %p41, %p42
    %s44 = ssub.s32 %s10, %s17
    %p45 = scmp.eq.s32.totalorder %s44, 0
    %s47 = sadd.s32 %s46, 1
    %s48 = scalar_select %p45, %s46, %s47
    %p51 = pneg %p45
    %p52 = scmp.eq.s32.totalorder %s10, 1
    %p53 = por %p51, %p52
    %p54 = scmp.ne.s32.totalorder %s46, %s49
    %p55 = scmp.eq.s32.totalorder %s10, 0
    %p56 = por %p54, %p55
    %p57 = scmp.ne.s32.totalorder %s46, %s49
    %p58 = scmp.eq.s32.totalorder %s15, 1
    %p59 = por %p57, %p58
    %p60 = scmp.ne.s32.totalorder %s49, %s50
    %p61 = scmp.eq.s32.totalorder %s15, 0
    %p62 = por %p60, %p61
    %p63 = scmp.ne.s32.totalorder %s49, %s50
    %p64 = scmp.eq.s32.totalorder %s16, 1
    %p65 = por %p63, %p64
    %p67 = scmp.ne.s32.totalorder %s50, %s66
    %p68 = scmp.eq.s32.totalorder %s16, 0
    %p69 = por %p67, %p68
    %s70 = ssub.s32 %s10, %s17
    %p71 = scmp.eq.s32.totalorder %s70, 0
    %s73 = sadd.s32 %s72, 1
    %s74 = scalar_select %p71, %s72, %s73
    %p77 = pneg %p71
    %p78 = scmp.eq.s32.totalorder %s10, 1
    %p79 = por %p77, %p78
    %p80 = scmp.ne.s32.totalorder %s72, %s75
    %p81 = scmp.eq.s32.totalorder %s10, 0
    %p82 = por %p80, %p81
    %p83 = scmp.ne.s32.totalorder %s72, %s75
    %p84 = scmp.eq.s32.totalorder %s15, 1
    %p85 = por %p83, %p84
    %p86 = scmp.ne.s32.totalorder %s75, %s76
    %p87 = scmp.eq.s32.totalorder %s15, 0
    %p88 = por %p86, %p87
    %p89 = scmp.ne.s32.totalorder %s75, %s76
    %p90 = scmp.eq.s32.totalorder %s16, 1
    %p91 = por %p89, %p90
    %p93 = scmp.ne.s32.totalorder %s76, %s92
    %p94 = scmp.eq.s32.totalorder %s16, 0
    %p95 = por %p93, %p94
    %s96 = ssub.s32 %s10, %s17
    %p97 = scmp.eq.s32.totalorder %s96, 0
    %s99 = sadd.s32 %s98, 1
    %s100 = scalar_select %p97, %s98, %s99
    %p103 = pneg %p97
    %p104 = scmp.eq.s32.totalorder %s10, 1
    %p105 = por %p103, %p104
    %p106 = scmp.ne.s32.totalorder %s98, %s101
    %p107 = scmp.eq.s32.totalorder %s10, 0
    %p108 = por %p106, %p107
    %p109 = scmp.ne.s32.totalorder %s98, %s101
    %p110 = scmp.eq.s32.totalorder %s15, 1
    %p111 = por %p109, %p110
    %p112 = scmp.ne.s32.totalorder %s101, %s102
    %p113 = scmp.eq.s32.totalorder %s15, 0
    %p114 = por %p112, %p113
    %p115 = scmp.ne.s32.totalorder %s101, %s102
    %p116 = scmp.eq.s32.totalorder %s16, 1
    %p117 = por %p115, %p116
    %p119 = scmp.ne.s32.totalorder %s102, %s118
    %p120 = scmp.eq.s32.totalorder %s16, 0
    %p121 = por %p119, %p120
    %s122 = ssub.s32 %s10, %s17
    %p123 = scmp.eq.s32.totalorder %s122, 0
    %s125 = sadd.s32 %s124, 1
    %s126 = scalar_select %p123, %s124, %s125
    %p129 = pneg %p123
    %p130 = scmp.eq.s32.totalorder %s10, 1
    %p131 = por %p129, %p130
    %p132 = scmp.ne.s32.totalorder %s124, %s127
    %p133 = scmp.eq.s32.totalorder %s10, 0
    %p134 = por %p132, %p133
    %p135 = scmp.ne.s32.totalorder %s124, %s127
    %p136 = scmp.eq.s32.totalorder %s15, 1
    %p137 = por %p135, %p136
    %p138 = scmp.ne.s32.totalorder %s127, %s128
    %p139 = scmp.eq.s32.totalorder %s15, 0
    %p140 = por %p138, %p139
    %p141 = scmp.ne.s32.totalorder %s127, %s128
    %p142 = scmp.eq.s32.totalorder %s16, 1
    %p143 = por %p141, %p142
    %p145 = scmp.ne.s32.totalorder %s128, %s144
    %p146 = scmp.eq.s32.totalorder %s16, 0
    %p147 = por %p145, %p146
    %p148 = scmp.le.s32.totalorder 1, %s10
    %p149 = scmp.lt.s32.totalorder %s10, 3
    %p150 = pnand %p148, %p149
    %p151 = pneg %p150
    // Predicated region
    $region9: #{electra_model_forward.29} parent=5 // pred_check
      _
    $region10: #{electra_model_forward.29} parent=5 // pred_check_branch
      %153 = sbr.rel (%p150) target = $region12
    $region11: #{electra_model_forward.29} parent=5 // pred_region
      %s154 = ssub.s32 %s10, 1
    $region12: #{electra_model_forward.29} parent=5 // pred_fallthru
      _
    %p155 = scmp.lt.s32.totalorder %s10, 2
    // Predicated region
    $region13: #{electra_model_forward.29} parent=5 // pred_check
      %p156 = pneg %p155
    $region14: #{electra_model_forward.29} parent=5 // pred_check_branch
      %158 = sbr.rel (%p156) target = $region16
    $region15: #{electra_model_forward.29} parent=5 // pred_region
      // Predicated region
      $region17: #{electra_model_forward.29} parent=15 // pred_check
        %p159 = pneg %p30
      $region18: #{electra_model_forward.29} parent=15 // pred_check_branch
        %161 = sbr.rel (%p159) target = $region20
      $region19: #{electra_model_forward.29} parent=15 // pred_region
        %p162 = scmp.lt.s32.totalorder %s10, 1
        %s163 = scalar_select %p162, %s10, 1
        %s164 = smul.addr %s163, 4
        %s165 = smul.addr %s164, 4
        %s166 = scalar_lea.vmem %s0, %s165
      $region20: #{electra_model_forward.29} parent=15 // pred_fallthru
        _
      // Predicated region
      $region21: #{electra_model_forward.29} parent=15 // pred_check
        %p167 = pneg %p56
      $region22: #{electra_model_forward.29} parent=15 // pred_check_branch
        %169 = sbr.rel (%p167) target = $region24
      $region23: #{electra_model_forward.29} parent=15 // pred_region
        %p170 = scmp.lt.s32.totalorder %s10, 1
        %s171 = scalar_select %p170, %s10, 1
        %s172 = smul.addr %s171, 4
        %s173 = smul.addr %s172, 4
        %s174 = scalar_lea.vmem %s1, %s173
      $region24: #{electra_model_forward.29} parent=15 // pred_fallthru
        _
      // Predicated region
      $region25: #{electra_model_forward.29} parent=15 // pred_check
        %p175 = pneg %p82
      $region26: #{electra_model_forward.29} parent=15 // pred_check_branch
        %177 = sbr.rel (%p175) target = $region28
      $region27: #{electra_model_forward.29} parent=15 // pred_region
        %p178 = scmp.lt.s32.totalorder %s10, 1
        %s179 = scalar_select %p178, %s10, 1
        %s180 = smul.addr %s179, 4
        %s181 = smul.addr %s180, 4
        %s182 = scalar_lea.vmem %s2, %s181
      $region28: #{electra_model_forward.29} parent=15 // pred_fallthru
        _
      // Predicated region
      $region29: #{electra_model_forward.29} parent=15 // pred_check
        %p183 = pneg %p108
      $region30: #{electra_model_forward.29} parent=15 // pred_check_branch
        %185 = sbr.rel (%p183) target = $region32
      $region31: #{electra_model_forward.29} parent=15 // pred_region
        %p186 = scmp.lt.s32.totalorder %s10, 1
        %s187 = scalar_select %p186, %s10, 1
        %s188 = scalar_lea.vmem %s3, %s187
      $region32: #{electra_model_forward.29} parent=15 // pred_fallthru
        _
    $region16: #{electra_model_forward.29} parent=5 // pred_fallthru
      _
    %p189 = scmp.le.s32.totalorder 1, %s10
    %p190 = scmp.lt.s32.totalorder %s10, 3
    %p191 = pnand %p189, %p190
    %p192 = pneg %p191
    // Predicated region
    $region33: #{electra_model_forward.29} parent=5 // pred_check
      _
    $region34: #{electra_model_forward.29} parent=5 // pred_check_branch
      %194 = sbr.rel (%p191) target = $region36
    $region35: #{electra_model_forward.29} parent=5 // pred_region
      %s195 = ssub.s32 %s10, 1
      %p196 = scmp.lt.s32.totalorder %s15, 1
      %s197 = scalar_select %p196, %s15, 1
      %s198 = smul.addr %s197, 4
      %s199 = smul.addr %s198, 4
      %s200 = scalar_lea.vmem %s0, %s199
      %p201 = pneg %p36
      %p202 = pneg %p33
      %p203 = scmp.lt.s32.totalorder %s15, 1
      %s204 = scalar_select %p203, %s15, 1
      %s205 = smul.addr %s204, 4
      %s206 = smul.addr %s205, 4
      %s207 = scalar_lea.vmem %s1, %s206
      %p208 = pneg %p62
      %p209 = pneg %p59
      %p210 = scmp.lt.s32.totalorder %s15, 1
      %s211 = scalar_select %p210, %s15, 1
      %s212 = smul.addr %s211, 4
      %s213 = smul.addr %s212, 4
      %s214 = scalar_lea.vmem %s2, %s213
      %p215 = pneg %p88
      %p216 = pneg %p85
      %p217 = scmp.lt.s32.totalorder %s15, 1
      %s218 = scalar_select %p217, %s15, 1
      %s219 = scalar_lea.vmem %s3, %s218
      %p220 = pneg %p114
      %p221 = pneg %p111
      %p222 = pneg %p140
      %p223 = pneg %p137
      %p224 = scmp.lt.s32.totalorder %s15, 1
      %s225 = scalar_select %p224, %s15, 1
      %s226 = smul.addr %s225, 2
      %s227 = smul.addr %s226, 4
      %s228 = scalar_lea.vmem %s4, %s227
      %p229 = scmp.lt.s32.totalorder %s15, 1
      %s230 = scalar_select %p229, %s15, 1
      %s231 = smul.addr %s230, 4
      %s232 = smul.addr %s231, 4
      %s233 = scalar_lea.vmem %s0, %s232
      %p234 = scmp.lt.s32.totalorder %s15, 1
      %s235 = scalar_select %p234, %s15, 1
      %s236 = smul.addr %s235, 4
      %s237 = smul.addr %s236, 4
      %s238 = scalar_lea.vmem %s1, %s237
      %p239 = scmp.lt.s32.totalorder %s15, 1
      %s240 = scalar_select %p239, %s15, 1
      %s241 = smul.addr %s240, 4
      %s242 = smul.addr %s241, 4
      %s243 = scalar_lea.vmem %s2, %s242
      %p244 = scmp.lt.s32.totalorder %s15, 1
      %s245 = scalar_select %p244, %s15, 1
      %s246 = scalar_lea.vmem %s3, %s245
      %p247 = scmp.lt.s32.totalorder %s15, 1
      %s248 = scalar_select %p247, %s15, 1
      %s249 = smul.addr %s248, 2
      %s250 = smul.addr %s249, 4
      %s251 = scalar_lea.vmem %s4, %s250
      %v253 = vld [vmem:[%s246] sm:$0x1]
      %v254 = vld [vmem:[%s233] sm:$0xf]
      %v255 = vld [vmem:[%s233 + $0x4] sm:$0xf]
      %v256 = vunpack.c.l.bf16 %v254
      %v257 = vunpack.c.l.bf16 %v255
      %v258 = vmul.f32 %v256, 0.125
      %v259 = vmul.f32 %v257, 0.125
      %v260 = vpack.c.bf16 %v259, %v258
      %v261 = vld [vmem:[%s238] sm:$0xf]
      %v262 = vld [vmem:[%s238 + $0x4] sm:$0xf]
      %v263 = vld [vmem:[%s243] sm:$0xf]
      %v264 = vld [vmem:[%s243 + $0x4] sm:$0xf]
      %v266 = vperm.slane %v253, 0
      %v270 = vunpack.c.l.b16 %v261
      %v271 = vunpack.c.l.b16 %v262
      %v272 = vpack.c.b16 %v271, %v270
      %vm273 = vcmask 523264
      %v275 = vsel %vm273, %v260, 0
      %v278 = vsel %vm273, %v272, 0
      %280 = vmatpush.bf16.xpose.msra.mxu0 0
      %281 = vmatpush.bf16.xpose.msra.mxu0 0
      %282 = vmatpush.bf16.xpose.msra.mxu0 0
      %283 = vmatpush.bf16.xpose.msra.mxu0 0
      %284 = vmatpush.bf16.xpose.msra.mxu0 0
      %285 = vmatpush.bf16.xpose.msra.mxu0 0
      %286 = vmatpush.bf16.xpose.msra.mxu0 0
      %287 = vmatpush.bf16.xpose.msra.mxu0 %v278
      %288 = vmatmul.bf16.gmra.mxu0 %v275
      %v289 = vpop.f32.mrf.mxu0
      %v290 = vadd.f32 %v266, %v289
      %v291 = vpop.f32.mrf.mxu0
      %v292 = vadd.f32 %v266, %v291
      %293 = vdwg.mxu0
      %vm294 = vcmask 130048
      %v295 = vsel %vm294, %v290, -inf
      %296 = vmax.xlane.f32.xlu0 %v295
      %v297 = vpop.xlane.xlu0 %296
      %v298 = vsel %vm294, %v292, -inf
      %299 = vmax.xlane.f32.xlu0 %v298
      %v300 = vpop.xlane.xlu0 %299
      %v301 = vsub.f32 %v290, %v297
      %v302 = vsub.f32 %v292, %v300
      %v303 = vmul.f32 %v301, 1.442695
      %v304 = vpow.pop %v303
      %v305 = vmul.f32 %v302, 1.442695
      %v306 = vpow.pop %v305
      %v307 = vsel %vm294, %v304, 0.0
      %308 = vadd.xlane.f32.xlu0 %v307
      %v309 = vpop.xlane.xlu0 %308
      %v310 = vsel %vm294, %v306, 0.0
      %311 = vadd.xlane.f32.xlu0 %v310
      %v312 = vpop.xlane.xlu0 %311
      %v313 = vrcp.pop %v309
      %v314 = vrcp.pop %v312
      %v315 = vmul.f32 %v304, %v313
      %v316 = vmul.f32 %v306, %v314
      %v317 = vpack.c.bf16 %v316, %v315
      %v320 = vunpack.c.l.b16 %v263
      %v321 = vunpack.c.l.b16 %v264
      %v322 = vpack.c.b16 %v321, %v320
      %v325 = vsel %vm294, %v317, 0
      %327 = vmatpush.bf16.msra.mxu0 0
      %328 = vmatpush.bf16.msra.mxu0 0
      %329 = vmatpush.bf16.msra.mxu0 0
      %330 = vmatpush.bf16.msra.mxu0 0
      %331 = vmatpush.bf16.msra.mxu0 0
      %332 = vmatpush.bf16.msra.mxu0 0
      %333 = vmatpush.bf16.msra.mxu0 0
      %334 = vmatpush.bf16.msra.mxu0 %v322
      %335 = vmatmul.bf16.gmra.mxu0 %v325
      %v336 = vpop.f32.mrf.mxu0
      %v337 = vadd.f32 0.0, %v336
      %v338 = vpop.f32.mrf.mxu0
      %v339 = vadd.f32 0.0, %v338
      %340 = vdwg.mxu0
      %v341 = vpack.c.bf16 %v337, %v337
      %v342 = vpack.c.bf16 %v339, %v339
      %s343 = scalar_lea.vmem %s233, 8
      %v344 = vld [vmem:[%s343] sm:$0xf]
      %v345 = vld [vmem:[%s343 + $0x4] sm:$0xf]
      %v346 = vunpack.c.l.bf16 %v344
      %v347 = vunpack.c.l.bf16 %v345
      %v348 = vmul.f32 %v346, 0.125
      %v349 = vmul.f32 %v347, 0.125
      %v350 = vpack.c.bf16 %v349, %v348
      %s351 = scalar_lea.vmem %s238, 8
      %v352 = vld [vmem:[%s351] sm:$0xf]
      %v353 = vld [vmem:[%s351 + $0x4] sm:$0xf]
      %s354 = scalar_lea.vmem %s243, 8
      %v355 = vld [vmem:[%s354] sm:$0xf]
      %v356 = vld [vmem:[%s354 + $0x4] sm:$0xf]
      %v359 = vunpack.c.l.b16 %v352
      %v360 = vunpack.c.l.b16 %v353
      %v361 = vpack.c.b16 %v360, %v359
      %v363 = vsel %vm273, %v350, 0
      %v366 = vsel %vm273, %v361, 0
      %368 = vmatpush.bf16.xpose.msra.mxu0 0
      %369 = vmatpush.bf16.xpose.msra.mxu0 0
      %370 = vmatpush.bf16.xpose.msra.mxu0 0
      %371 = vmatpush.bf16.xpose.msra.mxu0 0
      %372 = vmatpush.bf16.xpose.msra.mxu0 0
      %373 = vmatpush.bf16.xpose.msra.mxu0 0
      %374 = vmatpush.bf16.xpose.msra.mxu0 0
      %375 = vmatpush.bf16.xpose.msra.mxu0 %v366
      %376 = vmatmul.bf16.gmra.mxu0 %v363
      %v377 = vpop.f32.mrf.mxu0
      %v378 = vadd.f32 %v266, %v377
      %v379 = vpop.f32.mrf.mxu0
      %v380 = vadd.f32 %v266, %v379
      %381 = vdwg.mxu0
      %v382 = vsel %vm294, %v378, -inf
      %383 = vmax.xlane.f32.xlu0 %v382
      %v384 = vpop.xlane.xlu0 %383
      %v385 = vsel %vm294, %v380, -inf
      %386 = vmax.xlane.f32.xlu0 %v385
      %v387 = vpop.xlane.xlu0 %386
      %v388 = vsub.f32 %v378, %v384
      %v389 = vsub.f32 %v380, %v387
      %v390 = vmul.f32 %v388, 1.442695
      %v391 = vpow.pop %v390
      %v392 = vmul.f32 %v389, 1.442695
      %v393 = vpow.pop %v392
      %v394 = vsel %vm294, %v391, 0.0
      %395 = vadd.xlane.f32.xlu0 %v394
      %v396 = vpop.xlane.xlu0 %395
      %v397 = vsel %vm294, %v393, 0.0
      %398 = vadd.xlane.f32.xlu0 %v397
      %v399 = vpop.xlane.xlu0 %398
      %v400 = vrcp.pop %v396
      %v401 = vrcp.pop %v399
      %v402 = vmul.f32 %v391, %v400
      %v403 = vmul.f32 %v393, %v401
      %v404 = vpack.c.bf16 %v403, %v402
      %v407 = vunpack.c.l.b16 %v355
      %v408 = vunpack.c.l.b16 %v356
      %v409 = vpack.c.b16 %v408, %v407
      %v412 = vsel %vm294, %v404, 0
      %414 = vmatpush.bf16.msra.mxu0 0
      %415 = vmatpush.bf16.msra.mxu0 0
      %416 = vmatpush.bf16.msra.mxu0 0
      %417 = vmatpush.bf16.msra.mxu0 0
      %418 = vmatpush.bf16.msra.mxu0 0
      %419 = vmatpush.bf16.msra.mxu0 0
      %420 = vmatpush.bf16.msra.mxu0 0
      %421 = vmatpush.bf16.msra.mxu0 %v409
      %422 = vmatmul.bf16.gmra.mxu0 %v412
      %v423 = vpop.f32.mrf.mxu0
      %v424 = vadd.f32 0.0, %v423
      %v425 = vpop.f32.mrf.mxu0
      %v426 = vadd.f32 0.0, %v425
      %427 = vdwg.mxu0
      %v428 = vpack.c.bf16 %v424, %v424
      %v429 = vpack.c.bf16 %v426, %v426
      %v432 = vunpack.c.l.b16 %v341
      %v433 = vunpack.c.l.b16 %v342
      %v434 = vpack.c.b16 %v433, %v432
      %v437 = vunpack.c.l.b16 %v428
      %v438 = vunpack.c.l.b16 %v429
      %v439 = vpack.c.b16 %v438, %v437
      %440 = vrot.lane.b32.xlu0 %v439, 64
      %v441 = vpop.permute.xlu0 %440
      %v444 = vsel %vm273, %v434, %v441
      %v446 = vunpack.c.l.b16 %v444
      %v447 = vunpack.c.h.b16 %v444
      %v448 = vpack.c.b16 %v446, %v446
      %v449 = vpack.c.b16 %v447, %v447
      %452 = vst [vmem:[%s251] sm:$0xf] %v448
      %453 = vst [vmem:[%s251 + $0x4] sm:$0xf] %v449
      %p454 = scmp.lt.s32.totalorder %s15, 1
      %s455 = scalar_select %p454, %s15, 1
      %s456 = smul.addr %s455, 2
      %s457 = smul.addr %s456, 4
      %s458 = scalar_lea.vmem %s4, %s457
      // Predicated region
      $region37: #{electra_model_forward.29} parent=35 // pred_check
        %p459 = pneg %p137
      $region38: #{electra_model_forward.29} parent=35 // pred_check_branch
        %461 = sbr.rel (%p459) target = $region40
      $region39: #{electra_model_forward.29} parent=35 // pred_region
        _
      $region40: #{electra_model_forward.29} parent=35 // pred_fallthru
        _
    $region36: #{electra_model_forward.29} parent=5 // pred_fallthru
      _
    %p462 = scmp.le.s32.totalorder 2, %s10
    // Predicated region
    $region41: #{electra_model_forward.29} parent=5 // pred_check
      %p463 = pneg %p462
    $region42: #{electra_model_forward.29} parent=5 // pred_check_branch
      %465 = sbr.rel (%p463) target = $region44
    $region43: #{electra_model_forward.29} parent=5 // pred_region
      %s466 = ssub.s32 %s10, 2
      // Predicated region
      $region45: #{electra_model_forward.29} parent=43 // pred_check
        %p467 = pneg %p143
      $region46: #{electra_model_forward.29} parent=43 // pred_check_branch
        %469 = sbr.rel (%p467) target = $region48
      $region47: #{electra_model_forward.29} parent=43 // pred_region
        %p470 = scmp.lt.s32.totalorder %s16, 1
        %s471 = scalar_select %p470, %s16, 1
        %s472 = smul.addr %s471, 2
        %s473 = smul.addr %s472, 4
        %s474 = scalar_lea.vmem %s4, %s473
      $region48: #{electra_model_forward.29} parent=43 // pred_fallthru
        _
    $region44: #{electra_model_forward.29} parent=5 // pred_fallthru
      _
  $region6: #{electra_model_forward.29} parent=0 // loop_footer
    %s14 = sadd.s32 1, %s10
  $region7: #{electra_model_forward.29} parent=0 // loop_footer_branch
    %9 = sbr.rel target = $region3
  $region8: #{electra_model_forward.29} parent=0 // loop_exit
    _

// kernel: electra_model_forward.31
$region0: #{electra_model_forward.31}
  #allocation0 [shape = 'u32[]', space=smem, size = 0x4, offset = 0x4, fixed_abs, tag = 'smem constant byte address 0x4 - core index']
  #allocation1 [shape = 'u32[72,128]{1,0:T(1,128)}', space=vmem, size = 0x9000, scoped, tag = 'internal scratch']
  #allocation2 [shape = 'f32[32,256]{1,0:T(8,128)}', space=vmem, size = 0x8000, scoped, tag = 'scratch operand']
  %s0 = inlined_call_operand.vmem [shape: bf16[32,128], index: 0, kind: input, shape index: {}]
  %s1 = inlined_call_operand.vmem [shape: bf16[128,256], index: 1, kind: input, shape index: {}]
  %s2 = inlined_call_operand.vmem [shape: f32[1,256], index: 2, kind: input, shape index: {}]
  %s3 = inlined_call_operand.vmem [shape: bf16[32,256], index: 3, kind: output, shape index: {}]
  %s4 = sld [smem:[#allocation0]]
  $region30: #{electra_model_forward.31} parent=0
    _
  %s6 = ssub.s32 1, %s4
  %s7 = scalar_select 0, %s6, %s4
  // Predicated region
  $region2: #{electra_model_forward.31} parent=0 // pred_check
    _
  $region3: #{electra_model_forward.31} parent=0 // pred_check_branch
    %9 = sbr.rel (0) target = $region5
  $region4: #{electra_model_forward.31} parent=0 // pred_region
    _
  $region5: #{electra_model_forward.31} parent=0 // pred_fallthru
    _
  // Predicated region
  $region6: #{electra_model_forward.31} parent=0 // pred_check
    _
  $region7: #{electra_model_forward.31} parent=0 // pred_check_branch
    %11 = sbr.rel (0) target = $region9
  $region8: #{electra_model_forward.31} parent=0 // pred_region
    _
  $region9: #{electra_model_forward.31} parent=0 // pred_fallthru
    _
  // Predicated region
  $region10: #{electra_model_forward.31} parent=0 // pred_check
    _
  $region11: #{electra_model_forward.31} parent=0 // pred_check_branch
    %13 = sbr.rel (0) target = $region13
  $region12: #{electra_model_forward.31} parent=0 // pred_region
    _
  $region13: #{electra_model_forward.31} parent=0 // pred_fallthru
    _
  %p14 = scmp.eq.s32.totalorder 0, 0
  // Predicated region
  $region14: #{electra_model_forward.31} parent=0 // pred_check
    %p15 = pneg %p14
  $region15: #{electra_model_forward.31} parent=0 // pred_check_branch
    %17 = sbr.rel (%p15) target = $region17
  $region16: #{electra_model_forward.31} parent=0 // pred_region
    %18 = vst [vmem:[#allocation2] sm:$0xff] 0.0
    %19 = vst [vmem:[#allocation2 + $0x8] sm:$0xff] 0.0
    %20 = vst [vmem:[#allocation2 + $0x10] sm:$0xff] 0.0
    %21 = vst [vmem:[#allocation2 + $0x18] sm:$0xff] 0.0
    %22 = vst [vmem:[#allocation2 + $0x20] sm:$0xff] 0.0
    %23 = vst [vmem:[#allocation2 + $0x28] sm:$0xff] 0.0
    %24 = vst [vmem:[#allocation2 + $0x30] sm:$0xff] 0.0
    %25 = vst [vmem:[#allocation2 + $0x38] sm:$0xff] 0.0
  $region17: #{electra_model_forward.31} parent=0 // pred_fallthru
    _
  %v26 = vld [vmem:[#allocation2] sm:$0xff]
  %v27 = vld [vmem:[#allocation2 + $0x8] sm:$0xff]
  %v28 = vld [vmem:[#allocation2 + $0x10] sm:$0xff]
  %v29 = vld [vmem:[#allocation2 + $0x18] sm:$0xff]
  %v30 = vld [vmem:[#allocation2 + $0x20] sm:$0xff]
  %v31 = vld [vmem:[#allocation2 + $0x28] sm:$0xff]
  %v32 = vld [vmem:[#allocation2 + $0x30] sm:$0xff]
  %v33 = vld [vmem:[#allocation2 + $0x38] sm:$0xff]
  %v34 = vld [vmem:[%s0] sm:$0xf]
  %v35 = vld [vmem:[%s0 + $0x4] sm:$0xf]
  %v36 = vld [vmem:[%s0 + $0x8] sm:$0xf]
  %v37 = vld [vmem:[%s0 + $0xc] sm:$0xf]
  %v38 = vld [vmem:[%s1] sm:$0xff]
  %v39 = vld [vmem:[%s1 + $0x8] sm:$0xff]
  %v40 = vld [vmem:[%s1 + $0x10] sm:$0xff]
  %v41 = vld [vmem:[%s1 + $0x18] sm:$0xff]
  %v42 = vld [vmem:[%s1 + $0x20] sm:$0xff]
  %v43 = vld [vmem:[%s1 + $0x28] sm:$0xff]
  %v44 = vld [vmem:[%s1 + $0x30] sm:$0xff]
  %v45 = vld [vmem:[%s1 + $0x38] sm:$0xff]
  %v46 = vld [vmem:[%s1 + $0x40] sm:$0xff]
  %v47 = vld [vmem:[%s1 + $0x48] sm:$0xff]
  %v48 = vld [vmem:[%s1 + $0x50] sm:$0xff]
  %v49 = vld [vmem:[%s1 + $0x58] sm:$0xff]
  %v50 = vld [vmem:[%s1 + $0x60] sm:$0xff]
  %v51 = vld [vmem:[%s1 + $0x68] sm:$0xff]
  %v52 = vld [vmem:[%s1 + $0x70] sm:$0xff]
  %v53 = vld [vmem:[%s1 + $0x78] sm:$0xff]
  %v58 = vunpack.c.l.b16 %v34
  %v59 = vunpack.c.l.b16 %v35
  %v60 = vunpack.c.l.b16 %v36
  %v61 = vunpack.c.l.b16 %v37
  %v62 = vpack.c.b16 %v59, %v58
  %v63 = vpack.c.b16 %v61, %v60
  %v82 = vunpack.c.l.b16 %v38
  %v83 = vunpack.c.h.b16 %v38
  %v84 = vunpack.c.l.b16 %v39
  %v85 = vunpack.c.h.b16 %v39
  %v86 = vunpack.c.l.b16 %v40
  %v87 = vunpack.c.h.b16 %v40
  %v88 = vunpack.c.l.b16 %v41
  %v89 = vunpack.c.h.b16 %v41
  %v90 = vunpack.c.l.b16 %v42
  %v91 = vunpack.c.h.b16 %v42
  %v92 = vunpack.c.l.b16 %v43
  %v93 = vunpack.c.h.b16 %v43
  %v94 = vunpack.c.l.b16 %v44
  %v95 = vunpack.c.h.b16 %v44
  %v96 = vunpack.c.l.b16 %v45
  %v97 = vunpack.c.h.b16 %v45
  %v98 = vunpack.c.l.b16 %v46
  %v99 = vunpack.c.h.b16 %v46
  %v100 = vunpack.c.l.b16 %v47
  %v101 = vunpack.c.h.b16 %v47
  %v102 = vunpack.c.l.b16 %v48
  %v103 = vunpack.c.h.b16 %v48
  %v104 = vunpack.c.l.b16 %v49
  %v105 = vunpack.c.h.b16 %v49
  %v106 = vunpack.c.l.b16 %v50
  %v107 = vunpack.c.h.b16 %v50
  %v108 = vunpack.c.l.b16 %v51
  %v109 = vunpack.c.h.b16 %v51
  %v110 = vunpack.c.l.b16 %v52
  %v111 = vunpack.c.h.b16 %v52
  %v112 = vunpack.c.l.b16 %v53
  %v113 = vunpack.c.h.b16 %v53
  %v114 = vpack.c.b16 %v84, %v82
  %v115 = vpack.c.b16 %v85, %v83
  %v116 = vpack.c.b16 %v88, %v86
  %v117 = vpack.c.b16 %v89, %v87
  %v118 = vpack.c.b16 %v92, %v90
  %v119 = vpack.c.b16 %v93, %v91
  %v120 = vpack.c.b16 %v96, %v94
  %v121 = vpack.c.b16 %v97, %v95
  %v122 = vpack.c.b16 %v100, %v98
  %v123 = vpack.c.b16 %v101, %v99
  %v124 = vpack.c.b16 %v104, %v102
  %v125 = vpack.c.b16 %v105, %v103
  %v126 = vpack.c.b16 %v108, %v106
  %v127 = vpack.c.b16 %v109, %v107
  %v128 = vpack.c.b16 %v112, %v110
  %v129 = vpack.c.b16 %v113, %v111
  %146 = vmatpush.bf16.msra.mxu0 %v128
  %147 = vmatpush.bf16.msra.mxu0 %v126
  %148 = vmatpush.bf16.msra.mxu0 %v124
  %149 = vmatpush.bf16.msra.mxu0 %v122
  %150 = vmatpush.bf16.msra.mxu0 %v120
  %151 = vmatpush.bf16.msra.mxu0 %v118
  %152 = vmatpush.bf16.msra.mxu0 %v116
  %153 = vmatpush.bf16.msra.mxu0 %v114
  %154 = vmatmul.bf16.gmra.mxu0 %v62
  %v155 = vpop.f32.mrf.mxu0
  %v156 = vadd.f32 0.0, %v155
  %v157 = vpop.f32.mrf.mxu0
  %v158 = vadd.f32 0.0, %v157
  %159 = vmatmul.bf16.gmra.mxu0 %v63
  %v160 = vpop.f32.mrf.mxu0
  %v161 = vadd.f32 0.0, %v160
  %v162 = vpop.f32.mrf.mxu0
  %v163 = vadd.f32 0.0, %v162
  %164 = vdwg.mxu0
  %165 = vmatpush.bf16.msra.mxu0 %v129
  %166 = vmatpush.bf16.msra.mxu0 %v127
  %167 = vmatpush.bf16.msra.mxu0 %v125
  %168 = vmatpush.bf16.msra.mxu0 %v123
  %169 = vmatpush.bf16.msra.mxu0 %v121
  %170 = vmatpush.bf16.msra.mxu0 %v119
  %171 = vmatpush.bf16.msra.mxu0 %v117
  %172 = vmatpush.bf16.msra.mxu0 %v115
  %173 = vmatmul.bf16.gmra.mxu0 %v62
  %v174 = vpop.f32.mrf.mxu0
  %v175 = vadd.f32 0.0, %v174
  %v176 = vpop.f32.mrf.mxu0
  %v177 = vadd.f32 0.0, %v176
  %178 = vmatmul.bf16.gmra.mxu0 %v63
  %v179 = vpop.f32.mrf.mxu0
  %v180 = vadd.f32 0.0, %v179
  %v181 = vpop.f32.mrf.mxu0
  %v182 = vadd.f32 0.0, %v181
  %183 = vdwg.mxu0
  %v184 = vadd.f32 %v26, %v156
  %v185 = vadd.f32 %v27, %v175
  %v186 = vadd.f32 %v28, %v158
  %v187 = vadd.f32 %v29, %v177
  %v188 = vadd.f32 %v30, %v161
  %v189 = vadd.f32 %v31, %v180
  %v190 = vadd.f32 %v32, %v163
  %v191 = vadd.f32 %v33, %v182
  %192 = vst [vmem:[#allocation2] sm:$0xff] %v184
  %193 = vst [vmem:[#allocation2 + $0x8] sm:$0xff] %v185
  %194 = vst [vmem:[#allocation2 + $0x10] sm:$0xff] %v186
  %195 = vst [vmem:[#allocation2 + $0x18] sm:$0xff] %v187
  %196 = vst [vmem:[#allocation2 + $0x20] sm:$0xff] %v188
  %197 = vst [vmem:[#allocation2 + $0x28] sm:$0xff] %v189
  %198 = vst [vmem:[#allocation2 + $0x30] sm:$0xff] %v190
  %199 = vst [vmem:[#allocation2 + $0x38] sm:$0xff] %v191
  // Predicated region
  $region18: #{electra_model_forward.31} parent=0 // pred_check
    %p200 = pneg %p14
  $region19: #{electra_model_forward.31} parent=0 // pred_check_branch
    %202 = sbr.rel (%p200) target = $region21
  $region20: #{electra_model_forward.31} parent=0 // pred_region
    %v203 = vld [vmem:[#allocation2] sm:$0xff]
    %v204 = vld [vmem:[#allocation2 + $0x8] sm:$0xff]
    %v205 = vld [vmem:[#allocation2 + $0x10] sm:$0xff]
    %v206 = vld [vmem:[#allocation2 + $0x18] sm:$0xff]
    %v207 = vld [vmem:[#allocation2 + $0x20] sm:$0xff]
    %v208 = vld [vmem:[#allocation2 + $0x28] sm:$0xff]
    %v209 = vld [vmem:[#allocation2 + $0x30] sm:$0xff]
    %v210 = vld [vmem:[#allocation2 + $0x38] sm:$0xff]
    %v211 = vld [vmem:[%s2] sm:$0x3]
    %v213 = vperm.slane %v211, 0
    %v214 = vperm.slane %v211, 1
    %v217 = vadd.f32 %v203, %v213
    %v218 = vadd.f32 %v204, %v214
    %v219 = vadd.f32 %v205, %v213
    %v220 = vadd.f32 %v206, %v214
    %v221 = vadd.f32 %v207, %v213
    %v222 = vadd.f32 %v208, %v214
    %v223 = vadd.f32 %v209, %v213
    %v224 = vadd.f32 %v210, %v214
    %v225 = vmul.f32 %v217, %v217
    %v226 = vmul.f32 %v218, %v218
    %v227 = vmul.f32 %v219, %v219
    %v228 = vmul.f32 %v220, %v220
    %v229 = vmul.f32 %v221, %v221
    %v230 = vmul.f32 %v222, %v222
    %v231 = vmul.f32 %v223, %v223
    %v232 = vmul.f32 %v224, %v224
    %v233 = vmul.f32 %v217, %v225
    %v234 = vmul.f32 %v218, %v226
    %v235 = vmul.f32 %v219, %v227
    %v236 = vmul.f32 %v220, %v228
    %v237 = vmul.f32 %v221, %v229
    %v238 = vmul.f32 %v222, %v230
    %v239 = vmul.f32 %v223, %v231
    %v240 = vmul.f32 %v224, %v232
    %v241 = vmul.f32 %v233, 0.044715
    %v242 = vmul.f32 %v234, 0.044715
    %v243 = vmul.f32 %v235, 0.044715
    %v244 = vmul.f32 %v236, 0.044715
    %v245 = vmul.f32 %v237, 0.044715
    %v246 = vmul.f32 %v238, 0.044715
    %v247 = vmul.f32 %v239, 0.044715
    %v248 = vmul.f32 %v240, 0.044715
    %v249 = vadd.f32 %v217, %v241
    %v250 = vadd.f32 %v218, %v242
    %v251 = vadd.f32 %v219, %v243
    %v252 = vadd.f32 %v220, %v244
    %v253 = vadd.f32 %v221, %v245
    %v254 = vadd.f32 %v222, %v246
    %v255 = vadd.f32 %v223, %v247
    %v256 = vadd.f32 %v224, %v248
    %v257 = vmul.f32 %v249, 0.7978846
    %v258 = vmul.f32 %v250, 0.7978846
    %v259 = vmul.f32 %v251, 0.7978846
    %v260 = vmul.f32 %v252, 0.7978846
    %v261 = vmul.f32 %v253, 0.7978846
    %v262 = vmul.f32 %v254, 0.7978846
    %v263 = vmul.f32 %v255, 0.7978846
    %v264 = vmul.f32 %v256, 0.7978846
    %v265 = vtanh.pop %v257
    %v266 = vtanh.pop %v258
    %v267 = vtanh.pop %v259
    %v268 = vtanh.pop %v260
    %v269 = vtanh.pop %v261
    %v270 = vtanh.pop %v262
    %v271 = vtanh.pop %v263
    %v272 = vtanh.pop %v264
    %v273 = vadd.f32 %v265, 1.0
    %v274 = vadd.f32 %v266, 1.0
    %v275 = vadd.f32 %v267, 1.0
    %v276 = vadd.f32 %v268, 1.0
    %v277 = vadd.f32 %v269, 1.0
    %v278 = vadd.f32 %v270, 1.0
    %v279 = vadd.f32 %v271, 1.0
    %v280 = vadd.f32 %v272, 1.0
    %v281 = vmul.f32 %v273, 0.5
    %v282 = vmul.f32 %v274, 0.5
    %v283 = vmul.f32 %v275, 0.5
    %v284 = vmul.f32 %v276, 0.5
    %v285 = vmul.f32 %v277, 0.5
    %v286 = vmul.f32 %v278, 0.5
    %v287 = vmul.f32 %v279, 0.5
    %v288 = vmul.f32 %v280, 0.5
    %v289 = vmul.f32 %v217, %v281
    %v290 = vmul.f32 %v218, %v282
    %v291 = vmul.f32 %v219, %v283
    %v292 = vmul.f32 %v220, %v284
    %v293 = vmul.f32 %v221, %v285
    %v294 = vmul.f32 %v222, %v286
    %v295 = vmul.f32 %v223, %v287
    %v296 = vmul.f32 %v224, %v288
    %v297 = vpack.c.bf16 %v290, %v289
    %v298 = vpack.c.bf16 %v292, %v291
    %v299 = vpack.c.bf16 %v294, %v293
    %v300 = vpack.c.bf16 %v296, %v295
    %301 = vst [vmem:[%s3] sm:$0xff] %v297
    %302 = vst [vmem:[%s3 + $0x8] sm:$0xff] %v298
    %303 = vst [vmem:[%s3 + $0x10] sm:$0xff] %v299
    %304 = vst [vmem:[%s3 + $0x18] sm:$0xff] %v300
  $region21: #{electra_model_forward.31} parent=0 // pred_fallthru
    _
  // Predicated region
  $region22: #{electra_model_forward.31} parent=0 // pred_check
    _
  $region23: #{electra_model_forward.31} parent=0 // pred_check_branch
    %306 = sbr.rel (0) target = $region25
  $region24: #{electra_model_forward.31} parent=0 // pred_region
    _
  $region25: #{electra_model_forward.31} parent=0 // pred_fallthru
    _
  // Predicated region
  $region26: #{electra_model_forward.31} parent=0 // pred_check
    _
  $region27: #{electra_model_forward.31} parent=0 // pred_check_branch
    %308 = sbr.rel (0) target = $region29
  $region28: #{electra_model_forward.31} parent=0 // pred_region
    _
  $region29: #{electra_model_forward.31} parent=0 // pred_fallthru
    _

// kernel: electra_model_forward.32
$region0: #{electra_model_forward.32}
  #allocation0 [shape = 'u32[]', space=smem, size = 0x4, offset = 0x4, fixed_abs, tag = 'smem constant byte address 0x4 - core index']
  #allocation1 [shape = 'u32[72,128]{1,0:T(1,128)}', space=vmem, size = 0x9000, scoped, tag = 'internal scratch']
  #allocation2 [shape = 'f32[32,128]{1,0:T(8,128)}', space=vmem, size = 0x4000, scoped, tag = 'scratch operand']
  %s0 = inlined_call_operand.vmem [shape: bf16[32,256], index: 0, kind: input, shape index: {}]
  %s1 = inlined_call_operand.vmem [shape: bf16[256,128], index: 1, kind: input, shape index: {}]
  %s2 = inlined_call_operand.vmem [shape: f32[1,128], index: 2, kind: input, shape index: {}]
  %s3 = inlined_call_operand.vmem [shape: bf16[32,128], index: 3, kind: input, shape index: {}]
  %s4 = inlined_call_operand.vmem [shape: f32[1,128], index: 4, kind: input, shape index: {}]
  %s5 = inlined_call_operand.vmem [shape: f32[1,128], index: 5, kind: input, shape index: {}]
  %s6 = inlined_call_operand.vmem [shape: bf16[32,128], index: 6, kind: output, shape index: {}]
  %s7 = sld [smem:[#allocation0]]
  $region42: #{electra_model_forward.32} parent=0
    _
  %s9 = ssub.s32 1, %s7
  %s10 = scalar_select 0, %s9, %s7
  // Predicated region
  $region2: #{electra_model_forward.32} parent=0 // pred_check
    _
  $region3: #{electra_model_forward.32} parent=0 // pred_check_branch
    %12 = sbr.rel (0) target = $region5
  $region4: #{electra_model_forward.32} parent=0 // pred_region
    _
  $region5: #{electra_model_forward.32} parent=0 // pred_fallthru
    _
  // Predicated region
  $region6: #{electra_model_forward.32} parent=0 // pred_check
    _
  $region7: #{electra_model_forward.32} parent=0 // pred_check_branch
    %14 = sbr.rel (0) target = $region9
  $region8: #{electra_model_forward.32} parent=0 // pred_region
    _
  $region9: #{electra_model_forward.32} parent=0 // pred_fallthru
    _
  // Predicated region
  $region10: #{electra_model_forward.32} parent=0 // pred_check
    _
  $region11: #{electra_model_forward.32} parent=0 // pred_check_branch
    %16 = sbr.rel (0) target = $region13
  $region12: #{electra_model_forward.32} parent=0 // pred_region
    _
  $region13: #{electra_model_forward.32} parent=0 // pred_fallthru
    _
  // Predicated region
  $region14: #{electra_model_forward.32} parent=0 // pred_check
    _
  $region15: #{electra_model_forward.32} parent=0 // pred_check_branch
    %18 = sbr.rel (0) target = $region17
  $region16: #{electra_model_forward.32} parent=0 // pred_region
    _
  $region17: #{electra_model_forward.32} parent=0 // pred_fallthru
    _
  // Predicated region
  $region18: #{electra_model_forward.32} parent=0 // pred_check
    _
  $region19: #{electra_model_forward.32} parent=0 // pred_check_branch
    %20 = sbr.rel (0) target = $region21
  $region20: #{electra_model_forward.32} parent=0 // pred_region
    _
  $region21: #{electra_model_forward.32} parent=0 // pred_fallthru
    _
  // Predicated region
  $region22: #{electra_model_forward.32} parent=0 // pred_check
    _
  $region23: #{electra_model_forward.32} parent=0 // pred_check_branch
    %22 = sbr.rel (0) target = $region25
  $region24: #{electra_model_forward.32} parent=0 // pred_region
    _
  $region25: #{electra_model_forward.32} parent=0 // pred_fallthru
    _
  %p23 = scmp.eq.s32.totalorder 0, 0
  // Predicated region
  $region26: #{electra_model_forward.32} parent=0 // pred_check
    %p24 = pneg %p23
  $region27: #{electra_model_forward.32} parent=0 // pred_check_branch
    %26 = sbr.rel (%p24) target = $region29
  $region28: #{electra_model_forward.32} parent=0 // pred_region
    %27 = vst [vmem:[#allocation2] sm:$0xff] 0.0
    %28 = vst [vmem:[#allocation2 + $0x8] sm:$0xff] 0.0
    %29 = vst [vmem:[#allocation2 + $0x10] sm:$0xff] 0.0
    %30 = vst [vmem:[#allocation2 + $0x18] sm:$0xff] 0.0
  $region29: #{electra_model_forward.32} parent=0 // pred_fallthru
    _
  %v31 = vld [vmem:[#allocation2] sm:$0xff]
  %v32 = vld [vmem:[#allocation2 + $0x8] sm:$0xff]
  %v33 = vld [vmem:[#allocation2 + $0x10] sm:$0xff]
  %v34 = vld [vmem:[#allocation2 + $0x18] sm:$0xff]
  %v35 = vld [vmem:[%s0] sm:$0xff]
  %v36 = vld [vmem:[%s0 + $0x8] sm:$0xff]
  %v37 = vld [vmem:[%s0 + $0x10] sm:$0xff]
  %v38 = vld [vmem:[%s0 + $0x18] sm:$0xff]
  %v39 = vld [vmem:[%s1] sm:$0xf]
  %v40 = vld [vmem:[%s1 + $0x4] sm:$0xf]
  %v41 = vld [vmem:[%s1 + $0x8] sm:$0xf]
  %v42 = vld [vmem:[%s1 + $0xc] sm:$0xf]
  %v43 = vld [vmem:[%s1 + $0x10] sm:$0xf]
  %v44 = vld [vmem:[%s1 + $0x14] sm:$0xf]
  %v45 = vld [vmem:[%s1 + $0x18] sm:$0xf]
  %v46 = vld [vmem:[%s1 + $0x1c] sm:$0xf]
  %v47 = vld [vmem:[%s1 + $0x20] sm:$0xf]
  %v48 = vld [vmem:[%s1 + $0x24] sm:$0xf]
  %v49 = vld [vmem:[%s1 + $0x28] sm:$0xf]
  %v50 = vld [vmem:[%s1 + $0x2c] sm:$0xf]
  %v51 = vld [vmem:[%s1 + $0x30] sm:$0xf]
  %v52 = vld [vmem:[%s1 + $0x34] sm:$0xf]
  %v53 = vld [vmem:[%s1 + $0x38] sm:$0xf]
  %v54 = vld [vmem:[%s1 + $0x3c] sm:$0xf]
  %v55 = vld [vmem:[%s1 + $0x40] sm:$0xf]
  %v56 = vld [vmem:[%s1 + $0x44] sm:$0xf]
  %v57 = vld [vmem:[%s1 + $0x48] sm:$0xf]
  %v58 = vld [vmem:[%s1 + $0x4c] sm:$0xf]
  %v59 = vld [vmem:[%s1 + $0x50] sm:$0xf]
  %v60 = vld [vmem:[%s1 + $0x54] sm:$0xf]
  %v61 = vld [vmem:[%s1 + $0x58] sm:$0xf]
  %v62 = vld [vmem:[%s1 + $0x5c] sm:$0xf]
  %v63 = vld [vmem:[%s1 + $0x60] sm:$0xf]
  %v64 = vld [vmem:[%s1 + $0x64] sm:$0xf]
  %v65 = vld [vmem:[%s1 + $0x68] sm:$0xf]
  %v66 = vld [vmem:[%s1 + $0x6c] sm:$0xf]
  %v67 = vld [vmem:[%s1 + $0x70] sm:$0xf]
  %v68 = vld [vmem:[%s1 + $0x74] sm:$0xf]
  %v69 = vld [vmem:[%s1 + $0x78] sm:$0xf]
  %v70 = vld [vmem:[%s1 + $0x7c] sm:$0xf]
  %v75 = vunpack.c.l.b16 %v35
  %v76 = vunpack.c.h.b16 %v35
  %v77 = vunpack.c.l.b16 %v36
  %v78 = vunpack.c.h.b16 %v36
  %v79 = vunpack.c.l.b16 %v37
  %v80 = vunpack.c.h.b16 %v37
  %v81 = vunpack.c.l.b16 %v38
  %v82 = vunpack.c.h.b16 %v38
  %v83 = vpack.c.b16 %v77, %v75
  %v84 = vpack.c.b16 %v78, %v76
  %v85 = vpack.c.b16 %v81, %v79
  %v86 = vpack.c.b16 %v82, %v80
  %v123 = vunpack.c.l.b16 %v39
  %v124 = vunpack.c.l.b16 %v40
  %v125 = vunpack.c.l.b16 %v41
  %v126 = vunpack.c.l.b16 %v42
  %v127 = vunpack.c.l.b16 %v43
  %v128 = vunpack.c.l.b16 %v44
  %v129 = vunpack.c.l.b16 %v45
  %v130 = vunpack.c.l.b16 %v46
  %v131 = vunpack.c.l.b16 %v47
  %v132 = vunpack.c.l.b16 %v48
  %v133 = vunpack.c.l.b16 %v49
  %v134 = vunpack.c.l.b16 %v50
  %v135 = vunpack.c.l.b16 %v51
  %v136 = vunpack.c.l.b16 %v52
  %v137 = vunpack.c.l.b16 %v53
  %v138 = vunpack.c.l.b16 %v54
  %v139 = vunpack.c.l.b16 %v55
  %v140 = vunpack.c.l.b16 %v56
  %v141 = vunpack.c.l.b16 %v57
  %v142 = vunpack.c.l.b16 %v58
  %v143 = vunpack.c.l.b16 %v59
  %v144 = vunpack.c.l.b16 %v60
  %v145 = vunpack.c.l.b16 %v61
  %v146 = vunpack.c.l.b16 %v62
  %v147 = vunpack.c.l.b16 %v63
  %v148 = vunpack.c.l.b16 %v64
  %v149 = vunpack.c.l.b16 %v65
  %v150 = vunpack.c.l.b16 %v66
  %v151 = vunpack.c.l.b16 %v67
  %v152 = vunpack.c.l.b16 %v68
  %v153 = vunpack.c.l.b16 %v69
  %v154 = vunpack.c.l.b16 %v70
  %v155 = vpack.c.b16 %v124, %v123
  %v156 = vpack.c.b16 %v126, %v125
  %v157 = vpack.c.b16 %v128, %v127
  %v158 = vpack.c.b16 %v130, %v129
  %v159 = vpack.c.b16 %v132, %v131
  %v160 = vpack.c.b16 %v134, %v133
  %v161 = vpack.c.b16 %v136, %v135
  %v162 = vpack.c.b16 %v138, %v137
  %v163 = vpack.c.b16 %v140, %v139
  %v164 = vpack.c.b16 %v142, %v141
  %v165 = vpack.c.b16 %v144, %v143
  %v166 = vpack.c.b16 %v146, %v145
  %v167 = vpack.c.b16 %v148, %v147
  %v168 = vpack.c.b16 %v150, %v149
  %v169 = vpack.c.b16 %v152, %v151
  %v170 = vpack.c.b16 %v154, %v153
  %187 = vmatpush.bf16.msra.mxu0 %v162
  %188 = vmatpush.bf16.msra.mxu0 %v161
  %189 = vmatpush.bf16.msra.mxu0 %v160
  %190 = vmatpush.bf16.msra.mxu0 %v159
  %191 = vmatpush.bf16.msra.mxu0 %v158
  %192 = vmatpush.bf16.msra.mxu0 %v157
  %193 = vmatpush.bf16.msra.mxu0 %v156
  %194 = vmatpush.bf16.msra.mxu0 %v155
  %195 = vmatmul.bf16.gmra.mxu0 %v83
  %v196 = vpop.f32.mrf.mxu0
  %v197 = vadd.f32 0.0, %v196
  %v198 = vpop.f32.mrf.mxu0
  %v199 = vadd.f32 0.0, %v198
  %200 = vmatmul.bf16.gmra.mxu0 %v85
  %v201 = vpop.f32.mrf.mxu0
  %v202 = vadd.f32 0.0, %v201
  %v203 = vpop.f32.mrf.mxu0
  %v204 = vadd.f32 0.0, %v203
  %205 = vdwg.mxu0
  %206 = vmatpush.bf16.msra.mxu0 %v170
  %207 = vmatpush.bf16.msra.mxu0 %v169
  %208 = vmatpush.bf16.msra.mxu0 %v168
  %209 = vmatpush.bf16.msra.mxu0 %v167
  %210 = vmatpush.bf16.msra.mxu0 %v166
  %211 = vmatpush.bf16.msra.mxu0 %v165
  %212 = vmatpush.bf16.msra.mxu0 %v164
  %213 = vmatpush.bf16.msra.mxu0 %v163
  %214 = vmatmul.bf16.gmra.mxu0 %v84
  %v215 = vpop.f32.mrf.mxu0
  %v216 = vadd.f32 %v197, %v215
  %v217 = vpop.f32.mrf.mxu0
  %v218 = vadd.f32 %v199, %v217
  %219 = vmatmul.bf16.gmra.mxu0 %v86
  %v220 = vpop.f32.mrf.mxu0
  %v221 = vadd.f32 %v202, %v220
  %v222 = vpop.f32.mrf.mxu0
  %v223 = vadd.f32 %v204, %v222
  %224 = vdwg.mxu0
  %v225 = vadd.f32 %v31, %v216
  %v226 = vadd.f32 %v32, %v218
  %v227 = vadd.f32 %v33, %v221
  %v228 = vadd.f32 %v34, %v223
  %229 = vst [vmem:[#allocation2] sm:$0xff] %v225
  %230 = vst [vmem:[#allocation2 + $0x8] sm:$0xff] %v226
  %231 = vst [vmem:[#allocation2 + $0x10] sm:$0xff] %v227
  %232 = vst [vmem:[#allocation2 + $0x18] sm:$0xff] %v228
  // Predicated region
  $region30: #{electra_model_forward.32} parent=0 // pred_check
    %p233 = pneg %p23
  $region31: #{electra_model_forward.32} parent=0 // pred_check_branch
    %235 = sbr.rel (%p233) target = $region33
  $region32: #{electra_model_forward.32} parent=0 // pred_region
    %v236 = vld [vmem:[#allocation2] sm:$0xff]
    %v237 = vld [vmem:[#allocation2 + $0x8] sm:$0xff]
    %v238 = vld [vmem:[#allocation2 + $0x10] sm:$0xff]
    %v239 = vld [vmem:[#allocation2 + $0x18] sm:$0xff]
    %v240 = vld [vmem:[%s2] sm:$0x1]
    %v242 = vperm.slane %v240, 0
    %v244 = vadd.f32 %v236, %v242
    %v245 = vadd.f32 %v237, %v242
    %v246 = vadd.f32 %v238, %v242
    %v247 = vadd.f32 %v239, %v242
    %v248 = vld [vmem:[%s3] sm:$0xf]
    %v249 = vld [vmem:[%s3 + $0x4] sm:$0xf]
    %v250 = vld [vmem:[%s3 + $0x8] sm:$0xf]
    %v251 = vld [vmem:[%s3 + $0xc] sm:$0xf]
    %v252 = vunpack.c.l.bf16 %v248
    %v253 = vunpack.c.l.bf16 %v249
    %v254 = vunpack.c.l.bf16 %v250
    %v255 = vunpack.c.l.bf16 %v251
    %v256 = vadd.f32 %v244, %v252
    %v257 = vadd.f32 %v245, %v253
    %v258 = vadd.f32 %v246, %v254
    %v259 = vadd.f32 %v247, %v255
    %260 = vadd.xlane.f32.xlu0 %v256
    %v261 = vpop.xlane.xlu0 %260
    %262 = vadd.xlane.f32.xlu0 %v257
    %v263 = vpop.xlane.xlu0 %262
    %264 = vadd.xlane.f32.xlu0 %v258
    %v265 = vpop.xlane.xlu0 %264
    %266 = vadd.xlane.f32.xlu0 %v259
    %v267 = vpop.xlane.xlu0 %266
    %v268 = vrcp.pop 128.0
    %v269 = vmul.f32 128.0, %v268
    %v270 = vsub.f32 1.0, %v269
    %v271 = vmul.f32 %v268, %v270
    %v272 = vadd.f32 %v268, %v271
    %vm273 = vweird.f32 %v268
    %v274 = vsel %vm273, %v268, %v272
    %v275 = vmul.f32 %v261, %v274
    %v276 = vmul.f32 %v263, %v274
    %v277 = vmul.f32 %v265, %v274
    %v278 = vmul.f32 %v267, %v274
    %v279 = vsub.f32 %v256, %v275
    %v280 = vsub.f32 %v257, %v276
    %v281 = vsub.f32 %v258, %v277
    %v282 = vsub.f32 %v259, %v278
    %v283 = vmul.f32 %v279, %v279
    %v284 = vmul.f32 %v280, %v280
    %v285 = vmul.f32 %v281, %v281
    %v286 = vmul.f32 %v282, %v282
    %287 = vadd.xlane.f32.xlu0 %v283
    %v288 = vpop.xlane.xlu0 %287
    %289 = vadd.xlane.f32.xlu0 %v284
    %v290 = vpop.xlane.xlu0 %289
    %291 = vadd.xlane.f32.xlu0 %v285
    %v292 = vpop.xlane.xlu0 %291
    %293 = vadd.xlane.f32.xlu0 %v286
    %v294 = vpop.xlane.xlu0 %293
    %v295 = vmul.f32 %v288, %v274
    %v296 = vmul.f32 %v290, %v274
    %v297 = vmul.f32 %v292, %v274
    %v298 = vmul.f32 %v294, %v274
    %v299 = vadd.f32 %v295, 1e-12
    %v300 = vadd.f32 %v296, 1e-12
    %v301 = vadd.f32 %v297, 1e-12
    %v302 = vadd.f32 %v298, 1e-12
    %v303 = vrsqrt.pop %v299
    %v304 = vmul.f32 %v303, %v299
    %v305 = vmul.f32 %v304, %v303
    %v306 = vmul.f32 0.5, %v305
    %v307 = vsub.f32 1.5, %v306
    %v308 = vmul.f32 %v303, %v307
    %vm309 = vweird.f32 %v299
    %vm310 = vweird.f32 %v303
    %vm311 = vmor %vm309, %vm310
    %v312 = vsel %vm311, %v303, %v308
    %v313 = vrsqrt.pop %v300
    %v314 = vmul.f32 %v313, %v300
    %v315 = vmul.f32 %v314, %v313
    %v316 = vmul.f32 0.5, %v315
    %v317 = vsub.f32 1.5, %v316
    %v318 = vmul.f32 %v313, %v317
    %vm319 = vweird.f32 %v300
    %vm320 = vweird.f32 %v313
    %vm321 = vmor %vm319, %vm320
    %v322 = vsel %vm321, %v313, %v318
    %v323 = vrsqrt.pop %v301
    %v324 = vmul.f32 %v323, %v301
    %v325 = vmul.f32 %v324, %v323
    %v326 = vmul.f32 0.5, %v325
    %v327 = vsub.f32 1.5, %v326
    %v328 = vmul.f32 %v323, %v327
    %vm329 = vweird.f32 %v301
    %vm330 = vweird.f32 %v323
    %vm331 = vmor %vm329, %vm330
    %v332 = vsel %vm331, %v323, %v328
    %v333 = vrsqrt.pop %v302
    %v334 = vmul.f32 %v333, %v302
    %v335 = vmul.f32 %v334, %v333
    %v336 = vmul.f32 0.5, %v335
    %v337 = vsub.f32 1.5, %v336
    %v338 = vmul.f32 %v333, %v337
    %vm339 = vweird.f32 %v302
    %vm340 = vweird.f32 %v333
    %vm341 = vmor %vm339, %vm340
    %v342 = vsel %vm341, %v333, %v338
    %v343 = vmul.f32 %v279, %v312
    %v344 = vmul.f32 %v280, %v322
    %v345 = vmul.f32 %v281, %v332
    %v346 = vmul.f32 %v282, %v342
    %v347 = vld [vmem:[%s4] sm:$0x1]
    %v349 = vperm.slane %v347, 0
    %v351 = vmul.f32 %v343, %v349
    %v352 = vmul.f32 %v344, %v349
    %v353 = vmul.f32 %v345, %v349
    %v354 = vmul.f32 %v346, %v349
    %v355 = vld [vmem:[%s5] sm:$0x1]
    %v357 = vperm.slane %v355, 0
    %v359 = vadd.f32 %v351, %v357
    %v360 = vadd.f32 %v352, %v357
    %v361 = vadd.f32 %v353, %v357
    %v362 = vadd.f32 %v354, %v357
    %v363 = vpack.c.bf16 %v359, %v359
    %v364 = vpack.c.bf16 %v360, %v360
    %v365 = vpack.c.bf16 %v361, %v361
    %v366 = vpack.c.bf16 %v362, %v362
    %367 = vst [vmem:[%s6] sm:$0xf] %v363
    %368 = vst [vmem:[%s6 + $0x4] sm:$0xf] %v364
    %369 = vst [vmem:[%s6 + $0x8] sm:$0xf] %v365
    %370 = vst [vmem:[%s6 + $0xc] sm:$0xf] %v366
  $region33: #{electra_model_forward.32} parent=0 // pred_fallthru
    _
  // Predicated region
  $region34: #{electra_model_forward.32} parent=0 // pred_check
    _
  $region35: #{electra_model_forward.32} parent=0 // pred_check_branch
    %372 = sbr.rel (0) target = $region37
  $region36: #{electra_model_forward.32} parent=0 // pred_region
    _
  $region37: #{electra_model_forward.32} parent=0 // pred_fallthru
    _
  // Predicated region
  $region38: #{electra_model_forward.32} parent=0 // pred_check
    _
  $region39: #{electra_model_forward.32} parent=0 // pred_check_branch
    %374 = sbr.rel (0) target = $region41
  $region40: #{electra_model_forward.32} parent=0 // pred_region
    _
  $region41: #{electra_model_forward.32} parent=0 // pred_fallthru
    _

// kernel: electra_model_forward.38
$region0: #{electra_model_forward.38}
  #allocation0 [shape = 'u32[]', space=smem, size = 0x4, offset = 0x4, fixed_abs, tag = 'smem constant byte address 0x4 - core index']
  #allocation1 [shape = 'u32[72,128]{1,0:T(1,128)}', space=vmem, size = 0x9000, scoped, tag = 'internal scratch']
  #allocation2 [shape = 'f32[32,256]{1,0:T(8,128)}', space=vmem, size = 0x8000, scoped, tag = 'scratch operand']
  %s0 = inlined_call_operand.vmem [shape: bf16[32,128], index: 0, kind: input, shape index: {}]
  %s1 = inlined_call_operand.vmem [shape: bf16[128,256], index: 1, kind: input, shape index: {}]
  %s2 = inlined_call_operand.vmem [shape: f32[1,256], index: 2, kind: input, shape index: {}]
  %s3 = inlined_call_operand.vmem [shape: f32[1,256], index: 3, kind: input, shape index: {}]
  %s4 = inlined_call_operand.vmem [shape: f32[1,256], index: 4, kind: input, shape index: {}]
  %s5 = inlined_call_operand.vmem [shape: bf16[32,256], index: 5, kind: output, shape index: {}]
  %s6 = sld [smem:[#allocation0]]
  $region38: #{electra_model_forward.38} parent=0
    _
  %s8 = ssub.s32 1, %s6
  %s9 = scalar_select 0, %s8, %s6
  // Predicated region
  $region2: #{electra_model_forward.38} parent=0 // pred_check
    _
  $region3: #{electra_model_forward.38} parent=0 // pred_check_branch
    %11 = sbr.rel (0) target = $region5
  $region4: #{electra_model_forward.38} parent=0 // pred_region
    _
  $region5: #{electra_model_forward.38} parent=0 // pred_fallthru
    _
  // Predicated region
  $region6: #{electra_model_forward.38} parent=0 // pred_check
    _
  $region7: #{electra_model_forward.38} parent=0 // pred_check_branch
    %13 = sbr.rel (0) target = $region9
  $region8: #{electra_model_forward.38} parent=0 // pred_region
    _
  $region9: #{electra_model_forward.38} parent=0 // pred_fallthru
    _
  // Predicated region
  $region10: #{electra_model_forward.38} parent=0 // pred_check
    _
  $region11: #{electra_model_forward.38} parent=0 // pred_check_branch
    %15 = sbr.rel (0) target = $region13
  $region12: #{electra_model_forward.38} parent=0 // pred_region
    _
  $region13: #{electra_model_forward.38} parent=0 // pred_fallthru
    _
  // Predicated region
  $region14: #{electra_model_forward.38} parent=0 // pred_check
    _
  $region15: #{electra_model_forward.38} parent=0 // pred_check_branch
    %17 = sbr.rel (0) target = $region17
  $region16: #{electra_model_forward.38} parent=0 // pred_region
    _
  $region17: #{electra_model_forward.38} parent=0 // pred_fallthru
    _
  // Predicated region
  $region18: #{electra_model_forward.38} parent=0 // pred_check
    _
  $region19: #{electra_model_forward.38} parent=0 // pred_check_branch
    %19 = sbr.rel (0) target = $region21
  $region20: #{electra_model_forward.38} parent=0 // pred_region
    _
  $region21: #{electra_model_forward.38} parent=0 // pred_fallthru
    _
  %p20 = scmp.eq.s32.totalorder 0, 0
  // Predicated region
  $region22: #{electra_model_forward.38} parent=0 // pred_check
    %p21 = pneg %p20
  $region23: #{electra_model_forward.38} parent=0 // pred_check_branch
    %23 = sbr.rel (%p21) target = $region25
  $region24: #{electra_model_forward.38} parent=0 // pred_region
    %24 = vst [vmem:[#allocation2] sm:$0xff] 0.0
    %25 = vst [vmem:[#allocation2 + $0x8] sm:$0xff] 0.0
    %26 = vst [vmem:[#allocation2 + $0x10] sm:$0xff] 0.0
    %27 = vst [vmem:[#allocation2 + $0x18] sm:$0xff] 0.0
    %28 = vst [vmem:[#allocation2 + $0x20] sm:$0xff] 0.0
    %29 = vst [vmem:[#allocation2 + $0x28] sm:$0xff] 0.0
    %30 = vst [vmem:[#allocation2 + $0x30] sm:$0xff] 0.0
    %31 = vst [vmem:[#allocation2 + $0x38] sm:$0xff] 0.0
  $region25: #{electra_model_forward.38} parent=0 // pred_fallthru
    _
  %v32 = vld [vmem:[#allocation2] sm:$0xff]
  %v33 = vld [vmem:[#allocation2 + $0x8] sm:$0xff]
  %v34 = vld [vmem:[#allocation2 + $0x10] sm:$0xff]
  %v35 = vld [vmem:[#allocation2 + $0x18] sm:$0xff]
  %v36 = vld [vmem:[#allocation2 + $0x20] sm:$0xff]
  %v37 = vld [vmem:[#allocation2 + $0x28] sm:$0xff]
  %v38 = vld [vmem:[#allocation2 + $0x30] sm:$0xff]
  %v39 = vld [vmem:[#allocation2 + $0x38] sm:$0xff]
  %v40 = vld [vmem:[%s0] sm:$0xf]
  %v41 = vld [vmem:[%s0 + $0x4] sm:$0xf]
  %v42 = vld [vmem:[%s0 + $0x8] sm:$0xf]
  %v43 = vld [vmem:[%s0 + $0xc] sm:$0xf]
  %v44 = vld [vmem:[%s1] sm:$0xff]
  %v45 = vld [vmem:[%s1 + $0x8] sm:$0xff]
  %v46 = vld [vmem:[%s1 + $0x10] sm:$0xff]
  %v47 = vld [vmem:[%s1 + $0x18] sm:$0xff]
  %v48 = vld [vmem:[%s1 + $0x20] sm:$0xff]
  %v49 = vld [vmem:[%s1 + $0x28] sm:$0xff]
  %v50 = vld [vmem:[%s1 + $0x30] sm:$0xff]
  %v51 = vld [vmem:[%s1 + $0x38] sm:$0xff]
  %v52 = vld [vmem:[%s1 + $0x40] sm:$0xff]
  %v53 = vld [vmem:[%s1 + $0x48] sm:$0xff]
  %v54 = vld [vmem:[%s1 + $0x50] sm:$0xff]
  %v55 = vld [vmem:[%s1 + $0x58] sm:$0xff]
  %v56 = vld [vmem:[%s1 + $0x60] sm:$0xff]
  %v57 = vld [vmem:[%s1 + $0x68] sm:$0xff]
  %v58 = vld [vmem:[%s1 + $0x70] sm:$0xff]
  %v59 = vld [vmem:[%s1 + $0x78] sm:$0xff]
  %v64 = vunpack.c.l.b16 %v40
  %v65 = vunpack.c.l.b16 %v41
  %v66 = vunpack.c.l.b16 %v42
  %v67 = vunpack.c.l.b16 %v43
  %v68 = vpack.c.b16 %v65, %v64
  %v69 = vpack.c.b16 %v67, %v66
  %v88 = vunpack.c.l.b16 %v44
  %v89 = vunpack.c.h.b16 %v44
  %v90 = vunpack.c.l.b16 %v45
  %v91 = vunpack.c.h.b16 %v45
  %v92 = vunpack.c.l.b16 %v46
  %v93 = vunpack.c.h.b16 %v46
  %v94 = vunpack.c.l.b16 %v47
  %v95 = vunpack.c.h.b16 %v47
  %v96 = vunpack.c.l.b16 %v48
  %v97 = vunpack.c.h.b16 %v48
  %v98 = vunpack.c.l.b16 %v49
  %v99 = vunpack.c.h.b16 %v49
  %v100 = vunpack.c.l.b16 %v50
  %v101 = vunpack.c.h.b16 %v50
  %v102 = vunpack.c.l.b16 %v51
  %v103 = vunpack.c.h.b16 %v51
  %v104 = vunpack.c.l.b16 %v52
  %v105 = vunpack.c.h.b16 %v52
  %v106 = vunpack.c.l.b16 %v53
  %v107 = vunpack.c.h.b16 %v53
  %v108 = vunpack.c.l.b16 %v54
  %v109 = vunpack.c.h.b16 %v54
  %v110 = vunpack.c.l.b16 %v55
  %v111 = vunpack.c.h.b16 %v55
  %v112 = vunpack.c.l.b16 %v56
  %v113 = vunpack.c.h.b16 %v56
  %v114 = vunpack.c.l.b16 %v57
  %v115 = vunpack.c.h.b16 %v57
  %v116 = vunpack.c.l.b16 %v58
  %v117 = vunpack.c.h.b16 %v58
  %v118 = vunpack.c.l.b16 %v59
  %v119 = vunpack.c.h.b16 %v59
  %v120 = vpack.c.b16 %v90, %v88
  %v121 = vpack.c.b16 %v91, %v89
  %v122 = vpack.c.b16 %v94, %v92
  %v123 = vpack.c.b16 %v95, %v93
  %v124 = vpack.c.b16 %v98, %v96
  %v125 = vpack.c.b16 %v99, %v97
  %v126 = vpack.c.b16 %v102, %v100
  %v127 = vpack.c.b16 %v103, %v101
  %v128 = vpack.c.b16 %v106, %v104
  %v129 = vpack.c.b16 %v107, %v105
  %v130 = vpack.c.b16 %v110, %v108
  %v131 = vpack.c.b16 %v111, %v109
  %v132 = vpack.c.b16 %v114, %v112
  %v133 = vpack.c.b16 %v115, %v113
  %v134 = vpack.c.b16 %v118, %v116
  %v135 = vpack.c.b16 %v119, %v117
  %152 = vmatpush.bf16.msra.mxu0 %v134
  %153 = vmatpush.bf16.msra.mxu0 %v132
  %154 = vmatpush.bf16.msra.mxu0 %v130
  %155 = vmatpush.bf16.msra.mxu0 %v128
  %156 = vmatpush.bf16.msra.mxu0 %v126
  %157 = vmatpush.bf16.msra.mxu0 %v124
  %158 = vmatpush.bf16.msra.mxu0 %v122
  %159 = vmatpush.bf16.msra.mxu0 %v120
  %160 = vmatmul.bf16.gmra.mxu0 %v68
  %v161 = vpop.f32.mrf.mxu0
  %v162 = vadd.f32 0.0, %v161
  %v163 = vpop.f32.mrf.mxu0
  %v164 = vadd.f32 0.0, %v163
  %165 = vmatmul.bf16.gmra.mxu0 %v69
  %v166 = vpop.f32.mrf.mxu0
  %v167 = vadd.f32 0.0, %v166
  %v168 = vpop.f32.mrf.mxu0
  %v169 = vadd.f32 0.0, %v168
  %170 = vdwg.mxu0
  %171 = vmatpush.bf16.msra.mxu0 %v135
  %172 = vmatpush.bf16.msra.mxu0 %v133
  %173 = vmatpush.bf16.msra.mxu0 %v131
  %174 = vmatpush.bf16.msra.mxu0 %v129
  %175 = vmatpush.bf16.msra.mxu0 %v127
  %176 = vmatpush.bf16.msra.mxu0 %v125
  %177 = vmatpush.bf16.msra.mxu0 %v123
  %178 = vmatpush.bf16.msra.mxu0 %v121
  %179 = vmatmul.bf16.gmra.mxu0 %v68
  %v180 = vpop.f32.mrf.mxu0
  %v181 = vadd.f32 0.0, %v180
  %v182 = vpop.f32.mrf.mxu0
  %v183 = vadd.f32 0.0, %v182
  %184 = vmatmul.bf16.gmra.mxu0 %v69
  %v185 = vpop.f32.mrf.mxu0
  %v186 = vadd.f32 0.0, %v185
  %v187 = vpop.f32.mrf.mxu0
  %v188 = vadd.f32 0.0, %v187
  %189 = vdwg.mxu0
  %v190 = vadd.f32 %v32, %v162
  %v191 = vadd.f32 %v33, %v181
  %v192 = vadd.f32 %v34, %v164
  %v193 = vadd.f32 %v35, %v183
  %v194 = vadd.f32 %v36, %v167
  %v195 = vadd.f32 %v37, %v186
  %v196 = vadd.f32 %v38, %v169
  %v197 = vadd.f32 %v39, %v188
  %198 = vst [vmem:[#allocation2] sm:$0xff] %v190
  %199 = vst [vmem:[#allocation2 + $0x8] sm:$0xff] %v191
  %200 = vst [vmem:[#allocation2 + $0x10] sm:$0xff] %v192
  %201 = vst [vmem:[#allocation2 + $0x18] sm:$0xff] %v193
  %202 = vst [vmem:[#allocation2 + $0x20] sm:$0xff] %v194
  %203 = vst [vmem:[#allocation2 + $0x28] sm:$0xff] %v195
  %204 = vst [vmem:[#allocation2 + $0x30] sm:$0xff] %v196
  %205 = vst [vmem:[#allocation2 + $0x38] sm:$0xff] %v197
  // Predicated region
  $region26: #{electra_model_forward.38} parent=0 // pred_check
    %p206 = pneg %p20
  $region27: #{electra_model_forward.38} parent=0 // pred_check_branch
    %208 = sbr.rel (%p206) target = $region29
  $region28: #{electra_model_forward.38} parent=0 // pred_region
    %v209 = vld [vmem:[#allocation2] sm:$0xff]
    %v210 = vld [vmem:[#allocation2 + $0x8] sm:$0xff]
    %v211 = vld [vmem:[#allocation2 + $0x10] sm:$0xff]
    %v212 = vld [vmem:[#allocation2 + $0x18] sm:$0xff]
    %v213 = vld [vmem:[#allocation2 + $0x20] sm:$0xff]
    %v214 = vld [vmem:[#allocation2 + $0x28] sm:$0xff]
    %v215 = vld [vmem:[#allocation2 + $0x30] sm:$0xff]
    %v216 = vld [vmem:[#allocation2 + $0x38] sm:$0xff]
    %v217 = vld [vmem:[%s2] sm:$0x3]
    %v219 = vperm.slane %v217, 0
    %v220 = vperm.slane %v217, 1
    %v223 = vadd.f32 %v209, %v219
    %v224 = vadd.f32 %v210, %v220
    %v225 = vadd.f32 %v211, %v219
    %v226 = vadd.f32 %v212, %v220
    %v227 = vadd.f32 %v213, %v219
    %v228 = vadd.f32 %v214, %v220
    %v229 = vadd.f32 %v215, %v219
    %v230 = vadd.f32 %v216, %v220
    %v231 = vmul.f32 %v223, %v223
    %v232 = vmul.f32 %v224, %v224
    %v233 = vmul.f32 %v225, %v225
    %v234 = vmul.f32 %v226, %v226
    %v235 = vmul.f32 %v227, %v227
    %v236 = vmul.f32 %v228, %v228
    %v237 = vmul.f32 %v229, %v229
    %v238 = vmul.f32 %v230, %v230
    %v239 = vmul.f32 %v223, %v231
    %v240 = vmul.f32 %v224, %v232
    %v241 = vmul.f32 %v225, %v233
    %v242 = vmul.f32 %v226, %v234
    %v243 = vmul.f32 %v227, %v235
    %v244 = vmul.f32 %v228, %v236
    %v245 = vmul.f32 %v229, %v237
    %v246 = vmul.f32 %v230, %v238
    %v247 = vmul.f32 %v239, 0.044715
    %v248 = vmul.f32 %v240, 0.044715
    %v249 = vmul.f32 %v241, 0.044715
    %v250 = vmul.f32 %v242, 0.044715
    %v251 = vmul.f32 %v243, 0.044715
    %v252 = vmul.f32 %v244, 0.044715
    %v253 = vmul.f32 %v245, 0.044715
    %v254 = vmul.f32 %v246, 0.044715
    %v255 = vadd.f32 %v223, %v247
    %v256 = vadd.f32 %v224, %v248
    %v257 = vadd.f32 %v225, %v249
    %v258 = vadd.f32 %v226, %v250
    %v259 = vadd.f32 %v227, %v251
    %v260 = vadd.f32 %v228, %v252
    %v261 = vadd.f32 %v229, %v253
    %v262 = vadd.f32 %v230, %v254
    %v263 = vmul.f32 %v255, 0.7978846
    %v264 = vmul.f32 %v256, 0.7978846
    %v265 = vmul.f32 %v257, 0.7978846
    %v266 = vmul.f32 %v258, 0.7978846
    %v267 = vmul.f32 %v259, 0.7978846
    %v268 = vmul.f32 %v260, 0.7978846
    %v269 = vmul.f32 %v261, 0.7978846
    %v270 = vmul.f32 %v262, 0.7978846
    %v271 = vtanh.pop %v263
    %v272 = vtanh.pop %v264
    %v273 = vtanh.pop %v265
    %v274 = vtanh.pop %v266
    %v275 = vtanh.pop %v267
    %v276 = vtanh.pop %v268
    %v277 = vtanh.pop %v269
    %v278 = vtanh.pop %v270
    %v279 = vadd.f32 %v271, 1.0
    %v280 = vadd.f32 %v272, 1.0
    %v281 = vadd.f32 %v273, 1.0
    %v282 = vadd.f32 %v274, 1.0
    %v283 = vadd.f32 %v275, 1.0
    %v284 = vadd.f32 %v276, 1.0
    %v285 = vadd.f32 %v277, 1.0
    %v286 = vadd.f32 %v278, 1.0
    %v287 = vmul.f32 %v279, 0.5
    %v288 = vmul.f32 %v280, 0.5
    %v289 = vmul.f32 %v281, 0.5
    %v290 = vmul.f32 %v282, 0.5
    %v291 = vmul.f32 %v283, 0.5
    %v292 = vmul.f32 %v284, 0.5
    %v293 = vmul.f32 %v285, 0.5
    %v294 = vmul.f32 %v286, 0.5
    %v295 = vmul.f32 %v223, %v287
    %v296 = vmul.f32 %v224, %v288
    %v297 = vmul.f32 %v225, %v289
    %v298 = vmul.f32 %v226, %v290
    %v299 = vmul.f32 %v227, %v291
    %v300 = vmul.f32 %v228, %v292
    %v301 = vmul.f32 %v229, %v293
    %v302 = vmul.f32 %v230, %v294
    %v303 = vadd.f32 %v295, %v296
    %304 = vadd.xlane.f32.xlu0 %v303
    %v305 = vpop.xlane.xlu0 %304
    %v306 = vadd.f32 %v297, %v298
    %307 = vadd.xlane.f32.xlu0 %v306
    %v308 = vpop.xlane.xlu0 %307
    %v309 = vadd.f32 %v299, %v300
    %310 = vadd.xlane.f32.xlu0 %v309
    %v311 = vpop.xlane.xlu0 %310
    %v312 = vadd.f32 %v301, %v302
    %313 = vadd.xlane.f32.xlu0 %v312
    %v314 = vpop.xlane.xlu0 %313
    %v315 = vrcp.pop 256.0
    %v316 = vmul.f32 256.0, %v315
    %v317 = vsub.f32 1.0, %v316
    %v318 = vmul.f32 %v315, %v317
    %v319 = vadd.f32 %v315, %v318
    %vm320 = vweird.f32 %v315
    %v321 = vsel %vm320, %v315, %v319
    %v322 = vmul.f32 %v305, %v321
    %v323 = vmul.f32 %v308, %v321
    %v324 = vmul.f32 %v311, %v321
    %v325 = vmul.f32 %v314, %v321
    %v326 = vsub.f32 %v295, %v322
    %v327 = vsub.f32 %v296, %v322
    %v328 = vsub.f32 %v297, %v323
    %v329 = vsub.f32 %v298, %v323
    %v330 = vsub.f32 %v299, %v324
    %v331 = vsub.f32 %v300, %v324
    %v332 = vsub.f32 %v301, %v325
    %v333 = vsub.f32 %v302, %v325
    %v334 = vmul.f32 %v326, %v326
    %v335 = vmul.f32 %v327, %v327
    %v336 = vmul.f32 %v328, %v328
    %v337 = vmul.f32 %v329, %v329
    %v338 = vmul.f32 %v330, %v330
    %v339 = vmul.f32 %v331, %v331
    %v340 = vmul.f32 %v332, %v332
    %v341 = vmul.f32 %v333, %v333
    %v342 = vadd.f32 %v334, %v335
    %343 = vadd.xlane.f32.xlu0 %v342
    %v344 = vpop.xlane.xlu0 %343
    %v345 = vadd.f32 %v336, %v337
    %346 = vadd.xlane.f32.xlu0 %v345
    %v347 = vpop.xlane.xlu0 %346
    %v348 = vadd.f32 %v338, %v339
    %349 = vadd.xlane.f32.xlu0 %v348
    %v350 = vpop.xlane.xlu0 %349
    %v351 = vadd.f32 %v340, %v341
    %352 = vadd.xlane.f32.xlu0 %v351
    %v353 = vpop.xlane.xlu0 %352
    %v354 = vmul.f32 %v344, %v321
    %v355 = vmul.f32 %v347, %v321
    %v356 = vmul.f32 %v350, %v321
    %v357 = vmul.f32 %v353, %v321
    %v358 = vadd.f32 %v354, 1e-12
    %v359 = vadd.f32 %v355, 1e-12
    %v360 = vadd.f32 %v356, 1e-12
    %v361 = vadd.f32 %v357, 1e-12
    %v362 = vrsqrt.pop %v358
    %v363 = vmul.f32 %v362, %v358
    %v364 = vmul.f32 %v363, %v362
    %v365 = vmul.f32 0.5, %v364
    %v366 = vsub.f32 1.5, %v365
    %v367 = vmul.f32 %v362, %v366
    %vm368 = vweird.f32 %v358
    %vm369 = vweird.f32 %v362
    %vm370 = vmor %vm368, %vm369
    %v371 = vsel %vm370, %v362, %v367
    %v372 = vrsqrt.pop %v359
    %v373 = vmul.f32 %v372, %v359
    %v374 = vmul.f32 %v373, %v372
    %v375 = vmul.f32 0.5, %v374
    %v376 = vsub.f32 1.5, %v375
    %v377 = vmul.f32 %v372, %v376
    %vm378 = vweird.f32 %v359
    %vm379 = vweird.f32 %v372
    %vm380 = vmor %vm378, %vm379
    %v381 = vsel %vm380, %v372, %v377
    %v382 = vrsqrt.pop %v360
    %v383 = vmul.f32 %v382, %v360
    %v384 = vmul.f32 %v383, %v382
    %v385 = vmul.f32 0.5, %v384
    %v386 = vsub.f32 1.5, %v385
    %v387 = vmul.f32 %v382, %v386
    %vm388 = vweird.f32 %v360
    %vm389 = vweird.f32 %v382
    %vm390 = vmor %vm388, %vm389
    %v391 = vsel %vm390, %v382, %v387
    %v392 = vrsqrt.pop %v361
    %v393 = vmul.f32 %v392, %v361
    %v394 = vmul.f32 %v393, %v392
    %v395 = vmul.f32 0.5, %v394
    %v396 = vsub.f32 1.5, %v395
    %v397 = vmul.f32 %v392, %v396
    %vm398 = vweird.f32 %v361
    %vm399 = vweird.f32 %v392
    %vm400 = vmor %vm398, %vm399
    %v401 = vsel %vm400, %v392, %v397
    %v402 = vmul.f32 %v326, %v371
    %v403 = vmul.f32 %v327, %v371
    %v404 = vmul.f32 %v328, %v381
    %v405 = vmul.f32 %v329, %v381
    %v406 = vmul.f32 %v330, %v391
    %v407 = vmul.f32 %v331, %v391
    %v408 = vmul.f32 %v332, %v401
    %v409 = vmul.f32 %v333, %v401
    %v410 = vld [vmem:[%s3] sm:$0x3]
    %v412 = vperm.slane %v410, 0
    %v413 = vperm.slane %v410, 1
    %v416 = vmul.f32 %v402, %v412
    %v417 = vmul.f32 %v403, %v413
    %v418 = vmul.f32 %v404, %v412
    %v419 = vmul.f32 %v405, %v413
    %v420 = vmul.f32 %v406, %v412
    %v421 = vmul.f32 %v407, %v413
    %v422 = vmul.f32 %v408, %v412
    %v423 = vmul.f32 %v409, %v413
    %v424 = vld [vmem:[%s4] sm:$0x3]
    %v426 = vperm.slane %v424, 0
    %v427 = vperm.slane %v424, 1
    %v430 = vadd.f32 %v416, %v426
    %v431 = vadd.f32 %v417, %v427
    %v432 = vadd.f32 %v418, %v426
    %v433 = vadd.f32 %v419, %v427
    %v434 = vadd.f32 %v420, %v426
    %v435 = vadd.f32 %v421, %v427
    %v436 = vadd.f32 %v422, %v426
    %v437 = vadd.f32 %v423, %v427
    %v438 = vpack.c.bf16 %v431, %v430
    %v439 = vpack.c.bf16 %v433, %v432
    %v440 = vpack.c.bf16 %v435, %v434
    %v441 = vpack.c.bf16 %v437, %v436
    %442 = vst [vmem:[%s5] sm:$0xff] %v438
    %443 = vst [vmem:[%s5 + $0x8] sm:$0xff] %v439
    %444 = vst [vmem:[%s5 + $0x10] sm:$0xff] %v440
    %445 = vst [vmem:[%s5 + $0x18] sm:$0xff] %v441
  $region29: #{electra_model_forward.38} parent=0 // pred_fallthru
    _
  // Predicated region
  $region30: #{electra_model_forward.38} parent=0 // pred_check
    _
  $region31: #{electra_model_forward.38} parent=0 // pred_check_branch
    %447 = sbr.rel (0) target = $region33
  $region32: #{electra_model_forward.38} parent=0 // pred_region
    _
  $region33: #{electra_model_forward.38} parent=0 // pred_fallthru
    _
  // Predicated region
  $region34: #{electra_model_forward.38} parent=0 // pred_check
    _
  $region35: #{electra_model_forward.38} parent=0 // pred_check_branch
    %449 = sbr.rel (0) target = $region37
  $region36: #{electra_model_forward.38} parent=0 // pred_region
    _
  $region37: #{electra_model_forward.38} parent=0 // pred_fallthru
    _

// kernel: electra_model_forward.39
$region0: #{electra_model_forward.39}
  #allocation0 [shape = 'u32[]', space=smem, size = 0x4, offset = 0x4, fixed_abs, tag = 'smem constant byte address 0x4 - core index']
  #allocation1 [shape = 'u32[72,128]{1,0:T(1,128)}', space=vmem, size = 0x9000, scoped, tag = 'internal scratch']
  #allocation2 [shape = 'f32[32,512]{1,0:T(8,128)}', space=vmem, size = 0x10000, scoped, tag = 'scratch operand']
  %s0 = inlined_call_operand.vmem [shape: bf16[32,256], index: 0, kind: input, shape index: {}]
  %s1 = inlined_call_operand.vmem [shape: bf16[512,256], index: 1, kind: input, shape index: {}]
  %s2 = inlined_call_operand.vmem [shape: f32[1,512], index: 2, kind: input, shape index: {}]
  %s3 = inlined_call_operand.vmem [shape: bf16[32,512], index: 3, kind: output, shape index: {}]
  %s4 = sld [smem:[#allocation0]]
  $region30: #{electra_model_forward.39} parent=0
    _
  %s6 = ssub.s32 1, %s4
  %s7 = scalar_select 0, %s6, %s4
  // Predicated region
  $region2: #{electra_model_forward.39} parent=0 // pred_check
    _
  $region3: #{electra_model_forward.39} parent=0 // pred_check_branch
    %9 = sbr.rel (0) target = $region5
  $region4: #{electra_model_forward.39} parent=0 // pred_region
    _
  $region5: #{electra_model_forward.39} parent=0 // pred_fallthru
    _
  // Predicated region
  $region6: #{electra_model_forward.39} parent=0 // pred_check
    _
  $region7: #{electra_model_forward.39} parent=0 // pred_check_branch
    %11 = sbr.rel (0) target = $region9
  $region8: #{electra_model_forward.39} parent=0 // pred_region
    _
  $region9: #{electra_model_forward.39} parent=0 // pred_fallthru
    _
  // Predicated region
  $region10: #{electra_model_forward.39} parent=0 // pred_check
    _
  $region11: #{electra_model_forward.39} parent=0 // pred_check_branch
    %13 = sbr.rel (0) target = $region13
  $region12: #{electra_model_forward.39} parent=0 // pred_region
    _
  $region13: #{electra_model_forward.39} parent=0 // pred_fallthru
    _
  %p14 = scmp.eq.s32.totalorder 0, 0
  // Predicated region
  $region14: #{electra_model_forward.39} parent=0 // pred_check
    %p15 = pneg %p14
  $region15: #{electra_model_forward.39} parent=0 // pred_check_branch
    %17 = sbr.rel (%p15) target = $region17
  $region16: #{electra_model_forward.39} parent=0 // pred_region
    %18 = vst [vmem:[#allocation2] sm:$0xff] 0.0
    %19 = vst [vmem:[#allocation2 + $0x8] sm:$0xff] 0.0
    %20 = vst [vmem:[#allocation2 + $0x10] sm:$0xff] 0.0
    %21 = vst [vmem:[#allocation2 + $0x18] sm:$0xff] 0.0
    %22 = vst [vmem:[#allocation2 + $0x20] sm:$0xff] 0.0
    %23 = vst [vmem:[#allocation2 + $0x28] sm:$0xff] 0.0
    %24 = vst [vmem:[#allocation2 + $0x30] sm:$0xff] 0.0
    %25 = vst [vmem:[#allocation2 + $0x38] sm:$0xff] 0.0
    %26 = vst [vmem:[#allocation2 + $0x40] sm:$0xff] 0.0
    %27 = vst [vmem:[#allocation2 + $0x48] sm:$0xff] 0.0
    %28 = vst [vmem:[#allocation2 + $0x50] sm:$0xff] 0.0
    %29 = vst [vmem:[#allocation2 + $0x58] sm:$0xff] 0.0
    %30 = vst [vmem:[#allocation2 + $0x60] sm:$0xff] 0.0
    %31 = vst [vmem:[#allocation2 + $0x68] sm:$0xff] 0.0
    %32 = vst [vmem:[#allocation2 + $0x70] sm:$0xff] 0.0
    %33 = vst [vmem:[#allocation2 + $0x78] sm:$0xff] 0.0
  $region17: #{electra_model_forward.39} parent=0 // pred_fallthru
    _
  %v34 = vld [vmem:[#allocation2] sm:$0xff]
  %v35 = vld [vmem:[#allocation2 + $0x8] sm:$0xff]
  %v36 = vld [vmem:[#allocation2 + $0x10] sm:$0xff]
  %v37 = vld [vmem:[#allocation2 + $0x18] sm:$0xff]
  %v38 = vld [vmem:[#allocation2 + $0x20] sm:$0xff]
  %v39 = vld [vmem:[#allocation2 + $0x28] sm:$0xff]
  %v40 = vld [vmem:[#allocation2 + $0x30] sm:$0xff]
  %v41 = vld [vmem:[#allocation2 + $0x38] sm:$0xff]
  %v42 = vld [vmem:[#allocation2 + $0x40] sm:$0xff]
  %v43 = vld [vmem:[#allocation2 + $0x48] sm:$0xff]
  %v44 = vld [vmem:[#allocation2 + $0x50] sm:$0xff]
  %v45 = vld [vmem:[#allocation2 + $0x58] sm:$0xff]
  %v46 = vld [vmem:[#allocation2 + $0x60] sm:$0xff]
  %v47 = vld [vmem:[#allocation2 + $0x68] sm:$0xff]
  %v48 = vld [vmem:[#allocation2 + $0x70] sm:$0xff]
  %v49 = vld [vmem:[#allocation2 + $0x78] sm:$0xff]
  %v50 = vld [vmem:[%s0] sm:$0xff]
  %v51 = vld [vmem:[%s0 + $0x8] sm:$0xff]
  %v52 = vld [vmem:[%s0 + $0x10] sm:$0xff]
  %v53 = vld [vmem:[%s0 + $0x18] sm:$0xff]
  %v54 = vld [vmem:[%s1] sm:$0xff]
  %v55 = vld [vmem:[%s1 + $0x8] sm:$0xff]
  %v56 = vld [vmem:[%s1 + $0x10] sm:$0xff]
  %v57 = vld [vmem:[%s1 + $0x18] sm:$0xff]
  %v58 = vld [vmem:[%s1 + $0x20] sm:$0xff]
  %v59 = vld [vmem:[%s1 + $0x28] sm:$0xff]
  %v60 = vld [vmem:[%s1 + $0x30] sm:$0xff]
  %v61 = vld [vmem:[%s1 + $0x38] sm:$0xff]
  %v62 = vld [vmem:[%s1 + $0x40] sm:$0xff]
  %v63 = vld [vmem:[%s1 + $0x48] sm:$0xff]
  %v64 = vld [vmem:[%s1 + $0x50] sm:$0xff]
  %v65 = vld [vmem:[%s1 + $0x58] sm:$0xff]
  %v66 = vld [vmem:[%s1 + $0x60] sm:$0xff]
  %v67 = vld [vmem:[%s1 + $0x68] sm:$0xff]
  %v68 = vld [vmem:[%s1 + $0x70] sm:$0xff]
  %v69 = vld [vmem:[%s1 + $0x78] sm:$0xff]
  %v70 = vld [vmem:[%s1 + $0x80] sm:$0xff]
  %v71 = vld [vmem:[%s1 + $0x88] sm:$0xff]
  %v72 = vld [vmem:[%s1 + $0x90] sm:$0xff]
  %v73 = vld [vmem:[%s1 + $0x98] sm:$0xff]
  %v74 = vld [vmem:[%s1 + $0xa0] sm:$0xff]
  %v75 = vld [vmem:[%s1 + $0xa8] sm:$0xff]
  %v76 = vld [vmem:[%s1 + $0xb0] sm:$0xff]
  %v77 = vld [vmem:[%s1 + $0xb8] sm:$0xff]
  %v78 = vld [vmem:[%s1 + $0xc0] sm:$0xff]
  %v79 = vld [vmem:[%s1 + $0xc8] sm:$0xff]
  %v80 = vld [vmem:[%s1 + $0xd0] sm:$0xff]
  %v81 = vld [vmem:[%s1 + $0xd8] sm:$0xff]
  %v82 = vld [vmem:[%s1 + $0xe0] sm:$0xff]
  %v83 = vld [vmem:[%s1 + $0xe8] sm:$0xff]
  %v84 = vld [vmem:[%s1 + $0xf0] sm:$0xff]
  %v85 = vld [vmem:[%s1 + $0xf8] sm:$0xff]
  %v86 = vld [vmem:[%s1 + $0x100] sm:$0xff]
  %v87 = vld [vmem:[%s1 + $0x108] sm:$0xff]
  %v88 = vld [vmem:[%s1 + $0x110] sm:$0xff]
  %v89 = vld [vmem:[%s1 + $0x118] sm:$0xff]
  %v90 = vld [vmem:[%s1 + $0x120] sm:$0xff]
  %v91 = vld [vmem:[%s1 + $0x128] sm:$0xff]
  %v92 = vld [vmem:[%s1 + $0x130] sm:$0xff]
  %v93 = vld [vmem:[%s1 + $0x138] sm:$0xff]
  %v94 = vld [vmem:[%s1 + $0x140] sm:$0xff]
  %v95 = vld [vmem:[%s1 + $0x148] sm:$0xff]
  %v96 = vld [vmem:[%s1 + $0x150] sm:$0xff]
  %v97 = vld [vmem:[%s1 + $0x158] sm:$0xff]
  %v98 = vld [vmem:[%s1 + $0x160] sm:$0xff]
  %v99 = vld [vmem:[%s1 + $0x168] sm:$0xff]
  %v100 = vld [vmem:[%s1 + $0x170] sm:$0xff]
  %v101 = vld [vmem:[%s1 + $0x178] sm:$0xff]
  %v102 = vld [vmem:[%s1 + $0x180] sm:$0xff]
  %v103 = vld [vmem:[%s1 + $0x188] sm:$0xff]
  %v104 = vld [vmem:[%s1 + $0x190] sm:$0xff]
  %v105 = vld [vmem:[%s1 + $0x198] sm:$0xff]
  %v106 = vld [vmem:[%s1 + $0x1a0] sm:$0xff]
  %v107 = vld [vmem:[%s1 + $0x1a8] sm:$0xff]
  %v108 = vld [vmem:[%s1 + $0x1b0] sm:$0xff]
  %v109 = vld [vmem:[%s1 + $0x1b8] sm:$0xff]
  %v110 = vld [vmem:[%s1 + $0x1c0] sm:$0xff]
  %v111 = vld [vmem:[%s1 + $0x1c8] sm:$0xff]
  %v112 = vld [vmem:[%s1 + $0x1d0] sm:$0xff]
  %v113 = vld [vmem:[%s1 + $0x1d8] sm:$0xff]
  %v114 = vld [vmem:[%s1 + $0x1e0] sm:$0xff]
  %v115 = vld [vmem:[%s1 + $0x1e8] sm:$0xff]
  %v116 = vld [vmem:[%s1 + $0x1f0] sm:$0xff]
  %v117 = vld [vmem:[%s1 + $0x1f8] sm:$0xff]
  %v122 = vunpack.c.l.b16 %v50
  %v123 = vunpack.c.h.b16 %v50
  %v124 = vunpack.c.l.b16 %v51
  %v125 = vunpack.c.h.b16 %v51
  %v126 = vunpack.c.l.b16 %v52
  %v127 = vunpack.c.h.b16 %v52
  %v128 = vunpack.c.l.b16 %v53
  %v129 = vunpack.c.h.b16 %v53
  %v130 = vpack.c.b16 %v124, %v122
  %v131 = vpack.c.b16 %v125, %v123
  %v132 = vpack.c.b16 %v128, %v126
  %v133 = vpack.c.b16 %v129, %v127
  %v202 = vunpack.c.l.b16 %v54
  %v203 = vunpack.c.h.b16 %v54
  %v204 = vunpack.c.l.b16 %v55
  %v205 = vunpack.c.h.b16 %v55
  %v206 = vunpack.c.l.b16 %v56
  %v207 = vunpack.c.h.b16 %v56
  %v208 = vunpack.c.l.b16 %v57
  %v209 = vunpack.c.h.b16 %v57
  %v210 = vunpack.c.l.b16 %v58
  %v211 = vunpack.c.h.b16 %v58
  %v212 = vunpack.c.l.b16 %v59
  %v213 = vunpack.c.h.b16 %v59
  %v214 = vunpack.c.l.b16 %v60
  %v215 = vunpack.c.h.b16 %v60
  %v216 = vunpack.c.l.b16 %v61
  %v217 = vunpack.c.h.b16 %v61
  %v218 = vunpack.c.l.b16 %v62
  %v219 = vunpack.c.h.b16 %v62
  %v220 = vunpack.c.l.b16 %v63
  %v221 = vunpack.c.h.b16 %v63
  %v222 = vunpack.c.l.b16 %v64
  %v223 = vunpack.c.h.b16 %v64
  %v224 = vunpack.c.l.b16 %v65
  %v225 = vunpack.c.h.b16 %v65
  %v226 = vunpack.c.l.b16 %v66
  %v227 = vunpack.c.h.b16 %v66
  %v228 = vunpack.c.l.b16 %v67
  %v229 = vunpack.c.h.b16 %v67
  %v230 = vunpack.c.l.b16 %v68
  %v231 = vunpack.c.h.b16 %v68
  %v232 = vunpack.c.l.b16 %v69
  %v233 = vunpack.c.h.b16 %v69
  %v234 = vunpack.c.l.b16 %v70
  %v235 = vunpack.c.h.b16 %v70
  %v236 = vunpack.c.l.b16 %v71
  %v237 = vunpack.c.h.b16 %v71
  %v238 = vunpack.c.l.b16 %v72
  %v239 = vunpack.c.h.b16 %v72
  %v240 = vunpack.c.l.b16 %v73
  %v241 = vunpack.c.h.b16 %v73
  %v242 = vunpack.c.l.b16 %v74
  %v243 = vunpack.c.h.b16 %v74
  %v244 = vunpack.c.l.b16 %v75
  %v245 = vunpack.c.h.b16 %v75
  %v246 = vunpack.c.l.b16 %v76
  %v247 = vunpack.c.h.b16 %v76
  %v248 = vunpack.c.l.b16 %v77
  %v249 = vunpack.c.h.b16 %v77
  %v250 = vunpack.c.l.b16 %v78
  %v251 = vunpack.c.h.b16 %v78
  %v252 = vunpack.c.l.b16 %v79
  %v253 = vunpack.c.h.b16 %v79
  %v254 = vunpack.c.l.b16 %v80
  %v255 = vunpack.c.h.b16 %v80
  %v256 = vunpack.c.l.b16 %v81
  %v257 = vunpack.c.h.b16 %v81
  %v258 = vunpack.c.l.b16 %v82
  %v259 = vunpack.c.h.b16 %v82
  %v260 = vunpack.c.l.b16 %v83
  %v261 = vunpack.c.h.b16 %v83
  %v262 = vunpack.c.l.b16 %v84
  %v263 = vunpack.c.h.b16 %v84
  %v264 = vunpack.c.l.b16 %v85
  %v265 = vunpack.c.h.b16 %v85
  %v266 = vunpack.c.l.b16 %v86
  %v267 = vunpack.c.h.b16 %v86
  %v268 = vunpack.c.l.b16 %v87
  %v269 = vunpack.c.h.b16 %v87
  %v270 = vunpack.c.l.b16 %v88
  %v271 = vunpack.c.h.b16 %v88
  %v272 = vunpack.c.l.b16 %v89
  %v273 = vunpack.c.h.b16 %v89
  %v274 = vunpack.c.l.b16 %v90
  %v275 = vunpack.c.h.b16 %v90
  %v276 = vunpack.c.l.b16 %v91
  %v277 = vunpack.c.h.b16 %v91
  %v278 = vunpack.c.l.b16 %v92
  %v279 = vunpack.c.h.b16 %v92
  %v280 = vunpack.c.l.b16 %v93
  %v281 = vunpack.c.h.b16 %v93
  %v282 = vunpack.c.l.b16 %v94
  %v283 = vunpack.c.h.b16 %v94
  %v284 = vunpack.c.l.b16 %v95
  %v285 = vunpack.c.h.b16 %v95
  %v286 = vunpack.c.l.b16 %v96
  %v287 = vunpack.c.h.b16 %v96
  %v288 = vunpack.c.l.b16 %v97
  %v289 = vunpack.c.h.b16 %v97
  %v290 = vunpack.c.l.b16 %v98
  %v291 = vunpack.c.h.b16 %v98
  %v292 = vunpack.c.l.b16 %v99
  %v293 = vunpack.c.h.b16 %v99
  %v294 = vunpack.c.l.b16 %v100
  %v295 = vunpack.c.h.b16 %v100
  %v296 = vunpack.c.l.b16 %v101
  %v297 = vunpack.c.h.b16 %v101
  %v298 = vunpack.c.l.b16 %v102
  %v299 = vunpack.c.h.b16 %v102
  %v300 = vunpack.c.l.b16 %v103
  %v301 = vunpack.c.h.b16 %v103
  %v302 = vunpack.c.l.b16 %v104
  %v303 = vunpack.c.h.b16 %v104
  %v304 = vunpack.c.l.b16 %v105
  %v305 = vunpack.c.h.b16 %v105
  %v306 = vunpack.c.l.b16 %v106
  %v307 = vunpack.c.h.b16 %v106
  %v308 = vunpack.c.l.b16 %v107
  %v309 = vunpack.c.h.b16 %v107
  %v310 = vunpack.c.l.b16 %v108
  %v311 = vunpack.c.h.b16 %v108
  %v312 = vunpack.c.l.b16 %v109
  %v313 = vunpack.c.h.b16 %v109
  %v314 = vunpack.c.l.b16 %v110
  %v315 = vunpack.c.h.b16 %v110
  %v316 = vunpack.c.l.b16 %v111
  %v317 = vunpack.c.h.b16 %v111
  %v318 = vunpack.c.l.b16 %v112
  %v319 = vunpack.c.h.b16 %v112
  %v320 = vunpack.c.l.b16 %v113
  %v321 = vunpack.c.h.b16 %v113
  %v322 = vunpack.c.l.b16 %v114
  %v323 = vunpack.c.h.b16 %v114
  %v324 = vunpack.c.l.b16 %v115
  %v325 = vunpack.c.h.b16 %v115
  %v326 = vunpack.c.l.b16 %v116
  %v327 = vunpack.c.h.b16 %v116
  %v328 = vunpack.c.l.b16 %v117
  %v329 = vunpack.c.h.b16 %v117
  %v330 = vpack.c.b16 %v204, %v202
  %v331 = vpack.c.b16 %v205, %v203
  %v332 = vpack.c.b16 %v208, %v206
  %v333 = vpack.c.b16 %v209, %v207
  %v334 = vpack.c.b16 %v212, %v210
  %v335 = vpack.c.b16 %v213, %v211
  %v336 = vpack.c.b16 %v216, %v214
  %v337 = vpack.c.b16 %v217, %v215
  %v338 = vpack.c.b16 %v220, %v218
  %v339 = vpack.c.b16 %v221, %v219
  %v340 = vpack.c.b16 %v224, %v222
  %v341 = vpack.c.b16 %v225, %v223
  %v342 = vpack.c.b16 %v228, %v226
  %v343 = vpack.c.b16 %v229, %v227
  %v344 = vpack.c.b16 %v232, %v230
  %v345 = vpack.c.b16 %v233, %v231
  %v346 = vpack.c.b16 %v236, %v234
  %v347 = vpack.c.b16 %v237, %v235
  %v348 = vpack.c.b16 %v240, %v238
  %v349 = vpack.c.b16 %v241, %v239
  %v350 = vpack.c.b16 %v244, %v242
  %v351 = vpack.c.b16 %v245, %v243
  %v352 = vpack.c.b16 %v248, %v246
  %v353 = vpack.c.b16 %v249, %v247
  %v354 = vpack.c.b16 %v252, %v250
  %v355 = vpack.c.b16 %v253, %v251
  %v356 = vpack.c.b16 %v256, %v254
  %v357 = vpack.c.b16 %v257, %v255
  %v358 = vpack.c.b16 %v260, %v258
  %v359 = vpack.c.b16 %v261, %v259
  %v360 = vpack.c.b16 %v264, %v262
  %v361 = vpack.c.b16 %v265, %v263
  %v362 = vpack.c.b16 %v268, %v266
  %v363 = vpack.c.b16 %v269, %v267
  %v364 = vpack.c.b16 %v272, %v270
  %v365 = vpack.c.b16 %v273, %v271
  %v366 = vpack.c.b16 %v276, %v274
  %v367 = vpack.c.b16 %v277, %v275
  %v368 = vpack.c.b16 %v280, %v278
  %v369 = vpack.c.b16 %v281, %v279
  %v370 = vpack.c.b16 %v284, %v282
  %v371 = vpack.c.b16 %v285, %v283
  %v372 = vpack.c.b16 %v288, %v286
  %v373 = vpack.c.b16 %v289, %v287
  %v374 = vpack.c.b16 %v292, %v290
  %v375 = vpack.c.b16 %v293, %v291
  %v376 = vpack.c.b16 %v296, %v294
  %v377 = vpack.c.b16 %v297, %v295
  %v378 = vpack.c.b16 %v300, %v298
  %v379 = vpack.c.b16 %v301, %v299
  %v380 = vpack.c.b16 %v304, %v302
  %v381 = vpack.c.b16 %v305, %v303
  %v382 = vpack.c.b16 %v308, %v306
  %v383 = vpack.c.b16 %v309, %v307
  %v384 = vpack.c.b16 %v312, %v310
  %v385 = vpack.c.b16 %v313, %v311
  %v386 = vpack.c.b16 %v316, %v314
  %v387 = vpack.c.b16 %v317, %v315
  %v388 = vpack.c.b16 %v320, %v318
  %v389 = vpack.c.b16 %v321, %v319
  %v390 = vpack.c.b16 %v324, %v322
  %v391 = vpack.c.b16 %v325, %v323
  %v392 = vpack.c.b16 %v328, %v326
  %v393 = vpack.c.b16 %v329, %v327
  %458 = vmatpush.bf16.xpose.msra.mxu0 %v344
  %459 = vmatpush.bf16.xpose.msra.mxu0 %v342
  %460 = vmatpush.bf16.xpose.msra.mxu0 %v340
  %461 = vmatpush.bf16.xpose.msra.mxu0 %v338
  %462 = vmatpush.bf16.xpose.msra.mxu0 %v336
  %463 = vmatpush.bf16.xpose.msra.mxu0 %v334
  %464 = vmatpush.bf16.xpose.msra.mxu0 %v332
  %465 = vmatpush.bf16.xpose.msra.mxu0 %v330
  %466 = vmatmul.bf16.gmra.mxu0 %v130
  %v467 = vpop.f32.mrf.mxu0
  %v468 = vadd.f32 0.0, %v467
  %v469 = vpop.f32.mrf.mxu0
  %v470 = vadd.f32 0.0, %v469
  %471 = vmatmul.bf16.gmra.mxu0 %v132
  %v472 = vpop.f32.mrf.mxu0
  %v473 = vadd.f32 0.0, %v472
  %v474 = vpop.f32.mrf.mxu0
  %v475 = vadd.f32 0.0, %v474
  %476 = vdwg.mxu0
  %477 = vmatpush.bf16.xpose.msra.mxu0 %v345
  %478 = vmatpush.bf16.xpose.msra.mxu0 %v343
  %479 = vmatpush.bf16.xpose.msra.mxu0 %v341
  %480 = vmatpush.bf16.xpose.msra.mxu0 %v339
  %481 = vmatpush.bf16.xpose.msra.mxu0 %v337
  %482 = vmatpush.bf16.xpose.msra.mxu0 %v335
  %483 = vmatpush.bf16.xpose.msra.mxu0 %v333
  %484 = vmatpush.bf16.xpose.msra.mxu0 %v331
  %485 = vmatmul.bf16.gmra.mxu0 %v131
  %v486 = vpop.f32.mrf.mxu0
  %v487 = vadd.f32 %v468, %v486
  %v488 = vpop.f32.mrf.mxu0
  %v489 = vadd.f32 %v470, %v488
  %490 = vmatmul.bf16.gmra.mxu0 %v133
  %v491 = vpop.f32.mrf.mxu0
  %v492 = vadd.f32 %v473, %v491
  %v493 = vpop.f32.mrf.mxu0
  %v494 = vadd.f32 %v475, %v493
  %495 = vdwg.mxu0
  %496 = vmatpush.bf16.xpose.msra.mxu0 %v360
  %497 = vmatpush.bf16.xpose.msra.mxu0 %v358
  %498 = vmatpush.bf16.xpose.msra.mxu0 %v356
  %499 = vmatpush.bf16.xpose.msra.mxu0 %v354
  %500 = vmatpush.bf16.xpose.msra.mxu0 %v352
  %501 = vmatpush.bf16.xpose.msra.mxu0 %v350
  %502 = vmatpush.bf16.xpose.msra.mxu0 %v348
  %503 = vmatpush.bf16.xpose.msra.mxu0 %v346
  %504 = vmatmul.bf16.gmra.mxu0 %v130
  %v505 = vpop.f32.mrf.mxu0
  %v506 = vadd.f32 0.0, %v505
  %v507 = vpop.f32.mrf.mxu0
  %v508 = vadd.f32 0.0, %v507
  %509 = vmatmul.bf16.gmra.mxu0 %v132
  %v510 = vpop.f32.mrf.mxu0
  %v511 = vadd.f32 0.0, %v510
  %v512 = vpop.f32.mrf.mxu0
  %v513 = vadd.f32 0.0, %v512
  %514 = vdwg.mxu0
  %515 = vmatpush.bf16.xpose.msra.mxu0 %v361
  %516 = vmatpush.bf16.xpose.msra.mxu0 %v359
  %517 = vmatpush.bf16.xpose.msra.mxu0 %v357
  %518 = vmatpush.bf16.xpose.msra.mxu0 %v355
  %519 = vmatpush.bf16.xpose.msra.mxu0 %v353
  %520 = vmatpush.bf16.xpose.msra.mxu0 %v351
  %521 = vmatpush.bf16.xpose.msra.mxu0 %v349
  %522 = vmatpush.bf16.xpose.msra.mxu0 %v347
  %523 = vmatmul.bf16.gmra.mxu0 %v131
  %v524 = vpop.f32.mrf.mxu0
  %v525 = vadd.f32 %v506, %v524
  %v526 = vpop.f32.mrf.mxu0
  %v527 = vadd.f32 %v508, %v526
  %528 = vmatmul.bf16.gmra.mxu0 %v133
  %v529 = vpop.f32.mrf.mxu0
  %v530 = vadd.f32 %v511, %v529
  %v531 = vpop.f32.mrf.mxu0
  %v532 = vadd.f32 %v513, %v531
  %533 = vdwg.mxu0
  %534 = vmatpush.bf16.xpose.msra.mxu0 %v376
  %535 = vmatpush.bf16.xpose.msra.mxu0 %v374
  %536 = vmatpush.bf16.xpose.msra.mxu0 %v372
  %537 = vmatpush.bf16.xpose.msra.mxu0 %v370
  %538 = vmatpush.bf16.xpose.msra.mxu0 %v368
  %539 = vmatpush.bf16.xpose.msra.mxu0 %v366
  %540 = vmatpush.bf16.xpose.msra.mxu0 %v364
  %541 = vmatpush.bf16.xpose.msra.mxu0 %v362
  %542 = vmatmul.bf16.gmra.mxu0 %v130
  %v543 = vpop.f32.mrf.mxu0
  %v544 = vadd.f32 0.0, %v543
  %v545 = vpop.f32.mrf.mxu0
  %v546 = vadd.f32 0.0, %v545
  %547 = vmatmul.bf16.gmra.mxu0 %v132
  %v548 = vpop.f32.mrf.mxu0
  %v549 = vadd.f32 0.0, %v548
  %v550 = vpop.f32.mrf.mxu0
  %v551 = vadd.f32 0.0, %v550
  %552 = vdwg.mxu0
  %553 = vmatpush.bf16.xpose.msra.mxu0 %v377
  %554 = vmatpush.bf16.xpose.msra.mxu0 %v375
  %555 = vmatpush.bf16.xpose.msra.mxu0 %v373
  %556 = vmatpush.bf16.xpose.msra.mxu0 %v371
  %557 = vmatpush.bf16.xpose.msra.mxu0 %v369
  %558 = vmatpush.bf16.xpose.msra.mxu0 %v367
  %559 = vmatpush.bf16.xpose.msra.mxu0 %v365
  %560 = vmatpush.bf16.xpose.msra.mxu0 %v363
  %561 = vmatmul.bf16.gmra.mxu0 %v131
  %v562 = vpop.f32.mrf.mxu0
  %v563 = vadd.f32 %v544, %v562
  %v564 = vpop.f32.mrf.mxu0
  %v565 = vadd.f32 %v546, %v564
  %566 = vmatmul.bf16.gmra.mxu0 %v133
  %v567 = vpop.f32.mrf.mxu0
  %v568 = vadd.f32 %v549, %v567
  %v569 = vpop.f32.mrf.mxu0
  %v570 = vadd.f32 %v551, %v569
  %571 = vdwg.mxu0
  %572 = vmatpush.bf16.xpose.msra.mxu0 %v392
  %573 = vmatpush.bf16.xpose.msra.mxu0 %v390
  %574 = vmatpush.bf16.xpose.msra.mxu0 %v388
  %575 = vmatpush.bf16.xpose.msra.mxu0 %v386
  %576 = vmatpush.bf16.xpose.msra.mxu0 %v384
  %577 = vmatpush.bf16.xpose.msra.mxu0 %v382
  %578 = vmatpush.bf16.xpose.msra.mxu0 %v380
  %579 = vmatpush.bf16.xpose.msra.mxu0 %v378
  %580 = vmatmul.bf16.gmra.mxu0 %v130
  %v581 = vpop.f32.mrf.mxu0
  %v582 = vadd.f32 0.0, %v581
  %v583 = vpop.f32.mrf.mxu0
  %v584 = vadd.f32 0.0, %v583
  %585 = vmatmul.bf16.gmra.mxu0 %v132
  %v586 = vpop.f32.mrf.mxu0
  %v587 = vadd.f32 0.0, %v586
  %v588 = vpop.f32.mrf.mxu0
  %v589 = vadd.f32 0.0, %v588
  %590 = vdwg.mxu0
  %591 = vmatpush.bf16.xpose.msra.mxu0 %v393
  %592 = vmatpush.bf16.xpose.msra.mxu0 %v391
  %593 = vmatpush.bf16.xpose.msra.mxu0 %v389
  %594 = vmatpush.bf16.xpose.msra.mxu0 %v387
  %595 = vmatpush.bf16.xpose.msra.mxu0 %v385
  %596 = vmatpush.bf16.xpose.msra.mxu0 %v383
  %597 = vmatpush.bf16.xpose.msra.mxu0 %v381
  %598 = vmatpush.bf16.xpose.msra.mxu0 %v379
  %599 = vmatmul.bf16.gmra.mxu0 %v131
  %v600 = vpop.f32.mrf.mxu0
  %v601 = vadd.f32 %v582, %v600
  %v602 = vpop.f32.mrf.mxu0
  %v603 = vadd.f32 %v584, %v602
  %604 = vmatmul.bf16.gmra.mxu0 %v133
  %v605 = vpop.f32.mrf.mxu0
  %v606 = vadd.f32 %v587, %v605
  %v607 = vpop.f32.mrf.mxu0
  %v608 = vadd.f32 %v589, %v607
  %609 = vdwg.mxu0
  %v610 = vadd.f32 %v34, %v487
  %v611 = vadd.f32 %v35, %v525
  %v612 = vadd.f32 %v36, %v563
  %v613 = vadd.f32 %v37, %v601
  %v614 = vadd.f32 %v38, %v489
  %v615 = vadd.f32 %v39, %v527
  %v616 = vadd.f32 %v40, %v565
  %v617 = vadd.f32 %v41, %v603
  %v618 = vadd.f32 %v42, %v492
  %v619 = vadd.f32 %v43, %v530
  %v620 = vadd.f32 %v44, %v568
  %v621 = vadd.f32 %v45, %v606
  %v622 = vadd.f32 %v46, %v494
  %v623 = vadd.f32 %v47, %v532
  %v624 = vadd.f32 %v48, %v570
  %v625 = vadd.f32 %v49, %v608
  %626 = vst [vmem:[#allocation2] sm:$0xff] %v610
  %627 = vst [vmem:[#allocation2 + $0x8] sm:$0xff] %v611
  %628 = vst [vmem:[#allocation2 + $0x10] sm:$0xff] %v612
  %629 = vst [vmem:[#allocation2 + $0x18] sm:$0xff] %v613
  %630 = vst [vmem:[#allocation2 + $0x20] sm:$0xff] %v614
  %631 = vst [vmem:[#allocation2 + $0x28] sm:$0xff] %v615
  %632 = vst [vmem:[#allocation2 + $0x30] sm:$0xff] %v616
  %633 = vst [vmem:[#allocation2 + $0x38] sm:$0xff] %v617
  %634 = vst [vmem:[#allocation2 + $0x40] sm:$0xff] %v618
  %635 = vst [vmem:[#allocation2 + $0x48] sm:$0xff] %v619
  %636 = vst [vmem:[#allocation2 + $0x50] sm:$0xff] %v620
  %637 = vst [vmem:[#allocation2 + $0x58] sm:$0xff] %v621
  %638 = vst [vmem:[#allocation2 + $0x60] sm:$0xff] %v622
  %639 = vst [vmem:[#allocation2 + $0x68] sm:$0xff] %v623
  %640 = vst [vmem:[#allocation2 + $0x70] sm:$0xff] %v624
  %641 = vst [vmem:[#allocation2 + $0x78] sm:$0xff] %v625
  // Predicated region
  $region18: #{electra_model_forward.39} parent=0 // pred_check
    %p642 = pneg %p14
  $region19: #{electra_model_forward.39} parent=0 // pred_check_branch
    %644 = sbr.rel (%p642) target = $region21
  $region20: #{electra_model_forward.39} parent=0 // pred_region
    %v645 = vld [vmem:[#allocation2] sm:$0xff]
    %v646 = vld [vmem:[#allocation2 + $0x8] sm:$0xff]
    %v647 = vld [vmem:[#allocation2 + $0x10] sm:$0xff]
    %v648 = vld [vmem:[#allocation2 + $0x18] sm:$0xff]
    %v649 = vld [vmem:[#allocation2 + $0x20] sm:$0xff]
    %v650 = vld [vmem:[#allocation2 + $0x28] sm:$0xff]
    %v651 = vld [vmem:[#allocation2 + $0x30] sm:$0xff]
    %v652 = vld [vmem:[#allocation2 + $0x38] sm:$0xff]
    %v653 = vld [vmem:[#allocation2 + $0x40] sm:$0xff]
    %v654 = vld [vmem:[#allocation2 + $0x48] sm:$0xff]
    %v655 = vld [vmem:[#allocation2 + $0x50] sm:$0xff]
    %v656 = vld [vmem:[#allocation2 + $0x58] sm:$0xff]
    %v657 = vld [vmem:[#allocation2 + $0x60] sm:$0xff]
    %v658 = vld [vmem:[#allocation2 + $0x68] sm:$0xff]
    %v659 = vld [vmem:[#allocation2 + $0x70] sm:$0xff]
    %v660 = vld [vmem:[#allocation2 + $0x78] sm:$0xff]
    %v661 = vld [vmem:[%s2] sm:$0xf]
    %v663 = vperm.slane %v661, 0
    %v664 = vperm.slane %v661, 1
    %v665 = vperm.slane %v661, 2
    %v666 = vperm.slane %v661, 3
    %v671 = vadd.f32 %v645, %v663
    %v672 = vadd.f32 %v646, %v664
    %v673 = vadd.f32 %v647, %v665
    %v674 = vadd.f32 %v648, %v666
    %v675 = vadd.f32 %v649, %v663
    %v676 = vadd.f32 %v650, %v664
    %v677 = vadd.f32 %v651, %v665
    %v678 = vadd.f32 %v652, %v666
    %v679 = vadd.f32 %v653, %v663
    %v680 = vadd.f32 %v654, %v664
    %v681 = vadd.f32 %v655, %v665
    %v682 = vadd.f32 %v656, %v666
    %v683 = vadd.f32 %v657, %v663
    %v684 = vadd.f32 %v658, %v664
    %v685 = vadd.f32 %v659, %v665
    %v686 = vadd.f32 %v660, %v666
    %v687 = vpack.c.bf16 %v672, %v671
    %v688 = vpack.c.bf16 %v674, %v673
    %v689 = vpack.c.bf16 %v676, %v675
    %v690 = vpack.c.bf16 %v678, %v677
    %v691 = vpack.c.bf16 %v680, %v679
    %v692 = vpack.c.bf16 %v682, %v681
    %v693 = vpack.c.bf16 %v684, %v683
    %v694 = vpack.c.bf16 %v686, %v685
    %695 = vst [vmem:[%s3] sm:$0xff] %v687
    %696 = vst [vmem:[%s3 + $0x8] sm:$0xff] %v688
    %697 = vst [vmem:[%s3 + $0x10] sm:$0xff] %v689
    %698 = vst [vmem:[%s3 + $0x18] sm:$0xff] %v690
    %699 = vst [vmem:[%s3 + $0x20] sm:$0xff] %v691
    %700 = vst [vmem:[%s3 + $0x28] sm:$0xff] %v692
    %701 = vst [vmem:[%s3 + $0x30] sm:$0xff] %v693
    %702 = vst [vmem:[%s3 + $0x38] sm:$0xff] %v694
  $region21: #{electra_model_forward.39} parent=0 // pred_fallthru
    _
  // Predicated region
  $region22: #{electra_model_forward.39} parent=0 // pred_check
    _
  $region23: #{electra_model_forward.39} parent=0 // pred_check_branch
    %704 = sbr.rel (0) target = $region25
  $region24: #{electra_model_forward.39} parent=0 // pred_region
    _
  $region25: #{electra_model_forward.39} parent=0 // pred_fallthru
    _
  // Predicated region
  $region26: #{electra_model_forward.39} parent=0 // pred_check
    _
  $region27: #{electra_model_forward.39} parent=0 // pred_check_branch
    %706 = sbr.rel (0) target = $region29
  $region28: #{electra_model_forward.39} parent=0 // pred_region
    _
  $region29: #{electra_model_forward.39} parent=0 // pred_fallthru
    _

// kernel: electra_model_forward.41
$region0: #{electra_model_forward.41}
  #allocation0 [shape = 'u32[]', space=smem, size = 0x4, offset = 0x4, fixed_abs, tag = 'smem constant byte address 0x4 - core index']
  #allocation1 [shape = 'u32[72,128]{1,0:T(1,128)}', space=vmem, size = 0x9000, scoped, tag = 'internal scratch']
  #allocation2 [shape = 'f32[32,384]{1,0:T(8,128)}', space=vmem, size = 0xc000, scoped, tag = 'scratch operand']
  %s0 = inlined_call_operand.vmem [shape: bf16[32,256], index: 0, kind: input, shape index: {}]
  %s1 = inlined_call_operand.vmem [shape: bf16[256,768], index: 1, kind: input, shape index: {}]
  %s2 = inlined_call_operand.vmem [shape: f32[1,768], index: 2, kind: input, shape index: {}]
  %s3 = inlined_call_operand.vmem [shape: bf16[32,768], index: 3, kind: output, shape index: {}]
  %s4 = sld [smem:[#allocation0]]
  $region101: #{electra_model_forward.41} parent=0
    _
  %s6 = ssub.s32 1, %s4
  %s7 = scalar_select 0, %s6, %s4
  $region1: #{electra_model_forward.41} parent=0
    #allocation3 [shape = 'u8[393216]{0}', space=vmem, size = 0x60000, scoped, tag = 'input window, operand 1']
    #allocation4 [shape = 'u8[49152]{0}', space=vmem, size = 0xc000, scoped, tag = 'output window, operand 0']
    loop: start=0, step=1, limit=4
    $region2: #{electra_model_forward.41} parent=1 // loop_pre_header
      _
    $region3: #{electra_model_forward.41} parent=1 // loop_header
      %s9 = sphi 0, %s13
      %p10 = scmp.ge.s32.totalorder %s9, 4
      %s16 = sphi 0, %s35
      %s17 = sphi 0, %s31
      %s18 = sphi 0, %s27
      %s19 = sphi 0, %s16
      %s20 = sphi 0, %s17
      %s21 = sphi 0, %s18
      %s22 = sphi 0, %s19
      %s23 = sphi 0, %s20
      %s24 = sphi 0, %s21
      %s40 = sphi 0, %s42
      %s43 = sphi 0, %s40
      %s44 = sphi 0, %s43
      %s60 = sphi 0, %s44
      %s68 = sphi 0, %s70
      %s71 = sphi 0, %s68
      %s72 = sphi 0, %s71
      %s88 = sphi 0, %s72
      %s94 = sphi 0, %s96
      %s97 = sphi 0, %s94
      %s98 = sphi 0, %s97
      %s114 = sphi 0, %s98
      %s122 = sphi 0, %s124
      %s125 = sphi 0, %s122
      %s126 = sphi 0, %s125
      %s142 = sphi 0, %s126
    $region4: #{electra_model_forward.41} parent=1 // loop_header_branch
      %12 = sbr.rel (%p10) target = $region8
    $region5: #{electra_model_forward.41} parent=1 // loop_body
      %s14 = ssub.s32 %s9, 1
      %s15 = ssub.s32 %s9, 2
      %s25 = sadd.s32 1, %s18
      %p26 = scmp.ge.s32.totalorder %s25, 1
      %s27 = scalar_select %p26, 0, %s25
      %s28 = sadd.s32 1, %s17
      %s29 = scalar_select %p26, %s28, %s17
      %p30 = scmp.ge.s32.totalorder %s29, 2
      %s31 = scalar_select %p30, 0, %s29
      %s32 = sadd.s32 1, %s16
      %s33 = scalar_select %p30, %s32, %s16
      %p34 = scmp.ge.s32.totalorder %s33, 1
      %s35 = scalar_select %p34, 0, %s33
      %s36 = ssub.s32 %s16, %s35
      %s37 = ssub.s32 %s18, %s27
      %s38 = sor.u32 %s36, %s37
      %p39 = scmp.eq.s32.totalorder %s38, 0
      %s41 = sadd.s32 %s40, 1
      %s42 = scalar_select %p39, %s40, %s41
      %p45 = pneg %p39
      %p46 = scmp.eq.s32.totalorder %s9, 1
      %p47 = por %p45, %p46
      %p48 = scmp.ne.s32.totalorder %s40, %s43
      %p49 = scmp.eq.s32.totalorder %s9, 0
      %p50 = por %p48, %p49
      %p51 = scmp.ne.s32.totalorder %s40, %s43
      %p52 = scmp.eq.s32.totalorder %s14, 1
      %p53 = por %p51, %p52
      %p54 = scmp.ne.s32.totalorder %s43, %s44
      %p55 = scmp.eq.s32.totalorder %s14, 0
      %p56 = por %p54, %p55
      %p57 = scmp.ne.s32.totalorder %s43, %s44
      %p58 = scmp.eq.s32.totalorder %s15, 1
      %p59 = por %p57, %p58
      %p61 = scmp.ne.s32.totalorder %s44, %s60
      %p62 = scmp.eq.s32.totalorder %s15, 0
      %p63 = por %p61, %p62
      %s64 = ssub.s32 %s18, %s27
      %s65 = ssub.s32 %s17, %s31
      %s66 = sor.u32 %s64, %s65
      %p67 = scmp.eq.s32.totalorder %s66, 0
      %s69 = sadd.s32 %s68, 1
      %s70 = scalar_select %p67, %s68, %s69
      %p73 = pneg %p67
      %p74 = scmp.eq.s32.totalorder %s9, 1
      %p75 = por %p73, %p74
      %p76 = scmp.ne.s32.totalorder %s68, %s71
      %p77 = scmp.eq.s32.totalorder %s9, 0
      %p78 = por %p76, %p77
      %p79 = scmp.ne.s32.totalorder %s68, %s71
      %p80 = scmp.eq.s32.totalorder %s14, 1
      %p81 = por %p79, %p80
      %p82 = scmp.ne.s32.totalorder %s71, %s72
      %p83 = scmp.eq.s32.totalorder %s14, 0
      %p84 = por %p82, %p83
      %p85 = scmp.ne.s32.totalorder %s71, %s72
      %p86 = scmp.eq.s32.totalorder %s15, 1
      %p87 = por %p85, %p86
      %p89 = scmp.ne.s32.totalorder %s72, %s88
      %p90 = scmp.eq.s32.totalorder %s15, 0
      %p91 = por %p89, %p90
      %s92 = ssub.s32 %s17, %s31
      %p93 = scmp.eq.s32.totalorder %s92, 0
      %s95 = sadd.s32 %s94, 1
      %s96 = scalar_select %p93, %s94, %s95
      %p99 = pneg %p93
      %p100 = scmp.eq.s32.totalorder %s9, 1
      %p101 = por %p99, %p100
      %p102 = scmp.ne.s32.totalorder %s94, %s97
      %p103 = scmp.eq.s32.totalorder %s9, 0
      %p104 = por %p102, %p103
      %p105 = scmp.ne.s32.totalorder %s94, %s97
      %p106 = scmp.eq.s32.totalorder %s14, 1
      %p107 = por %p105, %p106
      %p108 = scmp.ne.s32.totalorder %s97, %s98
      %p109 = scmp.eq.s32.totalorder %s14, 0
      %p110 = por %p108, %p109
      %p111 = scmp.ne.s32.totalorder %s97, %s98
      %p112 = scmp.eq.s32.totalorder %s15, 1
      %p113 = por %p111, %p112
      %p115 = scmp.ne.s32.totalorder %s98, %s114
      %p116 = scmp.eq.s32.totalorder %s15, 0
      %p117 = por %p115, %p116
      %s118 = ssub.s32 %s16, %s35
      %s119 = ssub.s32 %s17, %s31
      %s120 = sor.u32 %s118, %s119
      %p121 = scmp.eq.s32.totalorder %s120, 0
      %s123 = sadd.s32 %s122, 1
      %s124 = scalar_select %p121, %s122, %s123
      %p127 = pneg %p121
      %p128 = scmp.eq.s32.totalorder %s9, 1
      %p129 = por %p127, %p128
      %p130 = scmp.ne.s32.totalorder %s122, %s125
      %p131 = scmp.eq.s32.totalorder %s9, 0
      %p132 = por %p130, %p131
      %p133 = scmp.ne.s32.totalorder %s122, %s125
      %p134 = scmp.eq.s32.totalorder %s14, 1
      %p135 = por %p133, %p134
      %p136 = scmp.ne.s32.totalorder %s125, %s126
      %p137 = scmp.eq.s32.totalorder %s14, 0
      %p138 = por %p136, %p137
      %p139 = scmp.ne.s32.totalorder %s125, %s126
      %p140 = scmp.eq.s32.totalorder %s15, 1
      %p141 = por %p139, %p140
      %p143 = scmp.ne.s32.totalorder %s126, %s142
      %p144 = scmp.eq.s32.totalorder %s15, 0
      %p145 = por %p143, %p144
      %p146 = scmp.le.s32.totalorder 1, %s9
      %p147 = scmp.lt.s32.totalorder %s9, 3
      %p148 = pnand %p146, %p147
      %p149 = pneg %p148
      // Predicated region
      $region9: #{electra_model_forward.41} parent=5 // pred_check
        _
      $region10: #{electra_model_forward.41} parent=5 // pred_check_branch
        %151 = sbr.rel (%p148) target = $region12
      $region11: #{electra_model_forward.41} parent=5 // pred_region
        %s152 = ssub.s32 %s9, 1
        // Predicated region
        $region13: #{electra_model_forward.41} parent=11 // pred_check
          %p153 = pneg %p56
        $region14: #{electra_model_forward.41} parent=11 // pred_check_branch
          %155 = sbr.rel (%p153) target = $region16
        $region15: #{electra_model_forward.41} parent=11 // pred_region
          %s156 = smul.u32 4, %s19
          %s157 = smul.u32 2, %s21
          %p158 = scmp.lt.s32.totalorder %s156, 3
          %s159 = scalar_select %p158, %s156, 3
          %p160 = scmp.lt.s32.totalorder %s157, 1
          %s161 = scalar_select %p160, %s157, 1
          %s162 = smul.addr %s159, 2
          %s163 = sadd.s32 %s161, %s162
          %s164 = smul.addr %s163, 4
          %s165 = scalar_lea.vmem %s0, %s164
          %s166 = smul.u32 4, %s19
          %s167 = smul.u32 2, %s21
        $region16: #{electra_model_forward.41} parent=11 // pred_fallthru
          _
      $region12: #{electra_model_forward.41} parent=5 // pred_fallthru
        _
      %p168 = scmp.lt.s32.totalorder %s9, 2
      // Predicated region
      $region17: #{electra_model_forward.41} parent=5 // pred_check
        %p169 = pneg %p168
      $region18: #{electra_model_forward.41} parent=5 // pred_check_branch
        %171 = sbr.rel (%p169) target = $region20
      $region19: #{electra_model_forward.41} parent=5 // pred_region
        // Predicated region
        $region21: #{electra_model_forward.41} parent=19 // pred_check
          %p172 = pneg %p78
        $region22: #{electra_model_forward.41} parent=19 // pred_check_branch
          %174 = sbr.rel (%p172) target = $region24
        $region23: #{electra_model_forward.41} parent=19 // pred_region
          %s175 = sand.u32 %s68, 1
          %s176 = sand.u32 %s68, 1
          %s177 = smul.addr %s176, 384
          %s178 = scalar_lea.vmem [#allocation3], %s177
          %s179 = smul.u32 32, %s18
          %s180 = smul.u32 3, %s17
          %s181 = smul.addr %s179, 6
          %s182 = sadd.s32 %s180, %s181
          %s183 = smul.addr %s182, 4
          %s184 = scalar_lea.vmem %s1, %s183
          // Predicated region
          $region25: #{electra_model_forward.41} parent=23 // pred_check
            _
          $region26: #{electra_model_forward.41} parent=23 // pred_check_branch
            %186 = sbr.rel (0) target = $region28
          $region27: #{electra_model_forward.41} parent=23 // pred_region
            // Predicated region
            $region29: #{electra_model_forward.41} parent=27 // pred_check
              _
            $region30: #{electra_model_forward.41} parent=27 // pred_check_branch
              %188 = sbr.rel (0) target = $region32
            $region31: #{electra_model_forward.41} parent=27 // pred_region
              %s189 = scalar_lea.vmem %s184, 8
              %s190 = scalar_lea.vmem %s178, 8 [#allocation3]
              loop: start=0, step=1, limit=1
              $region33: #{electra_model_forward.41} parent=31 // loop_pre_header
                _
              $region34: #{electra_model_forward.41} parent=31 // loop_header
                %s192 = sphi 0, %s196
                %p193 = scmp.ge.s32.totalorder %s192, 1
                %s197 = sphi %s184, %s184
                %s198 = sphi %s178, %s178
              $region35: #{electra_model_forward.41} parent=31 // loop_header_branch
                %195 = sbr.rel (%p193) target = $region39
              $region36: #{electra_model_forward.41} parent=31 // loop_body
                %v199 = vld [vmem:[%s197] sm:$0xff]
                %200 = vst [vmem:[%s198] sm:$0xff] %v199
                %v201 = vld [vmem:[%s197 + $0x18] sm:$0xff]
                %202 = vst [vmem:[%s198 + $0xc] sm:$0xff] %v201
                %v203 = vld [vmem:[%s197 + $0x30] sm:$0xff]
                %204 = vst [vmem:[%s198 + $0x18] sm:$0xff] %v203
                %v205 = vld [vmem:[%s197 + $0x48] sm:$0xff]
                %206 = vst [vmem:[%s198 + $0x24] sm:$0xff] %v205
                %v207 = vld [vmem:[%s197 + $0x60] sm:$0xff]
                %208 = vst [vmem:[%s198 + $0x30] sm:$0xff] %v207
                %v209 = vld [vmem:[%s197 + $0x78] sm:$0xff]
                %210 = vst [vmem:[%s198 + $0x3c] sm:$0xff] %v209
                %v211 = vld [vmem:[%s197 + $0x90] sm:$0xff]
                %212 = vst [vmem:[%s198 + $0x48] sm:$0xff] %v211
                %v213 = vld [vmem:[%s197 + $0xa8] sm:$0xff]
                %214 = vst [vmem:[%s198 + $0x54] sm:$0xff] %v213
                %v215 = vld [vmem:[%s197 + $0xc0] sm:$0xff]
                %216 = vst [vmem:[%s198 + $0x60] sm:$0xff] %v215
                %v217 = vld [vmem:[%s197 + $0xd8] sm:$0xff]
                %218 = vst [vmem:[%s198 + $0x6c] sm:$0xff] %v217
                %v219 = vld [vmem:[%s197 + $0xf0] sm:$0xff]
                %220 = vst [vmem:[%s198 + $0x78] sm:$0xff] %v219
                %v221 = vld [vmem:[%s197 + $0x108] sm:$0xff]
                %222 = vst [vmem:[%s198 + $0x84] sm:$0xff] %v221
                %v223 = vld [vmem:[%s197 + $0x120] sm:$0xff]
                %224 = vst [vmem:[%s198 + $0x90] sm:$0xff] %v223
                %v225 = vld [vmem:[%s197 + $0x138] sm:$0xff]
                %226 = vst [vmem:[%s198 + $0x9c] sm:$0xff] %v225
                %v227 = vld [vmem:[%s197 + $0x150] sm:$0xff]
                %228 = vst [vmem:[%s198 + $0xa8] sm:$0xff] %v227
                %v229 = vld [vmem:[%s197 + $0x168] sm:$0xff]
                %230 = vst [vmem:[%s198 + $0xb4] sm:$0xff] %v229
                %v231 = vld [vmem:[%s197 + $0x180] sm:$0xff]
                %232 = vst [vmem:[%s198 + $0xc0] sm:$0xff] %v231
                %v233 = vld [vmem:[%s197 + $0x198] sm:$0xff]
                %234 = vst [vmem:[%s198 + $0xcc] sm:$0xff] %v233
                %v235 = vld [vmem:[%s197 + $0x1b0] sm:$0xff]
                %236 = vst [vmem:[%s198 + $0xd8] sm:$0xff] %v235
                %v237 = vld [vmem:[%s197 + $0x1c8] sm:$0xff]
                %238 = vst [vmem:[%s198 + $0xe4] sm:$0xff] %v237
                %v239 = vld [vmem:[%s197 + $0x1e0] sm:$0xff]
                %240 = vst [vmem:[%s198 + $0xf0] sm:$0xff] %v239
                %v241 = vld [vmem:[%s197 + $0x1f8] sm:$0xff]
                %242 = vst [vmem:[%s198 + $0xfc] sm:$0xff] %v241
                %v243 = vld [vmem:[%s197 + $0x210] sm:$0xff]
                %244 = vst [vmem:[%s198 + $0x108] sm:$0xff] %v243
                %v245 = vld [vmem:[%s197 + $0x228] sm:$0xff]
                %246 = vst [vmem:[%s198 + $0x114] sm:$0xff] %v245
                %v247 = vld [vmem:[%s197 + $0x240] sm:$0xff]
                %248 = vst [vmem:[%s198 + $0x120] sm:$0xff] %v247
                %v249 = vld [vmem:[%s197 + $0x258] sm:$0xff]
                %250 = vst [vmem:[%s198 + $0x12c] sm:$0xff] %v249
                %v251 = vld [vmem:[%s197 + $0x270] sm:$0xff]
                %252 = vst [vmem:[%s198 + $0x138] sm:$0xff] %v251
                %v253 = vld [vmem:[%s197 + $0x288] sm:$0xff]
                %254 = vst [vmem:[%s198 + $0x144] sm:$0xff] %v253
                %v255 = vld [vmem:[%s197 + $0x2a0] sm:$0xff]
                %256 = vst [vmem:[%s198 + $0x150] sm:$0xff] %v255
                %v257 = vld [vmem:[%s197 + $0x2b8] sm:$0xff]
                %258 = vst [vmem:[%s198 + $0x15c] sm:$0xff] %v257
                %v259 = vld [vmem:[%s197 + $0x2d0] sm:$0xff]
                %260 = vst [vmem:[%s198 + $0x168] sm:$0xff] %v259
                %v261 = vld [vmem:[%s197 + $0x2e8] sm:$0xff]
                %262 = vst [vmem:[%s198 + $0x174] sm:$0xff] %v261
              $region37: #{electra_model_forward.41} parent=31 // loop_footer
                %s196 = sadd.s32 1, %s192
              $region38: #{electra_model_forward.41} parent=31 // loop_footer_branch
                %191 = sbr.rel target = $region34
              $region39: #{electra_model_forward.41} parent=31 // loop_exit
                _
              %s264 = ssub.s32 16, 1
              loop: start=0, step=1, limit=1
              $region40: #{electra_model_forward.41} parent=31 // loop_pre_header
                _
              $region41: #{electra_model_forward.41} parent=31 // loop_header
                %s266 = sphi 0, %s270
                %p267 = scmp.ge.s32.totalorder %s266, 1
                %s271 = sphi %s189, %s189
                %s272 = sphi %s190, %s190
              $region42: #{electra_model_forward.41} parent=31 // loop_header_branch
                %269 = sbr.rel (%p267) target = $region46
              $region43: #{electra_model_forward.41} parent=31 // loop_body
                %v273 = vld [vmem:[%s271] sm:%s264]
                %274 = vst [vmem:[%s272] sm:%s264] %v273
                %v275 = vld [vmem:[%s271 + $0x18] sm:%s264]
                %276 = vst [vmem:[%s272 + $0xc] sm:%s264] %v275
                %v277 = vld [vmem:[%s271 + $0x30] sm:%s264]
                %278 = vst [vmem:[%s272 + $0x18] sm:%s264] %v277
                %v279 = vld [vmem:[%s271 + $0x48] sm:%s264]
                %280 = vst [vmem:[%s272 + $0x24] sm:%s264] %v279
                %v281 = vld [vmem:[%s271 + $0x60] sm:%s264]
                %282 = vst [vmem:[%s272 + $0x30] sm:%s264] %v281
                %v283 = vld [vmem:[%s271 + $0x78] sm:%s264]
                %284 = vst [vmem:[%s272 + $0x3c] sm:%s264] %v283
                %v285 = vld [vmem:[%s271 + $0x90] sm:%s264]
                %286 = vst [vmem:[%s272 + $0x48] sm:%s264] %v285
                %v287 = vld [vmem:[%s271 + $0xa8] sm:%s264]
                %288 = vst [vmem:[%s272 + $0x54] sm:%s264] %v287
                %v289 = vld [vmem:[%s271 + $0xc0] sm:%s264]
                %290 = vst [vmem:[%s272 + $0x60] sm:%s264] %v289
                %v291 = vld [vmem:[%s271 + $0xd8] sm:%s264]
                %292 = vst [vmem:[%s272 + $0x6c] sm:%s264] %v291
                %v293 = vld [vmem:[%s271 + $0xf0] sm:%s264]
                %294 = vst [vmem:[%s272 + $0x78] sm:%s264] %v293
                %v295 = vld [vmem:[%s271 + $0x108] sm:%s264]
                %296 = vst [vmem:[%s272 + $0x84] sm:%s264] %v295
                %v297 = vld [vmem:[%s271 + $0x120] sm:%s264]
                %298 = vst [vmem:[%s272 + $0x90] sm:%s264] %v297
                %v299 = vld [vmem:[%s271 + $0x138] sm:%s264]
                %300 = vst [vmem:[%s272 + $0x9c] sm:%s264] %v299
                %v301 = vld [vmem:[%s271 + $0x150] sm:%s264]
                %302 = vst [vmem:[%s272 + $0xa8] sm:%s264] %v301
                %v303 = vld [vmem:[%s271 + $0x168] sm:%s264]
                %304 = vst [vmem:[%s272 + $0xb4] sm:%s264] %v303
                %v305 = vld [vmem:[%s271 + $0x180] sm:%s264]
                %306 = vst [vmem:[%s272 + $0xc0] sm:%s264] %v305
                %v307 = vld [vmem:[%s271 + $0x198] sm:%s264]
                %308 = vst [vmem:[%s272 + $0xcc] sm:%s264] %v307
                %v309 = vld [vmem:[%s271 + $0x1b0] sm:%s264]
                %310 = vst [vmem:[%s272 + $0xd8] sm:%s264] %v309
                %v311 = vld [vmem:[%s271 + $0x1c8] sm:%s264]
                %312 = vst [vmem:[%s272 + $0xe4] sm:%s264] %v311
                %v313 = vld [vmem:[%s271 + $0x1e0] sm:%s264]
                %314 = vst [vmem:[%s272 + $0xf0] sm:%s264] %v313
                %v315 = vld [vmem:[%s271 + $0x1f8] sm:%s264]
                %316 = vst [vmem:[%s272 + $0xfc] sm:%s264] %v315
                %v317 = vld [vmem:[%s271 + $0x210] sm:%s264]
                %318 = vst [vmem:[%s272 + $0x108] sm:%s264] %v317
                %v319 = vld [vmem:[%s271 + $0x228] sm:%s264]
                %320 = vst [vmem:[%s272 + $0x114] sm:%s264] %v319
                %v321 = vld [vmem:[%s271 + $0x240] sm:%s264]
                %322 = vst [vmem:[%s272 + $0x120] sm:%s264] %v321
                %v323 = vld [vmem:[%s271 + $0x258] sm:%s264]
                %324 = vst [vmem:[%s272 + $0x12c] sm:%s264] %v323
                %v325 = vld [vmem:[%s271 + $0x270] sm:%s264]
                %326 = vst [vmem:[%s272 + $0x138] sm:%s264] %v325
                %v327 = vld [vmem:[%s271 + $0x288] sm:%s264]
                %328 = vst [vmem:[%s272 + $0x144] sm:%s264] %v327
                %v329 = vld [vmem:[%s271 + $0x2a0] sm:%s264]
                %330 = vst [vmem:[%s272 + $0x150] sm:%s264] %v329
                %v331 = vld [vmem:[%s271 + $0x2b8] sm:%s264]
                %332 = vst [vmem:[%s272 + $0x15c] sm:%s264] %v331
                %v333 = vld [vmem:[%s271 + $0x2d0] sm:%s264]
                %334 = vst [vmem:[%s272 + $0x168] sm:%s264] %v333
                %v335 = vld [vmem:[%s271 + $0x2e8] sm:%s264]
                %336 = vst [vmem:[%s272 + $0x174] sm:%s264] %v335
              $region44: #{electra_model_forward.41} parent=31 // loop_footer
                %s270 = sadd.s32 1, %s266
              $region45: #{electra_model_forward.41} parent=31 // loop_footer_branch
                %265 = sbr.rel target = $region41
              $region46: #{electra_model_forward.41} parent=31 // loop_exit
                _
            $region32: #{electra_model_forward.41} parent=27 // pred_fallthru
              _
          $region28: #{electra_model_forward.41} parent=23 // pred_fallthru
            _
          %337 = vnop
        $region24: #{electra_model_forward.41} parent=19 // pred_fallthru
          _
        // Predicated region
        $region47: #{electra_model_forward.41} parent=19 // pred_check
          %p338 = pneg %p104
        $region48: #{electra_model_forward.41} parent=19 // pred_check_branch
          %340 = sbr.rel (%p338) target = $region50
        $region49: #{electra_model_forward.41} parent=19 // pred_region
          %s341 = smul.u32 3, %s17
          %p342 = scmp.lt.s32.totalorder %s341, 5
          %s343 = scalar_select %p342, %s341, 5
          %s344 = scalar_lea.vmem %s2, %s343
          %s345 = smul.u32 3, %s17
        $region50: #{electra_model_forward.41} parent=19 // pred_fallthru
          _
      $region20: #{electra_model_forward.41} parent=5 // pred_fallthru
        _
      %p346 = scmp.le.s32.totalorder 1, %s9
      %p347 = scmp.lt.s32.totalorder %s9, 3
      %p348 = pnand %p346, %p347
      %p349 = pneg %p348
      // Predicated region
      $region51: #{electra_model_forward.41} parent=5 // pred_check
        _
      $region52: #{electra_model_forward.41} parent=5 // pred_check_branch
        %351 = sbr.rel (%p348) target = $region54
      $region53: #{electra_model_forward.41} parent=5 // pred_region
        %s352 = ssub.s32 %s9, 1
        %s353 = sand.u32 %s71, 1
        %s354 = sand.u32 %s71, 1
        %s355 = smul.addr %s354, 384
        %s356 = scalar_lea.vmem [#allocation3], %s355
        // Predicated region
        $region55: #{electra_model_forward.41} parent=53 // pred_check
          %p357 = pneg %p84
        $region56: #{electra_model_forward.41} parent=53 // pred_check_branch
          %359 = sbr.rel (%p357) target = $region58
        $region57: #{electra_model_forward.41} parent=53 // pred_region
          _
        $region58: #{electra_model_forward.41} parent=53 // pred_fallthru
          _
        %s360 = smul.u32 4, %s19
        %s361 = smul.u32 2, %s21
        %p362 = scmp.lt.s32.totalorder %s360, 3
        %s363 = scalar_select %p362, %s360, 3
        %p364 = scmp.lt.s32.totalorder %s361, 1
        %s365 = scalar_select %p364, %s361, 1
        %s366 = smul.addr %s363, 2
        %s367 = sadd.s32 %s365, %s366
        %s368 = smul.addr %s367, 4
        %s369 = scalar_lea.vmem %s0, %s368
        %p370 = pneg %p56
        %p371 = pneg %p53
        %s372 = sand.u32 %s71, 1
        %s373 = sand.u32 %s71, 1
        %s374 = smul.addr %s373, 384
        %s375 = scalar_lea.vmem [#allocation3], %s374
        %p376 = pneg %p84
        %p377 = pneg %p81
        %s378 = smul.u32 3, %s20
        %p379 = scmp.lt.s32.totalorder %s378, 5
        %s380 = scalar_select %p379, %s378, 5
        %s381 = scalar_lea.vmem %s2, %s380
        %p382 = pneg %p110
        %p383 = pneg %p107
        %p384 = pneg %p138
        %p385 = pneg %p135
        %s386 = sand.u32 %s125, 1
        %s387 = sand.u32 %s125, 1
        %s388 = smul.addr %s387, 48
        %s389 = scalar_lea.vmem [#allocation4], %s388
        %s390 = smul.u32 4, %s19
        %s391 = smul.u32 2, %s21
        %p392 = scmp.lt.s32.totalorder %s390, 3
        %s393 = scalar_select %p392, %s390, 3
        %p394 = scmp.lt.s32.totalorder %s391, 1
        %s395 = scalar_select %p394, %s391, 1
        %s396 = smul.addr %s393, 2
        %s397 = sadd.s32 %s395, %s396
        %s398 = smul.addr %s397, 4
        %s399 = scalar_lea.vmem %s0, %s398
        %s400 = smul.u32 4, %s19
        %s401 = smul.u32 2, %s21
        %s402 = smul.u32 32, %s21
        %s403 = smul.u32 3, %s20
        %s404 = smul.u32 3, %s20
        %p405 = scmp.lt.s32.totalorder %s404, 5
        %s406 = scalar_select %p405, %s404, 5
        %s407 = scalar_lea.vmem %s2, %s406
        %s408 = smul.u32 3, %s20
        %s409 = smul.u32 4, %s19
        %s410 = smul.u32 3, %s20
        %p411 = scmp.eq.s32.totalorder %s21, 0
        // Predicated region
        $region59: #{electra_model_forward.41} parent=53 // pred_check
          %p412 = pneg %p411
        $region60: #{electra_model_forward.41} parent=53 // pred_check_branch
          %414 = sbr.rel (%p412) target = $region62
        $region61: #{electra_model_forward.41} parent=53 // pred_region
          %415 = vst [vmem:[#allocation2] sm:$0xff] 0.0
          %416 = vst [vmem:[#allocation2 + $0x8] sm:$0xff] 0.0
          %417 = vst [vmem:[#allocation2 + $0x10] sm:$0xff] 0.0
          %418 = vst [vmem:[#allocation2 + $0x18] sm:$0xff] 0.0
          %419 = vst [vmem:[#allocation2 + $0x20] sm:$0xff] 0.0
          %420 = vst [vmem:[#allocation2 + $0x28] sm:$0xff] 0.0
          %421 = vst [vmem:[#allocation2 + $0x30] sm:$0xff] 0.0
          %422 = vst [vmem:[#allocation2 + $0x38] sm:$0xff] 0.0
          %423 = vst [vmem:[#allocation2 + $0x40] sm:$0xff] 0.0
          %424 = vst [vmem:[#allocation2 + $0x48] sm:$0xff] 0.0
          %425 = vst [vmem:[#allocation2 + $0x50] sm:$0xff] 0.0
          %426 = vst [vmem:[#allocation2 + $0x58] sm:$0xff] 0.0
        $region62: #{electra_model_forward.41} parent=53 // pred_fallthru
          _
        %v427 = vld [vmem:[#allocation2] sm:$0xff]
        %v428 = vld [vmem:[#allocation2 + $0x8] sm:$0xff]
        %v429 = vld [vmem:[#allocation2 + $0x10] sm:$0xff]
        %v430 = vld [vmem:[#allocation2 + $0x18] sm:$0xff]
        %v431 = vld [vmem:[#allocation2 + $0x20] sm:$0xff]
        %v432 = vld [vmem:[#allocation2 + $0x28] sm:$0xff]
        %v433 = vld [vmem:[#allocation2 + $0x30] sm:$0xff]
        %v434 = vld [vmem:[#allocation2 + $0x38] sm:$0xff]
        %v435 = vld [vmem:[#allocation2 + $0x40] sm:$0xff]
        %v436 = vld [vmem:[#allocation2 + $0x48] sm:$0xff]
        %v437 = vld [vmem:[#allocation2 + $0x50] sm:$0xff]
        %v438 = vld [vmem:[#allocation2 + $0x58] sm:$0xff]
        %v439 = vld [vmem:[%s399] sm:$0xff]
        %v440 = vld [vmem:[%s399 + $0x8] sm:$0xff]
        %v441 = vld [vmem:[%s399 + $0x10] sm:$0xff]
        %v442 = vld [vmem:[%s399 + $0x18] sm:$0xff]
        %v443 = vld [vmem:[%s356] sm:$0xff]
        %v444 = vld [vmem:[%s356 + $0x8] sm:$0xf]
        %v445 = vld [vmem:[%s356 + $0xc] sm:$0xff]
        %v446 = vld [vmem:[%s356 + $0x14] sm:$0xf]
        %v447 = vld [vmem:[%s356 + $0x18] sm:$0xff]
        %v448 = vld [vmem:[%s356 + $0x20] sm:$0xf]
        %v449 = vld [vmem:[%s356 + $0x24] sm:$0xff]
        %v450 = vld [vmem:[%s356 + $0x2c] sm:$0xf]
        %v451 = vld [vmem:[%s356 + $0x30] sm:$0xff]
        %v452 = vld [vmem:[%s356 + $0x38] sm:$0xf]
        %v453 = vld [vmem:[%s356 + $0x3c] sm:$0xff]
        %v454 = vld [vmem:[%s356 + $0x44] sm:$0xf]
        %v455 = vld [vmem:[%s356 + $0x48] sm:$0xff]
        %v456 = vld [vmem:[%s356 + $0x50] sm:$0xf]
        %v457 = vld [vmem:[%s356 + $0x54] sm:$0xff]
        %v458 = vld [vmem:[%s356 + $0x5c] sm:$0xf]
        %v459 = vld [vmem:[%s356 + $0x60] sm:$0xff]
        %v460 = vld [vmem:[%s356 + $0x68] sm:$0xf]
        %v461 = vld [vmem:[%s356 + $0x6c] sm:$0xff]
        %v462 = vld [vmem:[%s356 + $0x74] sm:$0xf]
        %v463 = vld [vmem:[%s356 + $0x78] sm:$0xff]
        %v464 = vld [vmem:[%s356 + $0x80] sm:$0xf]
        %v465 = vld [vmem:[%s356 + $0x84] sm:$0xff]
        %v466 = vld [vmem:[%s356 + $0x8c] sm:$0xf]
        %v467 = vld [vmem:[%s356 + $0x90] sm:$0xff]
        %v468 = vld [vmem:[%s356 + $0x98] sm:$0xf]
        %v469 = vld [vmem:[%s356 + $0x9c] sm:$0xff]
        %v470 = vld [vmem:[%s356 + $0xa4] sm:$0xf]
        %v471 = vld [vmem:[%s356 + $0xa8] sm:$0xff]
        %v472 = vld [vmem:[%s356 + $0xb0] sm:$0xf]
        %v473 = vld [vmem:[%s356 + $0xb4] sm:$0xff]
        %v474 = vld [vmem:[%s356 + $0xbc] sm:$0xf]
        %v475 = vld [vmem:[%s356 + $0xc0] sm:$0xff]
        %v476 = vld [vmem:[%s356 + $0xc8] sm:$0xf]
        %v477 = vld [vmem:[%s356 + $0xcc] sm:$0xff]
        %v478 = vld [vmem:[%s356 + $0xd4] sm:$0xf]
        %v479 = vld [vmem:[%s356 + $0xd8] sm:$0xff]
        %v480 = vld [vmem:[%s356 + $0xe0] sm:$0xf]
        %v481 = vld [vmem:[%s356 + $0xe4] sm:$0xff]
        %v482 = vld [vmem:[%s356 + $0xec] sm:$0xf]
        %v483 = vld [vmem:[%s356 + $0xf0] sm:$0xff]
        %v484 = vld [vmem:[%s356 + $0xf8] sm:$0xf]
        %v485 = vld [vmem:[%s356 + $0xfc] sm:$0xff]
        %v486 = vld [vmem:[%s356 + $0x104] sm:$0xf]
        %v487 = vld [vmem:[%s356 + $0x108] sm:$0xff]
        %v488 = vld [vmem:[%s356 + $0x110] sm:$0xf]
        %v489 = vld [vmem:[%s356 + $0x114] sm:$0xff]
        %v490 = vld [vmem:[%s356 + $0x11c] sm:$0xf]
        %v491 = vld [vmem:[%s356 + $0x120] sm:$0xff]
        %v492 = vld [vmem:[%s356 + $0x128] sm:$0xf]
        %v493 = vld [vmem:[%s356 + $0x12c] sm:$0xff]
        %v494 = vld [vmem:[%s356 + $0x134] sm:$0xf]
        %v495 = vld [vmem:[%s356 + $0x138] sm:$0xff]
        %v496 = vld [vmem:[%s356 + $0x140] sm:$0xf]
        %v497 = vld [vmem:[%s356 + $0x144] sm:$0xff]
        %v498 = vld [vmem:[%s356 + $0x14c] sm:$0xf]
        %v499 = vld [vmem:[%s356 + $0x150] sm:$0xff]
        %v500 = vld [vmem:[%s356 + $0x158] sm:$0xf]
        %v501 = vld [vmem:[%s356 + $0x15c] sm:$0xff]
        %v502 = vld [vmem:[%s356 + $0x164] sm:$0xf]
        %v503 = vld [vmem:[%s356 + $0x168] sm:$0xff]
        %v504 = vld [vmem:[%s356 + $0x170] sm:$0xf]
        %v505 = vld [vmem:[%s356 + $0x174] sm:$0xff]
        %v506 = vld [vmem:[%s356 + $0x17c] sm:$0xf]
        %v511 = vunpack.c.l.b16 %v439
        %v512 = vunpack.c.h.b16 %v439
        %v513 = vunpack.c.l.b16 %v440
        %v514 = vunpack.c.h.b16 %v440
        %v515 = vunpack.c.l.b16 %v441
        %v516 = vunpack.c.h.b16 %v441
        %v517 = vunpack.c.l.b16 %v442
        %v518 = vunpack.c.h.b16 %v442
        %v519 = vpack.c.b16 %v513, %v511
        %v520 = vpack.c.b16 %v514, %v512
        %v521 = vpack.c.b16 %v517, %v515
        %v522 = vpack.c.b16 %v518, %v516
        %v591 = vunpack.c.l.b16 %v443
        %v592 = vunpack.c.h.b16 %v443
        %v593 = vunpack.c.l.b16 %v444
        %v594 = vunpack.c.l.b16 %v445
        %v595 = vunpack.c.h.b16 %v445
        %v596 = vunpack.c.l.b16 %v446
        %v597 = vunpack.c.l.b16 %v447
        %v598 = vunpack.c.h.b16 %v447
        %v599 = vunpack.c.l.b16 %v448
        %v600 = vunpack.c.l.b16 %v449
        %v601 = vunpack.c.h.b16 %v449
        %v602 = vunpack.c.l.b16 %v450
        %v603 = vunpack.c.l.b16 %v451
        %v604 = vunpack.c.h.b16 %v451
        %v605 = vunpack.c.l.b16 %v452
        %v606 = vunpack.c.l.b16 %v453
        %v607 = vunpack.c.h.b16 %v453
        %v608 = vunpack.c.l.b16 %v454
        %v609 = vunpack.c.l.b16 %v455
        %v610 = vunpack.c.h.b16 %v455
        %v611 = vunpack.c.l.b16 %v456
        %v612 = vunpack.c.l.b16 %v457
        %v613 = vunpack.c.h.b16 %v457
        %v614 = vunpack.c.l.b16 %v458
        %v615 = vunpack.c.l.b16 %v459
        %v616 = vunpack.c.h.b16 %v459
        %v617 = vunpack.c.l.b16 %v460
        %v618 = vunpack.c.l.b16 %v461
        %v619 = vunpack.c.h.b16 %v461
        %v620 = vunpack.c.l.b16 %v462
        %v621 = vunpack.c.l.b16 %v463
        %v622 = vunpack.c.h.b16 %v463
        %v623 = vunpack.c.l.b16 %v464
        %v624 = vunpack.c.l.b16 %v465
        %v625 = vunpack.c.h.b16 %v465
        %v626 = vunpack.c.l.b16 %v466
        %v627 = vunpack.c.l.b16 %v467
        %v628 = vunpack.c.h.b16 %v467
        %v629 = vunpack.c.l.b16 %v468
        %v630 = vunpack.c.l.b16 %v469
        %v631 = vunpack.c.h.b16 %v469
        %v632 = vunpack.c.l.b16 %v470
        %v633 = vunpack.c.l.b16 %v471
        %v634 = vunpack.c.h.b16 %v471
        %v635 = vunpack.c.l.b16 %v472
        %v636 = vunpack.c.l.b16 %v473
        %v637 = vunpack.c.h.b16 %v473
        %v638 = vunpack.c.l.b16 %v474
        %v639 = vunpack.c.l.b16 %v475
        %v640 = vunpack.c.h.b16 %v475
        %v641 = vunpack.c.l.b16 %v476
        %v642 = vunpack.c.l.b16 %v477
        %v643 = vunpack.c.h.b16 %v477
        %v644 = vunpack.c.l.b16 %v478
        %v645 = vunpack.c.l.b16 %v479
        %v646 = vunpack.c.h.b16 %v479
        %v647 = vunpack.c.l.b16 %v480
        %v648 = vunpack.c.l.b16 %v481
        %v649 = vunpack.c.h.b16 %v481
        %v650 = vunpack.c.l.b16 %v482
        %v651 = vunpack.c.l.b16 %v483
        %v652 = vunpack.c.h.b16 %v483
        %v653 = vunpack.c.l.b16 %v484
        %v654 = vunpack.c.l.b16 %v485
        %v655 = vunpack.c.h.b16 %v485
        %v656 = vunpack.c.l.b16 %v486
        %v657 = vunpack.c.l.b16 %v487
        %v658 = vunpack.c.h.b16 %v487
        %v659 = vunpack.c.l.b16 %v488
        %v660 = vunpack.c.l.b16 %v489
        %v661 = vunpack.c.h.b16 %v489
        %v662 = vunpack.c.l.b16 %v490
        %v663 = vunpack.c.l.b16 %v491
        %v664 = vunpack.c.h.b16 %v491
        %v665 = vunpack.c.l.b16 %v492
        %v666 = vunpack.c.l.b16 %v493
        %v667 = vunpack.c.h.b16 %v493
        %v668 = vunpack.c.l.b16 %v494
        %v669 = vunpack.c.l.b16 %v495
        %v670 = vunpack.c.h.b16 %v495
        %v671 = vunpack.c.l.b16 %v496
        %v672 = vunpack.c.l.b16 %v497
        %v673 = vunpack.c.h.b16 %v497
        %v674 = vunpack.c.l.b16 %v498
        %v675 = vunpack.c.l.b16 %v499
        %v676 = vunpack.c.h.b16 %v499
        %v677 = vunpack.c.l.b16 %v500
        %v678 = vunpack.c.l.b16 %v501
        %v679 = vunpack.c.h.b16 %v501
        %v680 = vunpack.c.l.b16 %v502
        %v681 = vunpack.c.l.b16 %v503
        %v682 = vunpack.c.h.b16 %v503
        %v683 = vunpack.c.l.b16 %v504
        %v684 = vunpack.c.l.b16 %v505
        %v685 = vunpack.c.h.b16 %v505
        %v686 = vunpack.c.l.b16 %v506
        %v687 = vpack.c.b16 %v594, %v591
        %v688 = vpack.c.b16 %v595, %v592
        %v689 = vpack.c.b16 %v596, %v593
        %v690 = vpack.c.b16 %v600, %v597
        %v691 = vpack.c.b16 %v601, %v598
        %v692 = vpack.c.b16 %v602, %v599
        %v693 = vpack.c.b16 %v606, %v603
        %v694 = vpack.c.b16 %v607, %v604
        %v695 = vpack.c.b16 %v608, %v605
        %v696 = vpack.c.b16 %v612, %v609
        %v697 = vpack.c.b16 %v613, %v610
        %v698 = vpack.c.b16 %v614, %v611
        %v699 = vpack.c.b16 %v618, %v615
        %v700 = vpack.c.b16 %v619, %v616
        %v701 = vpack.c.b16 %v620, %v617
        %v702 = vpack.c.b16 %v624, %v621
        %v703 = vpack.c.b16 %v625, %v622
        %v704 = vpack.c.b16 %v626, %v623
        %v705 = vpack.c.b16 %v630, %v627
        %v706 = vpack.c.b16 %v631, %v628
        %v707 = vpack.c.b16 %v632, %v629
        %v708 = vpack.c.b16 %v636, %v633
        %v709 = vpack.c.b16 %v637, %v634
        %v710 = vpack.c.b16 %v638, %v635
        %v711 = vpack.c.b16 %v642, %v639
        %v712 = vpack.c.b16 %v643, %v640
        %v713 = vpack.c.b16 %v644, %v641
        %v714 = vpack.c.b16 %v648, %v645
        %v715 = vpack.c.b16 %v649, %v646
        %v716 = vpack.c.b16 %v650, %v647
        %v717 = vpack.c.b16 %v654, %v651
        %v718 = vpack.c.b16 %v655, %v652
        %v719 = vpack.c.b16 %v656, %v653
        %v720 = vpack.c.b16 %v660, %v657
        %v721 = vpack.c.b16 %v661, %v658
        %v722 = vpack.c.b16 %v662, %v659
        %v723 = vpack.c.b16 %v666, %v663
        %v724 = vpack.c.b16 %v667, %v664
        %v725 = vpack.c.b16 %v668, %v665
        %v726 = vpack.c.b16 %v672, %v669
        %v727 = vpack.c.b16 %v673, %v670
        %v728 = vpack.c.b16 %v674, %v671
        %v729 = vpack.c.b16 %v678, %v675
        %v730 = vpack.c.b16 %v679, %v676
        %v731 = vpack.c.b16 %v680, %v677
        %v732 = vpack.c.b16 %v684, %v681
        %v733 = vpack.c.b16 %v685, %v682
        %v734 = vpack.c.b16 %v686, %v683
        %783 = vmatpush.bf16.msra.mxu0 %v708
        %784 = vmatpush.bf16.msra.mxu0 %v705
        %785 = vmatpush.bf16.msra.mxu0 %v702
        %786 = vmatpush.bf16.msra.mxu0 %v699
        %787 = vmatpush.bf16.msra.mxu0 %v696
        %788 = vmatpush.bf16.msra.mxu0 %v693
        %789 = vmatpush.bf16.msra.mxu0 %v690
        %790 = vmatpush.bf16.msra.mxu0 %v687
        %791 = vmatmul.bf16.gmra.mxu0 %v519
        %v792 = vpop.f32.mrf.mxu0
        %v793 = vadd.f32 0.0, %v792
        %v794 = vpop.f32.mrf.mxu0
        %v795 = vadd.f32 0.0, %v794
        %796 = vmatmul.bf16.gmra.mxu0 %v521
        %v797 = vpop.f32.mrf.mxu0
        %v798 = vadd.f32 0.0, %v797
        %v799 = vpop.f32.mrf.mxu0
        %v800 = vadd.f32 0.0, %v799
        %801 = vdwg.mxu0
        %802 = vmatpush.bf16.msra.mxu0 %v732
        %803 = vmatpush.bf16.msra.mxu0 %v729
        %804 = vmatpush.bf16.msra.mxu0 %v726
        %805 = vmatpush.bf16.msra.mxu0 %v723
        %806 = vmatpush.bf16.msra.mxu0 %v720
        %807 = vmatpush.bf16.msra.mxu0 %v717
        %808 = vmatpush.bf16.msra.mxu0 %v714
        %809 = vmatpush.bf16.msra.mxu0 %v711
        %810 = vmatmul.bf16.gmra.mxu0 %v520
        %v811 = vpop.f32.mrf.mxu0
        %v812 = vadd.f32 %v793, %v811
        %v813 = vpop.f32.mrf.mxu0
        %v814 = vadd.f32 %v795, %v813
        %815 = vmatmul.bf16.gmra.mxu0 %v522
        %v816 = vpop.f32.mrf.mxu0
        %v817 = vadd.f32 %v798, %v816
        %v818 = vpop.f32.mrf.mxu0
        %v819 = vadd.f32 %v800, %v818
        %820 = vdwg.mxu0
        %821 = vmatpush.bf16.msra.mxu0 %v709
        %822 = vmatpush.bf16.msra.mxu0 %v706
        %823 = vmatpush.bf16.msra.mxu0 %v703
        %824 = vmatpush.bf16.msra.mxu0 %v700
        %825 = vmatpush.bf16.msra.mxu0 %v697
        %826 = vmatpush.bf16.msra.mxu0 %v694
        %827 = vmatpush.bf16.msra.mxu0 %v691
        %828 = vmatpush.bf16.msra.mxu0 %v688
        %829 = vmatmul.bf16.gmra.mxu0 %v519
        %v830 = vpop.f32.mrf.mxu0
        %v831 = vadd.f32 0.0, %v830
        %v832 = vpop.f32.mrf.mxu0
        %v833 = vadd.f32 0.0, %v832
        %834 = vmatmul.bf16.gmra.mxu0 %v521
        %v835 = vpop.f32.mrf.mxu0
        %v836 = vadd.f32 0.0, %v835
        %v837 = vpop.f32.mrf.mxu0
        %v838 = vadd.f32 0.0, %v837
        %839 = vdwg.mxu0
        %840 = vmatpush.bf16.msra.mxu0 %v733
        %841 = vmatpush.bf16.msra.mxu0 %v730
        %842 = vmatpush.bf16.msra.mxu0 %v727
        %843 = vmatpush.bf16.msra.mxu0 %v724
        %844 = vmatpush.bf16.msra.mxu0 %v721
        %845 = vmatpush.bf16.msra.mxu0 %v718
        %846 = vmatpush.bf16.msra.mxu0 %v715
        %847 = vmatpush.bf16.msra.mxu0 %v712
        %848 = vmatmul.bf16.gmra.mxu0 %v520
        %v849 = vpop.f32.mrf.mxu0
        %v850 = vadd.f32 %v831, %v849
        %v851 = vpop.f32.mrf.mxu0
        %v852 = vadd.f32 %v833, %v851
        %853 = vmatmul.bf16.gmra.mxu0 %v522
        %v854 = vpop.f32.mrf.mxu0
        %v855 = vadd.f32 %v836, %v854
        %v856 = vpop.f32.mrf.mxu0
        %v857 = vadd.f32 %v838, %v856
        %858 = vdwg.mxu0
        %859 = vmatpush.bf16.msra.mxu0 %v710
        %860 = vmatpush.bf16.msra.mxu0 %v707
        %861 = vmatpush.bf16.msra.mxu0 %v704
        %862 = vmatpush.bf16.msra.mxu0 %v701
        %863 = vmatpush.bf16.msra.mxu0 %v698
        %864 = vmatpush.bf16.msra.mxu0 %v695
        %865 = vmatpush.bf16.msra.mxu0 %v692
        %866 = vmatpush.bf16.msra.mxu0 %v689
        %867 = vmatmul.bf16.gmra.mxu0 %v519
        %v868 = vpop.f32.mrf.mxu0
        %v869 = vadd.f32 0.0, %v868
        %v870 = vpop.f32.mrf.mxu0
        %v871 = vadd.f32 0.0, %v870
        %872 = vmatmul.bf16.gmra.mxu0 %v521
        %v873 = vpop.f32.mrf.mxu0
        %v874 = vadd.f32 0.0, %v873
        %v875 = vpop.f32.mrf.mxu0
        %v876 = vadd.f32 0.0, %v875
        %877 = vdwg.mxu0
        %878 = vmatpush.bf16.msra.mxu0 %v734
        %879 = vmatpush.bf16.msra.mxu0 %v731
        %880 = vmatpush.bf16.msra.mxu0 %v728
        %881 = vmatpush.bf16.msra.mxu0 %v725
        %882 = vmatpush.bf16.msra.mxu0 %v722
        %883 = vmatpush.bf16.msra.mxu0 %v719
        %884 = vmatpush.bf16.msra.mxu0 %v716
        %885 = vmatpush.bf16.msra.mxu0 %v713
        %886 = vmatmul.bf16.gmra.mxu0 %v520
        %v887 = vpop.f32.mrf.mxu0
        %v888 = vadd.f32 %v869, %v887
        %v889 = vpop.f32.mrf.mxu0
        %v890 = vadd.f32 %v871, %v889
        %891 = vmatmul.bf16.gmra.mxu0 %v522
        %v892 = vpop.f32.mrf.mxu0
        %v893 = vadd.f32 %v874, %v892
        %v894 = vpop.f32.mrf.mxu0
        %v895 = vadd.f32 %v876, %v894
        %896 = vdwg.mxu0
        %v897 = vadd.f32 %v427, %v812
        %v898 = vadd.f32 %v428, %v850
        %v899 = vadd.f32 %v429, %v888
        %v900 = vadd.f32 %v430, %v814
        %v901 = vadd.f32 %v431, %v852
        %v902 = vadd.f32 %v432, %v890
        %v903 = vadd.f32 %v433, %v817
        %v904 = vadd.f32 %v434, %v855
        %v905 = vadd.f32 %v435, %v893
        %v906 = vadd.f32 %v436, %v819
        %v907 = vadd.f32 %v437, %v857
        %v908 = vadd.f32 %v438, %v895
        %909 = vst [vmem:[#allocation2] sm:$0xff] %v897
        %910 = vst [vmem:[#allocation2 + $0x8] sm:$0xff] %v898
        %911 = vst [vmem:[#allocation2 + $0x10] sm:$0xff] %v899
        %912 = vst [vmem:[#allocation2 + $0x18] sm:$0xff] %v900
        %913 = vst [vmem:[#allocation2 + $0x20] sm:$0xff] %v901
        %914 = vst [vmem:[#allocation2 + $0x28] sm:$0xff] %v902
        %915 = vst [vmem:[#allocation2 + $0x30] sm:$0xff] %v903
        %916 = vst [vmem:[#allocation2 + $0x38] sm:$0xff] %v904
        %917 = vst [vmem:[#allocation2 + $0x40] sm:$0xff] %v905
        %918 = vst [vmem:[#allocation2 + $0x48] sm:$0xff] %v906
        %919 = vst [vmem:[#allocation2 + $0x50] sm:$0xff] %v907
        %920 = vst [vmem:[#allocation2 + $0x58] sm:$0xff] %v908
        // Predicated region
        $region63: #{electra_model_forward.41} parent=53 // pred_check
          %p921 = pneg %p411
        $region64: #{electra_model_forward.41} parent=53 // pred_check_branch
          %923 = sbr.rel (%p921) target = $region66
        $region65: #{electra_model_forward.41} parent=53 // pred_region
          %v924 = vld [vmem:[#allocation2] sm:$0xff]
          %v925 = vld [vmem:[#allocation2 + $0x8] sm:$0xff]
          %v926 = vld [vmem:[#allocation2 + $0x10] sm:$0xff]
          %v927 = vld [vmem:[#allocation2 + $0x18] sm:$0xff]
          %v928 = vld [vmem:[#allocation2 + $0x20] sm:$0xff]
          %v929 = vld [vmem:[#allocation2 + $0x28] sm:$0xff]
          %v930 = vld [vmem:[#allocation2 + $0x30] sm:$0xff]
          %v931 = vld [vmem:[#allocation2 + $0x38] sm:$0xff]
          %v932 = vld [vmem:[#allocation2 + $0x40] sm:$0xff]
          %v933 = vld [vmem:[#allocation2 + $0x48] sm:$0xff]
          %v934 = vld [vmem:[#allocation2 + $0x50] sm:$0xff]
          %v935 = vld [vmem:[#allocation2 + $0x58] sm:$0xff]
          %v936 = vld [vmem:[%s407] sm:$0x7]
          %v938 = vperm.slane %v936, 0
          %v939 = vperm.slane %v936, 1
          %v940 = vperm.slane %v936, 2
          %v944 = vadd.f32 %v924, %v938
          %v945 = vadd.f32 %v925, %v939
          %v946 = vadd.f32 %v926, %v940
          %v947 = vadd.f32 %v927, %v938
          %v948 = vadd.f32 %v928, %v939
          %v949 = vadd.f32 %v929, %v940
          %v950 = vadd.f32 %v930, %v938
          %v951 = vadd.f32 %v931, %v939
          %v952 = vadd.f32 %v932, %v940
          %v953 = vadd.f32 %v933, %v938
          %v954 = vadd.f32 %v934, %v939
          %v955 = vadd.f32 %v935, %v940
          %v956 = vpack.c.bf16 %v945, %v944
          %v957 = vpack.c.bf16 %v946, %v946
          %v958 = vpack.c.bf16 %v948, %v947
          %v959 = vpack.c.bf16 %v949, %v949
          %v960 = vpack.c.bf16 %v951, %v950
          %v961 = vpack.c.bf16 %v952, %v952
          %v962 = vpack.c.bf16 %v954, %v953
          %v963 = vpack.c.bf16 %v955, %v955
          %964 = vst [vmem:[%s389] sm:$0xff] %v956
          %965 = vst [vmem:[%s389 + $0x8] sm:$0xf] %v957
          %966 = vst [vmem:[%s389 + $0xc] sm:$0xff] %v958
          %967 = vst [vmem:[%s389 + $0x14] sm:$0xf] %v959
          %968 = vst [vmem:[%s389 + $0x18] sm:$0xff] %v960
          %969 = vst [vmem:[%s389 + $0x20] sm:$0xf] %v961
          %970 = vst [vmem:[%s389 + $0x24] sm:$0xff] %v962
          %971 = vst [vmem:[%s389 + $0x2c] sm:$0xf] %v963
        $region66: #{electra_model_forward.41} parent=53 // pred_fallthru
          _
        %s972 = sand.u32 %s125, 1
        %s973 = sand.u32 %s125, 1
        %s974 = smul.addr %s973, 48
        %s975 = scalar_lea.vmem [#allocation4], %s974
        // Predicated region
        $region67: #{electra_model_forward.41} parent=53 // pred_check
          %p976 = pneg %p135
        $region68: #{electra_model_forward.41} parent=53 // pred_check_branch
          %978 = sbr.rel (%p976) target = $region70
        $region69: #{electra_model_forward.41} parent=53 // pred_region
          %s979 = smul.u32 4, %s19
          %s980 = smul.u32 3, %s20
          %s981 = smul.addr %s979, 6
          %s982 = sadd.s32 %s980, %s981
          %s983 = smul.addr %s982, 4
          %s984 = scalar_lea.vmem %s3, %s983
          // Predicated region
          $region71: #{electra_model_forward.41} parent=69 // pred_check
            _
          $region72: #{electra_model_forward.41} parent=69 // pred_check_branch
            %986 = sbr.rel (0) target = $region74
          $region73: #{electra_model_forward.41} parent=69 // pred_region
            // Predicated region
            $region75: #{electra_model_forward.41} parent=73 // pred_check
              _
            $region76: #{electra_model_forward.41} parent=73 // pred_check_branch
              %988 = sbr.rel (0) target = $region78
            $region77: #{electra_model_forward.41} parent=73 // pred_region
              %s989 = scalar_lea.vmem %s975, 8 [#allocation4]
              %s990 = scalar_lea.vmem %s984, 8
              loop: start=0, step=1, limit=1
              $region79: #{electra_model_forward.41} parent=77 // loop_pre_header
                _
              $region80: #{electra_model_forward.41} parent=77 // loop_header
                %s992 = sphi 0, %s996
                %p993 = scmp.ge.s32.totalorder %s992, 1
                %s997 = sphi %s975, %s975
                %s998 = sphi %s984, %s984
              $region81: #{electra_model_forward.41} parent=77 // loop_header_branch
                %995 = sbr.rel (%p993) target = $region85
              $region82: #{electra_model_forward.41} parent=77 // loop_body
                %v999 = vld [vmem:[%s997] sm:$0xff]
                %1000 = vst [vmem:[%s998] sm:$0xff] %v999
                %v1001 = vld [vmem:[%s997 + $0xc] sm:$0xff]
                %1002 = vst [vmem:[%s998 + $0x18] sm:$0xff] %v1001
                %v1003 = vld [vmem:[%s997 + $0x18] sm:$0xff]
                %1004 = vst [vmem:[%s998 + $0x30] sm:$0xff] %v1003
                %v1005 = vld [vmem:[%s997 + $0x24] sm:$0xff]
                %1006 = vst [vmem:[%s998 + $0x48] sm:$0xff] %v1005
              $region83: #{electra_model_forward.41} parent=77 // loop_footer
                %s996 = sadd.s32 1, %s992
              $region84: #{electra_model_forward.41} parent=77 // loop_footer_branch
                %991 = sbr.rel target = $region80
              $region85: #{electra_model_forward.41} parent=77 // loop_exit
                _
              %s1008 = ssub.s32 16, 1
              loop: start=0, step=1, limit=1
              $region86: #{electra_model_forward.41} parent=77 // loop_pre_header
                _
              $region87: #{electra_model_forward.41} parent=77 // loop_header
                %s1010 = sphi 0, %s1014
                %p1011 = scmp.ge.s32.totalorder %s1010, 1
                %s1015 = sphi %s989, %s989
                %s1016 = sphi %s990, %s990
              $region88: #{electra_model_forward.41} parent=77 // loop_header_branch
                %1013 = sbr.rel (%p1011) target = $region92
              $region89: #{electra_model_forward.41} parent=77 // loop_body
                %v1017 = vld [vmem:[%s1015] sm:%s1008]
                %1018 = vst [vmem:[%s1016] sm:%s1008] %v1017
                %v1019 = vld [vmem:[%s1015 + $0xc] sm:%s1008]
                %1020 = vst [vmem:[%s1016 + $0x18] sm:%s1008] %v1019
                %v1021 = vld [vmem:[%s1015 + $0x18] sm:%s1008]
                %1022 = vst [vmem:[%s1016 + $0x30] sm:%s1008] %v1021
                %v1023 = vld [vmem:[%s1015 + $0x24] sm:%s1008]
                %1024 = vst [vmem:[%s1016 + $0x48] sm:%s1008] %v1023
              $region90: #{electra_model_forward.41} parent=77 // loop_footer
                %s1014 = sadd.s32 1, %s1010
              $region91: #{electra_model_forward.41} parent=77 // loop_footer_branch
                %1009 = sbr.rel target = $region87
              $region92: #{electra_model_forward.41} parent=77 // loop_exit
                _
            $region78: #{electra_model_forward.41} parent=73 // pred_fallthru
              _
          $region74: #{electra_model_forward.41} parent=69 // pred_fallthru
            _
          %1025 = vnop
        $region70: #{electra_model_forward.41} parent=53 // pred_fallthru
          _
      $region54: #{electra_model_forward.41} parent=5 // pred_fallthru
        _
      %p1026 = scmp.le.s32.totalorder 2, %s9
      // Predicated region
      $region93: #{electra_model_forward.41} parent=5 // pred_check
        %p1027 = pneg %p1026
      $region94: #{electra_model_forward.41} parent=5 // pred_check_branch
        %1029 = sbr.rel (%p1027) target = $region96
      $region95: #{electra_model_forward.41} parent=5 // pred_region
        %s1030 = ssub.s32 %s9, 2
        // Predicated region
        $region97: #{electra_model_forward.41} parent=95 // pred_check
          %p1031 = pneg %p141
        $region98: #{electra_model_forward.41} parent=95 // pred_check_branch
          %1033 = sbr.rel (%p1031) target = $region100
        $region99: #{electra_model_forward.41} parent=95 // pred_region
          %s1034 = sand.u32 %s126, 1
          %s1035 = sand.u32 %s126, 1
          %s1036 = smul.addr %s1035, 48
          %s1037 = scalar_lea.vmem [#allocation4], %s1036
        $region100: #{electra_model_forward.41} parent=95 // pred_fallthru
          _
      $region96: #{electra_model_forward.41} parent=5 // pred_fallthru
        _
    $region6: #{electra_model_forward.41} parent=1 // loop_footer
      %s13 = sadd.s32 1, %s9
    $region7: #{electra_model_forward.41} parent=1 // loop_footer_branch
      %8 = sbr.rel target = $region3
    $region8: #{electra_model_forward.41} parent=1 // loop_exit
      _

// kernel: electra_model_forward.42
$region0: #{electra_model_forward.42}
  #allocation0 [shape = 'u32[]', space=smem, size = 0x4, offset = 0x4, fixed_abs, tag = 'smem constant byte address 0x4 - core index']
  #allocation1 [shape = 'u32[72,128]{1,0:T(1,128)}', space=vmem, size = 0x9000, scoped, tag = 'internal scratch']
  %s0 = inlined_call_operand.vmem [shape: bf16[2,4,16,64], index: 0, kind: input, shape index: {}]
  %s1 = inlined_call_operand.vmem [shape: bf16[2,4,16,64], index: 1, kind: input, shape index: {}]
  %s2 = inlined_call_operand.vmem [shape: bf16[2,4,16,64], index: 2, kind: input, shape index: {}]
  %s3 = inlined_call_operand.vmem [shape: f32[2,1,16], index: 3, kind: input, shape index: {}]
  %s4 = inlined_call_operand.vmem [shape: bf16[2,16,256], index: 4, kind: output, shape index: {}]
  %s5 = sld [smem:[#allocation0]]
  $region49: #{electra_model_forward.42} parent=0
    _
  %s7 = ssub.s32 1, %s5
  %s8 = scalar_select 0, %s7, %s5
  loop: start=0, step=1, limit=4
  $region2: #{electra_model_forward.42} parent=0 // loop_pre_header
    _
  $region3: #{electra_model_forward.42} parent=0 // loop_header
    %s10 = sphi 0, %s14
    %p11 = scmp.ge.s32.totalorder %s10, 4
    %s20 = sphi 0, %s22
    %s23 = sphi 0, %s20
    %s24 = sphi 0, %s23
    %s40 = sphi 0, %s24
    %s46 = sphi 0, %s48
    %s49 = sphi 0, %s46
    %s50 = sphi 0, %s49
    %s66 = sphi 0, %s50
    %s72 = sphi 0, %s74
    %s75 = sphi 0, %s72
    %s76 = sphi 0, %s75
    %s92 = sphi 0, %s76
    %s98 = sphi 0, %s100
    %s101 = sphi 0, %s98
    %s102 = sphi 0, %s101
    %s118 = sphi 0, %s102
    %s124 = sphi 0, %s126
    %s127 = sphi 0, %s124
    %s128 = sphi 0, %s127
    %s144 = sphi 0, %s128
  $region4: #{electra_model_forward.42} parent=0 // loop_header_branch
    %13 = sbr.rel (%p11) target = $region8
  $region5: #{electra_model_forward.42} parent=0 // loop_body
    %s15 = ssub.s32 %s10, 1
    %s16 = ssub.s32 %s10, 2
    %s17 = sadd.s32 %s10, 1
    %s18 = ssub.s32 %s10, %s17
    %p19 = scmp.eq.s32.totalorder %s18, 0
    %s21 = sadd.s32 %s20, 1
    %s22 = scalar_select %p19, %s20, %s21
    %p25 = pneg %p19
    %p26 = scmp.eq.s32.totalorder %s10, 1
    %p27 = por %p25, %p26
    %p28 = scmp.ne.s32.totalorder %s20, %s23
    %p29 = scmp.eq.s32.totalorder %s10, 0
    %p30 = por %p28, %p29
    %p31 = scmp.ne.s32.totalorder %s20, %s23
    %p32 = scmp.eq.s32.totalorder %s15, 1
    %p33 = por %p31, %p32
    %p34 = scmp.ne.s32.totalorder %s23, %s24
    %p35 = scmp.eq.s32.totalorder %s15, 0
    %p36 = por %p34, %p35
    %p37 = scmp.ne.s32.totalorder %s23, %s24
    %p38 = scmp.eq.s32.totalorder %s16, 1
    %p39 = por %p37, %p38
    %p41 = scmp.ne.s32.totalorder %s24, %s40
    %p42 = scmp.eq.s32.totalorder %s16, 0
    %p43 = por %p41, %p42
    %s44 = ssub.s32 %s10, %s17
    %p45 = scmp.eq.s32.totalorder %s44, 0
    %s47 = sadd.s32 %s46, 1
    %s48 = scalar_select %p45, %s46, %s47
    %p51 = pneg %p45
    %p52 = scmp.eq.s32.totalorder %s10, 1
    %p53 = por %p51, %p52
    %p54 = scmp.ne.s32.totalorder %s46, %s49
    %p55 = scmp.eq.s32.totalorder %s10, 0
    %p56 = por %p54, %p55
    %p57 = scmp.ne.s32.totalorder %s46, %s49
    %p58 = scmp.eq.s32.totalorder %s15, 1
    %p59 = por %p57, %p58
    %p60 = scmp.ne.s32.totalorder %s49, %s50
    %p61 = scmp.eq.s32.totalorder %s15, 0
    %p62 = por %p60, %p61
    %p63 = scmp.ne.s32.totalorder %s49, %s50
    %p64 = scmp.eq.s32.totalorder %s16, 1
    %p65 = por %p63, %p64
    %p67 = scmp.ne.s32.totalorder %s50, %s66
    %p68 = scmp.eq.s32.totalorder %s16, 0
    %p69 = por %p67, %p68
    %s70 = ssub.s32 %s10, %s17
    %p71 = scmp.eq.s32.totalorder %s70, 0
    %s73 = sadd.s32 %s72, 1
    %s74 = scalar_select %p71, %s72, %s73
    %p77 = pneg %p71
    %p78 = scmp.eq.s32.totalorder %s10, 1
    %p79 = por %p77, %p78
    %p80 = scmp.ne.s32.totalorder %s72, %s75
    %p81 = scmp.eq.s32.totalorder %s10, 0
    %p82 = por %p80, %p81
    %p83 = scmp.ne.s32.totalorder %s72, %s75
    %p84 = scmp.eq.s32.totalorder %s15, 1
    %p85 = por %p83, %p84
    %p86 = scmp.ne.s32.totalorder %s75, %s76
    %p87 = scmp.eq.s32.totalorder %s15, 0
    %p88 = por %p86, %p87
    %p89 = scmp.ne.s32.totalorder %s75, %s76
    %p90 = scmp.eq.s32.totalorder %s16, 1
    %p91 = por %p89, %p90
    %p93 = scmp.ne.s32.totalorder %s76, %s92
    %p94 = scmp.eq.s32.totalorder %s16, 0
    %p95 = por %p93, %p94
    %s96 = ssub.s32 %s10, %s17
    %p97 = scmp.eq.s32.totalorder %s96, 0
    %s99 = sadd.s32 %s98, 1
    %s100 = scalar_select %p97, %s98, %s99
    %p103 = pneg %p97
    %p104 = scmp.eq.s32.totalorder %s10, 1
    %p105 = por %p103, %p104
    %p106 = scmp.ne.s32.totalorder %s98, %s101
    %p107 = scmp.eq.s32.totalorder %s10, 0
    %p108 = por %p106, %p107
    %p109 = scmp.ne.s32.totalorder %s98, %s101
    %p110 = scmp.eq.s32.totalorder %s15, 1
    %p111 = por %p109, %p110
    %p112 = scmp.ne.s32.totalorder %s101, %s102
    %p113 = scmp.eq.s32.totalorder %s15, 0
    %p114 = por %p112, %p113
    %p115 = scmp.ne.s32.totalorder %s101, %s102
    %p116 = scmp.eq.s32.totalorder %s16, 1
    %p117 = por %p115, %p116
    %p119 = scmp.ne.s32.totalorder %s102, %s118
    %p120 = scmp.eq.s32.totalorder %s16, 0
    %p121 = por %p119, %p120
    %s122 = ssub.s32 %s10, %s17
    %p123 = scmp.eq.s32.totalorder %s122, 0
    %s125 = sadd.s32 %s124, 1
    %s126 = scalar_select %p123, %s124, %s125
    %p129 = pneg %p123
    %p130 = scmp.eq.s32.totalorder %s10, 1
    %p131 = por %p129, %p130
    %p132 = scmp.ne.s32.totalorder %s124, %s127
    %p133 = scmp.eq.s32.totalorder %s10, 0
    %p134 = por %p132, %p133
    %p135 = scmp.ne.s32.totalorder %s124, %s127
    %p136 = scmp.eq.s32.totalorder %s15, 1
    %p137 = por %p135, %p136
    %p138 = scmp.ne.s32.totalorder %s127, %s128
    %p139 = scmp.eq.s32.totalorder %s15, 0
    %p140 = por %p138, %p139
    %p141 = scmp.ne.s32.totalorder %s127, %s128
    %p142 = scmp.eq.s32.totalorder %s16, 1
    %p143 = por %p141, %p142
    %p145 = scmp.ne.s32.totalorder %s128, %s144
    %p146 = scmp.eq.s32.totalorder %s16, 0
    %p147 = por %p145, %p146
    %p148 = scmp.le.s32.totalorder 1, %s10
    %p149 = scmp.lt.s32.totalorder %s10, 3
    %p150 = pnand %p148, %p149
    %p151 = pneg %p150
    // Predicated region
    $region9: #{electra_model_forward.42} parent=5 // pred_check
      _
    $region10: #{electra_model_forward.42} parent=5 // pred_check_branch
      %153 = sbr.rel (%p150) target = $region12
    $region11: #{electra_model_forward.42} parent=5 // pred_region
      %s154 = ssub.s32 %s10, 1
    $region12: #{electra_model_forward.42} parent=5 // pred_fallthru
      _
    %p155 = scmp.lt.s32.totalorder %s10, 2
    // Predicated region
    $region13: #{electra_model_forward.42} parent=5 // pred_check
      %p156 = pneg %p155
    $region14: #{electra_model_forward.42} parent=5 // pred_check_branch
      %158 = sbr.rel (%p156) target = $region16
    $region15: #{electra_model_forward.42} parent=5 // pred_region
      // Predicated region
      $region17: #{electra_model_forward.42} parent=15 // pred_check
        %p159 = pneg %p30
      $region18: #{electra_model_forward.42} parent=15 // pred_check_branch
        %161 = sbr.rel (%p159) target = $region20
      $region19: #{electra_model_forward.42} parent=15 // pred_region
        %p162 = scmp.lt.s32.totalorder %s10, 1
        %s163 = scalar_select %p162, %s10, 1
        %s164 = smul.addr %s163, 8
        %s165 = smul.addr %s164, 4
        %s166 = scalar_lea.vmem %s0, %s165
      $region20: #{electra_model_forward.42} parent=15 // pred_fallthru
        _
      // Predicated region
      $region21: #{electra_model_forward.42} parent=15 // pred_check
        %p167 = pneg %p56
      $region22: #{electra_model_forward.42} parent=15 // pred_check_branch
        %169 = sbr.rel (%p167) target = $region24
      $region23: #{electra_model_forward.42} parent=15 // pred_region
        %p170 = scmp.lt.s32.totalorder %s10, 1
        %s171 = scalar_select %p170, %s10, 1
        %s172 = smul.addr %s171, 8
        %s173 = smul.addr %s172, 4
        %s174 = scalar_lea.vmem %s1, %s173
      $region24: #{electra_model_forward.42} parent=15 // pred_fallthru
        _
      // Predicated region
      $region25: #{electra_model_forward.42} parent=15 // pred_check
        %p175 = pneg %p82
      $region26: #{electra_model_forward.42} parent=15 // pred_check_branch
        %177 = sbr.rel (%p175) target = $region28
      $region27: #{electra_model_forward.42} parent=15 // pred_region
        %p178 = scmp.lt.s32.totalorder %s10, 1
        %s179 = scalar_select %p178, %s10, 1
        %s180 = smul.addr %s179, 8
        %s181 = smul.addr %s180, 4
        %s182 = scalar_lea.vmem %s2, %s181
      $region28: #{electra_model_forward.42} parent=15 // pred_fallthru
        _
      // Predicated region
      $region29: #{electra_model_forward.42} parent=15 // pred_check
        %p183 = pneg %p108
      $region30: #{electra_model_forward.42} parent=15 // pred_check_branch
        %185 = sbr.rel (%p183) target = $region32
      $region31: #{electra_model_forward.42} parent=15 // pred_region
        %p186 = scmp.lt.s32.totalorder %s10, 1
        %s187 = scalar_select %p186, %s10, 1
        %s188 = scalar_lea.vmem %s3, %s187
      $region32: #{electra_model_forward.42} parent=15 // pred_fallthru
        _
    $region16: #{electra_model_forward.42} parent=5 // pred_fallthru
      _
    %p189 = scmp.le.s32.totalorder 1, %s10
    %p190 = scmp.lt.s32.totalorder %s10, 3
    %p191 = pnand %p189, %p190
    %p192 = pneg %p191
    // Predicated region
    $region33: #{electra_model_forward.42} parent=5 // pred_check
      _
    $region34: #{electra_model_forward.42} parent=5 // pred_check_branch
      %194 = sbr.rel (%p191) target = $region36
    $region35: #{electra_model_forward.42} parent=5 // pred_region
      %s195 = ssub.s32 %s10, 1
      %p196 = scmp.lt.s32.totalorder %s15, 1
      %s197 = scalar_select %p196, %s15, 1
      %s198 = smul.addr %s197, 8
      %s199 = smul.addr %s198, 4
      %s200 = scalar_lea.vmem %s0, %s199
      %p201 = pneg %p36
      %p202 = pneg %p33
      %p203 = scmp.lt.s32.totalorder %s15, 1
      %s204 = scalar_select %p203, %s15, 1
      %s205 = smul.addr %s204, 8
      %s206 = smul.addr %s205, 4
      %s207 = scalar_lea.vmem %s1, %s206
      %p208 = pneg %p62
      %p209 = pneg %p59
      %p210 = scmp.lt.s32.totalorder %s15, 1
      %s211 = scalar_select %p210, %s15, 1
      %s212 = smul.addr %s211, 8
      %s213 = smul.addr %s212, 4
      %s214 = scalar_lea.vmem %s2, %s213
      %p215 = pneg %p88
      %p216 = pneg %p85
      %p217 = scmp.lt.s32.totalorder %s15, 1
      %s218 = scalar_select %p217, %s15, 1
      %s219 = scalar_lea.vmem %s3, %s218
      %p220 = pneg %p114
      %p221 = pneg %p111
      %p222 = pneg %p140
      %p223 = pneg %p137
      %p224 = scmp.lt.s32.totalorder %s15, 1
      %s225 = scalar_select %p224, %s15, 1
      %s226 = smul.addr %s225, 4
      %s227 = smul.addr %s226, 4
      %s228 = scalar_lea.vmem %s4, %s227
      %p229 = scmp.lt.s32.totalorder %s15, 1
      %s230 = scalar_select %p229, %s15, 1
      %s231 = smul.addr %s230, 8
      %s232 = smul.addr %s231, 4
      %s233 = scalar_lea.vmem %s0, %s232
      %p234 = scmp.lt.s32.totalorder %s15, 1
      %s235 = scalar_select %p234, %s15, 1
      %s236 = smul.addr %s235, 8
      %s237 = smul.addr %s236, 4
      %s238 = scalar_lea.vmem %s1, %s237
      %p239 = scmp.lt.s32.totalorder %s15, 1
      %s240 = scalar_select %p239, %s15, 1
      %s241 = smul.addr %s240, 8
      %s242 = smul.addr %s241, 4
      %s243 = scalar_lea.vmem %s2, %s242
      %p244 = scmp.lt.s32.totalorder %s15, 1
      %s245 = scalar_select %p244, %s15, 1
      %s246 = scalar_lea.vmem %s3, %s245
      %p247 = scmp.lt.s32.totalorder %s15, 1
      %s248 = scalar_select %p247, %s15, 1
      %s249 = smul.addr %s248, 4
      %s250 = smul.addr %s249, 4
      %s251 = scalar_lea.vmem %s4, %s250
      %v253 = vld [vmem:[%s246] sm:$0x1]
      %v254 = vld [vmem:[%s233] sm:$0xf]
      %v255 = vld [vmem:[%s233 + $0x4] sm:$0xf]
      %v256 = vunpack.c.l.bf16 %v254
      %v257 = vunpack.c.l.bf16 %v255
      %v258 = vmul.f32 %v256, 0.125
      %v259 = vmul.f32 %v257, 0.125
      %v260 = vpack.c.bf16 %v259, %v258
      %v261 = vld [vmem:[%s238] sm:$0xf]
      %v262 = vld [vmem:[%s238 + $0x4] sm:$0xf]
      %v263 = vld [vmem:[%s243] sm:$0xf]
      %v264 = vld [vmem:[%s243 + $0x4] sm:$0xf]
      %v266 = vperm.slane %v253, 0
      %v270 = vunpack.c.l.b16 %v261
      %v271 = vunpack.c.l.b16 %v262
      %v272 = vpack.c.b16 %v271, %v270
      %vm273 = vcmask 523264
      %v275 = vsel %vm273, %v260, 0
      %v278 = vsel %vm273, %v272, 0
      %280 = vmatpush.bf16.xpose.msra.mxu0 0
      %281 = vmatpush.bf16.xpose.msra.mxu0 0
      %282 = vmatpush.bf16.xpose.msra.mxu0 0
      %283 = vmatpush.bf16.xpose.msra.mxu0 0
      %284 = vmatpush.bf16.xpose.msra.mxu0 0
      %285 = vmatpush.bf16.xpose.msra.mxu0 0
      %286 = vmatpush.bf16.xpose.msra.mxu0 0
      %287 = vmatpush.bf16.xpose.msra.mxu0 %v278
      %288 = vmatmul.bf16.gmra.mxu0 %v275
      %v289 = vpop.f32.mrf.mxu0
      %v290 = vadd.f32 %v266, %v289
      %v291 = vpop.f32.mrf.mxu0
      %v292 = vadd.f32 %v266, %v291
      %293 = vdwg.mxu0
      %vm294 = vcmask 130048
      %v295 = vsel %vm294, %v290, -inf
      %296 = vmax.xlane.f32.xlu0 %v295
      %v297 = vpop.xlane.xlu0 %296
      %v298 = vsel %vm294, %v292, -inf
      %299 = vmax.xlane.f32.xlu0 %v298
      %v300 = vpop.xlane.xlu0 %299
      %v301 = vsub.f32 %v290, %v297
      %v302 = vsub.f32 %v292, %v300
      %v303 = vmul.f32 %v301, 1.442695
      %v304 = vpow.pop %v303
      %v305 = vmul.f32 %v302, 1.442695
      %v306 = vpow.pop %v305
      %v307 = vsel %vm294, %v304, 0.0
      %308 = vadd.xlane.f32.xlu0 %v307
      %v309 = vpop.xlane.xlu0 %308
      %v310 = vsel %vm294, %v306, 0.0
      %311 = vadd.xlane.f32.xlu0 %v310
      %v312 = vpop.xlane.xlu0 %311
      %v313 = vrcp.pop %v309
      %v314 = vrcp.pop %v312
      %v315 = vmul.f32 %v304, %v313
      %v316 = vmul.f32 %v306, %v314
      %v317 = vpack.c.bf16 %v316, %v315
      %v320 = vunpack.c.l.b16 %v263
      %v321 = vunpack.c.l.b16 %v264
      %v322 = vpack.c.b16 %v321, %v320
      %v325 = vsel %vm294, %v317, 0
      %327 = vmatpush.bf16.msra.mxu0 0
      %328 = vmatpush.bf16.msra.mxu0 0
      %329 = vmatpush.bf16.msra.mxu0 0
      %330 = vmatpush.bf16.msra.mxu0 0
      %331 = vmatpush.bf16.msra.mxu0 0
      %332 = vmatpush.bf16.msra.mxu0 0
      %333 = vmatpush.bf16.msra.mxu0 0
      %334 = vmatpush.bf16.msra.mxu0 %v322
      %335 = vmatmul.bf16.gmra.mxu0 %v325
      %v336 = vpop.f32.mrf.mxu0
      %v337 = vadd.f32 0.0, %v336
      %v338 = vpop.f32.mrf.mxu0
      %v339 = vadd.f32 0.0, %v338
      %340 = vdwg.mxu0
      %v341 = vpack.c.bf16 %v337, %v337
      %v342 = vpack.c.bf16 %v339, %v339
      %s343 = scalar_lea.vmem %s233, 8
      %v344 = vld [vmem:[%s343] sm:$0xf]
      %v345 = vld [vmem:[%s343 + $0x4] sm:$0xf]
      %v346 = vunpack.c.l.bf16 %v344
      %v347 = vunpack.c.l.bf16 %v345
      %v348 = vmul.f32 %v346, 0.125
      %v349 = vmul.f32 %v347, 0.125
      %v350 = vpack.c.bf16 %v349, %v348
      %s351 = scalar_lea.vmem %s238, 8
      %v352 = vld [vmem:[%s351] sm:$0xf]
      %v353 = vld [vmem:[%s351 + $0x4] sm:$0xf]
      %s354 = scalar_lea.vmem %s243, 8
      %v355 = vld [vmem:[%s354] sm:$0xf]
      %v356 = vld [vmem:[%s354 + $0x4] sm:$0xf]
      %v359 = vunpack.c.l.b16 %v352
      %v360 = vunpack.c.l.b16 %v353
      %v361 = vpack.c.b16 %v360, %v359
      %v363 = vsel %vm273, %v350, 0
      %v366 = vsel %vm273, %v361, 0
      %368 = vmatpush.bf16.xpose.msra.mxu0 0
      %369 = vmatpush.bf16.xpose.msra.mxu0 0
      %370 = vmatpush.bf16.xpose.msra.mxu0 0
      %371 = vmatpush.bf16.xpose.msra.mxu0 0
      %372 = vmatpush.bf16.xpose.msra.mxu0 0
      %373 = vmatpush.bf16.xpose.msra.mxu0 0
      %374 = vmatpush.bf16.xpose.msra.mxu0 0
      %375 = vmatpush.bf16.xpose.msra.mxu0 %v366
      %376 = vmatmul.bf16.gmra.mxu0 %v363
      %v377 = vpop.f32.mrf.mxu0
      %v378 = vadd.f32 %v266, %v377
      %v379 = vpop.f32.mrf.mxu0
      %v380 = vadd.f32 %v266, %v379
      %381 = vdwg.mxu0
      %v382 = vsel %vm294, %v378, -inf
      %383 = vmax.xlane.f32.xlu0 %v382
      %v384 = vpop.xlane.xlu0 %383
      %v385 = vsel %vm294, %v380, -inf
      %386 = vmax.xlane.f32.xlu0 %v385
      %v387 = vpop.xlane.xlu0 %386
      %v388 = vsub.f32 %v378, %v384
      %v389 = vsub.f32 %v380, %v387
      %v390 = vmul.f32 %v388, 1.442695
      %v391 = vpow.pop %v390
      %v392 = vmul.f32 %v389, 1.442695
      %v393 = vpow.pop %v392
      %v394 = vsel %vm294, %v391, 0.0
      %395 = vadd.xlane.f32.xlu0 %v394
      %v396 = vpop.xlane.xlu0 %395
      %v397 = vsel %vm294, %v393, 0.0
      %398 = vadd.xlane.f32.xlu0 %v397
      %v399 = vpop.xlane.xlu0 %398
      %v400 = vrcp.pop %v396
      %v401 = vrcp.pop %v399
      %v402 = vmul.f32 %v391, %v400
      %v403 = vmul.f32 %v393, %v401
      %v404 = vpack.c.bf16 %v403, %v402
      %v407 = vunpack.c.l.b16 %v355
      %v408 = vunpack.c.l.b16 %v356
      %v409 = vpack.c.b16 %v408, %v407
      %v412 = vsel %vm294, %v404, 0
      %414 = vmatpush.bf16.msra.mxu0 0
      %415 = vmatpush.bf16.msra.mxu0 0
      %416 = vmatpush.bf16.msra.mxu0 0
      %417 = vmatpush.bf16.msra.mxu0 0
      %418 = vmatpush.bf16.msra.mxu0 0
      %419 = vmatpush.bf16.msra.mxu0 0
      %420 = vmatpush.bf16.msra.mxu0 0
      %421 = vmatpush.bf16.msra.mxu0 %v409
      %422 = vmatmul.bf16.gmra.mxu0 %v412
      %v423 = vpop.f32.mrf.mxu0
      %v424 = vadd.f32 0.0, %v423
      %v425 = vpop.f32.mrf.mxu0
      %v426 = vadd.f32 0.0, %v425
      %427 = vdwg.mxu0
      %v428 = vpack.c.bf16 %v424, %v424
      %v429 = vpack.c.bf16 %v426, %v426
      %s430 = scalar_lea.vmem %s233, 16
      %v431 = vld [vmem:[%s430] sm:$0xf]
      %v432 = vld [vmem:[%s430 + $0x4] sm:$0xf]
      %v433 = vunpack.c.l.bf16 %v431
      %v434 = vunpack.c.l.bf16 %v432
      %v435 = vmul.f32 %v433, 0.125
      %v436 = vmul.f32 %v434, 0.125
      %v437 = vpack.c.bf16 %v436, %v435
      %s438 = scalar_lea.vmem %s238, 16
      %v439 = vld [vmem:[%s438] sm:$0xf]
      %v440 = vld [vmem:[%s438 + $0x4] sm:$0xf]
      %s441 = scalar_lea.vmem %s243, 16
      %v442 = vld [vmem:[%s441] sm:$0xf]
      %v443 = vld [vmem:[%s441 + $0x4] sm:$0xf]
      %v446 = vunpack.c.l.b16 %v439
      %v447 = vunpack.c.l.b16 %v440
      %v448 = vpack.c.b16 %v447, %v446
      %v450 = vsel %vm273, %v437, 0
      %v453 = vsel %vm273, %v448, 0
      %455 = vmatpush.bf16.xpose.msra.mxu0 0
      %456 = vmatpush.bf16.xpose.msra.mxu0 0
      %457 = vmatpush.bf16.xpose.msra.mxu0 0
      %458 = vmatpush.bf16.xpose.msra.mxu0 0
      %459 = vmatpush.bf16.xpose.msra.mxu0 0
      %460 = vmatpush.bf16.xpose.msra.mxu0 0
      %461 = vmatpush.bf16.xpose.msra.mxu0 0
      %462 = vmatpush.bf16.xpose.msra.mxu0 %v453
      %463 = vmatmul.bf16.gmra.mxu0 %v450
      %v464 = vpop.f32.mrf.mxu0
      %v465 = vadd.f32 %v266, %v464
      %v466 = vpop.f32.mrf.mxu0
      %v467 = vadd.f32 %v266, %v466
      %468 = vdwg.mxu0
      %v469 = vsel %vm294, %v465, -inf
      %470 = vmax.xlane.f32.xlu0 %v469
      %v471 = vpop.xlane.xlu0 %470
      %v472 = vsel %vm294, %v467, -inf
      %473 = vmax.xlane.f32.xlu0 %v472
      %v474 = vpop.xlane.xlu0 %473
      %v475 = vsub.f32 %v465, %v471
      %v476 = vsub.f32 %v467, %v474
      %v477 = vmul.f32 %v475, 1.442695
      %v478 = vpow.pop %v477
      %v479 = vmul.f32 %v476, 1.442695
      %v480 = vpow.pop %v479
      %v481 = vsel %vm294, %v478, 0.0
      %482 = vadd.xlane.f32.xlu0 %v481
      %v483 = vpop.xlane.xlu0 %482
      %v484 = vsel %vm294, %v480, 0.0
      %485 = vadd.xlane.f32.xlu0 %v484
      %v486 = vpop.xlane.xlu0 %485
      %v487 = vrcp.pop %v483
      %v488 = vrcp.pop %v486
      %v489 = vmul.f32 %v478, %v487
      %v490 = vmul.f32 %v480, %v488
      %v491 = vpack.c.bf16 %v490, %v489
      %v494 = vunpack.c.l.b16 %v442
      %v495 = vunpack.c.l.b16 %v443
      %v496 = vpack.c.b16 %v495, %v494
      %v499 = vsel %vm294, %v491, 0
      %501 = vmatpush.bf16.msra.mxu0 0
      %502 = vmatpush.bf16.msra.mxu0 0
      %503 = vmatpush.bf16.msra.mxu0 0
      %504 = vmatpush.bf16.msra.mxu0 0
      %505 = vmatpush.bf16.msra.mxu0 0
      %506 = vmatpush.bf16.msra.mxu0 0
      %507 = vmatpush.bf16.msra.mxu0 0
      %508 = vmatpush.bf16.msra.mxu0 %v496
      %509 = vmatmul.bf16.gmra.mxu0 %v499
      %v510 = vpop.f32.mrf.mxu0
      %v511 = vadd.f32 0.0, %v510
      %v512 = vpop.f32.mrf.mxu0
      %v513 = vadd.f32 0.0, %v512
      %514 = vdwg.mxu0
      %v515 = vpack.c.bf16 %v511, %v511
      %v516 = vpack.c.bf16 %v513, %v513
      %s517 = scalar_lea.vmem %s233, 24
      %v518 = vld [vmem:[%s517] sm:$0xf]
      %v519 = vld [vmem:[%s517 + $0x4] sm:$0xf]
      %v520 = vunpack.c.l.bf16 %v518
      %v521 = vunpack.c.l.bf16 %v519
      %v522 = vmul.f32 %v520, 0.125
      %v523 = vmul.f32 %v521, 0.125
      %v524 = vpack.c.bf16 %v523, %v522
      %s525 = scalar_lea.vmem %s238, 24
      %v526 = vld [vmem:[%s525] sm:$0xf]
      %v527 = vld [vmem:[%s525 + $0x4] sm:$0xf]
      %s528 = scalar_lea.vmem %s243, 24
      %v529 = vld [vmem:[%s528] sm:$0xf]
      %v530 = vld [vmem:[%s528 + $0x4] sm:$0xf]
      %v533 = vunpack.c.l.b16 %v526
      %v534 = vunpack.c.l.b16 %v527
      %v535 = vpack.c.b16 %v534, %v533
      %v537 = vsel %vm273, %v524, 0
      %v540 = vsel %vm273, %v535, 0
      %542 = vmatpush.bf16.xpose.msra.mxu0 0
      %543 = vmatpush.bf16.xpose.msra.mxu0 0
      %544 = vmatpush.bf16.xpose.msra.mxu0 0
      %545 = vmatpush.bf16.xpose.msra.mxu0 0
      %546 = vmatpush.bf16.xpose.msra.mxu0 0
      %547 = vmatpush.bf16.xpose.msra.mxu0 0
      %548 = vmatpush.bf16.xpose.msra.mxu0 0
      %549 = vmatpush.bf16.xpose.msra.mxu0 %v540
      %550 = vmatmul.bf16.gmra.mxu0 %v537
      %v551 = vpop.f32.mrf.mxu0
      %v552 = vadd.f32 %v266, %v551
      %v553 = vpop.f32.mrf.mxu0
      %v554 = vadd.f32 %v266, %v553
      %555 = vdwg.mxu0
      %v556 = vsel %vm294, %v552, -inf
      %557 = vmax.xlane.f32.xlu0 %v556
      %v558 = vpop.xlane.xlu0 %557
      %v559 = vsel %vm294, %v554, -inf
      %560 = vmax.xlane.f32.xlu0 %v559
      %v561 = vpop.xlane.xlu0 %560
      %v562 = vsub.f32 %v552, %v558
      %v563 = vsub.f32 %v554, %v561
      %v564 = vmul.f32 %v562, 1.442695
      %v565 = vpow.pop %v564
      %v566 = vmul.f32 %v563, 1.442695
      %v567 = vpow.pop %v566
      %v568 = vsel %vm294, %v565, 0.0
      %569 = vadd.xlane.f32.xlu0 %v568
      %v570 = vpop.xlane.xlu0 %569
      %v571 = vsel %vm294, %v567, 0.0
      %572 = vadd.xlane.f32.xlu0 %v571
      %v573 = vpop.xlane.xlu0 %572
      %v574 = vrcp.pop %v570
      %v575 = vrcp.pop %v573
      %v576 = vmul.f32 %v565, %v574
      %v577 = vmul.f32 %v567, %v575
      %v578 = vpack.c.bf16 %v577, %v576
      %v581 = vunpack.c.l.b16 %v529
      %v582 = vunpack.c.l.b16 %v530
      %v583 = vpack.c.b16 %v582, %v581
      %v586 = vsel %vm294, %v578, 0
      %588 = vmatpush.bf16.msra.mxu0 0
      %589 = vmatpush.bf16.msra.mxu0 0
      %590 = vmatpush.bf16.msra.mxu0 0
      %591 = vmatpush.bf16.msra.mxu0 0
      %592 = vmatpush.bf16.msra.mxu0 0
      %593 = vmatpush.bf16.msra.mxu0 0
      %594 = vmatpush.bf16.msra.mxu0 0
      %595 = vmatpush.bf16.msra.mxu0 %v583
      %596 = vmatmul.bf16.gmra.mxu0 %v586
      %v597 = vpop.f32.mrf.mxu0
      %v598 = vadd.f32 0.0, %v597
      %v599 = vpop.f32.mrf.mxu0
      %v600 = vadd.f32 0.0, %v599
      %601 = vdwg.mxu0
      %v602 = vpack.c.bf16 %v598, %v598
      %v603 = vpack.c.bf16 %v600, %v600
      %v606 = vunpack.c.l.b16 %v341
      %v607 = vunpack.c.l.b16 %v342
      %v608 = vpack.c.b16 %v607, %v606
      %v611 = vunpack.c.l.b16 %v428
      %v612 = vunpack.c.l.b16 %v429
      %v613 = vpack.c.b16 %v612, %v611
      %614 = vrot.lane.b32.xlu0 %v613, 64
      %v615 = vpop.permute.xlu0 %614
      %v618 = vunpack.c.l.b16 %v515
      %v619 = vunpack.c.l.b16 %v516
      %v620 = vpack.c.b16 %v619, %v618
      %v623 = vunpack.c.l.b16 %v602
      %v624 = vunpack.c.l.b16 %v603
      %v625 = vpack.c.b16 %v624, %v623
      %626 = vrot.lane.b32.xlu0 %v625, 64
      %v627 = vpop.permute.xlu0 %626
      %v630 = vsel %vm273, %v608, %v615
      %v633 = vsel %vm273, %v620, %v627
      %v636 = vunpack.c.l.b16 %v630
      %v637 = vunpack.c.l.b16 %v633
      %v638 = vunpack.c.h.b16 %v630
      %v639 = vunpack.c.h.b16 %v633
      %v640 = vpack.c.b16 %v637, %v636
      %v641 = vpack.c.b16 %v639, %v638
      %644 = vst [vmem:[%s251] sm:$0xff] %v640
      %645 = vst [vmem:[%s251 + $0x8] sm:$0xff] %v641
      %p646 = scmp.lt.s32.totalorder %s15, 1
      %s647 = scalar_select %p646, %s15, 1
      %s648 = smul.addr %s647, 4
      %s649 = smul.addr %s648, 4
      %s650 = scalar_lea.vmem %s4, %s649
      // Predicated region
      $region37: #{electra_model_forward.42} parent=35 // pred_check
        %p651 = pneg %p137
      $region38: #{electra_model_forward.42} parent=35 // pred_check_branch
        %653 = sbr.rel (%p651) target = $region40
      $region39: #{electra_model_forward.42} parent=35 // pred_region
        _
      $region40: #{electra_model_forward.42} parent=35 // pred_fallthru
        _
    $region36: #{electra_model_forward.42} parent=5 // pred_fallthru
      _
    %p654 = scmp.le.s32.totalorder 2, %s10
    // Predicated region
    $region41: #{electra_model_forward.42} parent=5 // pred_check
      %p655 = pneg %p654
    $region42: #{electra_model_forward.42} parent=5 // pred_check_branch
      %657 = sbr.rel (%p655) target = $region44
    $region43: #{electra_model_forward.42} parent=5 // pred_region
      %s658 = ssub.s32 %s10, 2
      // Predicated region
      $region45: #{electra_model_forward.42} parent=43 // pred_check
        %p659 = pneg %p143
      $region46: #{electra_model_forward.42} parent=43 // pred_check_branch
        %661 = sbr.rel (%p659) target = $region48
      $region47: #{electra_model_forward.42} parent=43 // pred_region
        %p662 = scmp.lt.s32.totalorder %s16, 1
        %s663 = scalar_select %p662, %s16, 1
        %s664 = smul.addr %s663, 4
        %s665 = smul.addr %s664, 4
        %s666 = scalar_lea.vmem %s4, %s665
      $region48: #{electra_model_forward.42} parent=43 // pred_fallthru
        _
    $region44: #{electra_model_forward.42} parent=5 // pred_fallthru
      _
  $region6: #{electra_model_forward.42} parent=0 // loop_footer
    %s14 = sadd.s32 1, %s10
  $region7: #{electra_model_forward.42} parent=0 // loop_footer_branch
    %9 = sbr.rel target = $region3
  $region8: #{electra_model_forward.42} parent=0 // loop_exit
    _

// kernel: electra_model_forward.43
$region0: #{electra_model_forward.43}
  #allocation0 [shape = 'u32[]', space=smem, size = 0x4, offset = 0x4, fixed_abs, tag = 'smem constant byte address 0x4 - core index']
  #allocation1 [shape = 'u32[72,128]{1,0:T(1,128)}', space=vmem, size = 0x9000, scoped, tag = 'internal scratch']
  #allocation2 [shape = 'f32[32,256]{1,0:T(8,128)}', space=vmem, size = 0x8000, scoped, tag = 'scratch operand']
  %s0 = inlined_call_operand.vmem [shape: bf16[32,256], index: 0, kind: input, shape index: {}]
  %s1 = inlined_call_operand.vmem [shape: bf16[256,256], index: 1, kind: input, shape index: {}]
  %s2 = inlined_call_operand.vmem [shape: f32[1,256], index: 2, kind: input, shape index: {}]
  %s3 = inlined_call_operand.vmem [shape: bf16[32,256], index: 3, kind: input, shape index: {}]
  %s4 = inlined_call_operand.vmem [shape: f32[1,256], index: 4, kind: input, shape index: {}]
  %s5 = inlined_call_operand.vmem [shape: f32[1,256], index: 5, kind: input, shape index: {}]
  %s6 = inlined_call_operand.vmem [shape: bf16[32,256], index: 6, kind: output, shape index: {}]
  %s7 = sld [smem:[#allocation0]]
  $region42: #{electra_model_forward.43} parent=0
    _
  %s9 = ssub.s32 1, %s7
  %s10 = scalar_select 0, %s9, %s7
  // Predicated region
  $region2: #{electra_model_forward.43} parent=0 // pred_check
    _
  $region3: #{electra_model_forward.43} parent=0 // pred_check_branch
    %12 = sbr.rel (0) target = $region5
  $region4: #{electra_model_forward.43} parent=0 // pred_region
    _
  $region5: #{electra_model_forward.43} parent=0 // pred_fallthru
    _
  // Predicated region
  $region6: #{electra_model_forward.43} parent=0 // pred_check
    _
  $region7: #{electra_model_forward.43} parent=0 // pred_check_branch
    %14 = sbr.rel (0) target = $region9
  $region8: #{electra_model_forward.43} parent=0 // pred_region
    _
  $region9: #{electra_model_forward.43} parent=0 // pred_fallthru
    _
  // Predicated region
  $region10: #{electra_model_forward.43} parent=0 // pred_check
    _
  $region11: #{electra_model_forward.43} parent=0 // pred_check_branch
    %16 = sbr.rel (0) target = $region13
  $region12: #{electra_model_forward.43} parent=0 // pred_region
    _
  $region13: #{electra_model_forward.43} parent=0 // pred_fallthru
    _
  // Predicated region
  $region14: #{electra_model_forward.43} parent=0 // pred_check
    _
  $region15: #{electra_model_forward.43} parent=0 // pred_check_branch
    %18 = sbr.rel (0) target = $region17
  $region16: #{electra_model_forward.43} parent=0 // pred_region
    _
  $region17: #{electra_model_forward.43} parent=0 // pred_fallthru
    _
  // Predicated region
  $region18: #{electra_model_forward.43} parent=0 // pred_check
    _
  $region19: #{electra_model_forward.43} parent=0 // pred_check_branch
    %20 = sbr.rel (0) target = $region21
  $region20: #{electra_model_forward.43} parent=0 // pred_region
    _
  $region21: #{electra_model_forward.43} parent=0 // pred_fallthru
    _
  // Predicated region
  $region22: #{electra_model_forward.43} parent=0 // pred_check
    _
  $region23: #{electra_model_forward.43} parent=0 // pred_check_branch
    %22 = sbr.rel (0) target = $region25
  $region24: #{electra_model_forward.43} parent=0 // pred_region
    _
  $region25: #{electra_model_forward.43} parent=0 // pred_fallthru
    _
  %p23 = scmp.eq.s32.totalorder 0, 0
  // Predicated region
  $region26: #{electra_model_forward.43} parent=0 // pred_check
    %p24 = pneg %p23
  $region27: #{electra_model_forward.43} parent=0 // pred_check_branch
    %26 = sbr.rel (%p24) target = $region29
  $region28: #{electra_model_forward.43} parent=0 // pred_region
    %27 = vst [vmem:[#allocation2] sm:$0xff] 0.0
    %28 = vst [vmem:[#allocation2 + $0x8] sm:$0xff] 0.0
    %29 = vst [vmem:[#allocation2 + $0x10] sm:$0xff] 0.0
    %30 = vst [vmem:[#allocation2 + $0x18] sm:$0xff] 0.0
    %31 = vst [vmem:[#allocation2 + $0x20] sm:$0xff] 0.0
    %32 = vst [vmem:[#allocation2 + $0x28] sm:$0xff] 0.0
    %33 = vst [vmem:[#allocation2 + $0x30] sm:$0xff] 0.0
    %34 = vst [vmem:[#allocation2 + $0x38] sm:$0xff] 0.0
  $region29: #{electra_model_forward.43} parent=0 // pred_fallthru
    _
  %v35 = vld [vmem:[#allocation2] sm:$0xff]
  %v36 = vld [vmem:[#allocation2 + $0x8] sm:$0xff]
  %v37 = vld [vmem:[#allocation2 + $0x10] sm:$0xff]
  %v38 = vld [vmem:[#allocation2 + $0x18] sm:$0xff]
  %v39 = vld [vmem:[#allocation2 + $0x20] sm:$0xff]
  %v40 = vld [vmem:[#allocation2 + $0x28] sm:$0xff]
  %v41 = vld [vmem:[#allocation2 + $0x30] sm:$0xff]
  %v42 = vld [vmem:[#allocation2 + $0x38] sm:$0xff]
  %v43 = vld [vmem:[%s0] sm:$0xff]
  %v44 = vld [vmem:[%s0 + $0x8] sm:$0xff]
  %v45 = vld [vmem:[%s0 + $0x10] sm:$0xff]
  %v46 = vld [vmem:[%s0 + $0x18] sm:$0xff]
  %v47 = vld [vmem:[%s1] sm:$0xff]
  %v48 = vld [vmem:[%s1 + $0x8] sm:$0xff]
  %v49 = vld [vmem:[%s1 + $0x10] sm:$0xff]
  %v50 = vld [vmem:[%s1 + $0x18] sm:$0xff]
  %v51 = vld [vmem:[%s1 + $0x20] sm:$0xff]
  %v52 = vld [vmem:[%s1 + $0x28] sm:$0xff]
  %v53 = vld [vmem:[%s1 + $0x30] sm:$0xff]
  %v54 = vld [vmem:[%s1 + $0x38] sm:$0xff]
  %v55 = vld [vmem:[%s1 + $0x40] sm:$0xff]
  %v56 = vld [vmem:[%s1 + $0x48] sm:$0xff]
  %v57 = vld [vmem:[%s1 + $0x50] sm:$0xff]
  %v58 = vld [vmem:[%s1 + $0x58] sm:$0xff]
  %v59 = vld [vmem:[%s1 + $0x60] sm:$0xff]
  %v60 = vld [vmem:[%s1 + $0x68] sm:$0xff]
  %v61 = vld [vmem:[%s1 + $0x70] sm:$0xff]
  %v62 = vld [vmem:[%s1 + $0x78] sm:$0xff]
  %v63 = vld [vmem:[%s1 + $0x80] sm:$0xff]
  %v64 = vld [vmem:[%s1 + $0x88] sm:$0xff]
  %v65 = vld [vmem:[%s1 + $0x90] sm:$0xff]
  %v66 = vld [vmem:[%s1 + $0x98] sm:$0xff]
  %v67 = vld [vmem:[%s1 + $0xa0] sm:$0xff]
  %v68 = vld [vmem:[%s1 + $0xa8] sm:$0xff]
  %v69 = vld [vmem:[%s1 + $0xb0] sm:$0xff]
  %v70 = vld [vmem:[%s1 + $0xb8] sm:$0xff]
  %v71 = vld [vmem:[%s1 + $0xc0] sm:$0xff]
  %v72 = vld [vmem:[%s1 + $0xc8] sm:$0xff]
  %v73 = vld [vmem:[%s1 + $0xd0] sm:$0xff]
  %v74 = vld [vmem:[%s1 + $0xd8] sm:$0xff]
  %v75 = vld [vmem:[%s1 + $0xe0] sm:$0xff]
  %v76 = vld [vmem:[%s1 + $0xe8] sm:$0xff]
  %v77 = vld [vmem:[%s1 + $0xf0] sm:$0xff]
  %v78 = vld [vmem:[%s1 + $0xf8] sm:$0xff]
  %v83 = vunpack.c.l.b16 %v43
  %v84 = vunpack.c.h.b16 %v43
  %v85 = vunpack.c.l.b16 %v44
  %v86 = vunpack.c.h.b16 %v44
  %v87 = vunpack.c.l.b16 %v45
  %v88 = vunpack.c.h.b16 %v45
  %v89 = vunpack.c.l.b16 %v46
  %v90 = vunpack.c.h.b16 %v46
  %v91 = vpack.c.b16 %v85, %v83
  %v92 = vpack.c.b16 %v86, %v84
  %v93 = vpack.c.b16 %v89, %v87
  %v94 = vpack.c.b16 %v90, %v88
  %v131 = vunpack.c.l.b16 %v47
  %v132 = vunpack.c.h.b16 %v47
  %v133 = vunpack.c.l.b16 %v48
  %v134 = vunpack.c.h.b16 %v48
  %v135 = vunpack.c.l.b16 %v49
  %v136 = vunpack.c.h.b16 %v49
  %v137 = vunpack.c.l.b16 %v50
  %v138 = vunpack.c.h.b16 %v50
  %v139 = vunpack.c.l.b16 %v51
  %v140 = vunpack.c.h.b16 %v51
  %v141 = vunpack.c.l.b16 %v52
  %v142 = vunpack.c.h.b16 %v52
  %v143 = vunpack.c.l.b16 %v53
  %v144 = vunpack.c.h.b16 %v53
  %v145 = vunpack.c.l.b16 %v54
  %v146 = vunpack.c.h.b16 %v54
  %v147 = vunpack.c.l.b16 %v55
  %v148 = vunpack.c.h.b16 %v55
  %v149 = vunpack.c.l.b16 %v56
  %v150 = vunpack.c.h.b16 %v56
  %v151 = vunpack.c.l.b16 %v57
  %v152 = vunpack.c.h.b16 %v57
  %v153 = vunpack.c.l.b16 %v58
  %v154 = vunpack.c.h.b16 %v58
  %v155 = vunpack.c.l.b16 %v59
  %v156 = vunpack.c.h.b16 %v59
  %v157 = vunpack.c.l.b16 %v60
  %v158 = vunpack.c.h.b16 %v60
  %v159 = vunpack.c.l.b16 %v61
  %v160 = vunpack.c.h.b16 %v61
  %v161 = vunpack.c.l.b16 %v62
  %v162 = vunpack.c.h.b16 %v62
  %v163 = vunpack.c.l.b16 %v63
  %v164 = vunpack.c.h.b16 %v63
  %v165 = vunpack.c.l.b16 %v64
  %v166 = vunpack.c.h.b16 %v64
  %v167 = vunpack.c.l.b16 %v65
  %v168 = vunpack.c.h.b16 %v65
  %v169 = vunpack.c.l.b16 %v66
  %v170 = vunpack.c.h.b16 %v66
  %v171 = vunpack.c.l.b16 %v67
  %v172 = vunpack.c.h.b16 %v67
  %v173 = vunpack.c.l.b16 %v68
  %v174 = vunpack.c.h.b16 %v68
  %v175 = vunpack.c.l.b16 %v69
  %v176 = vunpack.c.h.b16 %v69
  %v177 = vunpack.c.l.b16 %v70
  %v178 = vunpack.c.h.b16 %v70
  %v179 = vunpack.c.l.b16 %v71
  %v180 = vunpack.c.h.b16 %v71
  %v181 = vunpack.c.l.b16 %v72
  %v182 = vunpack.c.h.b16 %v72
  %v183 = vunpack.c.l.b16 %v73
  %v184 = vunpack.c.h.b16 %v73
  %v185 = vunpack.c.l.b16 %v74
  %v186 = vunpack.c.h.b16 %v74
  %v187 = vunpack.c.l.b16 %v75
  %v188 = vunpack.c.h.b16 %v75
  %v189 = vunpack.c.l.b16 %v76
  %v190 = vunpack.c.h.b16 %v76
  %v191 = vunpack.c.l.b16 %v77
  %v192 = vunpack.c.h.b16 %v77
  %v193 = vunpack.c.l.b16 %v78
  %v194 = vunpack.c.h.b16 %v78
  %v195 = vpack.c.b16 %v133, %v131
  %v196 = vpack.c.b16 %v134, %v132
  %v197 = vpack.c.b16 %v137, %v135
  %v198 = vpack.c.b16 %v138, %v136
  %v199 = vpack.c.b16 %v141, %v139
  %v200 = vpack.c.b16 %v142, %v140
  %v201 = vpack.c.b16 %v145, %v143
  %v202 = vpack.c.b16 %v146, %v144
  %v203 = vpack.c.b16 %v149, %v147
  %v204 = vpack.c.b16 %v150, %v148
  %v205 = vpack.c.b16 %v153, %v151
  %v206 = vpack.c.b16 %v154, %v152
  %v207 = vpack.c.b16 %v157, %v155
  %v208 = vpack.c.b16 %v158, %v156
  %v209 = vpack.c.b16 %v161, %v159
  %v210 = vpack.c.b16 %v162, %v160
  %v211 = vpack.c.b16 %v165, %v163
  %v212 = vpack.c.b16 %v166, %v164
  %v213 = vpack.c.b16 %v169, %v167
  %v214 = vpack.c.b16 %v170, %v168
  %v215 = vpack.c.b16 %v173, %v171
  %v216 = vpack.c.b16 %v174, %v172
  %v217 = vpack.c.b16 %v177, %v175
  %v218 = vpack.c.b16 %v178, %v176
  %v219 = vpack.c.b16 %v181, %v179
  %v220 = vpack.c.b16 %v182, %v180
  %v221 = vpack.c.b16 %v185, %v183
  %v222 = vpack.c.b16 %v186, %v184
  %v223 = vpack.c.b16 %v189, %v187
  %v224 = vpack.c.b16 %v190, %v188
  %v225 = vpack.c.b16 %v193, %v191
  %v226 = vpack.c.b16 %v194, %v192
  %259 = vmatpush.bf16.msra.mxu0 %v209
  %260 = vmatpush.bf16.msra.mxu0 %v207
  %261 = vmatpush.bf16.msra.mxu0 %v205
  %262 = vmatpush.bf16.msra.mxu0 %v203
  %263 = vmatpush.bf16.msra.mxu0 %v201
  %264 = vmatpush.bf16.msra.mxu0 %v199
  %265 = vmatpush.bf16.msra.mxu0 %v197
  %266 = vmatpush.bf16.msra.mxu0 %v195
  %267 = vmatmul.bf16.gmra.mxu0 %v91
  %v268 = vpop.f32.mrf.mxu0
  %v269 = vadd.f32 0.0, %v268
  %v270 = vpop.f32.mrf.mxu0
  %v271 = vadd.f32 0.0, %v270
  %272 = vmatmul.bf16.gmra.mxu0 %v93
  %v273 = vpop.f32.mrf.mxu0
  %v274 = vadd.f32 0.0, %v273
  %v275 = vpop.f32.mrf.mxu0
  %v276 = vadd.f32 0.0, %v275
  %277 = vdwg.mxu0
  %278 = vmatpush.bf16.msra.mxu0 %v225
  %279 = vmatpush.bf16.msra.mxu0 %v223
  %280 = vmatpush.bf16.msra.mxu0 %v221
  %281 = vmatpush.bf16.msra.mxu0 %v219
  %282 = vmatpush.bf16.msra.mxu0 %v217
  %283 = vmatpush.bf16.msra.mxu0 %v215
  %284 = vmatpush.bf16.msra.mxu0 %v213
  %285 = vmatpush.bf16.msra.mxu0 %v211
  %286 = vmatmul.bf16.gmra.mxu0 %v92
  %v287 = vpop.f32.mrf.mxu0
  %v288 = vadd.f32 %v269, %v287
  %v289 = vpop.f32.mrf.mxu0
  %v290 = vadd.f32 %v271, %v289
  %291 = vmatmul.bf16.gmra.mxu0 %v94
  %v292 = vpop.f32.mrf.mxu0
  %v293 = vadd.f32 %v274, %v292
  %v294 = vpop.f32.mrf.mxu0
  %v295 = vadd.f32 %v276, %v294
  %296 = vdwg.mxu0
  %297 = vmatpush.bf16.msra.mxu0 %v210
  %298 = vmatpush.bf16.msra.mxu0 %v208
  %299 = vmatpush.bf16.msra.mxu0 %v206
  %300 = vmatpush.bf16.msra.mxu0 %v204
  %301 = vmatpush.bf16.msra.mxu0 %v202
  %302 = vmatpush.bf16.msra.mxu0 %v200
  %303 = vmatpush.bf16.msra.mxu0 %v198
  %304 = vmatpush.bf16.msra.mxu0 %v196
  %305 = vmatmul.bf16.gmra.mxu0 %v91
  %v306 = vpop.f32.mrf.mxu0
  %v307 = vadd.f32 0.0, %v306
  %v308 = vpop.f32.mrf.mxu0
  %v309 = vadd.f32 0.0, %v308
  %310 = vmatmul.bf16.gmra.mxu0 %v93
  %v311 = vpop.f32.mrf.mxu0
  %v312 = vadd.f32 0.0, %v311
  %v313 = vpop.f32.mrf.mxu0
  %v314 = vadd.f32 0.0, %v313
  %315 = vdwg.mxu0
  %316 = vmatpush.bf16.msra.mxu0 %v226
  %317 = vmatpush.bf16.msra.mxu0 %v224
  %318 = vmatpush.bf16.msra.mxu0 %v222
  %319 = vmatpush.bf16.msra.mxu0 %v220
  %320 = vmatpush.bf16.msra.mxu0 %v218
  %321 = vmatpush.bf16.msra.mxu0 %v216
  %322 = vmatpush.bf16.msra.mxu0 %v214
  %323 = vmatpush.bf16.msra.mxu0 %v212
  %324 = vmatmul.bf16.gmra.mxu0 %v92
  %v325 = vpop.f32.mrf.mxu0
  %v326 = vadd.f32 %v307, %v325
  %v327 = vpop.f32.mrf.mxu0
  %v328 = vadd.f32 %v309, %v327
  %329 = vmatmul.bf16.gmra.mxu0 %v94
  %v330 = vpop.f32.mrf.mxu0
  %v331 = vadd.f32 %v312, %v330
  %v332 = vpop.f32.mrf.mxu0
  %v333 = vadd.f32 %v314, %v332
  %334 = vdwg.mxu0
  %v335 = vadd.f32 %v35, %v288
  %v336 = vadd.f32 %v36, %v326
  %v337 = vadd.f32 %v37, %v290
  %v338 = vadd.f32 %v38, %v328
  %v339 = vadd.f32 %v39, %v293
  %v340 = vadd.f32 %v40, %v331
  %v341 = vadd.f32 %v41, %v295
  %v342 = vadd.f32 %v42, %v333
  %343 = vst [vmem:[#allocation2] sm:$0xff] %v335
  %344 = vst [vmem:[#allocation2 + $0x8] sm:$0xff] %v336
  %345 = vst [vmem:[#allocation2 + $0x10] sm:$0xff] %v337
  %346 = vst [vmem:[#allocation2 + $0x18] sm:$0xff] %v338
  %347 = vst [vmem:[#allocation2 + $0x20] sm:$0xff] %v339
  %348 = vst [vmem:[#allocation2 + $0x28] sm:$0xff] %v340
  %349 = vst [vmem:[#allocation2 + $0x30] sm:$0xff] %v341
  %350 = vst [vmem:[#allocation2 + $0x38] sm:$0xff] %v342
  // Predicated region
  $region30: #{electra_model_forward.43} parent=0 // pred_check
    %p351 = pneg %p23
  $region31: #{electra_model_forward.43} parent=0 // pred_check_branch
    %353 = sbr.rel (%p351) target = $region33
  $region32: #{electra_model_forward.43} parent=0 // pred_region
    %v354 = vld [vmem:[#allocation2] sm:$0xff]
    %v355 = vld [vmem:[#allocation2 + $0x8] sm:$0xff]
    %v356 = vld [vmem:[#allocation2 + $0x10] sm:$0xff]
    %v357 = vld [vmem:[#allocation2 + $0x18] sm:$0xff]
    %v358 = vld [vmem:[#allocation2 + $0x20] sm:$0xff]
    %v359 = vld [vmem:[#allocation2 + $0x28] sm:$0xff]
    %v360 = vld [vmem:[#allocation2 + $0x30] sm:$0xff]
    %v361 = vld [vmem:[#allocation2 + $0x38] sm:$0xff]
    %v362 = vld [vmem:[%s2] sm:$0x3]
    %v364 = vperm.slane %v362, 0
    %v365 = vperm.slane %v362, 1
    %v368 = vadd.f32 %v354, %v364
    %v369 = vadd.f32 %v355, %v365
    %v370 = vadd.f32 %v356, %v364
    %v371 = vadd.f32 %v357, %v365
    %v372 = vadd.f32 %v358, %v364
    %v373 = vadd.f32 %v359, %v365
    %v374 = vadd.f32 %v360, %v364
    %v375 = vadd.f32 %v361, %v365
    %v376 = vld [vmem:[%s3] sm:$0xff]
    %v377 = vld [vmem:[%s3 + $0x8] sm:$0xff]
    %v378 = vld [vmem:[%s3 + $0x10] sm:$0xff]
    %v379 = vld [vmem:[%s3 + $0x18] sm:$0xff]
    %v380 = vunpack.c.l.bf16 %v376
    %v381 = vunpack.c.h.bf16 %v376
    %v382 = vunpack.c.l.bf16 %v377
    %v383 = vunpack.c.h.bf16 %v377
    %v384 = vunpack.c.l.bf16 %v378
    %v385 = vunpack.c.h.bf16 %v378
    %v386 = vunpack.c.l.bf16 %v379
    %v387 = vunpack.c.h.bf16 %v379
    %v388 = vadd.f32 %v368, %v380
    %v389 = vadd.f32 %v369, %v381
    %v390 = vadd.f32 %v370, %v382
    %v391 = vadd.f32 %v371, %v383
    %v392 = vadd.f32 %v372, %v384
    %v393 = vadd.f32 %v373, %v385
    %v394 = vadd.f32 %v374, %v386
    %v395 = vadd.f32 %v375, %v387
    %v396 = vadd.f32 %v388, %v389
    %397 = vadd.xlane.f32.xlu0 %v396
    %v398 = vpop.xlane.xlu0 %397
    %v399 = vadd.f32 %v390, %v391
    %400 = vadd.xlane.f32.xlu0 %v399
    %v401 = vpop.xlane.xlu0 %400
    %v402 = vadd.f32 %v392, %v393
    %403 = vadd.xlane.f32.xlu0 %v402
    %v404 = vpop.xlane.xlu0 %403
    %v405 = vadd.f32 %v394, %v395
    %406 = vadd.xlane.f32.xlu0 %v405
    %v407 = vpop.xlane.xlu0 %406
    %v408 = vrcp.pop 256.0
    %v409 = vmul.f32 256.0, %v408
    %v410 = vsub.f32 1.0, %v409
    %v411 = vmul.f32 %v408, %v410
    %v412 = vadd.f32 %v408, %v411
    %vm413 = vweird.f32 %v408
    %v414 = vsel %vm413, %v408, %v412
    %v415 = vmul.f32 %v398, %v414
    %v416 = vmul.f32 %v401, %v414
    %v417 = vmul.f32 %v404, %v414
    %v418 = vmul.f32 %v407, %v414
    %v419 = vsub.f32 %v388, %v415
    %v420 = vsub.f32 %v389, %v415
    %v421 = vsub.f32 %v390, %v416
    %v422 = vsub.f32 %v391, %v416
    %v423 = vsub.f32 %v392, %v417
    %v424 = vsub.f32 %v393, %v417
    %v425 = vsub.f32 %v394, %v418
    %v426 = vsub.f32 %v395, %v418
    %v427 = vmul.f32 %v419, %v419
    %v428 = vmul.f32 %v420, %v420
    %v429 = vmul.f32 %v421, %v421
    %v430 = vmul.f32 %v422, %v422
    %v431 = vmul.f32 %v423, %v423
    %v432 = vmul.f32 %v424, %v424
    %v433 = vmul.f32 %v425, %v425
    %v434 = vmul.f32 %v426, %v426
    %v435 = vadd.f32 %v427, %v428
    %436 = vadd.xlane.f32.xlu0 %v435
    %v437 = vpop.xlane.xlu0 %436
    %v438 = vadd.f32 %v429, %v430
    %439 = vadd.xlane.f32.xlu0 %v438
    %v440 = vpop.xlane.xlu0 %439
    %v441 = vadd.f32 %v431, %v432
    %442 = vadd.xlane.f32.xlu0 %v441
    %v443 = vpop.xlane.xlu0 %442
    %v444 = vadd.f32 %v433, %v434
    %445 = vadd.xlane.f32.xlu0 %v444
    %v446 = vpop.xlane.xlu0 %445
    %v447 = vmul.f32 %v437, %v414
    %v448 = vmul.f32 %v440, %v414
    %v449 = vmul.f32 %v443, %v414
    %v450 = vmul.f32 %v446, %v414
    %v451 = vadd.f32 %v447, 1e-12
    %v452 = vadd.f32 %v448, 1e-12
    %v453 = vadd.f32 %v449, 1e-12
    %v454 = vadd.f32 %v450, 1e-12
    %v455 = vrsqrt.pop %v451
    %v456 = vmul.f32 %v455, %v451
    %v457 = vmul.f32 %v456, %v455
    %v458 = vmul.f32 0.5, %v457
    %v459 = vsub.f32 1.5, %v458
    %v460 = vmul.f32 %v455, %v459
    %vm461 = vweird.f32 %v451
    %vm462 = vweird.f32 %v455
    %vm463 = vmor %vm461, %vm462
    %v464 = vsel %vm463, %v455, %v460
    %v465 = vrsqrt.pop %v452
    %v466 = vmul.f32 %v465, %v452
    %v467 = vmul.f32 %v466, %v465
    %v468 = vmul.f32 0.5, %v467
    %v469 = vsub.f32 1.5, %v468
    %v470 = vmul.f32 %v465, %v469
    %vm471 = vweird.f32 %v452
    %vm472 = vweird.f32 %v465
    %vm473 = vmor %vm471, %vm472
    %v474 = vsel %vm473, %v465, %v470
    %v475 = vrsqrt.pop %v453
    %v476 = vmul.f32 %v475, %v453
    %v477 = vmul.f32 %v476, %v475
    %v478 = vmul.f32 0.5, %v477
    %v479 = vsub.f32 1.5, %v478
    %v480 = vmul.f32 %v475, %v479
    %vm481 = vweird.f32 %v453
    %vm482 = vweird.f32 %v475
    %vm483 = vmor %vm481, %vm482
    %v484 = vsel %vm483, %v475, %v480
    %v485 = vrsqrt.pop %v454
    %v486 = vmul.f32 %v485, %v454
    %v487 = vmul.f32 %v486, %v485
    %v488 = vmul.f32 0.5, %v487
    %v489 = vsub.f32 1.5, %v488
    %v490 = vmul.f32 %v485, %v489
    %vm491 = vweird.f32 %v454
    %vm492 = vweird.f32 %v485
    %vm493 = vmor %vm491, %vm492
    %v494 = vsel %vm493, %v485, %v490
    %v495 = vmul.f32 %v419, %v464
    %v496 = vmul.f32 %v420, %v464
    %v497 = vmul.f32 %v421, %v474
    %v498 = vmul.f32 %v422, %v474
    %v499 = vmul.f32 %v423, %v484
    %v500 = vmul.f32 %v424, %v484
    %v501 = vmul.f32 %v425, %v494
    %v502 = vmul.f32 %v426, %v494
    %v503 = vld [vmem:[%s4] sm:$0x3]
    %v505 = vperm.slane %v503, 0
    %v506 = vperm.slane %v503, 1
    %v509 = vmul.f32 %v495, %v505
    %v510 = vmul.f32 %v496, %v506
    %v511 = vmul.f32 %v497, %v505
    %v512 = vmul.f32 %v498, %v506
    %v513 = vmul.f32 %v499, %v505
    %v514 = vmul.f32 %v500, %v506
    %v515 = vmul.f32 %v501, %v505
    %v516 = vmul.f32 %v502, %v506
    %v517 = vld [vmem:[%s5] sm:$0x3]
    %v519 = vperm.slane %v517, 0
    %v520 = vperm.slane %v517, 1
    %v523 = vadd.f32 %v509, %v519
    %v524 = vadd.f32 %v510, %v520
    %v525 = vadd.f32 %v511, %v519
    %v526 = vadd.f32 %v512, %v520
    %v527 = vadd.f32 %v513, %v519
    %v528 = vadd.f32 %v514, %v520
    %v529 = vadd.f32 %v515, %v519
    %v530 = vadd.f32 %v516, %v520
    %v531 = vpack.c.bf16 %v524, %v523
    %v532 = vpack.c.bf16 %v526, %v525
    %v533 = vpack.c.bf16 %v528, %v527
    %v534 = vpack.c.bf16 %v530, %v529
    %535 = vst [vmem:[%s6] sm:$0xff] %v531
    %536 = vst [vmem:[%s6 + $0x8] sm:$0xff] %v532
    %537 = vst [vmem:[%s6 + $0x10] sm:$0xff] %v533
    %538 = vst [vmem:[%s6 + $0x18] sm:$0xff] %v534
  $region33: #{electra_model_forward.43} parent=0 // pred_fallthru
    _
  // Predicated region
  $region34: #{electra_model_forward.43} parent=0 // pred_check
    _
  $region35: #{electra_model_forward.43} parent=0 // pred_check_branch
    %540 = sbr.rel (0) target = $region37
  $region36: #{electra_model_forward.43} parent=0 // pred_region
    _
  $region37: #{electra_model_forward.43} parent=0 // pred_fallthru
    _
  // Predicated region
  $region38: #{electra_model_forward.43} parent=0 // pred_check
    _
  $region39: #{electra_model_forward.43} parent=0 // pred_check_branch
    %542 = sbr.rel (0) target = $region41
  $region40: #{electra_model_forward.43} parent=0 // pred_region
    _
  $region41: #{electra_model_forward.43} parent=0 // pred_fallthru
    _

// kernel: electra_model_forward.44
$region0: #{electra_model_forward.44}
  #allocation0 [shape = 'u32[]', space=smem, size = 0x4, offset = 0x4, fixed_abs, tag = 'smem constant byte address 0x4 - core index']
  #allocation1 [shape = 'u32[72,128]{1,0:T(1,128)}', space=vmem, size = 0x9000, scoped, tag = 'internal scratch']
  #allocation2 [shape = 'f32[32,512]{1,0:T(8,128)}', space=vmem, size = 0x10000, scoped, tag = 'scratch operand']
  %s0 = inlined_call_operand.vmem [shape: bf16[32,256], index: 0, kind: input, shape index: {}]
  %s1 = inlined_call_operand.vmem [shape: bf16[256,512], index: 1, kind: input, shape index: {}]
  %s2 = inlined_call_operand.vmem [shape: f32[1,512], index: 2, kind: input, shape index: {}]
  %s3 = inlined_call_operand.vmem [shape: bf16[32,512], index: 3, kind: output, shape index: {}]
  %s4 = sld [smem:[#allocation0]]
  $region30: #{electra_model_forward.44} parent=0
    _
  %s6 = ssub.s32 1, %s4
  %s7 = scalar_select 0, %s6, %s4
  // Predicated region
  $region2: #{electra_model_forward.44} parent=0 // pred_check
    _
  $region3: #{electra_model_forward.44} parent=0 // pred_check_branch
    %9 = sbr.rel (0) target = $region5
  $region4: #{electra_model_forward.44} parent=0 // pred_region
    _
  $region5: #{electra_model_forward.44} parent=0 // pred_fallthru
    _
  // Predicated region
  $region6: #{electra_model_forward.44} parent=0 // pred_check
    _
  $region7: #{electra_model_forward.44} parent=0 // pred_check_branch
    %11 = sbr.rel (0) target = $region9
  $region8: #{electra_model_forward.44} parent=0 // pred_region
    _
  $region9: #{electra_model_forward.44} parent=0 // pred_fallthru
    _
  // Predicated region
  $region10: #{electra_model_forward.44} parent=0 // pred_check
    _
  $region11: #{electra_model_forward.44} parent=0 // pred_check_branch
    %13 = sbr.rel (0) target = $region13
  $region12: #{electra_model_forward.44} parent=0 // pred_region
    _
  $region13: #{electra_model_forward.44} parent=0 // pred_fallthru
    _
  %p14 = scmp.eq.s32.totalorder 0, 0
  // Predicated region
  $region14: #{electra_model_forward.44} parent=0 // pred_check
    %p15 = pneg %p14
  $region15: #{electra_model_forward.44} parent=0 // pred_check_branch
    %17 = sbr.rel (%p15) target = $region17
  $region16: #{electra_model_forward.44} parent=0 // pred_region
    %18 = vst [vmem:[#allocation2] sm:$0xff] 0.0
    %19 = vst [vmem:[#allocation2 + $0x8] sm:$0xff] 0.0
    %20 = vst [vmem:[#allocation2 + $0x10] sm:$0xff] 0.0
    %21 = vst [vmem:[#allocation2 + $0x18] sm:$0xff] 0.0
    %22 = vst [vmem:[#allocation2 + $0x20] sm:$0xff] 0.0
    %23 = vst [vmem:[#allocation2 + $0x28] sm:$0xff] 0.0
    %24 = vst [vmem:[#allocation2 + $0x30] sm:$0xff] 0.0
    %25 = vst [vmem:[#allocation2 + $0x38] sm:$0xff] 0.0
    %26 = vst [vmem:[#allocation2 + $0x40] sm:$0xff] 0.0
    %27 = vst [vmem:[#allocation2 + $0x48] sm:$0xff] 0.0
    %28 = vst [vmem:[#allocation2 + $0x50] sm:$0xff] 0.0
    %29 = vst [vmem:[#allocation2 + $0x58] sm:$0xff] 0.0
    %30 = vst [vmem:[#allocation2 + $0x60] sm:$0xff] 0.0
    %31 = vst [vmem:[#allocation2 + $0x68] sm:$0xff] 0.0
    %32 = vst [vmem:[#allocation2 + $0x70] sm:$0xff] 0.0
    %33 = vst [vmem:[#allocation2 + $0x78] sm:$0xff] 0.0
  $region17: #{electra_model_forward.44} parent=0 // pred_fallthru
    _
  %v34 = vld [vmem:[#allocation2] sm:$0xff]
  %v35 = vld [vmem:[#allocation2 + $0x8] sm:$0xff]
  %v36 = vld [vmem:[#allocation2 + $0x10] sm:$0xff]
  %v37 = vld [vmem:[#allocation2 + $0x18] sm:$0xff]
  %v38 = vld [vmem:[#allocation2 + $0x20] sm:$0xff]
  %v39 = vld [vmem:[#allocation2 + $0x28] sm:$0xff]
  %v40 = vld [vmem:[#allocation2 + $0x30] sm:$0xff]
  %v41 = vld [vmem:[#allocation2 + $0x38] sm:$0xff]
  %v42 = vld [vmem:[#allocation2 + $0x40] sm:$0xff]
  %v43 = vld [vmem:[#allocation2 + $0x48] sm:$0xff]
  %v44 = vld [vmem:[#allocation2 + $0x50] sm:$0xff]
  %v45 = vld [vmem:[#allocation2 + $0x58] sm:$0xff]
  %v46 = vld [vmem:[#allocation2 + $0x60] sm:$0xff]
  %v47 = vld [vmem:[#allocation2 + $0x68] sm:$0xff]
  %v48 = vld [vmem:[#allocation2 + $0x70] sm:$0xff]
  %v49 = vld [vmem:[#allocation2 + $0x78] sm:$0xff]
  %v50 = vld [vmem:[%s0] sm:$0xff]
  %v51 = vld [vmem:[%s0 + $0x8] sm:$0xff]
  %v52 = vld [vmem:[%s0 + $0x10] sm:$0xff]
  %v53 = vld [vmem:[%s0 + $0x18] sm:$0xff]
  %v54 = vld [vmem:[%s1] sm:$0xff]
  %v55 = vld [vmem:[%s1 + $0x8] sm:$0xff]
  %v56 = vld [vmem:[%s1 + $0x10] sm:$0xff]
  %v57 = vld [vmem:[%s1 + $0x18] sm:$0xff]
  %v58 = vld [vmem:[%s1 + $0x20] sm:$0xff]
  %v59 = vld [vmem:[%s1 + $0x28] sm:$0xff]
  %v60 = vld [vmem:[%s1 + $0x30] sm:$0xff]
  %v61 = vld [vmem:[%s1 + $0x38] sm:$0xff]
  %v62 = vld [vmem:[%s1 + $0x40] sm:$0xff]
  %v63 = vld [vmem:[%s1 + $0x48] sm:$0xff]
  %v64 = vld [vmem:[%s1 + $0x50] sm:$0xff]
  %v65 = vld [vmem:[%s1 + $0x58] sm:$0xff]
  %v66 = vld [vmem:[%s1 + $0x60] sm:$0xff]
  %v67 = vld [vmem:[%s1 + $0x68] sm:$0xff]
  %v68 = vld [vmem:[%s1 + $0x70] sm:$0xff]
  %v69 = vld [vmem:[%s1 + $0x78] sm:$0xff]
  %v70 = vld [vmem:[%s1 + $0x80] sm:$0xff]
  %v71 = vld [vmem:[%s1 + $0x88] sm:$0xff]
  %v72 = vld [vmem:[%s1 + $0x90] sm:$0xff]
  %v73 = vld [vmem:[%s1 + $0x98] sm:$0xff]
  %v74 = vld [vmem:[%s1 + $0xa0] sm:$0xff]
  %v75 = vld [vmem:[%s1 + $0xa8] sm:$0xff]
  %v76 = vld [vmem:[%s1 + $0xb0] sm:$0xff]
  %v77 = vld [vmem:[%s1 + $0xb8] sm:$0xff]
  %v78 = vld [vmem:[%s1 + $0xc0] sm:$0xff]
  %v79 = vld [vmem:[%s1 + $0xc8] sm:$0xff]
  %v80 = vld [vmem:[%s1 + $0xd0] sm:$0xff]
  %v81 = vld [vmem:[%s1 + $0xd8] sm:$0xff]
  %v82 = vld [vmem:[%s1 + $0xe0] sm:$0xff]
  %v83 = vld [vmem:[%s1 + $0xe8] sm:$0xff]
  %v84 = vld [vmem:[%s1 + $0xf0] sm:$0xff]
  %v85 = vld [vmem:[%s1 + $0xf8] sm:$0xff]
  %v86 = vld [vmem:[%s1 + $0x100] sm:$0xff]
  %v87 = vld [vmem:[%s1 + $0x108] sm:$0xff]
  %v88 = vld [vmem:[%s1 + $0x110] sm:$0xff]
  %v89 = vld [vmem:[%s1 + $0x118] sm:$0xff]
  %v90 = vld [vmem:[%s1 + $0x120] sm:$0xff]
  %v91 = vld [vmem:[%s1 + $0x128] sm:$0xff]
  %v92 = vld [vmem:[%s1 + $0x130] sm:$0xff]
  %v93 = vld [vmem:[%s1 + $0x138] sm:$0xff]
  %v94 = vld [vmem:[%s1 + $0x140] sm:$0xff]
  %v95 = vld [vmem:[%s1 + $0x148] sm:$0xff]
  %v96 = vld [vmem:[%s1 + $0x150] sm:$0xff]
  %v97 = vld [vmem:[%s1 + $0x158] sm:$0xff]
  %v98 = vld [vmem:[%s1 + $0x160] sm:$0xff]
  %v99 = vld [vmem:[%s1 + $0x168] sm:$0xff]
  %v100 = vld [vmem:[%s1 + $0x170] sm:$0xff]
  %v101 = vld [vmem:[%s1 + $0x178] sm:$0xff]
  %v102 = vld [vmem:[%s1 + $0x180] sm:$0xff]
  %v103 = vld [vmem:[%s1 + $0x188] sm:$0xff]
  %v104 = vld [vmem:[%s1 + $0x190] sm:$0xff]
  %v105 = vld [vmem:[%s1 + $0x198] sm:$0xff]
  %v106 = vld [vmem:[%s1 + $0x1a0] sm:$0xff]
  %v107 = vld [vmem:[%s1 + $0x1a8] sm:$0xff]
  %v108 = vld [vmem:[%s1 + $0x1b0] sm:$0xff]
  %v109 = vld [vmem:[%s1 + $0x1b8] sm:$0xff]
  %v110 = vld [vmem:[%s1 + $0x1c0] sm:$0xff]
  %v111 = vld [vmem:[%s1 + $0x1c8] sm:$0xff]
  %v112 = vld [vmem:[%s1 + $0x1d0] sm:$0xff]
  %v113 = vld [vmem:[%s1 + $0x1d8] sm:$0xff]
  %v114 = vld [vmem:[%s1 + $0x1e0] sm:$0xff]
  %v115 = vld [vmem:[%s1 + $0x1e8] sm:$0xff]
  %v116 = vld [vmem:[%s1 + $0x1f0] sm:$0xff]
  %v117 = vld [vmem:[%s1 + $0x1f8] sm:$0xff]
  %v122 = vunpack.c.l.b16 %v50
  %v123 = vunpack.c.h.b16 %v50
  %v124 = vunpack.c.l.b16 %v51
  %v125 = vunpack.c.h.b16 %v51
  %v126 = vunpack.c.l.b16 %v52
  %v127 = vunpack.c.h.b16 %v52
  %v128 = vunpack.c.l.b16 %v53
  %v129 = vunpack.c.h.b16 %v53
  %v130 = vpack.c.b16 %v124, %v122
  %v131 = vpack.c.b16 %v125, %v123
  %v132 = vpack.c.b16 %v128, %v126
  %v133 = vpack.c.b16 %v129, %v127
  %v202 = vunpack.c.l.b16 %v54
  %v203 = vunpack.c.h.b16 %v54
  %v204 = vunpack.c.l.b16 %v55
  %v205 = vunpack.c.h.b16 %v55
  %v206 = vunpack.c.l.b16 %v56
  %v207 = vunpack.c.h.b16 %v56
  %v208 = vunpack.c.l.b16 %v57
  %v209 = vunpack.c.h.b16 %v57
  %v210 = vunpack.c.l.b16 %v58
  %v211 = vunpack.c.h.b16 %v58
  %v212 = vunpack.c.l.b16 %v59
  %v213 = vunpack.c.h.b16 %v59
  %v214 = vunpack.c.l.b16 %v60
  %v215 = vunpack.c.h.b16 %v60
  %v216 = vunpack.c.l.b16 %v61
  %v217 = vunpack.c.h.b16 %v61
  %v218 = vunpack.c.l.b16 %v62
  %v219 = vunpack.c.h.b16 %v62
  %v220 = vunpack.c.l.b16 %v63
  %v221 = vunpack.c.h.b16 %v63
  %v222 = vunpack.c.l.b16 %v64
  %v223 = vunpack.c.h.b16 %v64
  %v224 = vunpack.c.l.b16 %v65
  %v225 = vunpack.c.h.b16 %v65
  %v226 = vunpack.c.l.b16 %v66
  %v227 = vunpack.c.h.b16 %v66
  %v228 = vunpack.c.l.b16 %v67
  %v229 = vunpack.c.h.b16 %v67
  %v230 = vunpack.c.l.b16 %v68
  %v231 = vunpack.c.h.b16 %v68
  %v232 = vunpack.c.l.b16 %v69
  %v233 = vunpack.c.h.b16 %v69
  %v234 = vunpack.c.l.b16 %v70
  %v235 = vunpack.c.h.b16 %v70
  %v236 = vunpack.c.l.b16 %v71
  %v237 = vunpack.c.h.b16 %v71
  %v238 = vunpack.c.l.b16 %v72
  %v239 = vunpack.c.h.b16 %v72
  %v240 = vunpack.c.l.b16 %v73
  %v241 = vunpack.c.h.b16 %v73
  %v242 = vunpack.c.l.b16 %v74
  %v243 = vunpack.c.h.b16 %v74
  %v244 = vunpack.c.l.b16 %v75
  %v245 = vunpack.c.h.b16 %v75
  %v246 = vunpack.c.l.b16 %v76
  %v247 = vunpack.c.h.b16 %v76
  %v248 = vunpack.c.l.b16 %v77
  %v249 = vunpack.c.h.b16 %v77
  %v250 = vunpack.c.l.b16 %v78
  %v251 = vunpack.c.h.b16 %v78
  %v252 = vunpack.c.l.b16 %v79
  %v253 = vunpack.c.h.b16 %v79
  %v254 = vunpack.c.l.b16 %v80
  %v255 = vunpack.c.h.b16 %v80
  %v256 = vunpack.c.l.b16 %v81
  %v257 = vunpack.c.h.b16 %v81
  %v258 = vunpack.c.l.b16 %v82
  %v259 = vunpack.c.h.b16 %v82
  %v260 = vunpack.c.l.b16 %v83
  %v261 = vunpack.c.h.b16 %v83
  %v262 = vunpack.c.l.b16 %v84
  %v263 = vunpack.c.h.b16 %v84
  %v264 = vunpack.c.l.b16 %v85
  %v265 = vunpack.c.h.b16 %v85
  %v266 = vunpack.c.l.b16 %v86
  %v267 = vunpack.c.h.b16 %v86
  %v268 = vunpack.c.l.b16 %v87
  %v269 = vunpack.c.h.b16 %v87
  %v270 = vunpack.c.l.b16 %v88
  %v271 = vunpack.c.h.b16 %v88
  %v272 = vunpack.c.l.b16 %v89
  %v273 = vunpack.c.h.b16 %v89
  %v274 = vunpack.c.l.b16 %v90
  %v275 = vunpack.c.h.b16 %v90
  %v276 = vunpack.c.l.b16 %v91
  %v277 = vunpack.c.h.b16 %v91
  %v278 = vunpack.c.l.b16 %v92
  %v279 = vunpack.c.h.b16 %v92
  %v280 = vunpack.c.l.b16 %v93
  %v281 = vunpack.c.h.b16 %v93
  %v282 = vunpack.c.l.b16 %v94
  %v283 = vunpack.c.h.b16 %v94
  %v284 = vunpack.c.l.b16 %v95
  %v285 = vunpack.c.h.b16 %v95
  %v286 = vunpack.c.l.b16 %v96
  %v287 = vunpack.c.h.b16 %v96
  %v288 = vunpack.c.l.b16 %v97
  %v289 = vunpack.c.h.b16 %v97
  %v290 = vunpack.c.l.b16 %v98
  %v291 = vunpack.c.h.b16 %v98
  %v292 = vunpack.c.l.b16 %v99
  %v293 = vunpack.c.h.b16 %v99
  %v294 = vunpack.c.l.b16 %v100
  %v295 = vunpack.c.h.b16 %v100
  %v296 = vunpack.c.l.b16 %v101
  %v297 = vunpack.c.h.b16 %v101
  %v298 = vunpack.c.l.b16 %v102
  %v299 = vunpack.c.h.b16 %v102
  %v300 = vunpack.c.l.b16 %v103
  %v301 = vunpack.c.h.b16 %v103
  %v302 = vunpack.c.l.b16 %v104
  %v303 = vunpack.c.h.b16 %v104
  %v304 = vunpack.c.l.b16 %v105
  %v305 = vunpack.c.h.b16 %v105
  %v306 = vunpack.c.l.b16 %v106
  %v307 = vunpack.c.h.b16 %v106
  %v308 = vunpack.c.l.b16 %v107
  %v309 = vunpack.c.h.b16 %v107
  %v310 = vunpack.c.l.b16 %v108
  %v311 = vunpack.c.h.b16 %v108
  %v312 = vunpack.c.l.b16 %v109
  %v313 = vunpack.c.h.b16 %v109
  %v314 = vunpack.c.l.b16 %v110
  %v315 = vunpack.c.h.b16 %v110
  %v316 = vunpack.c.l.b16 %v111
  %v317 = vunpack.c.h.b16 %v111
  %v318 = vunpack.c.l.b16 %v112
  %v319 = vunpack.c.h.b16 %v112
  %v320 = vunpack.c.l.b16 %v113
  %v321 = vunpack.c.h.b16 %v113
  %v322 = vunpack.c.l.b16 %v114
  %v323 = vunpack.c.h.b16 %v114
  %v324 = vunpack.c.l.b16 %v115
  %v325 = vunpack.c.h.b16 %v115
  %v326 = vunpack.c.l.b16 %v116
  %v327 = vunpack.c.h.b16 %v116
  %v328 = vunpack.c.l.b16 %v117
  %v329 = vunpack.c.h.b16 %v117
  %v330 = vpack.c.b16 %v206, %v202
  %v331 = vpack.c.b16 %v207, %v203
  %v332 = vpack.c.b16 %v208, %v204
  %v333 = vpack.c.b16 %v209, %v205
  %v334 = vpack.c.b16 %v214, %v210
  %v335 = vpack.c.b16 %v215, %v211
  %v336 = vpack.c.b16 %v216, %v212
  %v337 = vpack.c.b16 %v217, %v213
  %v338 = vpack.c.b16 %v222, %v218
  %v339 = vpack.c.b16 %v223, %v219
  %v340 = vpack.c.b16 %v224, %v220
  %v341 = vpack.c.b16 %v225, %v221
  %v342 = vpack.c.b16 %v230, %v226
  %v343 = vpack.c.b16 %v231, %v227
  %v344 = vpack.c.b16 %v232, %v228
  %v345 = vpack.c.b16 %v233, %v229
  %v346 = vpack.c.b16 %v238, %v234
  %v347 = vpack.c.b16 %v239, %v235
  %v348 = vpack.c.b16 %v240, %v236
  %v349 = vpack.c.b16 %v241, %v237
  %v350 = vpack.c.b16 %v246, %v242
  %v351 = vpack.c.b16 %v247, %v243
  %v352 = vpack.c.b16 %v248, %v244
  %v353 = vpack.c.b16 %v249, %v245
  %v354 = vpack.c.b16 %v254, %v250
  %v355 = vpack.c.b16 %v255, %v251
  %v356 = vpack.c.b16 %v256, %v252
  %v357 = vpack.c.b16 %v257, %v253
  %v358 = vpack.c.b16 %v262, %v258
  %v359 = vpack.c.b16 %v263, %v259
  %v360 = vpack.c.b16 %v264, %v260
  %v361 = vpack.c.b16 %v265, %v261
  %v362 = vpack.c.b16 %v270, %v266
  %v363 = vpack.c.b16 %v271, %v267
  %v364 = vpack.c.b16 %v272, %v268
  %v365 = vpack.c.b16 %v273, %v269
  %v366 = vpack.c.b16 %v278, %v274
  %v367 = vpack.c.b16 %v279, %v275
  %v368 = vpack.c.b16 %v280, %v276
  %v369 = vpack.c.b16 %v281, %v277
  %v370 = vpack.c.b16 %v286, %v282
  %v371 = vpack.c.b16 %v287, %v283
  %v372 = vpack.c.b16 %v288, %v284
  %v373 = vpack.c.b16 %v289, %v285
  %v374 = vpack.c.b16 %v294, %v290
  %v375 = vpack.c.b16 %v295, %v291
  %v376 = vpack.c.b16 %v296, %v292
  %v377 = vpack.c.b16 %v297, %v293
  %v378 = vpack.c.b16 %v302, %v298
  %v379 = vpack.c.b16 %v303, %v299
  %v380 = vpack.c.b16 %v304, %v300
  %v381 = vpack.c.b16 %v305, %v301
  %v382 = vpack.c.b16 %v310, %v306
  %v383 = vpack.c.b16 %v311, %v307
  %v384 = vpack.c.b16 %v312, %v308
  %v385 = vpack.c.b16 %v313, %v309
  %v386 = vpack.c.b16 %v318, %v314
  %v387 = vpack.c.b16 %v319, %v315
  %v388 = vpack.c.b16 %v320, %v316
  %v389 = vpack.c.b16 %v321, %v317
  %v390 = vpack.c.b16 %v326, %v322
  %v391 = vpack.c.b16 %v327, %v323
  %v392 = vpack.c.b16 %v328, %v324
  %v393 = vpack.c.b16 %v329, %v325
  %458 = vmatpush.bf16.msra.mxu0 %v358
  %459 = vmatpush.bf16.msra.mxu0 %v354
  %460 = vmatpush.bf16.msra.mxu0 %v350
  %461 = vmatpush.bf16.msra.mxu0 %v346
  %462 = vmatpush.bf16.msra.mxu0 %v342
  %463 = vmatpush.bf16.msra.mxu0 %v338
  %464 = vmatpush.bf16.msra.mxu0 %v334
  %465 = vmatpush.bf16.msra.mxu0 %v330
  %466 = vmatmul.bf16.gmra.mxu0 %v130
  %v467 = vpop.f32.mrf.mxu0
  %v468 = vadd.f32 0.0, %v467
  %v469 = vpop.f32.mrf.mxu0
  %v470 = vadd.f32 0.0, %v469
  %471 = vmatmul.bf16.gmra.mxu0 %v132
  %v472 = vpop.f32.mrf.mxu0
  %v473 = vadd.f32 0.0, %v472
  %v474 = vpop.f32.mrf.mxu0
  %v475 = vadd.f32 0.0, %v474
  %476 = vdwg.mxu0
  %477 = vmatpush.bf16.msra.mxu0 %v390
  %478 = vmatpush.bf16.msra.mxu0 %v386
  %479 = vmatpush.bf16.msra.mxu0 %v382
  %480 = vmatpush.bf16.msra.mxu0 %v378
  %481 = vmatpush.bf16.msra.mxu0 %v374
  %482 = vmatpush.bf16.msra.mxu0 %v370
  %483 = vmatpush.bf16.msra.mxu0 %v366
  %484 = vmatpush.bf16.msra.mxu0 %v362
  %485 = vmatmul.bf16.gmra.mxu0 %v131
  %v486 = vpop.f32.mrf.mxu0
  %v487 = vadd.f32 %v468, %v486
  %v488 = vpop.f32.mrf.mxu0
  %v489 = vadd.f32 %v470, %v488
  %490 = vmatmul.bf16.gmra.mxu0 %v133
  %v491 = vpop.f32.mrf.mxu0
  %v492 = vadd.f32 %v473, %v491
  %v493 = vpop.f32.mrf.mxu0
  %v494 = vadd.f32 %v475, %v493
  %495 = vdwg.mxu0
  %496 = vmatpush.bf16.msra.mxu0 %v359
  %497 = vmatpush.bf16.msra.mxu0 %v355
  %498 = vmatpush.bf16.msra.mxu0 %v351
  %499 = vmatpush.bf16.msra.mxu0 %v347
  %500 = vmatpush.bf16.msra.mxu0 %v343
  %501 = vmatpush.bf16.msra.mxu0 %v339
  %502 = vmatpush.bf16.msra.mxu0 %v335
  %503 = vmatpush.bf16.msra.mxu0 %v331
  %504 = vmatmul.bf16.gmra.mxu0 %v130
  %v505 = vpop.f32.mrf.mxu0
  %v506 = vadd.f32 0.0, %v505
  %v507 = vpop.f32.mrf.mxu0
  %v508 = vadd.f32 0.0, %v507
  %509 = vmatmul.bf16.gmra.mxu0 %v132
  %v510 = vpop.f32.mrf.mxu0
  %v511 = vadd.f32 0.0, %v510
  %v512 = vpop.f32.mrf.mxu0
  %v513 = vadd.f32 0.0, %v512
  %514 = vdwg.mxu0
  %515 = vmatpush.bf16.msra.mxu0 %v391
  %516 = vmatpush.bf16.msra.mxu0 %v387
  %517 = vmatpush.bf16.msra.mxu0 %v383
  %518 = vmatpush.bf16.msra.mxu0 %v379
  %519 = vmatpush.bf16.msra.mxu0 %v375
  %520 = vmatpush.bf16.msra.mxu0 %v371
  %521 = vmatpush.bf16.msra.mxu0 %v367
  %522 = vmatpush.bf16.msra.mxu0 %v363
  %523 = vmatmul.bf16.gmra.mxu0 %v131
  %v524 = vpop.f32.mrf.mxu0
  %v525 = vadd.f32 %v506, %v524
  %v526 = vpop.f32.mrf.mxu0
  %v527 = vadd.f32 %v508, %v526
  %528 = vmatmul.bf16.gmra.mxu0 %v133
  %v529 = vpop.f32.mrf.mxu0
  %v530 = vadd.f32 %v511, %v529
  %v531 = vpop.f32.mrf.mxu0
  %v532 = vadd.f32 %v513, %v531
  %533 = vdwg.mxu0
  %534 = vmatpush.bf16.msra.mxu0 %v360
  %535 = vmatpush.bf16.msra.mxu0 %v356
  %536 = vmatpush.bf16.msra.mxu0 %v352
  %537 = vmatpush.bf16.msra.mxu0 %v348
  %538 = vmatpush.bf16.msra.mxu0 %v344
  %539 = vmatpush.bf16.msra.mxu0 %v340
  %540 = vmatpush.bf16.msra.mxu0 %v336
  %541 = vmatpush.bf16.msra.mxu0 %v332
  %542 = vmatmul.bf16.gmra.mxu0 %v130
  %v543 = vpop.f32.mrf.mxu0
  %v544 = vadd.f32 0.0, %v543
  %v545 = vpop.f32.mrf.mxu0
  %v546 = vadd.f32 0.0, %v545
  %547 = vmatmul.bf16.gmra.mxu0 %v132
  %v548 = vpop.f32.mrf.mxu0
  %v549 = vadd.f32 0.0, %v548
  %v550 = vpop.f32.mrf.mxu0
  %v551 = vadd.f32 0.0, %v550
  %552 = vdwg.mxu0
  %553 = vmatpush.bf16.msra.mxu0 %v392
  %554 = vmatpush.bf16.msra.mxu0 %v388
  %555 = vmatpush.bf16.msra.mxu0 %v384
  %556 = vmatpush.bf16.msra.mxu0 %v380
  %557 = vmatpush.bf16.msra.mxu0 %v376
  %558 = vmatpush.bf16.msra.mxu0 %v372
  %559 = vmatpush.bf16.msra.mxu0 %v368
  %560 = vmatpush.bf16.msra.mxu0 %v364
  %561 = vmatmul.bf16.gmra.mxu0 %v131
  %v562 = vpop.f32.mrf.mxu0
  %v563 = vadd.f32 %v544, %v562
  %v564 = vpop.f32.mrf.mxu0
  %v565 = vadd.f32 %v546, %v564
  %566 = vmatmul.bf16.gmra.mxu0 %v133
  %v567 = vpop.f32.mrf.mxu0
  %v568 = vadd.f32 %v549, %v567
  %v569 = vpop.f32.mrf.mxu0
  %v570 = vadd.f32 %v551, %v569
  %571 = vdwg.mxu0
  %572 = vmatpush.bf16.msra.mxu0 %v361
  %573 = vmatpush.bf16.msra.mxu0 %v357
  %574 = vmatpush.bf16.msra.mxu0 %v353
  %575 = vmatpush.bf16.msra.mxu0 %v349
  %576 = vmatpush.bf16.msra.mxu0 %v345
  %577 = vmatpush.bf16.msra.mxu0 %v341
  %578 = vmatpush.bf16.msra.mxu0 %v337
  %579 = vmatpush.bf16.msra.mxu0 %v333
  %580 = vmatmul.bf16.gmra.mxu0 %v130
  %v581 = vpop.f32.mrf.mxu0
  %v582 = vadd.f32 0.0, %v581
  %v583 = vpop.f32.mrf.mxu0
  %v584 = vadd.f32 0.0, %v583
  %585 = vmatmul.bf16.gmra.mxu0 %v132
  %v586 = vpop.f32.mrf.mxu0
  %v587 = vadd.f32 0.0, %v586
  %v588 = vpop.f32.mrf.mxu0
  %v589 = vadd.f32 0.0, %v588
  %590 = vdwg.mxu0
  %591 = vmatpush.bf16.msra.mxu0 %v393
  %592 = vmatpush.bf16.msra.mxu0 %v389
  %593 = vmatpush.bf16.msra.mxu0 %v385
  %594 = vmatpush.bf16.msra.mxu0 %v381
  %595 = vmatpush.bf16.msra.mxu0 %v377
  %596 = vmatpush.bf16.msra.mxu0 %v373
  %597 = vmatpush.bf16.msra.mxu0 %v369
  %598 = vmatpush.bf16.msra.mxu0 %v365
  %599 = vmatmul.bf16.gmra.mxu0 %v131
  %v600 = vpop.f32.mrf.mxu0
  %v601 = vadd.f32 %v582, %v600
  %v602 = vpop.f32.mrf.mxu0
  %v603 = vadd.f32 %v584, %v602
  %604 = vmatmul.bf16.gmra.mxu0 %v133
  %v605 = vpop.f32.mrf.mxu0
  %v606 = vadd.f32 %v587, %v605
  %v607 = vpop.f32.mrf.mxu0
  %v608 = vadd.f32 %v589, %v607
  %609 = vdwg.mxu0
  %v610 = vadd.f32 %v34, %v487
  %v611 = vadd.f32 %v35, %v525
  %v612 = vadd.f32 %v36, %v563
  %v613 = vadd.f32 %v37, %v601
  %v614 = vadd.f32 %v38, %v489
  %v615 = vadd.f32 %v39, %v527
  %v616 = vadd.f32 %v40, %v565
  %v617 = vadd.f32 %v41, %v603
  %v618 = vadd.f32 %v42, %v492
  %v619 = vadd.f32 %v43, %v530
  %v620 = vadd.f32 %v44, %v568
  %v621 = vadd.f32 %v45, %v606
  %v622 = vadd.f32 %v46, %v494
  %v623 = vadd.f32 %v47, %v532
  %v624 = vadd.f32 %v48, %v570
  %v625 = vadd.f32 %v49, %v608
  %626 = vst [vmem:[#allocation2] sm:$0xff] %v610
  %627 = vst [vmem:[#allocation2 + $0x8] sm:$0xff] %v611
  %628 = vst [vmem:[#allocation2 + $0x10] sm:$0xff] %v612
  %629 = vst [vmem:[#allocation2 + $0x18] sm:$0xff] %v613
  %630 = vst [vmem:[#allocation2 + $0x20] sm:$0xff] %v614
  %631 = vst [vmem:[#allocation2 + $0x28] sm:$0xff] %v615
  %632 = vst [vmem:[#allocation2 + $0x30] sm:$0xff] %v616
  %633 = vst [vmem:[#allocation2 + $0x38] sm:$0xff] %v617
  %634 = vst [vmem:[#allocation2 + $0x40] sm:$0xff] %v618
  %635 = vst [vmem:[#allocation2 + $0x48] sm:$0xff] %v619
  %636 = vst [vmem:[#allocation2 + $0x50] sm:$0xff] %v620
  %637 = vst [vmem:[#allocation2 + $0x58] sm:$0xff] %v621
  %638 = vst [vmem:[#allocation2 + $0x60] sm:$0xff] %v622
  %639 = vst [vmem:[#allocation2 + $0x68] sm:$0xff] %v623
  %640 = vst [vmem:[#allocation2 + $0x70] sm:$0xff] %v624
  %641 = vst [vmem:[#allocation2 + $0x78] sm:$0xff] %v625
  // Predicated region
  $region18: #{electra_model_forward.44} parent=0 // pred_check
    %p642 = pneg %p14
  $region19: #{electra_model_forward.44} parent=0 // pred_check_branch
    %644 = sbr.rel (%p642) target = $region21
  $region20: #{electra_model_forward.44} parent=0 // pred_region
    %v645 = vld [vmem:[#allocation2] sm:$0xff]
    %v646 = vld [vmem:[#allocation2 + $0x8] sm:$0xff]
    %v647 = vld [vmem:[#allocation2 + $0x10] sm:$0xff]
    %v648 = vld [vmem:[#allocation2 + $0x18] sm:$0xff]
    %v649 = vld [vmem:[#allocation2 + $0x20] sm:$0xff]
    %v650 = vld [vmem:[#allocation2 + $0x28] sm:$0xff]
    %v651 = vld [vmem:[#allocation2 + $0x30] sm:$0xff]
    %v652 = vld [vmem:[#allocation2 + $0x38] sm:$0xff]
    %v653 = vld [vmem:[#allocation2 + $0x40] sm:$0xff]
    %v654 = vld [vmem:[#allocation2 + $0x48] sm:$0xff]
    %v655 = vld [vmem:[#allocation2 + $0x50] sm:$0xff]
    %v656 = vld [vmem:[#allocation2 + $0x58] sm:$0xff]
    %v657 = vld [vmem:[#allocation2 + $0x60] sm:$0xff]
    %v658 = vld [vmem:[#allocation2 + $0x68] sm:$0xff]
    %v659 = vld [vmem:[#allocation2 + $0x70] sm:$0xff]
    %v660 = vld [vmem:[#allocation2 + $0x78] sm:$0xff]
    %v661 = vld [vmem:[%s2] sm:$0xf]
    %v663 = vperm.slane %v661, 0
    %v664 = vperm.slane %v661, 1
    %v665 = vperm.slane %v661, 2
    %v666 = vperm.slane %v661, 3
    %v671 = vadd.f32 %v645, %v663
    %v672 = vadd.f32 %v646, %v664
    %v673 = vadd.f32 %v647, %v665
    %v674 = vadd.f32 %v648, %v666
    %v675 = vadd.f32 %v649, %v663
    %v676 = vadd.f32 %v650, %v664
    %v677 = vadd.f32 %v651, %v665
    %v678 = vadd.f32 %v652, %v666
    %v679 = vadd.f32 %v653, %v663
    %v680 = vadd.f32 %v654, %v664
    %v681 = vadd.f32 %v655, %v665
    %v682 = vadd.f32 %v656, %v666
    %v683 = vadd.f32 %v657, %v663
    %v684 = vadd.f32 %v658, %v664
    %v685 = vadd.f32 %v659, %v665
    %v686 = vadd.f32 %v660, %v666
    %v687 = vmul.f32 %v671, %v671
    %v688 = vmul.f32 %v672, %v672
    %v689 = vmul.f32 %v673, %v673
    %v690 = vmul.f32 %v674, %v674
    %v691 = vmul.f32 %v675, %v675
    %v692 = vmul.f32 %v676, %v676
    %v693 = vmul.f32 %v677, %v677
    %v694 = vmul.f32 %v678, %v678
    %v695 = vmul.f32 %v679, %v679
    %v696 = vmul.f32 %v680, %v680
    %v697 = vmul.f32 %v681, %v681
    %v698 = vmul.f32 %v682, %v682
    %v699 = vmul.f32 %v683, %v683
    %v700 = vmul.f32 %v684, %v684
    %v701 = vmul.f32 %v685, %v685
    %v702 = vmul.f32 %v686, %v686
    %v703 = vmul.f32 %v671, %v687
    %v704 = vmul.f32 %v672, %v688
    %v705 = vmul.f32 %v673, %v689
    %v706 = vmul.f32 %v674, %v690
    %v707 = vmul.f32 %v675, %v691
    %v708 = vmul.f32 %v676, %v692
    %v709 = vmul.f32 %v677, %v693
    %v710 = vmul.f32 %v678, %v694
    %v711 = vmul.f32 %v679, %v695
    %v712 = vmul.f32 %v680, %v696
    %v713 = vmul.f32 %v681, %v697
    %v714 = vmul.f32 %v682, %v698
    %v715 = vmul.f32 %v683, %v699
    %v716 = vmul.f32 %v684, %v700
    %v717 = vmul.f32 %v685, %v701
    %v718 = vmul.f32 %v686, %v702
    %v719 = vmul.f32 %v703, 0.044715
    %v720 = vmul.f32 %v704, 0.044715
    %v721 = vmul.f32 %v705, 0.044715
    %v722 = vmul.f32 %v706, 0.044715
    %v723 = vmul.f32 %v707, 0.044715
    %v724 = vmul.f32 %v708, 0.044715
    %v725 = vmul.f32 %v709, 0.044715
    %v726 = vmul.f32 %v710, 0.044715
    %v727 = vmul.f32 %v711, 0.044715
    %v728 = vmul.f32 %v712, 0.044715
    %v729 = vmul.f32 %v713, 0.044715
    %v730 = vmul.f32 %v714, 0.044715
    %v731 = vmul.f32 %v715, 0.044715
    %v732 = vmul.f32 %v716, 0.044715
    %v733 = vmul.f32 %v717, 0.044715
    %v734 = vmul.f32 %v718, 0.044715
    %v735 = vadd.f32 %v671, %v719
    %v736 = vadd.f32 %v672, %v720
    %v737 = vadd.f32 %v673, %v721
    %v738 = vadd.f32 %v674, %v722
    %v739 = vadd.f32 %v675, %v723
    %v740 = vadd.f32 %v676, %v724
    %v741 = vadd.f32 %v677, %v725
    %v742 = vadd.f32 %v678, %v726
    %v743 = vadd.f32 %v679, %v727
    %v744 = vadd.f32 %v680, %v728
    %v745 = vadd.f32 %v681, %v729
    %v746 = vadd.f32 %v682, %v730
    %v747 = vadd.f32 %v683, %v731
    %v748 = vadd.f32 %v684, %v732
    %v749 = vadd.f32 %v685, %v733
    %v750 = vadd.f32 %v686, %v734
    %v751 = vmul.f32 %v735, 0.7978846
    %v752 = vmul.f32 %v736, 0.7978846
    %v753 = vmul.f32 %v737, 0.7978846
    %v754 = vmul.f32 %v738, 0.7978846
    %v755 = vmul.f32 %v739, 0.7978846
    %v756 = vmul.f32 %v740, 0.7978846
    %v757 = vmul.f32 %v741, 0.7978846
    %v758 = vmul.f32 %v742, 0.7978846
    %v759 = vmul.f32 %v743, 0.7978846
    %v760 = vmul.f32 %v744, 0.7978846
    %v761 = vmul.f32 %v745, 0.7978846
    %v762 = vmul.f32 %v746, 0.7978846
    %v763 = vmul.f32 %v747, 0.7978846
    %v764 = vmul.f32 %v748, 0.7978846
    %v765 = vmul.f32 %v749, 0.7978846
    %v766 = vmul.f32 %v750, 0.7978846
    %v767 = vtanh.pop %v751
    %v768 = vtanh.pop %v752
    %v769 = vtanh.pop %v753
    %v770 = vtanh.pop %v754
    %v771 = vtanh.pop %v755
    %v772 = vtanh.pop %v756
    %v773 = vtanh.pop %v757
    %v774 = vtanh.pop %v758
    %v775 = vtanh.pop %v759
    %v776 = vtanh.pop %v760
    %v777 = vtanh.pop %v761
    %v778 = vtanh.pop %v762
    %v779 = vtanh.pop %v763
    %v780 = vtanh.pop %v764
    %v781 = vtanh.pop %v765
    %v782 = vtanh.pop %v766
    %v783 = vadd.f32 %v767, 1.0
    %v784 = vadd.f32 %v768, 1.0
    %v785 = vadd.f32 %v769, 1.0
    %v786 = vadd.f32 %v770, 1.0
    %v787 = vadd.f32 %v771, 1.0
    %v788 = vadd.f32 %v772, 1.0
    %v789 = vadd.f32 %v773, 1.0
    %v790 = vadd.f32 %v774, 1.0
    %v791 = vadd.f32 %v775, 1.0
    %v792 = vadd.f32 %v776, 1.0
    %v793 = vadd.f32 %v777, 1.0
    %v794 = vadd.f32 %v778, 1.0
    %v795 = vadd.f32 %v779, 1.0
    %v796 = vadd.f32 %v780, 1.0
    %v797 = vadd.f32 %v781, 1.0
    %v798 = vadd.f32 %v782, 1.0
    %v799 = vmul.f32 %v783, 0.5
    %v800 = vmul.f32 %v784, 0.5
    %v801 = vmul.f32 %v785, 0.5
    %v802 = vmul.f32 %v786, 0.5
    %v803 = vmul.f32 %v787, 0.5
    %v804 = vmul.f32 %v788, 0.5
    %v805 = vmul.f32 %v789, 0.5
    %v806 = vmul.f32 %v790, 0.5
    %v807 = vmul.f32 %v791, 0.5
    %v808 = vmul.f32 %v792, 0.5
    %v809 = vmul.f32 %v793, 0.5
    %v810 = vmul.f32 %v794, 0.5
    %v811 = vmul.f32 %v795, 0.5
    %v812 = vmul.f32 %v796, 0.5
    %v813 = vmul.f32 %v797, 0.5
    %v814 = vmul.f32 %v798, 0.5
    %v815 = vmul.f32 %v671, %v799
    %v816 = vmul.f32 %v672, %v800
    %v817 = vmul.f32 %v673, %v801
    %v818 = vmul.f32 %v674, %v802
    %v819 = vmul.f32 %v675, %v803
    %v820 = vmul.f32 %v676, %v804
    %v821 = vmul.f32 %v677, %v805
    %v822 = vmul.f32 %v678, %v806
    %v823 = vmul.f32 %v679, %v807
    %v824 = vmul.f32 %v680, %v808
    %v825 = vmul.f32 %v681, %v809
    %v826 = vmul.f32 %v682, %v810
    %v827 = vmul.f32 %v683, %v811
    %v828 = vmul.f32 %v684, %v812
    %v829 = vmul.f32 %v685, %v813
    %v830 = vmul.f32 %v686, %v814
    %v831 = vpack.c.bf16 %v816, %v815
    %v832 = vpack.c.bf16 %v818, %v817
    %v833 = vpack.c.bf16 %v820, %v819
    %v834 = vpack.c.bf16 %v822, %v821
    %v835 = vpack.c.bf16 %v824, %v823
    %v836 = vpack.c.bf16 %v826, %v825
    %v837 = vpack.c.bf16 %v828, %v827
    %v838 = vpack.c.bf16 %v830, %v829
    %839 = vst [vmem:[%s3] sm:$0xff] %v831
    %840 = vst [vmem:[%s3 + $0x8] sm:$0xff] %v832
    %841 = vst [vmem:[%s3 + $0x10] sm:$0xff] %v833
    %842 = vst [vmem:[%s3 + $0x18] sm:$0xff] %v834
    %843 = vst [vmem:[%s3 + $0x20] sm:$0xff] %v835
    %844 = vst [vmem:[%s3 + $0x28] sm:$0xff] %v836
    %845 = vst [vmem:[%s3 + $0x30] sm:$0xff] %v837
    %846 = vst [vmem:[%s3 + $0x38] sm:$0xff] %v838
  $region21: #{electra_model_forward.44} parent=0 // pred_fallthru
    _
  // Predicated region
  $region22: #{electra_model_forward.44} parent=0 // pred_check
    _
  $region23: #{electra_model_forward.44} parent=0 // pred_check_branch
    %848 = sbr.rel (0) target = $region25
  $region24: #{electra_model_forward.44} parent=0 // pred_region
    _
  $region25: #{electra_model_forward.44} parent=0 // pred_fallthru
    _
  // Predicated region
  $region26: #{electra_model_forward.44} parent=0 // pred_check
    _
  $region27: #{electra_model_forward.44} parent=0 // pred_check_branch
    %850 = sbr.rel (0) target = $region29
  $region28: #{electra_model_forward.44} parent=0 // pred_region
    _
  $region29: #{electra_model_forward.44} parent=0 // pred_fallthru
    _

// kernel: squeeze.29
$region0: #{squeeze.29}
  %s0 = inlined_call_operand.vmem [shape: f32[32], index: 0, kind: input, shape index: {}]
  %s1 = inlined_call_operand.hbm [shape: f32[2,16], index: 1, kind: output, shape index: {}]
  $region1: #{squeeze.29} parent=0
    #allocation0 [shape = 'u8[1024]{0}', space=vmem, size = 0x400, scoped, tag = 'operand span for operand 1']
    #allocation1 [shape = 's32[1]{0}', space=sflag, size = 0x4, scoped, tag = 'scoped memory for squeeze.29']
    #allocation2 [shape = 'u8[4096]{0}', space=vmem, size = 0x1000, scoped, tag = 'scoped mem for output reshape']
    #allocation3 [shape = 'u8[4096]{0}', space=vmem, size = 0x1000, scoped, tag = 'scoped mem for input reshape']
    %2 = vsyncpa [#allocation1], 0
    %s4 = ssub.s32 2, 1
    %v5 = vld [vmem:[%s0] sm:%s4]
    %6 = vst [vmem:[#allocation3] sm:%s4] %v5
    %v7 = vld [vmem:[#allocation3] sm:$0x1]
    %vm8 = vcmask 130048
    %9 = vst.msk [vmem:[#allocation2] sm:$0x1] %vm8, %v7
    %v10 = vld [vmem:[#allocation3] sm:$0x1]
    %11 = vrot.lane.b32.xlu0 %v10, 112
    %v12 = vpop.permute.xlu0 %11
    %vm13 = vcmask 130048
    %s14 = scalar_lea.vmem [#allocation2], 1
    %15 = vst.msk [vmem:[%s14] sm:$0x1] %vm13, %v12
    %s17 = ssub.s32 4, 1
    %v18 = vld [vmem:[#allocation2] sm:%s17]
    %s20 = ssub.s32 4, 1
    %21 = vst [vmem:[#allocation0] sm:%s20] %v18
    %23 = vsyncadd [#allocation1], 0
    %s25 = sshll.u32 [#allocation0], 4
    %s26 = int_to_ptr.vmem [resolvable:$true] %s25
    %s27 = sshll.u32 %s1, 4
    %s28 = int_to_ptr.hbm [resolvable:$true] %s27
    %30 = dma.vmem_to_hbm [thread:$0]  %s26, 32, %s28, [#allocation1]
    %32 = dma.done [#allocation1], 32
    %33 = vsyncpa [#allocation1], 1

// kernel: ne.5
$region0: #{ne.5}
  #allocation0 [shape = 's32[1]{0}', space=sflag, size = 0x4, scoped, tag = 'scoped memory for ne.5']
  %s0 = inlined_call_operand.vmem [shape: s32[5], index: 0, kind: input, shape index: {}]
  %s1 = inlined_call_operand.vmem [shape: s32[5], index: 1, kind: input, shape index: {}]
  %s2 = inlined_call_operand.vmem [shape: pred[5], index: 2, kind: output, shape index: {}]
  %v3 = vld [vmem:[%s0] sm:$0x1]
  %v4 = vld [vmem:[%s1] sm:$0x1]
  %5 = xla_tuple %v3, %v4
  %6 = xla_tuple %5
  %vm7 = vcmp.ne.s32.totalorder %v3, %v4
  %v8 = vsel %vm7, 1, 0
  %9 = xla_tuple %v8
  %v10 = vpack.c.b16 0, %v8
  %v11 = vpack.c.b8 0, %v10
  %s13 = ssub.s32 2, 1
  %14 = vst [vmem:[%s2] sm:%s13] %v11

// kernel: electra_model_forward.45
$region0: #{electra_model_forward.45}
  #allocation0 [shape = 'u32[]', space=smem, size = 0x4, offset = 0x4, fixed_abs, tag = 'smem constant byte address 0x4 - core index']
  #allocation1 [shape = 'u32[72,128]{1,0:T(1,128)}', space=vmem, size = 0x9000, scoped, tag = 'internal scratch']
  #allocation2 [shape = 'f32[32,256]{1,0:T(8,128)}', space=vmem, size = 0x8000, scoped, tag = 'scratch operand']
  %s0 = inlined_call_operand.vmem [shape: bf16[32,512], index: 0, kind: input, shape index: {}]
  %s1 = inlined_call_operand.vmem [shape: bf16[512,256], index: 1, kind: input, shape index: {}]
  %s2 = inlined_call_operand.vmem [shape: f32[1,256], index: 2, kind: input, shape index: {}]
  %s3 = inlined_call_operand.vmem [shape: bf16[32,256], index: 3, kind: input, shape index: {}]
  %s4 = inlined_call_operand.vmem [shape: f32[1,256], index: 4, kind: input, shape index: {}]
  %s5 = inlined_call_operand.vmem [shape: f32[1,256], index: 5, kind: input, shape index: {}]
  %s6 = inlined_call_operand.vmem [shape: bf16[32,256], index: 6, kind: output, shape index: {}]
  %s7 = sld [smem:[#allocation0]]
  $region42: #{electra_model_forward.45} parent=0
    _
  %s9 = ssub.s32 1, %s7
  %s10 = scalar_select 0, %s9, %s7
  // Predicated region
  $region2: #{electra_model_forward.45} parent=0 // pred_check
    _
  $region3: #{electra_model_forward.45} parent=0 // pred_check_branch
    %12 = sbr.rel (0) target = $region5
  $region4: #{electra_model_forward.45} parent=0 // pred_region
    _
  $region5: #{electra_model_forward.45} parent=0 // pred_fallthru
    _
  // Predicated region
  $region6: #{electra_model_forward.45} parent=0 // pred_check
    _
  $region7: #{electra_model_forward.45} parent=0 // pred_check_branch
    %14 = sbr.rel (0) target = $region9
  $region8: #{electra_model_forward.45} parent=0 // pred_region
    _
  $region9: #{electra_model_forward.45} parent=0 // pred_fallthru
    _
  // Predicated region
  $region10: #{electra_model_forward.45} parent=0 // pred_check
    _
  $region11: #{electra_model_forward.45} parent=0 // pred_check_branch
    %16 = sbr.rel (0) target = $region13
  $region12: #{electra_model_forward.45} parent=0 // pred_region
    _
  $region13: #{electra_model_forward.45} parent=0 // pred_fallthru
    _
  // Predicated region
  $region14: #{electra_model_forward.45} parent=0 // pred_check
    _
  $region15: #{electra_model_forward.45} parent=0 // pred_check_branch
    %18 = sbr.rel (0) target = $region17
  $region16: #{electra_model_forward.45} parent=0 // pred_region
    _
  $region17: #{electra_model_forward.45} parent=0 // pred_fallthru
    _
  // Predicated region
  $region18: #{electra_model_forward.45} parent=0 // pred_check
    _
  $region19: #{electra_model_forward.45} parent=0 // pred_check_branch
    %20 = sbr.rel (0) target = $region21
  $region20: #{electra_model_forward.45} parent=0 // pred_region
    _
  $region21: #{electra_model_forward.45} parent=0 // pred_fallthru
    _
  // Predicated region
  $region22: #{electra_model_forward.45} parent=0 // pred_check
    _
  $region23: #{electra_model_forward.45} parent=0 // pred_check_branch
    %22 = sbr.rel (0) target = $region25
  $region24: #{electra_model_forward.45} parent=0 // pred_region
    _
  $region25: #{electra_model_forward.45} parent=0 // pred_fallthru
    _
  %p23 = scmp.eq.s32.totalorder 0, 0
  // Predicated region
  $region26: #{electra_model_forward.45} parent=0 // pred_check
    %p24 = pneg %p23
  $region27: #{electra_model_forward.45} parent=0 // pred_check_branch
    %26 = sbr.rel (%p24) target = $region29
  $region28: #{electra_model_forward.45} parent=0 // pred_region
    %27 = vst [vmem:[#allocation2] sm:$0xff] 0.0
    %28 = vst [vmem:[#allocation2 + $0x8] sm:$0xff] 0.0
    %29 = vst [vmem:[#allocation2 + $0x10] sm:$0xff] 0.0
    %30 = vst [vmem:[#allocation2 + $0x18] sm:$0xff] 0.0
    %31 = vst [vmem:[#allocation2 + $0x20] sm:$0xff] 0.0
    %32 = vst [vmem:[#allocation2 + $0x28] sm:$0xff] 0.0
    %33 = vst [vmem:[#allocation2 + $0x30] sm:$0xff] 0.0
    %34 = vst [vmem:[#allocation2 + $0x38] sm:$0xff] 0.0
  $region29: #{electra_model_forward.45} parent=0 // pred_fallthru
    _
  %v35 = vld [vmem:[#allocation2] sm:$0xff]
  %v36 = vld [vmem:[#allocation2 + $0x8] sm:$0xff]
  %v37 = vld [vmem:[#allocation2 + $0x10] sm:$0xff]
  %v38 = vld [vmem:[#allocation2 + $0x18] sm:$0xff]
  %v39 = vld [vmem:[#allocation2 + $0x20] sm:$0xff]
  %v40 = vld [vmem:[#allocation2 + $0x28] sm:$0xff]
  %v41 = vld [vmem:[#allocation2 + $0x30] sm:$0xff]
  %v42 = vld [vmem:[#allocation2 + $0x38] sm:$0xff]
  %v43 = vld [vmem:[%s0] sm:$0xff]
  %v44 = vld [vmem:[%s0 + $0x8] sm:$0xff]
  %v45 = vld [vmem:[%s0 + $0x10] sm:$0xff]
  %v46 = vld [vmem:[%s0 + $0x18] sm:$0xff]
  %v47 = vld [vmem:[%s0 + $0x20] sm:$0xff]
  %v48 = vld [vmem:[%s0 + $0x28] sm:$0xff]
  %v49 = vld [vmem:[%s0 + $0x30] sm:$0xff]
  %v50 = vld [vmem:[%s0 + $0x38] sm:$0xff]
  %v51 = vld [vmem:[%s1] sm:$0xff]
  %v52 = vld [vmem:[%s1 + $0x8] sm:$0xff]
  %v53 = vld [vmem:[%s1 + $0x10] sm:$0xff]
  %v54 = vld [vmem:[%s1 + $0x18] sm:$0xff]
  %v55 = vld [vmem:[%s1 + $0x20] sm:$0xff]
  %v56 = vld [vmem:[%s1 + $0x28] sm:$0xff]
  %v57 = vld [vmem:[%s1 + $0x30] sm:$0xff]
  %v58 = vld [vmem:[%s1 + $0x38] sm:$0xff]
  %v59 = vld [vmem:[%s1 + $0x40] sm:$0xff]
  %v60 = vld [vmem:[%s1 + $0x48] sm:$0xff]
  %v61 = vld [vmem:[%s1 + $0x50] sm:$0xff]
  %v62 = vld [vmem:[%s1 + $0x58] sm:$0xff]
  %v63 = vld [vmem:[%s1 + $0x60] sm:$0xff]
  %v64 = vld [vmem:[%s1 + $0x68] sm:$0xff]
  %v65 = vld [vmem:[%s1 + $0x70] sm:$0xff]
  %v66 = vld [vmem:[%s1 + $0x78] sm:$0xff]
  %v67 = vld [vmem:[%s1 + $0x80] sm:$0xff]
  %v68 = vld [vmem:[%s1 + $0x88] sm:$0xff]
  %v69 = vld [vmem:[%s1 + $0x90] sm:$0xff]
  %v70 = vld [vmem:[%s1 + $0x98] sm:$0xff]
  %v71 = vld [vmem:[%s1 + $0xa0] sm:$0xff]
  %v72 = vld [vmem:[%s1 + $0xa8] sm:$0xff]
  %v73 = vld [vmem:[%s1 + $0xb0] sm:$0xff]
  %v74 = vld [vmem:[%s1 + $0xb8] sm:$0xff]
  %v75 = vld [vmem:[%s1 + $0xc0] sm:$0xff]
  %v76 = vld [vmem:[%s1 + $0xc8] sm:$0xff]
  %v77 = vld [vmem:[%s1 + $0xd0] sm:$0xff]
  %v78 = vld [vmem:[%s1 + $0xd8] sm:$0xff]
  %v79 = vld [vmem:[%s1 + $0xe0] sm:$0xff]
  %v80 = vld [vmem:[%s1 + $0xe8] sm:$0xff]
  %v81 = vld [vmem:[%s1 + $0xf0] sm:$0xff]
  %v82 = vld [vmem:[%s1 + $0xf8] sm:$0xff]
  %v83 = vld [vmem:[%s1 + $0x100] sm:$0xff]
  %v84 = vld [vmem:[%s1 + $0x108] sm:$0xff]
  %v85 = vld [vmem:[%s1 + $0x110] sm:$0xff]
  %v86 = vld [vmem:[%s1 + $0x118] sm:$0xff]
  %v87 = vld [vmem:[%s1 + $0x120] sm:$0xff]
  %v88 = vld [vmem:[%s1 + $0x128] sm:$0xff]
  %v89 = vld [vmem:[%s1 + $0x130] sm:$0xff]
  %v90 = vld [vmem:[%s1 + $0x138] sm:$0xff]
  %v91 = vld [vmem:[%s1 + $0x140] sm:$0xff]
  %v92 = vld [vmem:[%s1 + $0x148] sm:$0xff]
  %v93 = vld [vmem:[%s1 + $0x150] sm:$0xff]
  %v94 = vld [vmem:[%s1 + $0x158] sm:$0xff]
  %v95 = vld [vmem:[%s1 + $0x160] sm:$0xff]
  %v96 = vld [vmem:[%s1 + $0x168] sm:$0xff]
  %v97 = vld [vmem:[%s1 + $0x170] sm:$0xff]
  %v98 = vld [vmem:[%s1 + $0x178] sm:$0xff]
  %v99 = vld [vmem:[%s1 + $0x180] sm:$0xff]
  %v100 = vld [vmem:[%s1 + $0x188] sm:$0xff]
  %v101 = vld [vmem:[%s1 + $0x190] sm:$0xff]
  %v102 = vld [vmem:[%s1 + $0x198] sm:$0xff]
  %v103 = vld [vmem:[%s1 + $0x1a0] sm:$0xff]
  %v104 = vld [vmem:[%s1 + $0x1a8] sm:$0xff]
  %v105 = vld [vmem:[%s1 + $0x1b0] sm:$0xff]
  %v106 = vld [vmem:[%s1 + $0x1b8] sm:$0xff]
  %v107 = vld [vmem:[%s1 + $0x1c0] sm:$0xff]
  %v108 = vld [vmem:[%s1 + $0x1c8] sm:$0xff]
  %v109 = vld [vmem:[%s1 + $0x1d0] sm:$0xff]
  %v110 = vld [vmem:[%s1 + $0x1d8] sm:$0xff]
  %v111 = vld [vmem:[%s1 + $0x1e0] sm:$0xff]
  %v112 = vld [vmem:[%s1 + $0x1e8] sm:$0xff]
  %v113 = vld [vmem:[%s1 + $0x1f0] sm:$0xff]
  %v114 = vld [vmem:[%s1 + $0x1f8] sm:$0xff]
  %v123 = vunpack.c.l.b16 %v43
  %v124 = vunpack.c.h.b16 %v43
  %v125 = vunpack.c.l.b16 %v44
  %v126 = vunpack.c.h.b16 %v44
  %v127 = vunpack.c.l.b16 %v45
  %v128 = vunpack.c.h.b16 %v45
  %v129 = vunpack.c.l.b16 %v46
  %v130 = vunpack.c.h.b16 %v46
  %v131 = vunpack.c.l.b16 %v47
  %v132 = vunpack.c.h.b16 %v47
  %v133 = vunpack.c.l.b16 %v48
  %v134 = vunpack.c.h.b16 %v48
  %v135 = vunpack.c.l.b16 %v49
  %v136 = vunpack.c.h.b16 %v49
  %v137 = vunpack.c.l.b16 %v50
  %v138 = vunpack.c.h.b16 %v50
  %v139 = vpack.c.b16 %v127, %v123
  %v140 = vpack.c.b16 %v128, %v124
  %v141 = vpack.c.b16 %v129, %v125
  %v142 = vpack.c.b16 %v130, %v126
  %v143 = vpack.c.b16 %v135, %v131
  %v144 = vpack.c.b16 %v136, %v132
  %v145 = vpack.c.b16 %v137, %v133
  %v146 = vpack.c.b16 %v138, %v134
  %v219 = vunpack.c.l.b16 %v51
  %v220 = vunpack.c.h.b16 %v51
  %v221 = vunpack.c.l.b16 %v52
  %v222 = vunpack.c.h.b16 %v52
  %v223 = vunpack.c.l.b16 %v53
  %v224 = vunpack.c.h.b16 %v53
  %v225 = vunpack.c.l.b16 %v54
  %v226 = vunpack.c.h.b16 %v54
  %v227 = vunpack.c.l.b16 %v55
  %v228 = vunpack.c.h.b16 %v55
  %v229 = vunpack.c.l.b16 %v56
  %v230 = vunpack.c.h.b16 %v56
  %v231 = vunpack.c.l.b16 %v57
  %v232 = vunpack.c.h.b16 %v57
  %v233 = vunpack.c.l.b16 %v58
  %v234 = vunpack.c.h.b16 %v58
  %v235 = vunpack.c.l.b16 %v59
  %v236 = vunpack.c.h.b16 %v59
  %v237 = vunpack.c.l.b16 %v60
  %v238 = vunpack.c.h.b16 %v60
  %v239 = vunpack.c.l.b16 %v61
  %v240 = vunpack.c.h.b16 %v61
  %v241 = vunpack.c.l.b16 %v62
  %v242 = vunpack.c.h.b16 %v62
  %v243 = vunpack.c.l.b16 %v63
  %v244 = vunpack.c.h.b16 %v63
  %v245 = vunpack.c.l.b16 %v64
  %v246 = vunpack.c.h.b16 %v64
  %v247 = vunpack.c.l.b16 %v65
  %v248 = vunpack.c.h.b16 %v65
  %v249 = vunpack.c.l.b16 %v66
  %v250 = vunpack.c.h.b16 %v66
  %v251 = vunpack.c.l.b16 %v67
  %v252 = vunpack.c.h.b16 %v67
  %v253 = vunpack.c.l.b16 %v68
  %v254 = vunpack.c.h.b16 %v68
  %v255 = vunpack.c.l.b16 %v69
  %v256 = vunpack.c.h.b16 %v69
  %v257 = vunpack.c.l.b16 %v70
  %v258 = vunpack.c.h.b16 %v70
  %v259 = vunpack.c.l.b16 %v71
  %v260 = vunpack.c.h.b16 %v71
  %v261 = vunpack.c.l.b16 %v72
  %v262 = vunpack.c.h.b16 %v72
  %v263 = vunpack.c.l.b16 %v73
  %v264 = vunpack.c.h.b16 %v73
  %v265 = vunpack.c.l.b16 %v74
  %v266 = vunpack.c.h.b16 %v74
  %v267 = vunpack.c.l.b16 %v75
  %v268 = vunpack.c.h.b16 %v75
  %v269 = vunpack.c.l.b16 %v76
  %v270 = vunpack.c.h.b16 %v76
  %v271 = vunpack.c.l.b16 %v77
  %v272 = vunpack.c.h.b16 %v77
  %v273 = vunpack.c.l.b16 %v78
  %v274 = vunpack.c.h.b16 %v78
  %v275 = vunpack.c.l.b16 %v79
  %v276 = vunpack.c.h.b16 %v79
  %v277 = vunpack.c.l.b16 %v80
  %v278 = vunpack.c.h.b16 %v80
  %v279 = vunpack.c.l.b16 %v81
  %v280 = vunpack.c.h.b16 %v81
  %v281 = vunpack.c.l.b16 %v82
  %v282 = vunpack.c.h.b16 %v82
  %v283 = vunpack.c.l.b16 %v83
  %v284 = vunpack.c.h.b16 %v83
  %v285 = vunpack.c.l.b16 %v84
  %v286 = vunpack.c.h.b16 %v84
  %v287 = vunpack.c.l.b16 %v85
  %v288 = vunpack.c.h.b16 %v85
  %v289 = vunpack.c.l.b16 %v86
  %v290 = vunpack.c.h.b16 %v86
  %v291 = vunpack.c.l.b16 %v87
  %v292 = vunpack.c.h.b16 %v87
  %v293 = vunpack.c.l.b16 %v88
  %v294 = vunpack.c.h.b16 %v88
  %v295 = vunpack.c.l.b16 %v89
  %v296 = vunpack.c.h.b16 %v89
  %v297 = vunpack.c.l.b16 %v90
  %v298 = vunpack.c.h.b16 %v90
  %v299 = vunpack.c.l.b16 %v91
  %v300 = vunpack.c.h.b16 %v91
  %v301 = vunpack.c.l.b16 %v92
  %v302 = vunpack.c.h.b16 %v92
  %v303 = vunpack.c.l.b16 %v93
  %v304 = vunpack.c.h.b16 %v93
  %v305 = vunpack.c.l.b16 %v94
  %v306 = vunpack.c.h.b16 %v94
  %v307 = vunpack.c.l.b16 %v95
  %v308 = vunpack.c.h.b16 %v95
  %v309 = vunpack.c.l.b16 %v96
  %v310 = vunpack.c.h.b16 %v96
  %v311 = vunpack.c.l.b16 %v97
  %v312 = vunpack.c.h.b16 %v97
  %v313 = vunpack.c.l.b16 %v98
  %v314 = vunpack.c.h.b16 %v98
  %v315 = vunpack.c.l.b16 %v99
  %v316 = vunpack.c.h.b16 %v99
  %v317 = vunpack.c.l.b16 %v100
  %v318 = vunpack.c.h.b16 %v100
  %v319 = vunpack.c.l.b16 %v101
  %v320 = vunpack.c.h.b16 %v101
  %v321 = vunpack.c.l.b16 %v102
  %v322 = vunpack.c.h.b16 %v102
  %v323 = vunpack.c.l.b16 %v103
  %v324 = vunpack.c.h.b16 %v103
  %v325 = vunpack.c.l.b16 %v104
  %v326 = vunpack.c.h.b16 %v104
  %v327 = vunpack.c.l.b16 %v105
  %v328 = vunpack.c.h.b16 %v105
  %v329 = vunpack.c.l.b16 %v106
  %v330 = vunpack.c.h.b16 %v106
  %v331 = vunpack.c.l.b16 %v107
  %v332 = vunpack.c.h.b16 %v107
  %v333 = vunpack.c.l.b16 %v108
  %v334 = vunpack.c.h.b16 %v108
  %v335 = vunpack.c.l.b16 %v109
  %v336 = vunpack.c.h.b16 %v109
  %v337 = vunpack.c.l.b16 %v110
  %v338 = vunpack.c.h.b16 %v110
  %v339 = vunpack.c.l.b16 %v111
  %v340 = vunpack.c.h.b16 %v111
  %v341 = vunpack.c.l.b16 %v112
  %v342 = vunpack.c.h.b16 %v112
  %v343 = vunpack.c.l.b16 %v113
  %v344 = vunpack.c.h.b16 %v113
  %v345 = vunpack.c.l.b16 %v114
  %v346 = vunpack.c.h.b16 %v114
  %v347 = vpack.c.b16 %v221, %v219
  %v348 = vpack.c.b16 %v222, %v220
  %v349 = vpack.c.b16 %v225, %v223
  %v350 = vpack.c.b16 %v226, %v224
  %v351 = vpack.c.b16 %v229, %v227
  %v352 = vpack.c.b16 %v230, %v228
  %v353 = vpack.c.b16 %v233, %v231
  %v354 = vpack.c.b16 %v234, %v232
  %v355 = vpack.c.b16 %v237, %v235
  %v356 = vpack.c.b16 %v238, %v236
  %v357 = vpack.c.b16 %v241, %v239
  %v358 = vpack.c.b16 %v242, %v240
  %v359 = vpack.c.b16 %v245, %v243
  %v360 = vpack.c.b16 %v246, %v244
  %v361 = vpack.c.b16 %v249, %v247
  %v362 = vpack.c.b16 %v250, %v248
  %v363 = vpack.c.b16 %v253, %v251
  %v364 = vpack.c.b16 %v254, %v252
  %v365 = vpack.c.b16 %v257, %v255
  %v366 = vpack.c.b16 %v258, %v256
  %v367 = vpack.c.b16 %v261, %v259
  %v368 = vpack.c.b16 %v262, %v260
  %v369 = vpack.c.b16 %v265, %v263
  %v370 = vpack.c.b16 %v266, %v264
  %v371 = vpack.c.b16 %v269, %v267
  %v372 = vpack.c.b16 %v270, %v268
  %v373 = vpack.c.b16 %v273, %v271
  %v374 = vpack.c.b16 %v274, %v272
  %v375 = vpack.c.b16 %v277, %v275
  %v376 = vpack.c.b16 %v278, %v276
  %v377 = vpack.c.b16 %v281, %v279
  %v378 = vpack.c.b16 %v282, %v280
  %v379 = vpack.c.b16 %v285, %v283
  %v380 = vpack.c.b16 %v286, %v284
  %v381 = vpack.c.b16 %v289, %v287
  %v382 = vpack.c.b16 %v290, %v288
  %v383 = vpack.c.b16 %v293, %v291
  %v384 = vpack.c.b16 %v294, %v292
  %v385 = vpack.c.b16 %v297, %v295
  %v386 = vpack.c.b16 %v298, %v296
  %v387 = vpack.c.b16 %v301, %v299
  %v388 = vpack.c.b16 %v302, %v300
  %v389 = vpack.c.b16 %v305, %v303
  %v390 = vpack.c.b16 %v306, %v304
  %v391 = vpack.c.b16 %v309, %v307
  %v392 = vpack.c.b16 %v310, %v308
  %v393 = vpack.c.b16 %v313, %v311
  %v394 = vpack.c.b16 %v314, %v312
  %v395 = vpack.c.b16 %v317, %v315
  %v396 = vpack.c.b16 %v318, %v316
  %v397 = vpack.c.b16 %v321, %v319
  %v398 = vpack.c.b16 %v322, %v320
  %v399 = vpack.c.b16 %v325, %v323
  %v400 = vpack.c.b16 %v326, %v324
  %v401 = vpack.c.b16 %v329, %v327
  %v402 = vpack.c.b16 %v330, %v328
  %v403 = vpack.c.b16 %v333, %v331
  %v404 = vpack.c.b16 %v334, %v332
  %v405 = vpack.c.b16 %v337, %v335
  %v406 = vpack.c.b16 %v338, %v336
  %v407 = vpack.c.b16 %v341, %v339
  %v408 = vpack.c.b16 %v342, %v340
  %v409 = vpack.c.b16 %v345, %v343
  %v410 = vpack.c.b16 %v346, %v344
  %475 = vmatpush.bf16.msra.mxu0 %v361
  %476 = vmatpush.bf16.msra.mxu0 %v359
  %477 = vmatpush.bf16.msra.mxu0 %v357
  %478 = vmatpush.bf16.msra.mxu0 %v355
  %479 = vmatpush.bf16.msra.mxu0 %v353
  %480 = vmatpush.bf16.msra.mxu0 %v351
  %481 = vmatpush.bf16.msra.mxu0 %v349
  %482 = vmatpush.bf16.msra.mxu0 %v347
  %483 = vmatmul.bf16.gmra.mxu0 %v139
  %v484 = vpop.f32.mrf.mxu0
  %v485 = vadd.f32 0.0, %v484
  %v486 = vpop.f32.mrf.mxu0
  %v487 = vadd.f32 0.0, %v486
  %488 = vmatmul.bf16.gmra.mxu0 %v143
  %v489 = vpop.f32.mrf.mxu0
  %v490 = vadd.f32 0.0, %v489
  %v491 = vpop.f32.mrf.mxu0
  %v492 = vadd.f32 0.0, %v491
  %493 = vdwg.mxu0
  %494 = vmatpush.bf16.msra.mxu0 %v377
  %495 = vmatpush.bf16.msra.mxu0 %v375
  %496 = vmatpush.bf16.msra.mxu0 %v373
  %497 = vmatpush.bf16.msra.mxu0 %v371
  %498 = vmatpush.bf16.msra.mxu0 %v369
  %499 = vmatpush.bf16.msra.mxu0 %v367
  %500 = vmatpush.bf16.msra.mxu0 %v365
  %501 = vmatpush.bf16.msra.mxu0 %v363
  %502 = vmatmul.bf16.gmra.mxu0 %v140
  %v503 = vpop.f32.mrf.mxu0
  %v504 = vadd.f32 %v485, %v503
  %v505 = vpop.f32.mrf.mxu0
  %v506 = vadd.f32 %v487, %v505
  %507 = vmatmul.bf16.gmra.mxu0 %v144
  %v508 = vpop.f32.mrf.mxu0
  %v509 = vadd.f32 %v490, %v508
  %v510 = vpop.f32.mrf.mxu0
  %v511 = vadd.f32 %v492, %v510
  %512 = vdwg.mxu0
  %513 = vmatpush.bf16.msra.mxu0 %v393
  %514 = vmatpush.bf16.msra.mxu0 %v391
  %515 = vmatpush.bf16.msra.mxu0 %v389
  %516 = vmatpush.bf16.msra.mxu0 %v387
  %517 = vmatpush.bf16.msra.mxu0 %v385
  %518 = vmatpush.bf16.msra.mxu0 %v383
  %519 = vmatpush.bf16.msra.mxu0 %v381
  %520 = vmatpush.bf16.msra.mxu0 %v379
  %521 = vmatmul.bf16.gmra.mxu0 %v141
  %v522 = vpop.f32.mrf.mxu0
  %v523 = vadd.f32 %v504, %v522
  %v524 = vpop.f32.mrf.mxu0
  %v525 = vadd.f32 %v506, %v524
  %526 = vmatmul.bf16.gmra.mxu0 %v145
  %v527 = vpop.f32.mrf.mxu0
  %v528 = vadd.f32 %v509, %v527
  %v529 = vpop.f32.mrf.mxu0
  %v530 = vadd.f32 %v511, %v529
  %531 = vdwg.mxu0
  %532 = vmatpush.bf16.msra.mxu0 %v409
  %533 = vmatpush.bf16.msra.mxu0 %v407
  %534 = vmatpush.bf16.msra.mxu0 %v405
  %535 = vmatpush.bf16.msra.mxu0 %v403
  %536 = vmatpush.bf16.msra.mxu0 %v401
  %537 = vmatpush.bf16.msra.mxu0 %v399
  %538 = vmatpush.bf16.msra.mxu0 %v397
  %539 = vmatpush.bf16.msra.mxu0 %v395
  %540 = vmatmul.bf16.gmra.mxu0 %v142
  %v541 = vpop.f32.mrf.mxu0
  %v542 = vadd.f32 %v523, %v541
  %v543 = vpop.f32.mrf.mxu0
  %v544 = vadd.f32 %v525, %v543
  %545 = vmatmul.bf16.gmra.mxu0 %v146
  %v546 = vpop.f32.mrf.mxu0
  %v547 = vadd.f32 %v528, %v546
  %v548 = vpop.f32.mrf.mxu0
  %v549 = vadd.f32 %v530, %v548
  %550 = vdwg.mxu0
  %551 = vmatpush.bf16.msra.mxu0 %v362
  %552 = vmatpush.bf16.msra.mxu0 %v360
  %553 = vmatpush.bf16.msra.mxu0 %v358
  %554 = vmatpush.bf16.msra.mxu0 %v356
  %555 = vmatpush.bf16.msra.mxu0 %v354
  %556 = vmatpush.bf16.msra.mxu0 %v352
  %557 = vmatpush.bf16.msra.mxu0 %v350
  %558 = vmatpush.bf16.msra.mxu0 %v348
  %559 = vmatmul.bf16.gmra.mxu0 %v139
  %v560 = vpop.f32.mrf.mxu0
  %v561 = vadd.f32 0.0, %v560
  %v562 = vpop.f32.mrf.mxu0
  %v563 = vadd.f32 0.0, %v562
  %564 = vmatmul.bf16.gmra.mxu0 %v143
  %v565 = vpop.f32.mrf.mxu0
  %v566 = vadd.f32 0.0, %v565
  %v567 = vpop.f32.mrf.mxu0
  %v568 = vadd.f32 0.0, %v567
  %569 = vdwg.mxu0
  %570 = vmatpush.bf16.msra.mxu0 %v378
  %571 = vmatpush.bf16.msra.mxu0 %v376
  %572 = vmatpush.bf16.msra.mxu0 %v374
  %573 = vmatpush.bf16.msra.mxu0 %v372
  %574 = vmatpush.bf16.msra.mxu0 %v370
  %575 = vmatpush.bf16.msra.mxu0 %v368
  %576 = vmatpush.bf16.msra.mxu0 %v366
  %577 = vmatpush.bf16.msra.mxu0 %v364
  %578 = vmatmul.bf16.gmra.mxu0 %v140
  %v579 = vpop.f32.mrf.mxu0
  %v580 = vadd.f32 %v561, %v579
  %v581 = vpop.f32.mrf.mxu0
  %v582 = vadd.f32 %v563, %v581
  %583 = vmatmul.bf16.gmra.mxu0 %v144
  %v584 = vpop.f32.mrf.mxu0
  %v585 = vadd.f32 %v566, %v584
  %v586 = vpop.f32.mrf.mxu0
  %v587 = vadd.f32 %v568, %v586
  %588 = vdwg.mxu0
  %589 = vmatpush.bf16.msra.mxu0 %v394
  %590 = vmatpush.bf16.msra.mxu0 %v392
  %591 = vmatpush.bf16.msra.mxu0 %v390
  %592 = vmatpush.bf16.msra.mxu0 %v388
  %593 = vmatpush.bf16.msra.mxu0 %v386
  %594 = vmatpush.bf16.msra.mxu0 %v384
  %595 = vmatpush.bf16.msra.mxu0 %v382
  %596 = vmatpush.bf16.msra.mxu0 %v380
  %597 = vmatmul.bf16.gmra.mxu0 %v141
  %v598 = vpop.f32.mrf.mxu0
  %v599 = vadd.f32 %v580, %v598
  %v600 = vpop.f32.mrf.mxu0
  %v601 = vadd.f32 %v582, %v600
  %602 = vmatmul.bf16.gmra.mxu0 %v145
  %v603 = vpop.f32.mrf.mxu0
  %v604 = vadd.f32 %v585, %v603
  %v605 = vpop.f32.mrf.mxu0
  %v606 = vadd.f32 %v587, %v605
  %607 = vdwg.mxu0
  %608 = vmatpush.bf16.msra.mxu0 %v410
  %609 = vmatpush.bf16.msra.mxu0 %v408
  %610 = vmatpush.bf16.msra.mxu0 %v406
  %611 = vmatpush.bf16.msra.mxu0 %v404
  %612 = vmatpush.bf16.msra.mxu0 %v402
  %613 = vmatpush.bf16.msra.mxu0 %v400
  %614 = vmatpush.bf16.msra.mxu0 %v398
  %615 = vmatpush.bf16.msra.mxu0 %v396
  %616 = vmatmul.bf16.gmra.mxu0 %v142
  %v617 = vpop.f32.mrf.mxu0
  %v618 = vadd.f32 %v599, %v617
  %v619 = vpop.f32.mrf.mxu0
  %v620 = vadd.f32 %v601, %v619
  %621 = vmatmul.bf16.gmra.mxu0 %v146
  %v622 = vpop.f32.mrf.mxu0
  %v623 = vadd.f32 %v604, %v622
  %v624 = vpop.f32.mrf.mxu0
  %v625 = vadd.f32 %v606, %v624
  %626 = vdwg.mxu0
  %v627 = vadd.f32 %v35, %v542
  %v628 = vadd.f32 %v36, %v618
  %v629 = vadd.f32 %v37, %v544
  %v630 = vadd.f32 %v38, %v620
  %v631 = vadd.f32 %v39, %v547
  %v632 = vadd.f32 %v40, %v623
  %v633 = vadd.f32 %v41, %v549
  %v634 = vadd.f32 %v42, %v625
  %635 = vst [vmem:[#allocation2] sm:$0xff] %v627
  %636 = vst [vmem:[#allocation2 + $0x8] sm:$0xff] %v628
  %637 = vst [vmem:[#allocation2 + $0x10] sm:$0xff] %v629
  %638 = vst [vmem:[#allocation2 + $0x18] sm:$0xff] %v630
  %639 = vst [vmem:[#allocation2 + $0x20] sm:$0xff] %v631
  %640 = vst [vmem:[#allocation2 + $0x28] sm:$0xff] %v632
  %641 = vst [vmem:[#allocation2 + $0x30] sm:$0xff] %v633
  %642 = vst [vmem:[#allocation2 + $0x38] sm:$0xff] %v634
  // Predicated region
  $region30: #{electra_model_forward.45} parent=0 // pred_check
    %p643 = pneg %p23
  $region31: #{electra_model_forward.45} parent=0 // pred_check_branch
    %645 = sbr.rel (%p643) target = $region33
  $region32: #{electra_model_forward.45} parent=0 // pred_region
    %v646 = vld [vmem:[#allocation2] sm:$0xff]
    %v647 = vld [vmem:[#allocation2 + $0x8] sm:$0xff]
    %v648 = vld [vmem:[#allocation2 + $0x10] sm:$0xff]
    %v649 = vld [vmem:[#allocation2 + $0x18] sm:$0xff]
    %v650 = vld [vmem:[#allocation2 + $0x20] sm:$0xff]
    %v651 = vld [vmem:[#allocation2 + $0x28] sm:$0xff]
    %v652 = vld [vmem:[#allocation2 + $0x30] sm:$0xff]
    %v653 = vld [vmem:[#allocation2 + $0x38] sm:$0xff]
    %v654 = vld [vmem:[%s2] sm:$0x3]
    %v656 = vperm.slane %v654, 0
    %v657 = vperm.slane %v654, 1
    %v660 = vadd.f32 %v646, %v656
    %v661 = vadd.f32 %v647, %v657
    %v662 = vadd.f32 %v648, %v656
    %v663 = vadd.f32 %v649, %v657
    %v664 = vadd.f32 %v650, %v656
    %v665 = vadd.f32 %v651, %v657
    %v666 = vadd.f32 %v652, %v656
    %v667 = vadd.f32 %v653, %v657
    %v668 = vld [vmem:[%s3] sm:$0xff]
    %v669 = vld [vmem:[%s3 + $0x8] sm:$0xff]
    %v670 = vld [vmem:[%s3 + $0x10] sm:$0xff]
    %v671 = vld [vmem:[%s3 + $0x18] sm:$0xff]
    %v672 = vunpack.c.l.bf16 %v668
    %v673 = vunpack.c.h.bf16 %v668
    %v674 = vunpack.c.l.bf16 %v669
    %v675 = vunpack.c.h.bf16 %v669
    %v676 = vunpack.c.l.bf16 %v670
    %v677 = vunpack.c.h.bf16 %v670
    %v678 = vunpack.c.l.bf16 %v671
    %v679 = vunpack.c.h.bf16 %v671
    %v680 = vadd.f32 %v660, %v672
    %v681 = vadd.f32 %v661, %v673
    %v682 = vadd.f32 %v662, %v674
    %v683 = vadd.f32 %v663, %v675
    %v684 = vadd.f32 %v664, %v676
    %v685 = vadd.f32 %v665, %v677
    %v686 = vadd.f32 %v666, %v678
    %v687 = vadd.f32 %v667, %v679
    %v688 = vadd.f32 %v680, %v681
    %689 = vadd.xlane.f32.xlu0 %v688
    %v690 = vpop.xlane.xlu0 %689
    %v691 = vadd.f32 %v682, %v683
    %692 = vadd.xlane.f32.xlu0 %v691
    %v693 = vpop.xlane.xlu0 %692
    %v694 = vadd.f32 %v684, %v685
    %695 = vadd.xlane.f32.xlu0 %v694
    %v696 = vpop.xlane.xlu0 %695
    %v697 = vadd.f32 %v686, %v687
    %698 = vadd.xlane.f32.xlu0 %v697
    %v699 = vpop.xlane.xlu0 %698
    %v700 = vrcp.pop 256.0
    %v701 = vmul.f32 256.0, %v700
    %v702 = vsub.f32 1.0, %v701
    %v703 = vmul.f32 %v700, %v702
    %v704 = vadd.f32 %v700, %v703
    %vm705 = vweird.f32 %v700
    %v706 = vsel %vm705, %v700, %v704
    %v707 = vmul.f32 %v690, %v706
    %v708 = vmul.f32 %v693, %v706
    %v709 = vmul.f32 %v696, %v706
    %v710 = vmul.f32 %v699, %v706
    %v711 = vsub.f32 %v680, %v707
    %v712 = vsub.f32 %v681, %v707
    %v713 = vsub.f32 %v682, %v708
    %v714 = vsub.f32 %v683, %v708
    %v715 = vsub.f32 %v684, %v709
    %v716 = vsub.f32 %v685, %v709
    %v717 = vsub.f32 %v686, %v710
    %v718 = vsub.f32 %v687, %v710
    %v719 = vmul.f32 %v711, %v711
    %v720 = vmul.f32 %v712, %v712
    %v721 = vmul.f32 %v713, %v713
    %v722 = vmul.f32 %v714, %v714
    %v723 = vmul.f32 %v715, %v715
    %v724 = vmul.f32 %v716, %v716
    %v725 = vmul.f32 %v717, %v717
    %v726 = vmul.f32 %v718, %v718
    %v727 = vadd.f32 %v719, %v720
    %728 = vadd.xlane.f32.xlu0 %v727
    %v729 = vpop.xlane.xlu0 %728
    %v730 = vadd.f32 %v721, %v722
    %731 = vadd.xlane.f32.xlu0 %v730
    %v732 = vpop.xlane.xlu0 %731
    %v733 = vadd.f32 %v723, %v724
    %734 = vadd.xlane.f32.xlu0 %v733
    %v735 = vpop.xlane.xlu0 %734
    %v736 = vadd.f32 %v725, %v726
    %737 = vadd.xlane.f32.xlu0 %v736
    %v738 = vpop.xlane.xlu0 %737
    %v739 = vmul.f32 %v729, %v706
    %v740 = vmul.f32 %v732, %v706
    %v741 = vmul.f32 %v735, %v706
    %v742 = vmul.f32 %v738, %v706
    %v743 = vadd.f32 %v739, 1e-12
    %v744 = vadd.f32 %v740, 1e-12
    %v745 = vadd.f32 %v741, 1e-12
    %v746 = vadd.f32 %v742, 1e-12
    %v747 = vrsqrt.pop %v743
    %v748 = vmul.f32 %v747, %v743
    %v749 = vmul.f32 %v748, %v747
    %v750 = vmul.f32 0.5, %v749
    %v751 = vsub.f32 1.5, %v750
    %v752 = vmul.f32 %v747, %v751
    %vm753 = vweird.f32 %v743
    %vm754 = vweird.f32 %v747
    %vm755 = vmor %vm753, %vm754
    %v756 = vsel %vm755, %v747, %v752
    %v757 = vrsqrt.pop %v744
    %v758 = vmul.f32 %v757, %v744
    %v759 = vmul.f32 %v758, %v757
    %v760 = vmul.f32 0.5, %v759
    %v761 = vsub.f32 1.5, %v760
    %v762 = vmul.f32 %v757, %v761
    %vm763 = vweird.f32 %v744
    %vm764 = vweird.f32 %v757
    %vm765 = vmor %vm763, %vm764
    %v766 = vsel %vm765, %v757, %v762
    %v767 = vrsqrt.pop %v745
    %v768 = vmul.f32 %v767, %v745
    %v769 = vmul.f32 %v768, %v767
    %v770 = vmul.f32 0.5, %v769
    %v771 = vsub.f32 1.5, %v770
    %v772 = vmul.f32 %v767, %v771
    %vm773 = vweird.f32 %v745
    %vm774 = vweird.f32 %v767
    %vm775 = vmor %vm773, %vm774
    %v776 = vsel %vm775, %v767, %v772
    %v777 = vrsqrt.pop %v746
    %v778 = vmul.f32 %v777, %v746
    %v779 = vmul.f32 %v778, %v777
    %v780 = vmul.f32 0.5, %v779
    %v781 = vsub.f32 1.5, %v780
    %v782 = vmul.f32 %v777, %v781
    %vm783 = vweird.f32 %v746
    %vm784 = vweird.f32 %v777
    %vm785 = vmor %vm783, %vm784
    %v786 = vsel %vm785, %v777, %v782
    %v787 = vmul.f32 %v711, %v756
    %v788 = vmul.f32 %v712, %v756
    %v789 = vmul.f32 %v713, %v766
    %v790 = vmul.f32 %v714, %v766
    %v791 = vmul.f32 %v715, %v776
    %v792 = vmul.f32 %v716, %v776
    %v793 = vmul.f32 %v717, %v786
    %v794 = vmul.f32 %v718, %v786
    %v795 = vld [vmem:[%s4] sm:$0x3]
    %v797 = vperm.slane %v795, 0
    %v798 = vperm.slane %v795, 1
    %v801 = vmul.f32 %v787, %v797
    %v802 = vmul.f32 %v788, %v798
    %v803 = vmul.f32 %v789, %v797
    %v804 = vmul.f32 %v790, %v798
    %v805 = vmul.f32 %v791, %v797
    %v806 = vmul.f32 %v792, %v798
    %v807 = vmul.f32 %v793, %v797
    %v808 = vmul.f32 %v794, %v798
    %v809 = vld [vmem:[%s5] sm:$0x3]
    %v811 = vperm.slane %v809, 0
    %v812 = vperm.slane %v809, 1
    %v815 = vadd.f32 %v801, %v811
    %v816 = vadd.f32 %v802, %v812
    %v817 = vadd.f32 %v803, %v811
    %v818 = vadd.f32 %v804, %v812
    %v819 = vadd.f32 %v805, %v811
    %v820 = vadd.f32 %v806, %v812
    %v821 = vadd.f32 %v807, %v811
    %v822 = vadd.f32 %v808, %v812
    %v823 = vpack.c.bf16 %v816, %v815
    %v824 = vpack.c.bf16 %v818, %v817
    %v825 = vpack.c.bf16 %v820, %v819
    %v826 = vpack.c.bf16 %v822, %v821
    %827 = vst [vmem:[%s6] sm:$0xff] %v823
    %828 = vst [vmem:[%s6 + $0x8] sm:$0xff] %v824
    %829 = vst [vmem:[%s6 + $0x10] sm:$0xff] %v825
    %830 = vst [vmem:[%s6 + $0x18] sm:$0xff] %v826
  $region33: #{electra_model_forward.45} parent=0 // pred_fallthru
    _
  // Predicated region
  $region34: #{electra_model_forward.45} parent=0 // pred_check
    _
  $region35: #{electra_model_forward.45} parent=0 // pred_check_branch
    %832 = sbr.rel (0) target = $region37
  $region36: #{electra_model_forward.45} parent=0 // pred_region
    _
  $region37: #{electra_model_forward.45} parent=0 // pred_fallthru
    _
  // Predicated region
  $region38: #{electra_model_forward.45} parent=0 // pred_check
    _
  $region39: #{electra_model_forward.45} parent=0 // pred_check_branch
    %834 = sbr.rel (0) target = $region41
  $region40: #{electra_model_forward.45} parent=0 // pred_region
    _
  $region41: #{electra_model_forward.45} parent=0 // pred_fallthru
    _

// kernel: electra_model_forward.51
$region0: #{electra_model_forward.51}
  #allocation0 [shape = 'u32[]', space=smem, size = 0x4, offset = 0x4, fixed_abs, tag = 'smem constant byte address 0x4 - core index']
  #allocation1 [shape = 'u32[72,128]{1,0:T(1,128)}', space=vmem, size = 0x9000, scoped, tag = 'internal scratch']
  %s0 = inlined_call_operand.vmem [shape: bf16[32,256], index: 0, kind: input, shape index: {}]
  %s1 = inlined_call_operand.vmem [shape: bf16[256,256], index: 1, kind: input, shape index: {}]
  %s2 = inlined_call_operand.vmem [shape: f32[1,256], index: 2, kind: input, shape index: {}]
  %s3 = inlined_call_operand.vmem [shape: bf16[256,128], index: 3, kind: input, shape index: {}]
  %s4 = inlined_call_operand.vmem [shape: f32[1,128], index: 4, kind: input, shape index: {}]
  %s5 = inlined_call_operand.vmem [shape: f32[32,128], index: 5, kind: output, shape index: {}]
  %s6 = sld [smem:[#allocation0]]
  $region30: #{electra_model_forward.51} parent=0
    _
  %s8 = ssub.s32 1, %s6
  %s9 = scalar_select 0, %s8, %s6
  // Predicated region
  $region2: #{electra_model_forward.51} parent=0 // pred_check
    _
  $region3: #{electra_model_forward.51} parent=0 // pred_check_branch
    %11 = sbr.rel (0) target = $region5
  $region4: #{electra_model_forward.51} parent=0 // pred_region
    _
  $region5: #{electra_model_forward.51} parent=0 // pred_fallthru
    _
  // Predicated region
  $region6: #{electra_model_forward.51} parent=0 // pred_check
    _
  $region7: #{electra_model_forward.51} parent=0 // pred_check_branch
    %13 = sbr.rel (0) target = $region9
  $region8: #{electra_model_forward.51} parent=0 // pred_region
    _
  $region9: #{electra_model_forward.51} parent=0 // pred_fallthru
    _
  // Predicated region
  $region10: #{electra_model_forward.51} parent=0 // pred_check
    _
  $region11: #{electra_model_forward.51} parent=0 // pred_check_branch
    %15 = sbr.rel (0) target = $region13
  $region12: #{electra_model_forward.51} parent=0 // pred_region
    _
  $region13: #{electra_model_forward.51} parent=0 // pred_fallthru
    _
  // Predicated region
  $region14: #{electra_model_forward.51} parent=0 // pred_check
    _
  $region15: #{electra_model_forward.51} parent=0 // pred_check_branch
    %17 = sbr.rel (0) target = $region17
  $region16: #{electra_model_forward.51} parent=0 // pred_region
    _
  $region17: #{electra_model_forward.51} parent=0 // pred_fallthru
    _
  // Predicated region
  $region18: #{electra_model_forward.51} parent=0 // pred_check
    _
  $region19: #{electra_model_forward.51} parent=0 // pred_check_branch
    %19 = sbr.rel (0) target = $region21
  $region20: #{electra_model_forward.51} parent=0 // pred_region
    _
  $region21: #{electra_model_forward.51} parent=0 // pred_fallthru
    _
  %v20 = vld [vmem:[%s0] sm:$0xff]
  %v21 = vld [vmem:[%s0 + $0x8] sm:$0xff]
  %v22 = vld [vmem:[%s0 + $0x10] sm:$0xff]
  %v23 = vld [vmem:[%s0 + $0x18] sm:$0xff]
  %v24 = vld [vmem:[%s1] sm:$0xff]
  %v25 = vld [vmem:[%s1 + $0x8] sm:$0xff]
  %v26 = vld [vmem:[%s1 + $0x10] sm:$0xff]
  %v27 = vld [vmem:[%s1 + $0x18] sm:$0xff]
  %v28 = vld [vmem:[%s1 + $0x20] sm:$0xff]
  %v29 = vld [vmem:[%s1 + $0x28] sm:$0xff]
  %v30 = vld [vmem:[%s1 + $0x30] sm:$0xff]
  %v31 = vld [vmem:[%s1 + $0x38] sm:$0xff]
  %v32 = vld [vmem:[%s1 + $0x40] sm:$0xff]
  %v33 = vld [vmem:[%s1 + $0x48] sm:$0xff]
  %v34 = vld [vmem:[%s1 + $0x50] sm:$0xff]
  %v35 = vld [vmem:[%s1 + $0x58] sm:$0xff]
  %v36 = vld [vmem:[%s1 + $0x60] sm:$0xff]
  %v37 = vld [vmem:[%s1 + $0x68] sm:$0xff]
  %v38 = vld [vmem:[%s1 + $0x70] sm:$0xff]
  %v39 = vld [vmem:[%s1 + $0x78] sm:$0xff]
  %v40 = vld [vmem:[%s1 + $0x80] sm:$0xff]
  %v41 = vld [vmem:[%s1 + $0x88] sm:$0xff]
  %v42 = vld [vmem:[%s1 + $0x90] sm:$0xff]
  %v43 = vld [vmem:[%s1 + $0x98] sm:$0xff]
  %v44 = vld [vmem:[%s1 + $0xa0] sm:$0xff]
  %v45 = vld [vmem:[%s1 + $0xa8] sm:$0xff]
  %v46 = vld [vmem:[%s1 + $0xb0] sm:$0xff]
  %v47 = vld [vmem:[%s1 + $0xb8] sm:$0xff]
  %v48 = vld [vmem:[%s1 + $0xc0] sm:$0xff]
  %v49 = vld [vmem:[%s1 + $0xc8] sm:$0xff]
  %v50 = vld [vmem:[%s1 + $0xd0] sm:$0xff]
  %v51 = vld [vmem:[%s1 + $0xd8] sm:$0xff]
  %v52 = vld [vmem:[%s1 + $0xe0] sm:$0xff]
  %v53 = vld [vmem:[%s1 + $0xe8] sm:$0xff]
  %v54 = vld [vmem:[%s1 + $0xf0] sm:$0xff]
  %v55 = vld [vmem:[%s1 + $0xf8] sm:$0xff]
  %v56 = vld [vmem:[%s2] sm:$0x3]
  %v58 = vperm.slane %v56, 0
  %v59 = vperm.slane %v56, 1
  %v66 = vunpack.c.l.b16 %v20
  %v67 = vunpack.c.h.b16 %v20
  %v68 = vunpack.c.l.b16 %v21
  %v69 = vunpack.c.h.b16 %v21
  %v70 = vunpack.c.l.b16 %v22
  %v71 = vunpack.c.h.b16 %v22
  %v72 = vunpack.c.l.b16 %v23
  %v73 = vunpack.c.h.b16 %v23
  %v74 = vpack.c.b16 %v68, %v66
  %v75 = vpack.c.b16 %v69, %v67
  %v76 = vpack.c.b16 %v72, %v70
  %v77 = vpack.c.b16 %v73, %v71
  %v114 = vunpack.c.l.b16 %v24
  %v115 = vunpack.c.h.b16 %v24
  %v116 = vunpack.c.l.b16 %v25
  %v117 = vunpack.c.h.b16 %v25
  %v118 = vunpack.c.l.b16 %v26
  %v119 = vunpack.c.h.b16 %v26
  %v120 = vunpack.c.l.b16 %v27
  %v121 = vunpack.c.h.b16 %v27
  %v122 = vunpack.c.l.b16 %v28
  %v123 = vunpack.c.h.b16 %v28
  %v124 = vunpack.c.l.b16 %v29
  %v125 = vunpack.c.h.b16 %v29
  %v126 = vunpack.c.l.b16 %v30
  %v127 = vunpack.c.h.b16 %v30
  %v128 = vunpack.c.l.b16 %v31
  %v129 = vunpack.c.h.b16 %v31
  %v130 = vunpack.c.l.b16 %v32
  %v131 = vunpack.c.h.b16 %v32
  %v132 = vunpack.c.l.b16 %v33
  %v133 = vunpack.c.h.b16 %v33
  %v134 = vunpack.c.l.b16 %v34
  %v135 = vunpack.c.h.b16 %v34
  %v136 = vunpack.c.l.b16 %v35
  %v137 = vunpack.c.h.b16 %v35
  %v138 = vunpack.c.l.b16 %v36
  %v139 = vunpack.c.h.b16 %v36
  %v140 = vunpack.c.l.b16 %v37
  %v141 = vunpack.c.h.b16 %v37
  %v142 = vunpack.c.l.b16 %v38
  %v143 = vunpack.c.h.b16 %v38
  %v144 = vunpack.c.l.b16 %v39
  %v145 = vunpack.c.h.b16 %v39
  %v146 = vunpack.c.l.b16 %v40
  %v147 = vunpack.c.h.b16 %v40
  %v148 = vunpack.c.l.b16 %v41
  %v149 = vunpack.c.h.b16 %v41
  %v150 = vunpack.c.l.b16 %v42
  %v151 = vunpack.c.h.b16 %v42
  %v152 = vunpack.c.l.b16 %v43
  %v153 = vunpack.c.h.b16 %v43
  %v154 = vunpack.c.l.b16 %v44
  %v155 = vunpack.c.h.b16 %v44
  %v156 = vunpack.c.l.b16 %v45
  %v157 = vunpack.c.h.b16 %v45
  %v158 = vunpack.c.l.b16 %v46
  %v159 = vunpack.c.h.b16 %v46
  %v160 = vunpack.c.l.b16 %v47
  %v161 = vunpack.c.h.b16 %v47
  %v162 = vunpack.c.l.b16 %v48
  %v163 = vunpack.c.h.b16 %v48
  %v164 = vunpack.c.l.b16 %v49
  %v165 = vunpack.c.h.b16 %v49
  %v166 = vunpack.c.l.b16 %v50
  %v167 = vunpack.c.h.b16 %v50
  %v168 = vunpack.c.l.b16 %v51
  %v169 = vunpack.c.h.b16 %v51
  %v170 = vunpack.c.l.b16 %v52
  %v171 = vunpack.c.h.b16 %v52
  %v172 = vunpack.c.l.b16 %v53
  %v173 = vunpack.c.h.b16 %v53
  %v174 = vunpack.c.l.b16 %v54
  %v175 = vunpack.c.h.b16 %v54
  %v176 = vunpack.c.l.b16 %v55
  %v177 = vunpack.c.h.b16 %v55
  %v178 = vpack.c.b16 %v116, %v114
  %v179 = vpack.c.b16 %v117, %v115
  %v180 = vpack.c.b16 %v120, %v118
  %v181 = vpack.c.b16 %v121, %v119
  %v182 = vpack.c.b16 %v124, %v122
  %v183 = vpack.c.b16 %v125, %v123
  %v184 = vpack.c.b16 %v128, %v126
  %v185 = vpack.c.b16 %v129, %v127
  %v186 = vpack.c.b16 %v132, %v130
  %v187 = vpack.c.b16 %v133, %v131
  %v188 = vpack.c.b16 %v136, %v134
  %v189 = vpack.c.b16 %v137, %v135
  %v190 = vpack.c.b16 %v140, %v138
  %v191 = vpack.c.b16 %v141, %v139
  %v192 = vpack.c.b16 %v144, %v142
  %v193 = vpack.c.b16 %v145, %v143
  %v194 = vpack.c.b16 %v148, %v146
  %v195 = vpack.c.b16 %v149, %v147
  %v196 = vpack.c.b16 %v152, %v150
  %v197 = vpack.c.b16 %v153, %v151
  %v198 = vpack.c.b16 %v156, %v154
  %v199 = vpack.c.b16 %v157, %v155
  %v200 = vpack.c.b16 %v160, %v158
  %v201 = vpack.c.b16 %v161, %v159
  %v202 = vpack.c.b16 %v164, %v162
  %v203 = vpack.c.b16 %v165, %v163
  %v204 = vpack.c.b16 %v168, %v166
  %v205 = vpack.c.b16 %v169, %v167
  %v206 = vpack.c.b16 %v172, %v170
  %v207 = vpack.c.b16 %v173, %v171
  %v208 = vpack.c.b16 %v176, %v174
  %v209 = vpack.c.b16 %v177, %v175
  %242 = vmatpush.bf16.msra.mxu0 %v192
  %243 = vmatpush.bf16.msra.mxu0 %v190
  %244 = vmatpush.bf16.msra.mxu0 %v188
  %245 = vmatpush.bf16.msra.mxu0 %v186
  %246 = vmatpush.bf16.msra.mxu0 %v184
  %247 = vmatpush.bf16.msra.mxu0 %v182
  %248 = vmatpush.bf16.msra.mxu0 %v180
  %249 = vmatpush.bf16.msra.mxu0 %v178
  %250 = vmatmul.bf16.gmra.mxu0 %v74
  %v251 = vpop.f32.mrf.mxu0
  %v252 = vadd.f32 %v58, %v251
  %v253 = vpop.f32.mrf.mxu0
  %v254 = vadd.f32 %v58, %v253
  %255 = vmatmul.bf16.gmra.mxu0 %v76
  %v256 = vpop.f32.mrf.mxu0
  %v257 = vadd.f32 %v58, %v256
  %v258 = vpop.f32.mrf.mxu0
  %v259 = vadd.f32 %v58, %v258
  %260 = vdwg.mxu0
  %261 = vmatpush.bf16.msra.mxu0 %v208
  %262 = vmatpush.bf16.msra.mxu0 %v206
  %263 = vmatpush.bf16.msra.mxu0 %v204
  %264 = vmatpush.bf16.msra.mxu0 %v202
  %265 = vmatpush.bf16.msra.mxu0 %v200
  %266 = vmatpush.bf16.msra.mxu0 %v198
  %267 = vmatpush.bf16.msra.mxu0 %v196
  %268 = vmatpush.bf16.msra.mxu0 %v194
  %269 = vmatmul.bf16.gmra.mxu0 %v75
  %v270 = vpop.f32.mrf.mxu0
  %v271 = vadd.f32 %v252, %v270
  %v272 = vpop.f32.mrf.mxu0
  %v273 = vadd.f32 %v254, %v272
  %274 = vmatmul.bf16.gmra.mxu0 %v77
  %v275 = vpop.f32.mrf.mxu0
  %v276 = vadd.f32 %v257, %v275
  %v277 = vpop.f32.mrf.mxu0
  %v278 = vadd.f32 %v259, %v277
  %279 = vdwg.mxu0
  %280 = vmatpush.bf16.msra.mxu0 %v193
  %281 = vmatpush.bf16.msra.mxu0 %v191
  %282 = vmatpush.bf16.msra.mxu0 %v189
  %283 = vmatpush.bf16.msra.mxu0 %v187
  %284 = vmatpush.bf16.msra.mxu0 %v185
  %285 = vmatpush.bf16.msra.mxu0 %v183
  %286 = vmatpush.bf16.msra.mxu0 %v181
  %287 = vmatpush.bf16.msra.mxu0 %v179
  %288 = vmatmul.bf16.gmra.mxu0 %v74
  %v289 = vpop.f32.mrf.mxu0
  %v290 = vadd.f32 %v59, %v289
  %v291 = vpop.f32.mrf.mxu0
  %v292 = vadd.f32 %v59, %v291
  %293 = vmatmul.bf16.gmra.mxu0 %v76
  %v294 = vpop.f32.mrf.mxu0
  %v295 = vadd.f32 %v59, %v294
  %v296 = vpop.f32.mrf.mxu0
  %v297 = vadd.f32 %v59, %v296
  %298 = vdwg.mxu0
  %299 = vmatpush.bf16.msra.mxu0 %v209
  %300 = vmatpush.bf16.msra.mxu0 %v207
  %301 = vmatpush.bf16.msra.mxu0 %v205
  %302 = vmatpush.bf16.msra.mxu0 %v203
  %303 = vmatpush.bf16.msra.mxu0 %v201
  %304 = vmatpush.bf16.msra.mxu0 %v199
  %305 = vmatpush.bf16.msra.mxu0 %v197
  %306 = vmatpush.bf16.msra.mxu0 %v195
  %307 = vmatmul.bf16.gmra.mxu0 %v75
  %v308 = vpop.f32.mrf.mxu0
  %v309 = vadd.f32 %v290, %v308
  %v310 = vpop.f32.mrf.mxu0
  %v311 = vadd.f32 %v292, %v310
  %312 = vmatmul.bf16.gmra.mxu0 %v77
  %v313 = vpop.f32.mrf.mxu0
  %v314 = vadd.f32 %v295, %v313
  %v315 = vpop.f32.mrf.mxu0
  %v316 = vadd.f32 %v297, %v315
  %317 = vdwg.mxu0
  %v318 = vmul.f32 %v271, %v271
  %v319 = vmul.f32 %v309, %v309
  %v320 = vmul.f32 %v273, %v273
  %v321 = vmul.f32 %v311, %v311
  %v322 = vmul.f32 %v276, %v276
  %v323 = vmul.f32 %v314, %v314
  %v324 = vmul.f32 %v278, %v278
  %v325 = vmul.f32 %v316, %v316
  %v326 = vmul.f32 %v271, %v318
  %v327 = vmul.f32 %v309, %v319
  %v328 = vmul.f32 %v273, %v320
  %v329 = vmul.f32 %v311, %v321
  %v330 = vmul.f32 %v276, %v322
  %v331 = vmul.f32 %v314, %v323
  %v332 = vmul.f32 %v278, %v324
  %v333 = vmul.f32 %v316, %v325
  %v334 = vmul.f32 %v326, 0.044715
  %v335 = vmul.f32 %v327, 0.044715
  %v336 = vmul.f32 %v328, 0.044715
  %v337 = vmul.f32 %v329, 0.044715
  %v338 = vmul.f32 %v330, 0.044715
  %v339 = vmul.f32 %v331, 0.044715
  %v340 = vmul.f32 %v332, 0.044715
  %v341 = vmul.f32 %v333, 0.044715
  %v342 = vadd.f32 %v271, %v334
  %v343 = vadd.f32 %v309, %v335
  %v344 = vadd.f32 %v273, %v336
  %v345 = vadd.f32 %v311, %v337
  %v346 = vadd.f32 %v276, %v338
  %v347 = vadd.f32 %v314, %v339
  %v348 = vadd.f32 %v278, %v340
  %v349 = vadd.f32 %v316, %v341
  %v350 = vmul.f32 %v342, 0.7978846
  %v351 = vmul.f32 %v343, 0.7978846
  %v352 = vmul.f32 %v344, 0.7978846
  %v353 = vmul.f32 %v345, 0.7978846
  %v354 = vmul.f32 %v346, 0.7978846
  %v355 = vmul.f32 %v347, 0.7978846
  %v356 = vmul.f32 %v348, 0.7978846
  %v357 = vmul.f32 %v349, 0.7978846
  %v358 = vtanh.pop %v350
  %v359 = vtanh.pop %v351
  %v360 = vtanh.pop %v352
  %v361 = vtanh.pop %v353
  %v362 = vtanh.pop %v354
  %v363 = vtanh.pop %v355
  %v364 = vtanh.pop %v356
  %v365 = vtanh.pop %v357
  %v366 = vadd.f32 %v358, 1.0
  %v367 = vadd.f32 %v359, 1.0
  %v368 = vadd.f32 %v360, 1.0
  %v369 = vadd.f32 %v361, 1.0
  %v370 = vadd.f32 %v362, 1.0
  %v371 = vadd.f32 %v363, 1.0
  %v372 = vadd.f32 %v364, 1.0
  %v373 = vadd.f32 %v365, 1.0
  %v374 = vmul.f32 %v366, 0.5
  %v375 = vmul.f32 %v367, 0.5
  %v376 = vmul.f32 %v368, 0.5
  %v377 = vmul.f32 %v369, 0.5
  %v378 = vmul.f32 %v370, 0.5
  %v379 = vmul.f32 %v371, 0.5
  %v380 = vmul.f32 %v372, 0.5
  %v381 = vmul.f32 %v373, 0.5
  %v382 = vmul.f32 %v271, %v374
  %v383 = vmul.f32 %v309, %v375
  %v384 = vmul.f32 %v273, %v376
  %v385 = vmul.f32 %v311, %v377
  %v386 = vmul.f32 %v276, %v378
  %v387 = vmul.f32 %v314, %v379
  %v388 = vmul.f32 %v278, %v380
  %v389 = vmul.f32 %v316, %v381
  %v390 = vpack.c.bf16 %v384, %v382
  %v391 = vpack.c.bf16 %v385, %v383
  %v392 = vpack.c.bf16 %v388, %v386
  %v393 = vpack.c.bf16 %v389, %v387
  %v394 = vld [vmem:[%s3] sm:$0xf]
  %v395 = vld [vmem:[%s3 + $0x4] sm:$0xf]
  %v396 = vld [vmem:[%s3 + $0x8] sm:$0xf]
  %v397 = vld [vmem:[%s3 + $0xc] sm:$0xf]
  %v398 = vld [vmem:[%s3 + $0x10] sm:$0xf]
  %v399 = vld [vmem:[%s3 + $0x14] sm:$0xf]
  %v400 = vld [vmem:[%s3 + $0x18] sm:$0xf]
  %v401 = vld [vmem:[%s3 + $0x1c] sm:$0xf]
  %v402 = vld [vmem:[%s3 + $0x20] sm:$0xf]
  %v403 = vld [vmem:[%s3 + $0x24] sm:$0xf]
  %v404 = vld [vmem:[%s3 + $0x28] sm:$0xf]
  %v405 = vld [vmem:[%s3 + $0x2c] sm:$0xf]
  %v406 = vld [vmem:[%s3 + $0x30] sm:$0xf]
  %v407 = vld [vmem:[%s3 + $0x34] sm:$0xf]
  %v408 = vld [vmem:[%s3 + $0x38] sm:$0xf]
  %v409 = vld [vmem:[%s3 + $0x3c] sm:$0xf]
  %v410 = vld [vmem:[%s3 + $0x40] sm:$0xf]
  %v411 = vld [vmem:[%s3 + $0x44] sm:$0xf]
  %v412 = vld [vmem:[%s3 + $0x48] sm:$0xf]
  %v413 = vld [vmem:[%s3 + $0x4c] sm:$0xf]
  %v414 = vld [vmem:[%s3 + $0x50] sm:$0xf]
  %v415 = vld [vmem:[%s3 + $0x54] sm:$0xf]
  %v416 = vld [vmem:[%s3 + $0x58] sm:$0xf]
  %v417 = vld [vmem:[%s3 + $0x5c] sm:$0xf]
  %v418 = vld [vmem:[%s3 + $0x60] sm:$0xf]
  %v419 = vld [vmem:[%s3 + $0x64] sm:$0xf]
  %v420 = vld [vmem:[%s3 + $0x68] sm:$0xf]
  %v421 = vld [vmem:[%s3 + $0x6c] sm:$0xf]
  %v422 = vld [vmem:[%s3 + $0x70] sm:$0xf]
  %v423 = vld [vmem:[%s3 + $0x74] sm:$0xf]
  %v424 = vld [vmem:[%s3 + $0x78] sm:$0xf]
  %v425 = vld [vmem:[%s3 + $0x7c] sm:$0xf]
  %v426 = vld [vmem:[%s4] sm:$0x1]
  %v428 = vperm.slane %v426, 0
  %v462 = vunpack.c.l.b16 %v394
  %v463 = vunpack.c.l.b16 %v395
  %v464 = vunpack.c.l.b16 %v396
  %v465 = vunpack.c.l.b16 %v397
  %v466 = vunpack.c.l.b16 %v398
  %v467 = vunpack.c.l.b16 %v399
  %v468 = vunpack.c.l.b16 %v400
  %v469 = vunpack.c.l.b16 %v401
  %v470 = vunpack.c.l.b16 %v402
  %v471 = vunpack.c.l.b16 %v403
  %v472 = vunpack.c.l.b16 %v404
  %v473 = vunpack.c.l.b16 %v405
  %v474 = vunpack.c.l.b16 %v406
  %v475 = vunpack.c.l.b16 %v407
  %v476 = vunpack.c.l.b16 %v408
  %v477 = vunpack.c.l.b16 %v409
  %v478 = vunpack.c.l.b16 %v410
  %v479 = vunpack.c.l.b16 %v411
  %v480 = vunpack.c.l.b16 %v412
  %v481 = vunpack.c.l.b16 %v413
  %v482 = vunpack.c.l.b16 %v414
  %v483 = vunpack.c.l.b16 %v415
  %v484 = vunpack.c.l.b16 %v416
  %v485 = vunpack.c.l.b16 %v417
  %v486 = vunpack.c.l.b16 %v418
  %v487 = vunpack.c.l.b16 %v419
  %v488 = vunpack.c.l.b16 %v420
  %v489 = vunpack.c.l.b16 %v421
  %v490 = vunpack.c.l.b16 %v422
  %v491 = vunpack.c.l.b16 %v423
  %v492 = vunpack.c.l.b16 %v424
  %v493 = vunpack.c.l.b16 %v425
  %v494 = vpack.c.b16 %v463, %v462
  %v495 = vpack.c.b16 %v465, %v464
  %v496 = vpack.c.b16 %v467, %v466
  %v497 = vpack.c.b16 %v469, %v468
  %v498 = vpack.c.b16 %v471, %v470
  %v499 = vpack.c.b16 %v473, %v472
  %v500 = vpack.c.b16 %v475, %v474
  %v501 = vpack.c.b16 %v477, %v476
  %v502 = vpack.c.b16 %v479, %v478
  %v503 = vpack.c.b16 %v481, %v480
  %v504 = vpack.c.b16 %v483, %v482
  %v505 = vpack.c.b16 %v485, %v484
  %v506 = vpack.c.b16 %v487, %v486
  %v507 = vpack.c.b16 %v489, %v488
  %v508 = vpack.c.b16 %v491, %v490
  %v509 = vpack.c.b16 %v493, %v492
  %526 = vmatpush.bf16.msra.mxu0 %v501
  %527 = vmatpush.bf16.msra.mxu0 %v500
  %528 = vmatpush.bf16.msra.mxu0 %v499
  %529 = vmatpush.bf16.msra.mxu0 %v498
  %530 = vmatpush.bf16.msra.mxu0 %v497
  %531 = vmatpush.bf16.msra.mxu0 %v496
  %532 = vmatpush.bf16.msra.mxu0 %v495
  %533 = vmatpush.bf16.msra.mxu0 %v494
  %534 = vmatmul.bf16.gmra.mxu0 %v390
  %v535 = vpop.f32.mrf.mxu0
  %v536 = vadd.f32 %v428, %v535
  %v537 = vpop.f32.mrf.mxu0
  %v538 = vadd.f32 %v428, %v537
  %539 = vmatmul.bf16.gmra.mxu0 %v392
  %v540 = vpop.f32.mrf.mxu0
  %v541 = vadd.f32 %v428, %v540
  %v542 = vpop.f32.mrf.mxu0
  %v543 = vadd.f32 %v428, %v542
  %544 = vdwg.mxu0
  %545 = vmatpush.bf16.msra.mxu0 %v509
  %546 = vmatpush.bf16.msra.mxu0 %v508
  %547 = vmatpush.bf16.msra.mxu0 %v507
  %548 = vmatpush.bf16.msra.mxu0 %v506
  %549 = vmatpush.bf16.msra.mxu0 %v505
  %550 = vmatpush.bf16.msra.mxu0 %v504
  %551 = vmatpush.bf16.msra.mxu0 %v503
  %552 = vmatpush.bf16.msra.mxu0 %v502
  %553 = vmatmul.bf16.gmra.mxu0 %v391
  %v554 = vpop.f32.mrf.mxu0
  %v555 = vadd.f32 %v536, %v554
  %v556 = vpop.f32.mrf.mxu0
  %v557 = vadd.f32 %v538, %v556
  %558 = vmatmul.bf16.gmra.mxu0 %v393
  %v559 = vpop.f32.mrf.mxu0
  %v560 = vadd.f32 %v541, %v559
  %v561 = vpop.f32.mrf.mxu0
  %v562 = vadd.f32 %v543, %v561
  %563 = vdwg.mxu0
  %564 = vst [vmem:[%s5] sm:$0xff] %v555
  %565 = vst [vmem:[%s5 + $0x8] sm:$0xff] %v557
  %566 = vst [vmem:[%s5 + $0x10] sm:$0xff] %v560
  %567 = vst [vmem:[%s5 + $0x18] sm:$0xff] %v562
  // Predicated region
  $region22: #{electra_model_forward.51} parent=0 // pred_check
    _
  $region23: #{electra_model_forward.51} parent=0 // pred_check_branch
    %569 = sbr.rel (0) target = $region25
  $region24: #{electra_model_forward.51} parent=0 // pred_region
    _
  $region25: #{electra_model_forward.51} parent=0 // pred_fallthru
    _
  // Predicated region
  $region26: #{electra_model_forward.51} parent=0 // pred_check
    _
  $region27: #{electra_model_forward.51} parent=0 // pred_check_branch
    %571 = sbr.rel (0) target = $region29
  $region28: #{electra_model_forward.51} parent=0 // pred_region
    _
  $region29: #{electra_model_forward.51} parent=0 // pred_fallthru
    _

</llo_original>
